<compile_context>
chip_gen: v7x
topology: tpu7x:2x2x1
jax: 0.10.0
libtpu: 0.0.40
codegen_flags: <defaults>
</compile_context>

<pallas_src>
import functools
import math

import jax
import jax.numpy as jnp
from jax import lax
from jax.experimental import pallas as pl
from jax.experimental.pallas import tpu as pltpu

MXU_DTYPE = jnp.bfloat16   # matmul operand dtype (f32 accumulation everywhere)


# ----------------------------- in-kernel helpers ---------------------------

def _layer_norm(x, gamma, beta, eps):
    """LayerNorm over last dim. x: (M, E) f32; gamma/beta: (1, E) f32."""
    mean = jnp.mean(x, axis=-1, keepdims=True)
    var = jnp.mean(jnp.square(x - mean), axis=-1, keepdims=True)
    return (x - mean) * lax.rsqrt(var + eps) * gamma + beta


def _mha_block(q_all, k_all, v_all, *, nhead, dh, b_blk, sq, sk):
    """Multi-head attention for a block of b_blk batch elements.

    q_all: (b_blk*sq, E) f32 (Q already scaled via folded weights),
    k_all/v_all: (b_blk*sk, E) f32.  Per-head results are gathered in a list
    and concatenated once (lane-dense), no masked partial stores.
    """
    outs = []
    for b in range(b_blk):
        qb = q_all[b * sq:(b + 1) * sq, :]
        kb = k_all[b * sk:(b + 1) * sk, :]
        vb = v_all[b * sk:(b + 1) * sk, :]
        heads = []
        for h in range(nhead):
            sl = slice(h * dh, (h + 1) * dh)
            q = qb[:, sl].astype(MXU_DTYPE)                       # (sq, dh)
            k = kb[:, sl].astype(MXU_DTYPE)                       # (sk, dh)
            v = vb[:, sl].astype(MXU_DTYPE)                       # (sk, dh)
            # q @ k^T without an explicit transpose (contract last dims).
            s = lax.dot_general(q, k, (((1,), (1,)), ((), ())),
                                preferred_element_type=jnp.float32)  # (sq, sk)
            s = s - jnp.max(s, axis=-1, keepdims=True)
            p = jnp.exp(s)
            p = p * pl.reciprocal(jnp.sum(p, axis=-1, keepdims=True),
                                  approx=True)
            heads.append(jnp.dot(p.astype(MXU_DTYPE), v,
                                 preferred_element_type=jnp.float32))
        outs.append(jnp.concatenate(heads, axis=-1))               # (sq, E)
    return outs[0] if b_blk == 1 else jnp.concatenate(outs, axis=0)


# ------------------------------ fused kernel -------------------------------

def _fused_transformer_kernel(
        src_ref, tgt_ref,
        e_wqkv, e_wo, e_w1, e_w2, e_sm,
        d_wqkv, d_wo_s, d_wq_c, d_wkv_c, d_wo_c, d_w1, d_w2, d_sm,
        enc_norm_ref, dec_norm_ref, out_w_ref, out_b_ref,
        out_ref,
        x_ref, mem_ref, y_ref,
        *, n_enc, n_dec, nhead, dh, b_blk, s_src, s_tgt, eps):
    l = pl.program_id(1)
    E = x_ref.shape[-1]

    @pl.when(l == 0)
    def _init():
        x_ref[...] = src_ref[...]
        y_ref[...] = tgt_ref[...]

    # ------------------------------ encoder phase --------------------------
    @pl.when(l < n_enc)
    def _encoder_layer():
        dff = e_w1.shape[-1]
        x = x_ref[...]                                    # (b_blk*Ss, E) f32
        sm = e_sm[0]                                      # (8, We) f32

        # fused QKV projection (Q scale folded into weights at init)
        qkv = (jnp.dot(x.astype(MXU_DTYPE), e_wqkv[0],
                       preferred_element_type=jnp.float32)
               + sm[0:1, :3 * E])
        attn = _mha_block(qkv[:, :E], qkv[:, E:2 * E], qkv[:, 2 * E:],
                          nhead=nhead, dh=dh, b_blk=b_blk, sq=s_src, sk=s_src)
        attn = (jnp.dot(attn.astype(MXU_DTYPE), e_wo[0],
                        preferred_element_type=jnp.float32)
                + sm[1:2, :E])
        x1 = _layer_norm(x + attn, sm[4:5, :E], sm[5:6, :E], eps)

        # fused FFN (w1 + ReLU + w2)
        hid = jnp.maximum(
            jnp.dot(x1.astype(MXU_DTYPE), e_w1[0],
                    preferred_element_type=jnp.float32) + sm[2:3, :dff], 0.0)
        ff = (jnp.dot(hid.astype(MXU_DTYPE), e_w2[0],
                      preferred_element_type=jnp.float32)
              + sm[3:4, :E])
        x2 = _layer_norm(x1 + ff, sm[6:7, :E], sm[7:8, :E], eps)
        x_ref[...] = x2

        @pl.when(l == n_enc - 1)
        def _finalize_encoder():
            mem = _layer_norm(x2, enc_norm_ref[0:1, :], enc_norm_ref[1:2, :],
                              eps)
            mem_ref[...] = mem.astype(mem_ref.dtype)      # keep memory bf16

    # ------------------------------ decoder phase --------------------------
    @pl.when(l >= n_enc)
    def _decoder_layer():
        dff = d_w1.shape[-1]
        y = y_ref[...]                                    # (b_blk*St, E) f32
        sm = d_sm[0]                                      # (13, Wd) f32

        # self-attention (unmasked, matching the reference call)
        qkv = (jnp.dot(y.astype(MXU_DTYPE), d_wqkv[0],
                       preferred_element_type=jnp.float32)
               + sm[0:1, :3 * E])
        sa = _mha_block(qkv[:, :E], qkv[:, E:2 * E], qkv[:, 2 * E:],
                        nhead=nhead, dh=dh, b_blk=b_blk, sq=s_tgt, sk=s_tgt)
        sa = (jnp.dot(sa.astype(MXU_DTYPE), d_wo_s[0],
                      preferred_element_type=jnp.float32)
              + sm[1:2, :E])
        y1 = _layer_norm(y + sa, sm[7:8, :E], sm[8:9, :E], eps)

        # cross-attention: Q from decoder, fused K|V from encoder memory
        mem = mem_ref[...]                                # bf16 (b_blk*Ss, E)
        q_c = (jnp.dot(y1.astype(MXU_DTYPE), d_wq_c[0],
                       preferred_element_type=jnp.float32)
               + sm[2:3, :E])
        kv_c = (jnp.dot(mem, d_wkv_c[0],
                        preferred_element_type=jnp.float32)
                + sm[3:4, :2 * E])
        ca = _mha_block(q_c, kv_c[:, :E], kv_c[:, E:],
                        nhead=nhead, dh=dh, b_blk=b_blk, sq=s_tgt, sk=s_src)
        ca = (jnp.dot(ca.astype(MXU_DTYPE), d_wo_c[0],
                      preferred_element_type=jnp.float32)
              + sm[4:5, :E])
        y2 = _layer_norm(y1 + ca, sm[9:10, :E], sm[10:11, :E], eps)

        # fused FFN
        hid = jnp.maximum(
            jnp.dot(y2.astype(MXU_DTYPE), d_w1[0],
                    preferred_element_type=jnp.float32) + sm[5:6, :dff], 0.0)
        ff = (jnp.dot(hid.astype(MXU_DTYPE), d_w2[0],
                      preferred_element_type=jnp.float32)
              + sm[6:7, :E])
        y3 = _layer_norm(y2 + ff, sm[11:12, :E], sm[12:13, :E], eps)
        y_ref[...] = y3

        @pl.when(l == n_enc + n_dec - 1)
        def _finalize_decoder():
            yn = _layer_norm(y3, dec_norm_ref[0:1, :], dec_norm_ref[1:2, :],
                             eps)
            out_ref[...] = (jnp.dot(yn.astype(MXU_DTYPE), out_w_ref[...],
                                    preferred_element_type=jnp.float32)
                            + out_b_ref[...])


def fused_transformer(src2d, tgt2d, enc, dec, enc_norm, dec_norm, out_w, out_b,
                      *, B, Ss, St, nhead, b_blk):
    """src2d: (B*Ss, E) batch-major rows; tgt2d: (B*St, E).
    Returns (B*St, out_pad) f32 (output projection, lane padded)."""
    E = src2d.shape[-1]
    dff = enc["w1"].shape[-1]
    n_enc = enc["wqkv"].shape[0]
    n_dec = dec["wqkv"].shape[0]
    L = n_enc + n_dec
    dh = E // nhead
    out_pad = out_w.shape[-1]
    assert B % b_blk == 0
    nb = B // b_blk
    we = enc["small"].shape[-1]
    wd = dec["small"].shape[-1]

    # Clamped layer maps: the "wrong" stack's block index stays constant during
    # the other phase, so it is never re-DMA'd there.
    emap = lambda b, l: (jnp.minimum(l, n_enc - 1), 0, 0)
    dmap = lambda b, l: (jnp.maximum(l - n_enc, 0), 0, 0)
    bmap = lambda b, l: (b, 0)
    cmap = lambda b, l: (0, 0)

    kernel = functools.partial(
        _fused_transformer_kernel, n_enc=n_enc, n_dec=n_dec, nhead=nhead,
        dh=dh, b_blk=b_blk, s_src=Ss, s_tgt=St, eps=1e-5)

    return pl.pallas_call(
        kernel,
        out_shape=jax.ShapeDtypeStruct((B * St, out_pad), jnp.float32),
        grid=(nb, L),
        in_specs=[
            pl.BlockSpec((b_blk * Ss, E), bmap),          # src (resident)
            pl.BlockSpec((b_blk * St, E), bmap),          # tgt (resident)
            # encoder stack (per-layer, clamped)
            pl.BlockSpec((1, E, 3 * E), emap),            # wqkv
            pl.BlockSpec((1, E, E), emap),                # wo
            pl.BlockSpec((1, E, dff), emap),              # w1
            pl.BlockSpec((1, dff, E), emap),              # w2
            pl.BlockSpec((1, 8, we), emap),               # packed biases+LN
            # decoder stack (per-layer, clamped)
            pl.BlockSpec((1, E, 3 * E), dmap),            # wqkv (self)
            pl.BlockSpec((1, E, E), dmap),                # wo (self)
            pl.BlockSpec((1, E, E), dmap),                # wq (cross)
            pl.BlockSpec((1, E, 2 * E), dmap),            # wkv (cross)
            pl.BlockSpec((1, E, E), dmap),                # wo (cross)
            pl.BlockSpec((1, E, dff), dmap),              # w1
            pl.BlockSpec((1, dff, E), dmap),              # w2
            pl.BlockSpec((1, 13, wd), dmap),              # packed biases+LN
            # constants
            pl.BlockSpec((2, E), cmap),                   # final enc norm
            pl.BlockSpec((2, E), cmap),                   # final dec norm
            pl.BlockSpec((E, out_pad), cmap),             # output proj W
            pl.BlockSpec((1, out_pad), cmap),             # output proj b
        ],
        out_specs=pl.BlockSpec((b_blk * St, out_pad), bmap),
        scratch_shapes=[
            pltpu.VMEM((b_blk * Ss, E), jnp.float32),     # encoder activation
            pltpu.VMEM((b_blk * Ss, E), MXU_DTYPE),       # encoder memory bf16
            pltpu.VMEM((b_blk * St, E), jnp.float32),     # decoder activation
        ],
        compiler_params=pltpu.CompilerParams(
            dimension_semantics=("parallel", "arbitrary")),
    )(src2d, tgt2d,
      enc["wqkv"], enc["wo"], enc["w1"], enc["w2"], enc["small"],
      dec["wqkv"], dec["wo_s"], dec["wq_c"], dec["wkv_c"], dec["wo_c"],
      dec["w1"], dec["w2"], dec["small"],
      enc_norm, dec_norm, out_w, out_b)


# ------------------------------ full forward -------------------------------

def transformer_forward(params, src_tokens, tgt_tokens, *, nhead,
                        batch_block=None):
    """src_tokens/tgt_tokens: int32 (S, B) -> (S_tgt, B, feature_size)."""
    emb = params["embedding"]                             # (F, E)
    feature_size = emb.shape[0]
    src = jnp.take(emb, src_tokens, axis=0)               # (Ss, B, E)
    tgt = jnp.take(emb, tgt_tokens, axis=0)               # (St, B, E)

    pe = params["pos_encoding"]                           # (max_len, E)
    src = src + pe[: src.shape[0]][:, None, :]
    tgt = tgt + pe[: tgt.shape[0]][:, None, :]

    Ss, B, E = src.shape
    St = tgt.shape[0]
    src2d = src.transpose(1, 0, 2).reshape(B * Ss, E)     # batch-major rows
    tgt2d = tgt.transpose(1, 0, 2).reshape(B * St, E)

    if batch_block is None:
        batch_block = B                                   # whole batch / block

    out_pad = fused_transformer(
        src2d, tgt2d, params["enc"], params["dec"], params["enc_norm"],
        params["dec_norm"], params["out_w"], params["out_b"],
        B=B, Ss=Ss, St=St, nhead=nhead, b_blk=batch_block)

    out = out_pad[:, :feature_size].reshape(B, St, feature_size)
    return out.transpose(1, 0, 2)                         # (St, B, F)


# ------------------------------- parameters --------------------------------

def sinusoidal_pe(max_len, d_model):
    pos = jnp.arange(max_len, dtype=jnp.float32)[:, None]
    div = jnp.exp(jnp.arange(0, d_model, 2, dtype=jnp.float32)
                  * (-math.log(10000.0) / d_model))
    ang = pos * div
    pe = jnp.stack([jnp.sin(ang), jnp.cos(ang)], axis=-1).reshape(max_len,
                                                                  d_model)
    return pe.astype(jnp.float32)


def _pack_rows(rows, width):
    """Stack 1-D f32 vectors (zero-padded on the right) into (len(rows), width)."""
    out = jnp.zeros((len(rows), width), jnp.float32)
    for i, r in enumerate(rows):
        out = out.at[i, : r.shape[0]].set(r.astype(jnp.float32))
    return out


def init_params(key, feature_size, d_model, nhead, n_enc, n_dec, dff, max_len):
    keys = iter(jax.random.split(key, 64))
    dh = d_model // nhead
    q_scale = 1.0 / math.sqrt(dh)

    def xavier(shape, n=None):
        fan_in, fan_out = shape
        lim = math.sqrt(6.0 / (fan_in + fan_out))
        full = shape if n is None else (n,) + shape
        return jax.random.uniform(next(keys), full, jnp.float32, -lim, lim)

    def zeros(shape):
        return jnp.zeros(shape, jnp.float32)

    g = jnp.ones((d_model,), jnp.float32)      # LayerNorm gamma
    b = jnp.zeros((d_model,), jnp.float32)     # LayerNorm beta

    # ----------------------------- encoder stack ----------------------------
    e_wqkv = xavier((d_model, 3 * d_model), n_enc)
    e_wqkv = e_wqkv.at[:, :, :d_model].multiply(q_scale)   # fold 1/sqrt(dh)
    e_bqkv = zeros((n_enc, 3 * d_model)).at[:, :d_model].multiply(q_scale)
    e_wo = xavier((d_model, d_model), n_enc)
    e_bo = zeros((n_enc, d_model))
    e_w1 = xavier((d_model, dff), n_enc)
    e_b1 = zeros((n_enc, dff))
    e_w2 = xavier((dff, d_model), n_enc)
    e_b2 = zeros((n_enc, d_model))
    we = max(3 * d_model, dff, d_model)
    e_small = jnp.stack(
        [_pack_rows([e_bqkv[i], e_bo[i], e_b1[i], e_b2[i], g, b, g, b], we)
         for i in range(n_enc)], axis=0)                   # (L, 8, we)
    enc = dict(wqkv=e_wqkv.astype(MXU_DTYPE), wo=e_wo.astype(MXU_DTYPE),
               w1=e_w1.astype(MXU_DTYPE), w2=e_w2.astype(MXU_DTYPE),
               small=e_small)

    # ----------------------------- decoder stack ----------------------------
    d_wqkv = xavier((d_model, 3 * d_model), n_dec)
    d_wqkv = d_wqkv.at[:, :, :d_model].multiply(q_scale)
    d_bqkv = zeros((n_dec, 3 * d_model)).at[:, :d_model].multiply(q_scale)
    d_wo_s = xavier((d_model, d_model), n_dec)
    d_bo_s = zeros((n_dec, d_model))
    d_wq_c = xavier((d_model, d_model), n_dec) * q_scale
    d_bq_c = zeros((n_dec, d_model)) * q_scale
    d_wkv_c = xavier((d_model, 2 * d_model), n_dec)
    d_bkv_c = zeros((n_dec, 2 * d_model))
    d_wo_c = xavier((d_model, d_model), n_dec)
    d_bo_c = zeros((n_dec, d_model))
    d_w1 = xavier((d_model, dff), n_dec)
    d_b1 = zeros((n_dec, dff))
    d_w2 = xavier((dff, d_model), n_dec)
    d_b2 = zeros((n_dec, d_model))
    wd = max(3 * d_model, 2 * d_model, dff, d_model)
    d_small = jnp.stack(
        [_pack_rows([d_bqkv[i], d_bo_s[i], d_bq_c[i], d_bkv_c[i], d_bo_c[i],
                     d_b1[i], d_b2[i], g, b, g, b, g, b], wd)
         for i in range(n_dec)], axis=0)                   # (L, 13, wd)
    dec = dict(wqkv=d_wqkv.astype(MXU_DTYPE), wo_s=d_wo_s.astype(MXU_DTYPE),
               wq_c=d_wq_c.astype(MXU_DTYPE), wkv_c=d_wkv_c.astype(MXU_DTYPE),
               wo_c=d_wo_c.astype(MXU_DTYPE), w1=d_w1.astype(MXU_DTYPE),
               w2=d_w2.astype(MXU_DTYPE), small=d_small)

    # Output projection padded to a lane-dense 128-wide weight; the pad is
    # zero and sliced off in the wrapper.
    out_pad = max(128, ((feature_size + 127) // 128) * 128)
    out_w = jnp.zeros((d_model, out_pad), jnp.float32)
    out_w = out_w.at[:, :feature_size].set(xavier((d_model, feature_size)))

    def norm2():
        return jnp.stack([g, b], axis=0)                   # (2, E)

    return dict(
        embedding=xavier((feature_size, d_model)),
        pos_encoding=sinusoidal_pe(max_len, d_model),
        enc=enc,
        dec=dec,
        enc_norm=norm2(),
        dec_norm=norm2(),
        out_w=out_w.astype(MXU_DTYPE),
        out_b=zeros((1, out_pad)),
    )


# ---------------------------------- main ------------------------------------

if __name__ == "__main__":
    # Small shapes consistent with the module (d_model scaled down from 512).
    feature_size = 16
    d_model = 64
    nhead = 4
    num_encoder_layers = 2
    num_decoder_layers = 2
    dim_feedforward = 128
    S, B = 8, 2                                    # sequence length, batch

    key = jax.random.PRNGKey(0)
    kp, ks, kt = jax.random.split(key, 3)
    params = init_params(kp, feature_size, d_model, nhead,
                         num_encoder_layers, num_decoder_layers,
                         dim_feedforward, max_len=64)

    src = jax.random.randint(ks, (S, B), 0, feature_size, dtype=jnp.int32)
    tgt = jax.random.randint(kt, (S, B), 0, feature_size, dtype=jnp.int32)

    fwd = jax.jit(functools.partial(transformer_forward, nhead=nhead))
    out = fwd(params, src, tgt)
    out = jax.block_until_ready(out)
    assert out.shape == (S, B, feature_size), out.shape
    assert bool(jnp.all(jnp.isfinite(out)))
    print("KERNEL_OK")
</pallas_src>

<mosaic_0001>
module attributes {stable_mosaic.version = 11 : i64} {
  func.func @_fused_transformer_kernel(%arg0: i32, %arg1: i32, %arg2: memref<16x64xf32, #tpu.memory_space<vmem>>, %arg3: memref<16x64xf32, #tpu.memory_space<vmem>>, %arg4: memref<1x64x192xbf16, #tpu.memory_space<vmem>>, %arg5: memref<1x64x64xbf16, #tpu.memory_space<vmem>>, %arg6: memref<1x64x128xbf16, #tpu.memory_space<vmem>>, %arg7: memref<1x128x64xbf16, #tpu.memory_space<vmem>>, %arg8: memref<1x8x192xf32, #tpu.memory_space<vmem>>, %arg9: memref<1x64x192xbf16, #tpu.memory_space<vmem>>, %arg10: memref<1x64x64xbf16, #tpu.memory_space<vmem>>, %arg11: memref<1x64x64xbf16, #tpu.memory_space<vmem>>, %arg12: memref<1x64x128xbf16, #tpu.memory_space<vmem>>, %arg13: memref<1x64x64xbf16, #tpu.memory_space<vmem>>, %arg14: memref<1x64x128xbf16, #tpu.memory_space<vmem>>, %arg15: memref<1x128x64xbf16, #tpu.memory_space<vmem>>, %arg16: memref<1x13x192xf32, #tpu.memory_space<vmem>>, %arg17: memref<2x64xf32, #tpu.memory_space<vmem>>, %arg18: memref<2x64xf32, #tpu.memory_space<vmem>>, %arg19: memref<64x128xbf16, #tpu.memory_space<vmem>>, %arg20: memref<1x128xf32, #tpu.memory_space<vmem>>, %arg21: memref<16x128xf32, #tpu.memory_space<vmem>>, %arg22: memref<16x64xf32, #tpu.memory_space<vmem>>, %arg23: memref<16x64xbf16, #tpu.memory_space<vmem>>, %arg24: memref<16x64xf32, #tpu.memory_space<vmem>>) attributes {dimension_semantics = [#tpu.dimension_semantics<parallel>, #tpu.dimension_semantics<arbitrary>], iteration_bounds = array<i64: 1, 4>, scalar_prefetch = 0 : i64, scratch_operands = 3 : i64, tpu.core_type = #tpu.core_type<tc>, window_params = [{transform_indices = @transform_0, window_bounds = array<i64: 16, 64>}, {transform_indices = @transform_1, window_bounds = array<i64: 16, 64>}, {transform_indices = @transform_2, window_bounds = array<i64: 1, 64, 192>}, {transform_indices = @transform_3, window_bounds = array<i64: 1, 64, 64>}, {transform_indices = @transform_4, window_bounds = array<i64: 1, 64, 128>}, {transform_indices = @transform_5, window_bounds = array<i64: 1, 128, 64>}, {transform_indices = @transform_6, window_bounds = array<i64: 1, 8, 192>}, {transform_indices = @transform_7, window_bounds = array<i64: 1, 64, 192>}, {transform_indices = @transform_8, window_bounds = array<i64: 1, 64, 64>}, {transform_indices = @transform_9, window_bounds = array<i64: 1, 64, 64>}, {transform_indices = @transform_10, window_bounds = array<i64: 1, 64, 128>}, {transform_indices = @transform_11, window_bounds = array<i64: 1, 64, 64>}, {transform_indices = @transform_12, window_bounds = array<i64: 1, 64, 128>}, {transform_indices = @transform_13, window_bounds = array<i64: 1, 128, 64>}, {transform_indices = @transform_14, window_bounds = array<i64: 1, 13, 192>}, {pipeline_mode = #tpu.pipeline_mode<synchronous>, transform_indices = @transform_15, window_bounds = array<i64: 2, 64>}, {pipeline_mode = #tpu.pipeline_mode<synchronous>, transform_indices = @transform_16, window_bounds = array<i64: 2, 64>}, {pipeline_mode = #tpu.pipeline_mode<synchronous>, transform_indices = @transform_17, window_bounds = array<i64: 64, 128>}, {pipeline_mode = #tpu.pipeline_mode<synchronous>, transform_indices = @transform_18, window_bounds = array<i64: 1, 128>}, {transform_indices = @transform_19, window_bounds = array<i64: 16, 128>}]} {
    %c0_i32 = arith.constant 0 : i32
    %0 = arith.cmpi eq, %arg1, %c0_i32 : i32
    %1 = arith.extui %0 : i1 to i32
    %c0_i32_0 = arith.constant 0 : i32
    %2 = arith.cmpi ne, %1, %c0_i32_0 : i32
    scf.if %2 {
      %c0 = arith.constant 0 : index
      %c0_4 = arith.constant 0 : index
      %9 = vector.load %arg2[%c0, %c0_4] : memref<16x64xf32, #tpu.memory_space<vmem>>, vector<16x64xf32>
      %c0_5 = arith.constant 0 : index
      %c0_6 = arith.constant 0 : index
      %10 = vector.load %arg22[%c0_5, %c0_6] : memref<16x64xf32, #tpu.memory_space<vmem>>, vector<16x64xf32>
      tpu.vector_store %arg22[%c0_5, %c0_6], %9 {strides = array<i32>} : memref<16x64xf32, #tpu.memory_space<vmem>>, vector<16x64xf32>,
      %c0_7 = arith.constant 0 : index
      %c0_8 = arith.constant 0 : index
      %11 = vector.load %arg3[%c0_7, %c0_8] : memref<16x64xf32, #tpu.memory_space<vmem>>, vector<16x64xf32>
      %c0_9 = arith.constant 0 : index
      %c0_10 = arith.constant 0 : index
      %12 = vector.load %arg24[%c0_9, %c0_10] : memref<16x64xf32, #tpu.memory_space<vmem>>, vector<16x64xf32>
      tpu.vector_store %arg24[%c0_9, %c0_10], %11 {strides = array<i32>} : memref<16x64xf32, #tpu.memory_space<vmem>>, vector<16x64xf32>,
    } else {
    }
    %c2_i32 = arith.constant 2 : i32
    %3 = arith.cmpi slt, %arg1, %c2_i32 : i32
    %4 = arith.extui %3 : i1 to i32
    %c0_i32_1 = arith.constant 0 : i32
    %5 = arith.cmpi ne, %4, %c0_i32_1 : i32
    scf.if %5 {
      %c0 = arith.constant 0 : index
      %c0_4 = arith.constant 0 : index
      %9 = vector.load %arg22[%c0, %c0_4] : memref<16x64xf32, #tpu.memory_space<vmem>>, vector<16x64xf32>
      %c0_5 = arith.constant 0 : index
      %c0_6 = arith.constant 0 : index
      %c0_7 = arith.constant 0 : index
      %10 = vector.load %arg8[%c0_5, %c0_6, %c0_7] : memref<1x8x192xf32, #tpu.memory_space<vmem>>, vector<1x8x192xf32>
      %11 = vector.shape_cast %10 : vector<1x8x192xf32> to vector<8x192xf32>
      %12 = arith.truncf %9 : vector<16x64xf32> to vector<16x64xbf16>
      %c0_8 = arith.constant 0 : index
      %c0_9 = arith.constant 0 : index
      %c0_10 = arith.constant 0 : index
      %13 = vector.load %arg4[%c0_8, %c0_9, %c0_10] : memref<1x64x192xbf16, #tpu.memory_space<vmem>>, vector<1x64x192xbf16>
      %14 = vector.shape_cast %13 : vector<1x64x192xbf16> to vector<64x192xbf16>
      %cst = arith.constant dense<0.000000e+00> : vector<16x192xf32>
      %15 = tpu.matmul %12, %14, %cst {dimension_numbers = #tpu.dot_dimension_numbers<[1], [0], [0], [1], [0, 0, 1, 1], [], []>} : vector<16x64xbf16>, vector<64x192xbf16>, vector<16x192xf32> -> vector<16x192xf32>
      %16 = vector.extract_strided_slice %11 {offsets = [0, 0], sizes = [1, 192], strides = [1, 1]} : vector<8x192xf32> to vector<1x192xf32>
      %17 = vector.broadcast %16 : vector<1x192xf32> to vector<16x192xf32>
      %18 = arith.addf %15, %17 : vector<16x192xf32>
      %19 = vector.extract_strided_slice %18 {offsets = [0, 0], sizes = [16, 64], strides = [1, 1]} : vector<16x192xf32> to vector<16x64xf32>
      %20 = vector.extract_strided_slice %18 {offsets = [0, 64], sizes = [16, 64], strides = [1, 1]} : vector<16x192xf32> to vector<16x64xf32>
      %21 = vector.extract_strided_slice %18 {offsets = [0, 128], sizes = [16, 64], strides = [1, 1]} : vector<16x192xf32> to vector<16x64xf32>
      %22 = vector.extract_strided_slice %19 {offsets = [0, 0], sizes = [8, 64], strides = [1, 1]} : vector<16x64xf32> to vector<8x64xf32>
      %23 = vector.extract_strided_slice %20 {offsets = [0, 0], sizes = [8, 64], strides = [1, 1]} : vector<16x64xf32> to vector<8x64xf32>
      %24 = vector.extract_strided_slice %21 {offsets = [0, 0], sizes = [8, 64], strides = [1, 1]} : vector<16x64xf32> to vector<8x64xf32>
      %25 = vector.extract_strided_slice %22 {offsets = [0, 0], sizes = [8, 16], strides = [1, 1]} : vector<8x64xf32> to vector<8x16xf32>
      %26 = arith.truncf %25 : vector<8x16xf32> to vector<8x16xbf16>
      %27 = vector.extract_strided_slice %23 {offsets = [0, 0], sizes = [8, 16], strides = [1, 1]} : vector<8x64xf32> to vector<8x16xf32>
      %28 = arith.truncf %27 : vector<8x16xf32> to vector<8x16xbf16>
      %29 = vector.extract_strided_slice %24 {offsets = [0, 0], sizes = [8, 16], strides = [1, 1]} : vector<8x64xf32> to vector<8x16xf32>
      %30 = arith.truncf %29 : vector<8x16xf32> to vector<8x16xbf16>
      %cst_11 = arith.constant dense<0.000000e+00> : vector<8x8xf32>
      %31 = tpu.matmul %26, %28, %cst_11 {dimension_numbers = #tpu.dot_dimension_numbers<[1], [1], [0], [0], [0, 0, 1, 0], [], []>} : vector<8x16xbf16>, vector<8x16xbf16>, vector<8x8xf32> -> vector<8x8xf32>
      %cst_12 = arith.constant dense<0xFF800000> : vector<8xf32>
      %32 = vector.multi_reduction <maximumf>, %31, %cst_12 [1] : vector<8x8xf32> to vector<8xf32>
      %33 = vector.shape_cast %32 : vector<8xf32> to vector<8x1xf32>
      %34 = vector.broadcast %33 : vector<8x1xf32> to vector<8x8xf32>
      %35 = arith.subf %31, %34 : vector<8x8xf32>
      %36 = math.exp %35 : vector<8x8xf32>
      %cst_13 = arith.constant dense<0.000000e+00> : vector<8xf32>
      %37 = vector.multi_reduction <add>, %36, %cst_13 [1] : vector<8x8xf32> to vector<8xf32>
      %38 = vector.shape_cast %37 : vector<8xf32> to vector<8x1xf32>
      %39 = tpu.reciprocal %38 {approx = true} : vector<8x1xf32> -> vector<8x1xf32>
      %40 = vector.broadcast %39 : vector<8x1xf32> to vector<8x8xf32>
      %41 = arith.mulf %36, %40 : vector<8x8xf32>
      %42 = arith.truncf %41 : vector<8x8xf32> to vector<8x8xbf16>
      %cst_14 = arith.constant dense<0.000000e+00> : vector<8x16xf32>
      %43 = tpu.matmul %42, %30, %cst_14 {dimension_numbers = #tpu.dot_dimension_numbers<[1], [0], [0], [1], [0, 0, 1, 1], [], []>} : vector<8x8xbf16>, vector<8x16xbf16>, vector<8x16xf32> -> vector<8x16xf32>
      %44 = vector.extract_strided_slice %22 {offsets = [0, 16], sizes = [8, 16], strides = [1, 1]} : vector<8x64xf32> to vector<8x16xf32>
      %45 = arith.truncf %44 : vector<8x16xf32> to vector<8x16xbf16>
      %46 = vector.extract_strided_slice %23 {offsets = [0, 16], sizes = [8, 16], strides = [1, 1]} : vector<8x64xf32> to vector<8x16xf32>
      %47 = arith.truncf %46 : vector<8x16xf32> to vector<8x16xbf16>
      %48 = vector.extract_strided_slice %24 {offsets = [0, 16], sizes = [8, 16], strides = [1, 1]} : vector<8x64xf32> to vector<8x16xf32>
      %49 = arith.truncf %48 : vector<8x16xf32> to vector<8x16xbf16>
      %cst_15 = arith.constant dense<0.000000e+00> : vector<8x8xf32>
      %50 = tpu.matmul %45, %47, %cst_15 {dimension_numbers = #tpu.dot_dimension_numbers<[1], [1], [0], [0], [0, 0, 1, 0], [], []>} : vector<8x16xbf16>, vector<8x16xbf16>, vector<8x8xf32> -> vector<8x8xf32>
      %cst_16 = arith.constant dense<0xFF800000> : vector<8xf32>
      %51 = vector.multi_reduction <maximumf>, %50, %cst_16 [1] : vector<8x8xf32> to vector<8xf32>
      %52 = vector.shape_cast %51 : vector<8xf32> to vector<8x1xf32>
      %53 = vector.broadcast %52 : vector<8x1xf32> to vector<8x8xf32>
      %54 = arith.subf %50, %53 : vector<8x8xf32>
      %55 = math.exp %54 : vector<8x8xf32>
      %cst_17 = arith.constant dense<0.000000e+00> : vector<8xf32>
      %56 = vector.multi_reduction <add>, %55, %cst_17 [1] : vector<8x8xf32> to vector<8xf32>
      %57 = vector.shape_cast %56 : vector<8xf32> to vector<8x1xf32>
      %58 = tpu.reciprocal %57 {approx = true} : vector<8x1xf32> -> vector<8x1xf32>
      %59 = vector.broadcast %58 : vector<8x1xf32> to vector<8x8xf32>
      %60 = arith.mulf %55, %59 : vector<8x8xf32>
      %61 = arith.truncf %60 : vector<8x8xf32> to vector<8x8xbf16>
      %cst_18 = arith.constant dense<0.000000e+00> : vector<8x16xf32>
      %62 = tpu.matmul %61, %49, %cst_18 {dimension_numbers = #tpu.dot_dimension_numbers<[1], [0], [0], [1], [0, 0, 1, 1], [], []>} : vector<8x8xbf16>, vector<8x16xbf16>, vector<8x16xf32> -> vector<8x16xf32>
      %63 = vector.extract_strided_slice %22 {offsets = [0, 32], sizes = [8, 16], strides = [1, 1]} : vector<8x64xf32> to vector<8x16xf32>
      %64 = arith.truncf %63 : vector<8x16xf32> to vector<8x16xbf16>
      %65 = vector.extract_strided_slice %23 {offsets = [0, 32], sizes = [8, 16], strides = [1, 1]} : vector<8x64xf32> to vector<8x16xf32>
      %66 = arith.truncf %65 : vector<8x16xf32> to vector<8x16xbf16>
      %67 = vector.extract_strided_slice %24 {offsets = [0, 32], sizes = [8, 16], strides = [1, 1]} : vector<8x64xf32> to vector<8x16xf32>
      %68 = arith.truncf %67 : vector<8x16xf32> to vector<8x16xbf16>
      %cst_19 = arith.constant dense<0.000000e+00> : vector<8x8xf32>
      %69 = tpu.matmul %64, %66, %cst_19 {dimension_numbers = #tpu.dot_dimension_numbers<[1], [1], [0], [0], [0, 0, 1, 0], [], []>} : vector<8x16xbf16>, vector<8x16xbf16>, vector<8x8xf32> -> vector<8x8xf32>
      %cst_20 = arith.constant dense<0xFF800000> : vector<8xf32>
      %70 = vector.multi_reduction <maximumf>, %69, %cst_20 [1] : vector<8x8xf32> to vector<8xf32>
      %71 = vector.shape_cast %70 : vector<8xf32> to vector<8x1xf32>
      %72 = vector.broadcast %71 : vector<8x1xf32> to vector<8x8xf32>
      %73 = arith.subf %69, %72 : vector<8x8xf32>
      %74 = math.exp %73 : vector<8x8xf32>
      %cst_21 = arith.constant dense<0.000000e+00> : vector<8xf32>
      %75 = vector.multi_reduction <add>, %74, %cst_21 [1] : vector<8x8xf32> to vector<8xf32>
      %76 = vector.shape_cast %75 : vector<8xf32> to vector<8x1xf32>
      %77 = tpu.reciprocal %76 {approx = true} : vector<8x1xf32> -> vector<8x1xf32>
      %78 = vector.broadcast %77 : vector<8x1xf32> to vector<8x8xf32>
      %79 = arith.mulf %74, %78 : vector<8x8xf32>
      %80 = arith.truncf %79 : vector<8x8xf32> to vector<8x8xbf16>
      %cst_22 = arith.constant dense<0.000000e+00> : vector<8x16xf32>
      %81 = tpu.matmul %80, %68, %cst_22 {dimension_numbers = #tpu.dot_dimension_numbers<[1], [0], [0], [1], [0, 0, 1, 1], [], []>} : vector<8x8xbf16>, vector<8x16xbf16>, vector<8x16xf32> -> vector<8x16xf32>
      %82 = vector.extract_strided_slice %22 {offsets = [0, 48], sizes = [8, 16], strides = [1, 1]} : vector<8x64xf32> to vector<8x16xf32>
      %83 = arith.truncf %82 : vector<8x16xf32> to vector<8x16xbf16>
      %84 = vector.extract_strided_slice %23 {offsets = [0, 48], sizes = [8, 16], strides = [1, 1]} : vector<8x64xf32> to vector<8x16xf32>
      %85 = arith.truncf %84 : vector<8x16xf32> to vector<8x16xbf16>
      %86 = vector.extract_strided_slice %24 {offsets = [0, 48], sizes = [8, 16], strides = [1, 1]} : vector<8x64xf32> to vector<8x16xf32>
      %87 = arith.truncf %86 : vector<8x16xf32> to vector<8x16xbf16>
      %cst_23 = arith.constant dense<0.000000e+00> : vector<8x8xf32>
      %88 = tpu.matmul %83, %85, %cst_23 {dimension_numbers = #tpu.dot_dimension_numbers<[1], [1], [0], [0], [0, 0, 1, 0], [], []>} : vector<8x16xbf16>, vector<8x16xbf16>, vector<8x8xf32> -> vector<8x8xf32>
      %cst_24 = arith.constant dense<0xFF800000> : vector<8xf32>
      %89 = vector.multi_reduction <maximumf>, %88, %cst_24 [1] : vector<8x8xf32> to vector<8xf32>
      %90 = vector.shape_cast %89 : vector<8xf32> to vector<8x1xf32>
      %91 = vector.broadcast %90 : vector<8x1xf32> to vector<8x8xf32>
      %92 = arith.subf %88, %91 : vector<8x8xf32>
      %93 = math.exp %92 : vector<8x8xf32>
      %cst_25 = arith.constant dense<0.000000e+00> : vector<8xf32>
      %94 = vector.multi_reduction <add>, %93, %cst_25 [1] : vector<8x8xf32> to vector<8xf32>
      %95 = vector.shape_cast %94 : vector<8xf32> to vector<8x1xf32>
      %96 = tpu.reciprocal %95 {approx = true} : vector<8x1xf32> -> vector<8x1xf32>
      %97 = vector.broadcast %96 : vector<8x1xf32> to vector<8x8xf32>
      %98 = arith.mulf %93, %97 : vector<8x8xf32>
      %99 = arith.truncf %98 : vector<8x8xf32> to vector<8x8xbf16>
      %cst_26 = arith.constant dense<0.000000e+00> : vector<8x16xf32>
      %100 = tpu.matmul %99, %87, %cst_26 {dimension_numbers = #tpu.dot_dimension_numbers<[1], [0], [0], [1], [0, 0, 1, 1], [], []>} : vector<8x8xbf16>, vector<8x16xbf16>, vector<8x16xf32> -> vector<8x16xf32>
      %101 = tpu.concatenate %43, %62, %81, %100 in 1 : vector<8x16xf32>, vector<8x16xf32>, vector<8x16xf32>, vector<8x16xf32> -> vector<8x64xf32>
      %102 = vector.extract_strided_slice %19 {offsets = [8, 0], sizes = [8, 64], strides = [1, 1]} : vector<16x64xf32> to vector<8x64xf32>
      %103 = vector.extract_strided_slice %20 {offsets = [8, 0], sizes = [8, 64], strides = [1, 1]} : vector<16x64xf32> to vector<8x64xf32>
      %104 = vector.extract_strided_slice %21 {offsets = [8, 0], sizes = [8, 64], strides = [1, 1]} : vector<16x64xf32> to vector<8x64xf32>
      %105 = vector.extract_strided_slice %102 {offsets = [0, 0], sizes = [8, 16], strides = [1, 1]} : vector<8x64xf32> to vector<8x16xf32>
      %106 = arith.truncf %105 : vector<8x16xf32> to vector<8x16xbf16>
      %107 = vector.extract_strided_slice %103 {offsets = [0, 0], sizes = [8, 16], strides = [1, 1]} : vector<8x64xf32> to vector<8x16xf32>
      %108 = arith.truncf %107 : vector<8x16xf32> to vector<8x16xbf16>
      %109 = vector.extract_strided_slice %104 {offsets = [0, 0], sizes = [8, 16], strides = [1, 1]} : vector<8x64xf32> to vector<8x16xf32>
      %110 = arith.truncf %109 : vector<8x16xf32> to vector<8x16xbf16>
      %cst_27 = arith.constant dense<0.000000e+00> : vector<8x8xf32>
      %111 = tpu.matmul %106, %108, %cst_27 {dimension_numbers = #tpu.dot_dimension_numbers<[1], [1], [0], [0], [0, 0, 1, 0], [], []>} : vector<8x16xbf16>, vector<8x16xbf16>, vector<8x8xf32> -> vector<8x8xf32>
      %cst_28 = arith.constant dense<0xFF800000> : vector<8xf32>
      %112 = vector.multi_reduction <maximumf>, %111, %cst_28 [1] : vector<8x8xf32> to vector<8xf32>
      %113 = vector.shape_cast %112 : vector<8xf32> to vector<8x1xf32>
      %114 = vector.broadcast %113 : vector<8x1xf32> to vector<8x8xf32>
      %115 = arith.subf %111, %114 : vector<8x8xf32>
      %116 = math.exp %115 : vector<8x8xf32>
      %cst_29 = arith.constant dense<0.000000e+00> : vector<8xf32>
      %117 = vector.multi_reduction <add>, %116, %cst_29 [1] : vector<8x8xf32> to vector<8xf32>
      %118 = vector.shape_cast %117 : vector<8xf32> to vector<8x1xf32>
      %119 = tpu.reciprocal %118 {approx = true} : vector<8x1xf32> -> vector<8x1xf32>
      %120 = vector.broadcast %119 : vector<8x1xf32> to vector<8x8xf32>
      %121 = arith.mulf %116, %120 : vector<8x8xf32>
      %122 = arith.truncf %121 : vector<8x8xf32> to vector<8x8xbf16>
      %cst_30 = arith.constant dense<0.000000e+00> : vector<8x16xf32>
      %123 = tpu.matmul %122, %110, %cst_30 {dimension_numbers = #tpu.dot_dimension_numbers<[1], [0], [0], [1], [0, 0, 1, 1], [], []>} : vector<8x8xbf16>, vector<8x16xbf16>, vector<8x16xf32> -> vector<8x16xf32>
      %124 = vector.extract_strided_slice %102 {offsets = [0, 16], sizes = [8, 16], strides = [1, 1]} : vector<8x64xf32> to vector<8x16xf32>
      %125 = arith.truncf %124 : vector<8x16xf32> to vector<8x16xbf16>
      %126 = vector.extract_strided_slice %103 {offsets = [0, 16], sizes = [8, 16], strides = [1, 1]} : vector<8x64xf32> to vector<8x16xf32>
      %127 = arith.truncf %126 : vector<8x16xf32> to vector<8x16xbf16>
      %128 = vector.extract_strided_slice %104 {offsets = [0, 16], sizes = [8, 16], strides = [1, 1]} : vector<8x64xf32> to vector<8x16xf32>
      %129 = arith.truncf %128 : vector<8x16xf32> to vector<8x16xbf16>
      %cst_31 = arith.constant dense<0.000000e+00> : vector<8x8xf32>
      %130 = tpu.matmul %125, %127, %cst_31 {dimension_numbers = #tpu.dot_dimension_numbers<[1], [1], [0], [0], [0, 0, 1, 0], [], []>} : vector<8x16xbf16>, vector<8x16xbf16>, vector<8x8xf32> -> vector<8x8xf32>
      %cst_32 = arith.constant dense<0xFF800000> : vector<8xf32>
      %131 = vector.multi_reduction <maximumf>, %130, %cst_32 [1] : vector<8x8xf32> to vector<8xf32>
      %132 = vector.shape_cast %131 : vector<8xf32> to vector<8x1xf32>
      %133 = vector.broadcast %132 : vector<8x1xf32> to vector<8x8xf32>
      %134 = arith.subf %130, %133 : vector<8x8xf32>
      %135 = math.exp %134 : vector<8x8xf32>
      %cst_33 = arith.constant dense<0.000000e+00> : vector<8xf32>
      %136 = vector.multi_reduction <add>, %135, %cst_33 [1] : vector<8x8xf32> to vector<8xf32>
      %137 = vector.shape_cast %136 : vector<8xf32> to vector<8x1xf32>
      %138 = tpu.reciprocal %137 {approx = true} : vector<8x1xf32> -> vector<8x1xf32>
      %139 = vector.broadcast %138 : vector<8x1xf32> to vector<8x8xf32>
      %140 = arith.mulf %135, %139 : vector<8x8xf32>
      %141 = arith.truncf %140 : vector<8x8xf32> to vector<8x8xbf16>
      %cst_34 = arith.constant dense<0.000000e+00> : vector<8x16xf32>
      %142 = tpu.matmul %141, %129, %cst_34 {dimension_numbers = #tpu.dot_dimension_numbers<[1], [0], [0], [1], [0, 0, 1, 1], [], []>} : vector<8x8xbf16>, vector<8x16xbf16>, vector<8x16xf32> -> vector<8x16xf32>
      %143 = vector.extract_strided_slice %102 {offsets = [0, 32], sizes = [8, 16], strides = [1, 1]} : vector<8x64xf32> to vector<8x16xf32>
      %144 = arith.truncf %143 : vector<8x16xf32> to vector<8x16xbf16>
      %145 = vector.extract_strided_slice %103 {offsets = [0, 32], sizes = [8, 16], strides = [1, 1]} : vector<8x64xf32> to vector<8x16xf32>
      %146 = arith.truncf %145 : vector<8x16xf32> to vector<8x16xbf16>
      %147 = vector.extract_strided_slice %104 {offsets = [0, 32], sizes = [8, 16], strides = [1, 1]} : vector<8x64xf32> to vector<8x16xf32>
      %148 = arith.truncf %147 : vector<8x16xf32> to vector<8x16xbf16>
      %cst_35 = arith.constant dense<0.000000e+00> : vector<8x8xf32>
      %149 = tpu.matmul %144, %146, %cst_35 {dimension_numbers = #tpu.dot_dimension_numbers<[1], [1], [0], [0], [0, 0, 1, 0], [], []>} : vector<8x16xbf16>, vector<8x16xbf16>, vector<8x8xf32> -> vector<8x8xf32>
      %cst_36 = arith.constant dense<0xFF800000> : vector<8xf32>
      %150 = vector.multi_reduction <maximumf>, %149, %cst_36 [1] : vector<8x8xf32> to vector<8xf32>
      %151 = vector.shape_cast %150 : vector<8xf32> to vector<8x1xf32>
      %152 = vector.broadcast %151 : vector<8x1xf32> to vector<8x8xf32>
      %153 = arith.subf %149, %152 : vector<8x8xf32>
      %154 = math.exp %153 : vector<8x8xf32>
      %cst_37 = arith.constant dense<0.000000e+00> : vector<8xf32>
      %155 = vector.multi_reduction <add>, %154, %cst_37 [1] : vector<8x8xf32> to vector<8xf32>
      %156 = vector.shape_cast %155 : vector<8xf32> to vector<8x1xf32>
      %157 = tpu.reciprocal %156 {approx = true} : vector<8x1xf32> -> vector<8x1xf32>
      %158 = vector.broadcast %157 : vector<8x1xf32> to vector<8x8xf32>
      %159 = arith.mulf %154, %158 : vector<8x8xf32>
      %160 = arith.truncf %159 : vector<8x8xf32> to vector<8x8xbf16>
      %cst_38 = arith.constant dense<0.000000e+00> : vector<8x16xf32>
      %161 = tpu.matmul %160, %148, %cst_38 {dimension_numbers = #tpu.dot_dimension_numbers<[1], [0], [0], [1], [0, 0, 1, 1], [], []>} : vector<8x8xbf16>, vector<8x16xbf16>, vector<8x16xf32> -> vector<8x16xf32>
      %162 = vector.extract_strided_slice %102 {offsets = [0, 48], sizes = [8, 16], strides = [1, 1]} : vector<8x64xf32> to vector<8x16xf32>
      %163 = arith.truncf %162 : vector<8x16xf32> to vector<8x16xbf16>
      %164 = vector.extract_strided_slice %103 {offsets = [0, 48], sizes = [8, 16], strides = [1, 1]} : vector<8x64xf32> to vector<8x16xf32>
      %165 = arith.truncf %164 : vector<8x16xf32> to vector<8x16xbf16>
      %166 = vector.extract_strided_slice %104 {offsets = [0, 48], sizes = [8, 16], strides = [1, 1]} : vector<8x64xf32> to vector<8x16xf32>
      %167 = arith.truncf %166 : vector<8x16xf32> to vector<8x16xbf16>
      %cst_39 = arith.constant dense<0.000000e+00> : vector<8x8xf32>
      %168 = tpu.matmul %163, %165, %cst_39 {dimension_numbers = #tpu.dot_dimension_numbers<[1], [1], [0], [0], [0, 0, 1, 0], [], []>} : vector<8x16xbf16>, vector<8x16xbf16>, vector<8x8xf32> -> vector<8x8xf32>
      %cst_40 = arith.constant dense<0xFF800000> : vector<8xf32>
      %169 = vector.multi_reduction <maximumf>, %168, %cst_40 [1] : vector<8x8xf32> to vector<8xf32>
      %170 = vector.shape_cast %169 : vector<8xf32> to vector<8x1xf32>
      %171 = vector.broadcast %170 : vector<8x1xf32> to vector<8x8xf32>
      %172 = arith.subf %168, %171 : vector<8x8xf32>
      %173 = math.exp %172 : vector<8x8xf32>
      %cst_41 = arith.constant dense<0.000000e+00> : vector<8xf32>
      %174 = vector.multi_reduction <add>, %173, %cst_41 [1] : vector<8x8xf32> to vector<8xf32>
      %175 = vector.shape_cast %174 : vector<8xf32> to vector<8x1xf32>
      %176 = tpu.reciprocal %175 {approx = true} : vector<8x1xf32> -> vector<8x1xf32>
      %177 = vector.broadcast %176 : vector<8x1xf32> to vector<8x8xf32>
      %178 = arith.mulf %173, %177 : vector<8x8xf32>
      %179 = arith.truncf %178 : vector<8x8xf32> to vector<8x8xbf16>
      %cst_42 = arith.constant dense<0.000000e+00> : vector<8x16xf32>
      %180 = tpu.matmul %179, %167, %cst_42 {dimension_numbers = #tpu.dot_dimension_numbers<[1], [0], [0], [1], [0, 0, 1, 1], [], []>} : vector<8x8xbf16>, vector<8x16xbf16>, vector<8x16xf32> -> vector<8x16xf32>
      %181 = tpu.concatenate %123, %142, %161, %180 in 1 : vector<8x16xf32>, vector<8x16xf32>, vector<8x16xf32>, vector<8x16xf32> -> vector<8x64xf32>
      %182 = tpu.concatenate %101, %181 in 0 : vector<8x64xf32>, vector<8x64xf32> -> vector<16x64xf32>
      %183 = arith.truncf %182 : vector<16x64xf32> to vector<16x64xbf16>
      %c0_43 = arith.constant 0 : index
      %c0_44 = arith.constant 0 : index
      %c0_45 = arith.constant 0 : index
      %184 = vector.load %arg5[%c0_43, %c0_44, %c0_45] : memref<1x64x64xbf16, #tpu.memory_space<vmem>>, vector<1x64x64xbf16>
      %185 = vector.shape_cast %184 : vector<1x64x64xbf16> to vector<64x64xbf16>
      %cst_46 = arith.constant dense<0.000000e+00> : vector<16x64xf32>
      %186 = tpu.matmul %183, %185, %cst_46 {dimension_numbers = #tpu.dot_dimension_numbers<[1], [0], [0], [1], [0, 0, 1, 1], [], []>} : vector<16x64xbf16>, vector<64x64xbf16>, vector<16x64xf32> -> vector<16x64xf32>
      %187 = vector.extract_strided_slice %11 {offsets = [1, 0], sizes = [1, 64], strides = [1, 1]} : vector<8x192xf32> to vector<1x64xf32>
      %188 = vector.broadcast %187 : vector<1x64xf32> to vector<16x64xf32>
      %189 = arith.addf %186, %188 : vector<16x64xf32>
      %190 = arith.addf %9, %189 : vector<16x64xf32>
      %191 = vector.extract_strided_slice %11 {offsets = [4, 0], sizes = [1, 64], strides = [1, 1]} : vector<8x192xf32> to vector<1x64xf32>
      %192 = vector.extract_strided_slice %11 {offsets = [5, 0], sizes = [1, 64], strides = [1, 1]} : vector<8x192xf32> to vector<1x64xf32>
      %cst_47 = arith.constant dense<0.000000e+00> : vector<16xf32>
      %193 = vector.multi_reduction <add>, %190, %cst_47 [1] : vector<16x64xf32> to vector<16xf32>
      %194 = vector.shape_cast %193 : vector<16xf32> to vector<16x1xf32>
      %cst_48 = arith.constant 6.400000e+01 : f32
      %195 = vector.broadcast %cst_48 : f32 to vector<16x1xf32>
      %196 = arith.divf %194, %195 : vector<16x1xf32>
      %197 = vector.broadcast %196 : vector<16x1xf32> to vector<16x64xf32>
      %198 = arith.subf %190, %197 : vector<16x64xf32>
      %199 = arith.mulf %198, %198 : vector<16x64xf32>
      %cst_49 = arith.constant dense<0.000000e+00> : vector<16xf32>
      %200 = vector.multi_reduction <add>, %199, %cst_49 [1] : vector<16x64xf32> to vector<16xf32>
      %201 = vector.shape_cast %200 : vector<16xf32> to vector<16x1xf32>
      %cst_50 = arith.constant 6.400000e+01 : f32
      %202 = vector.broadcast %cst_50 : f32 to vector<16x1xf32>
      %203 = arith.divf %201, %202 : vector<16x1xf32>
      %204 = vector.broadcast %196 : vector<16x1xf32> to vector<16x64xf32>
      %205 = arith.subf %190, %204 : vector<16x64xf32>
      %cst_51 = arith.constant 9.99999974E-6 : f32
      %206 = vector.broadcast %cst_51 : f32 to vector<16x1xf32>
      %207 = arith.addf %203, %206 : vector<16x1xf32>
      %208 = math.rsqrt %207 : vector<16x1xf32>
      %209 = vector.broadcast %208 : vector<16x1xf32> to vector<16x64xf32>
      %210 = arith.mulf %205, %209 : vector<16x64xf32>
      %211 = vector.broadcast %191 : vector<1x64xf32> to vector<16x64xf32>
      %212 = arith.mulf %210, %211 : vector<16x64xf32>
      %213 = vector.broadcast %192 : vector<1x64xf32> to vector<16x64xf32>
      %214 = arith.addf %212, %213 : vector<16x64xf32>
      %215 = arith.truncf %214 : vector<16x64xf32> to vector<16x64xbf16>
      %c0_52 = arith.constant 0 : index
      %c0_53 = arith.constant 0 : index
      %c0_54 = arith.constant 0 : index
      %216 = vector.load %arg6[%c0_52, %c0_53, %c0_54] : memref<1x64x128xbf16, #tpu.memory_space<vmem>>, vector<1x64x128xbf16>
      %217 = vector.shape_cast %216 : vector<1x64x128xbf16> to vector<64x128xbf16>
      %cst_55 = arith.constant dense<0.000000e+00> : vector<16x128xf32>
      %218 = tpu.matmul %215, %217, %cst_55 {dimension_numbers = #tpu.dot_dimension_numbers<[1], [0], [0], [1], [0, 0, 1, 1], [], []>} : vector<16x64xbf16>, vector<64x128xbf16>, vector<16x128xf32> -> vector<16x128xf32>
      %219 = vector.extract_strided_slice %11 {offsets = [2, 0], sizes = [1, 128], strides = [1, 1]} : vector<8x192xf32> to vector<1x128xf32>
      %220 = vector.broadcast %219 : vector<1x128xf32> to vector<16x128xf32>
      %221 = arith.addf %218, %220 : vector<16x128xf32>
      %cst_56 = arith.constant 0.000000e+00 : f32
      %222 = vector.broadcast %cst_56 : f32 to vector<16x128xf32>
      %223 = arith.maximumf %221, %222 : vector<16x128xf32>
      %224 = arith.truncf %223 : vector<16x128xf32> to vector<16x128xbf16>
      %c0_57 = arith.constant 0 : index
      %c0_58 = arith.constant 0 : index
      %c0_59 = arith.constant 0 : index
      %225 = vector.load %arg7[%c0_57, %c0_58, %c0_59] : memref<1x128x64xbf16, #tpu.memory_space<vmem>>, vector<1x128x64xbf16>
      %226 = vector.shape_cast %225 : vector<1x128x64xbf16> to vector<128x64xbf16>
      %cst_60 = arith.constant dense<0.000000e+00> : vector<16x64xf32>
      %227 = tpu.matmul %224, %226, %cst_60 {dimension_numbers = #tpu.dot_dimension_numbers<[1], [0], [0], [1], [0, 0, 1, 1], [], []>} : vector<16x128xbf16>, vector<128x64xbf16>, vector<16x64xf32> -> vector<16x64xf32>
      %228 = vector.extract_strided_slice %11 {offsets = [3, 0], sizes = [1, 64], strides = [1, 1]} : vector<8x192xf32> to vector<1x64xf32>
      %229 = vector.broadcast %228 : vector<1x64xf32> to vector<16x64xf32>
      %230 = arith.addf %227, %229 : vector<16x64xf32>
      %231 = arith.addf %214, %230 : vector<16x64xf32>
      %232 = vector.extract_strided_slice %11 {offsets = [6, 0], sizes = [1, 64], strides = [1, 1]} : vector<8x192xf32> to vector<1x64xf32>
      %233 = vector.extract_strided_slice %11 {offsets = [7, 0], sizes = [1, 64], strides = [1, 1]} : vector<8x192xf32> to vector<1x64xf32>
      %cst_61 = arith.constant dense<0.000000e+00> : vector<16xf32>
      %234 = vector.multi_reduction <add>, %231, %cst_61 [1] : vector<16x64xf32> to vector<16xf32>
      %235 = vector.shape_cast %234 : vector<16xf32> to vector<16x1xf32>
      %cst_62 = arith.constant 6.400000e+01 : f32
      %236 = vector.broadcast %cst_62 : f32 to vector<16x1xf32>
      %237 = arith.divf %235, %236 : vector<16x1xf32>
      %238 = vector.broadcast %237 : vector<16x1xf32> to vector<16x64xf32>
      %239 = arith.subf %231, %238 : vector<16x64xf32>
      %240 = arith.mulf %239, %239 : vector<16x64xf32>
      %cst_63 = arith.constant dense<0.000000e+00> : vector<16xf32>
      %241 = vector.multi_reduction <add>, %240, %cst_63 [1] : vector<16x64xf32> to vector<16xf32>
      %242 = vector.shape_cast %241 : vector<16xf32> to vector<16x1xf32>
      %cst_64 = arith.constant 6.400000e+01 : f32
      %243 = vector.broadcast %cst_64 : f32 to vector<16x1xf32>
      %244 = arith.divf %242, %243 : vector<16x1xf32>
      %245 = vector.broadcast %237 : vector<16x1xf32> to vector<16x64xf32>
      %246 = arith.subf %231, %245 : vector<16x64xf32>
      %cst_65 = arith.constant 9.99999974E-6 : f32
      %247 = vector.broadcast %cst_65 : f32 to vector<16x1xf32>
      %248 = arith.addf %244, %247 : vector<16x1xf32>
      %249 = math.rsqrt %248 : vector<16x1xf32>
      %250 = vector.broadcast %249 : vector<16x1xf32> to vector<16x64xf32>
      %251 = arith.mulf %246, %250 : vector<16x64xf32>
      %252 = vector.broadcast %232 : vector<1x64xf32> to vector<16x64xf32>
      %253 = arith.mulf %251, %252 : vector<16x64xf32>
      %254 = vector.broadcast %233 : vector<1x64xf32> to vector<16x64xf32>
      %255 = arith.addf %253, %254 : vector<16x64xf32>
      %c0_66 = arith.constant 0 : index
      %c0_67 = arith.constant 0 : index
      %256 = vector.load %arg22[%c0_66, %c0_67] : memref<16x64xf32, #tpu.memory_space<vmem>>, vector<16x64xf32>
      tpu.vector_store %arg22[%c0_66, %c0_67], %255 {strides = array<i32>} : memref<16x64xf32, #tpu.memory_space<vmem>>, vector<16x64xf32>,
      %c1_i32 = arith.constant 1 : i32
      %257 = arith.cmpi eq, %arg1, %c1_i32 : i32
      %258 = arith.extui %257 : i1 to i32
      %c0_i32_68 = arith.constant 0 : i32
      %259 = arith.cmpi ne, %258, %c0_i32_68 : i32
      scf.if %259 {
        %c0_69 = arith.constant 0 : index
        %c0_70 = arith.constant 0 : index
        %260 = vector.load %arg17[%c0_69, %c0_70] : memref<2x64xf32, #tpu.memory_space<vmem>>, vector<1x64xf32>
        %c1 = arith.constant 1 : index
        %c0_71 = arith.constant 0 : index
        %261 = vector.load %arg17[%c1, %c0_71] : memref<2x64xf32, #tpu.memory_space<vmem>>, vector<1x64xf32>
        %cst_72 = arith.constant dense<0.000000e+00> : vector<16xf32>
        %262 = vector.multi_reduction <add>, %255, %cst_72 [1] : vector<16x64xf32> to vector<16xf32>
        %263 = vector.shape_cast %262 : vector<16xf32> to vector<16x1xf32>
        %cst_73 = arith.constant 6.400000e+01 : f32
        %264 = vector.broadcast %cst_73 : f32 to vector<16x1xf32>
        %265 = arith.divf %263, %264 : vector<16x1xf32>
        %266 = vector.broadcast %265 : vector<16x1xf32> to vector<16x64xf32>
        %267 = arith.subf %255, %266 : vector<16x64xf32>
        %268 = arith.mulf %267, %267 : vector<16x64xf32>
        %cst_74 = arith.constant dense<0.000000e+00> : vector<16xf32>
        %269 = vector.multi_reduction <add>, %268, %cst_74 [1] : vector<16x64xf32> to vector<16xf32>
        %270 = vector.shape_cast %269 : vector<16xf32> to vector<16x1xf32>
        %cst_75 = arith.constant 6.400000e+01 : f32
        %271 = vector.broadcast %cst_75 : f32 to vector<16x1xf32>
        %272 = arith.divf %270, %271 : vector<16x1xf32>
        %273 = vector.broadcast %265 : vector<16x1xf32> to vector<16x64xf32>
        %274 = arith.subf %255, %273 : vector<16x64xf32>
        %cst_76 = arith.constant 9.99999974E-6 : f32
        %275 = vector.broadcast %cst_76 : f32 to vector<16x1xf32>
        %276 = arith.addf %272, %275 : vector<16x1xf32>
        %277 = math.rsqrt %276 : vector<16x1xf32>
        %278 = vector.broadcast %277 : vector<16x1xf32> to vector<16x64xf32>
        %279 = arith.mulf %274, %278 : vector<16x64xf32>
        %280 = vector.broadcast %260 : vector<1x64xf32> to vector<16x64xf32>
        %281 = arith.mulf %279, %280 : vector<16x64xf32>
        %282 = vector.broadcast %261 : vector<1x64xf32> to vector<16x64xf32>
        %283 = arith.addf %281, %282 : vector<16x64xf32>
        %284 = arith.truncf %283 : vector<16x64xf32> to vector<16x64xbf16>
        %c0_77 = arith.constant 0 : index
        %c0_78 = arith.constant 0 : index
        %285 = vector.load %arg23[%c0_77, %c0_78] : memref<16x64xbf16, #tpu.memory_space<vmem>>, vector<16x64xbf16>
        tpu.vector_store %arg23[%c0_77, %c0_78], %284 {strides = array<i32>} : memref<16x64xbf16, #tpu.memory_space<vmem>>, vector<16x64xbf16>,
      } else {
      }
    } else {
    }
    %c2_i32_2 = arith.constant 2 : i32
    %6 = arith.cmpi sge, %arg1, %c2_i32_2 : i32
    %7 = arith.extui %6 : i1 to i32
    %c0_i32_3 = arith.constant 0 : i32
    %8 = arith.cmpi ne, %7, %c0_i32_3 : i32
    scf.if %8 {
      %c0 = arith.constant 0 : index
      %c0_4 = arith.constant 0 : index
      %9 = vector.load %arg24[%c0, %c0_4] : memref<16x64xf32, #tpu.memory_space<vmem>>, vector<16x64xf32>
      %c0_5 = arith.constant 0 : index
      %c0_6 = arith.constant 0 : index
      %c0_7 = arith.constant 0 : index
      %10 = vector.load %arg16[%c0_5, %c0_6, %c0_7] : memref<1x13x192xf32, #tpu.memory_space<vmem>>, vector<1x13x192xf32>
      %11 = vector.shape_cast %10 : vector<1x13x192xf32> to vector<13x192xf32>
      %12 = arith.truncf %9 : vector<16x64xf32> to vector<16x64xbf16>
      %c0_8 = arith.constant 0 : index
      %c0_9 = arith.constant 0 : index
      %c0_10 = arith.constant 0 : index
      %13 = vector.load %arg9[%c0_8, %c0_9, %c0_10] : memref<1x64x192xbf16, #tpu.memory_space<vmem>>, vector<1x64x192xbf16>
      %14 = vector.shape_cast %13 : vector<1x64x192xbf16> to vector<64x192xbf16>
      %cst = arith.constant dense<0.000000e+00> : vector<16x192xf32>
      %15 = tpu.matmul %12, %14, %cst {dimension_numbers = #tpu.dot_dimension_numbers<[1], [0], [0], [1], [0, 0, 1, 1], [], []>} : vector<16x64xbf16>, vector<64x192xbf16>, vector<16x192xf32> -> vector<16x192xf32>
      %16 = vector.extract_strided_slice %11 {offsets = [0, 0], sizes = [1, 192], strides = [1, 1]} : vector<13x192xf32> to vector<1x192xf32>
      %17 = vector.broadcast %16 : vector<1x192xf32> to vector<16x192xf32>
      %18 = arith.addf %15, %17 : vector<16x192xf32>
      %19 = vector.extract_strided_slice %18 {offsets = [0, 0], sizes = [16, 64], strides = [1, 1]} : vector<16x192xf32> to vector<16x64xf32>
      %20 = vector.extract_strided_slice %18 {offsets = [0, 64], sizes = [16, 64], strides = [1, 1]} : vector<16x192xf32> to vector<16x64xf32>
      %21 = vector.extract_strided_slice %18 {offsets = [0, 128], sizes = [16, 64], strides = [1, 1]} : vector<16x192xf32> to vector<16x64xf32>
      %22 = vector.extract_strided_slice %19 {offsets = [0, 0], sizes = [8, 64], strides = [1, 1]} : vector<16x64xf32> to vector<8x64xf32>
      %23 = vector.extract_strided_slice %20 {offsets = [0, 0], sizes = [8, 64], strides = [1, 1]} : vector<16x64xf32> to vector<8x64xf32>
      %24 = vector.extract_strided_slice %21 {offsets = [0, 0], sizes = [8, 64], strides = [1, 1]} : vector<16x64xf32> to vector<8x64xf32>
      %25 = vector.extract_strided_slice %22 {offsets = [0, 0], sizes = [8, 16], strides = [1, 1]} : vector<8x64xf32> to vector<8x16xf32>
      %26 = arith.truncf %25 : vector<8x16xf32> to vector<8x16xbf16>
      %27 = vector.extract_strided_slice %23 {offsets = [0, 0], sizes = [8, 16], strides = [1, 1]} : vector<8x64xf32> to vector<8x16xf32>
      %28 = arith.truncf %27 : vector<8x16xf32> to vector<8x16xbf16>
      %29 = vector.extract_strided_slice %24 {offsets = [0, 0], sizes = [8, 16], strides = [1, 1]} : vector<8x64xf32> to vector<8x16xf32>
      %30 = arith.truncf %29 : vector<8x16xf32> to vector<8x16xbf16>
      %cst_11 = arith.constant dense<0.000000e+00> : vector<8x8xf32>
      %31 = tpu.matmul %26, %28, %cst_11 {dimension_numbers = #tpu.dot_dimension_numbers<[1], [1], [0], [0], [0, 0, 1, 0], [], []>} : vector<8x16xbf16>, vector<8x16xbf16>, vector<8x8xf32> -> vector<8x8xf32>
      %cst_12 = arith.constant dense<0xFF800000> : vector<8xf32>
      %32 = vector.multi_reduction <maximumf>, %31, %cst_12 [1] : vector<8x8xf32> to vector<8xf32>
      %33 = vector.shape_cast %32 : vector<8xf32> to vector<8x1xf32>
      %34 = vector.broadcast %33 : vector<8x1xf32> to vector<8x8xf32>
      %35 = arith.subf %31, %34 : vector<8x8xf32>
      %36 = math.exp %35 : vector<8x8xf32>
      %cst_13 = arith.constant dense<0.000000e+00> : vector<8xf32>
      %37 = vector.multi_reduction <add>, %36, %cst_13 [1] : vector<8x8xf32> to vector<8xf32>
      %38 = vector.shape_cast %37 : vector<8xf32> to vector<8x1xf32>
      %39 = tpu.reciprocal %38 {approx = true} : vector<8x1xf32> -> vector<8x1xf32>
      %40 = vector.broadcast %39 : vector<8x1xf32> to vector<8x8xf32>
      %41 = arith.mulf %36, %40 : vector<8x8xf32>
      %42 = arith.truncf %41 : vector<8x8xf32> to vector<8x8xbf16>
      %cst_14 = arith.constant dense<0.000000e+00> : vector<8x16xf32>
      %43 = tpu.matmul %42, %30, %cst_14 {dimension_numbers = #tpu.dot_dimension_numbers<[1], [0], [0], [1], [0, 0, 1, 1], [], []>} : vector<8x8xbf16>, vector<8x16xbf16>, vector<8x16xf32> -> vector<8x16xf32>
      %44 = vector.extract_strided_slice %22 {offsets = [0, 16], sizes = [8, 16], strides = [1, 1]} : vector<8x64xf32> to vector<8x16xf32>
      %45 = arith.truncf %44 : vector<8x16xf32> to vector<8x16xbf16>
      %46 = vector.extract_strided_slice %23 {offsets = [0, 16], sizes = [8, 16], strides = [1, 1]} : vector<8x64xf32> to vector<8x16xf32>
      %47 = arith.truncf %46 : vector<8x16xf32> to vector<8x16xbf16>
      %48 = vector.extract_strided_slice %24 {offsets = [0, 16], sizes = [8, 16], strides = [1, 1]} : vector<8x64xf32> to vector<8x16xf32>
      %49 = arith.truncf %48 : vector<8x16xf32> to vector<8x16xbf16>
      %cst_15 = arith.constant dense<0.000000e+00> : vector<8x8xf32>
      %50 = tpu.matmul %45, %47, %cst_15 {dimension_numbers = #tpu.dot_dimension_numbers<[1], [1], [0], [0], [0, 0, 1, 0], [], []>} : vector<8x16xbf16>, vector<8x16xbf16>, vector<8x8xf32> -> vector<8x8xf32>
      %cst_16 = arith.constant dense<0xFF800000> : vector<8xf32>
      %51 = vector.multi_reduction <maximumf>, %50, %cst_16 [1] : vector<8x8xf32> to vector<8xf32>
      %52 = vector.shape_cast %51 : vector<8xf32> to vector<8x1xf32>
      %53 = vector.broadcast %52 : vector<8x1xf32> to vector<8x8xf32>
      %54 = arith.subf %50, %53 : vector<8x8xf32>
      %55 = math.exp %54 : vector<8x8xf32>
      %cst_17 = arith.constant dense<0.000000e+00> : vector<8xf32>
      %56 = vector.multi_reduction <add>, %55, %cst_17 [1] : vector<8x8xf32> to vector<8xf32>
      %57 = vector.shape_cast %56 : vector<8xf32> to vector<8x1xf32>
      %58 = tpu.reciprocal %57 {approx = true} : vector<8x1xf32> -> vector<8x1xf32>
      %59 = vector.broadcast %58 : vector<8x1xf32> to vector<8x8xf32>
      %60 = arith.mulf %55, %59 : vector<8x8xf32>
      %61 = arith.truncf %60 : vector<8x8xf32> to vector<8x8xbf16>
      %cst_18 = arith.constant dense<0.000000e+00> : vector<8x16xf32>
      %62 = tpu.matmul %61, %49, %cst_18 {dimension_numbers = #tpu.dot_dimension_numbers<[1], [0], [0], [1], [0, 0, 1, 1], [], []>} : vector<8x8xbf16>, vector<8x16xbf16>, vector<8x16xf32> -> vector<8x16xf32>
      %63 = vector.extract_strided_slice %22 {offsets = [0, 32], sizes = [8, 16], strides = [1, 1]} : vector<8x64xf32> to vector<8x16xf32>
      %64 = arith.truncf %63 : vector<8x16xf32> to vector<8x16xbf16>
      %65 = vector.extract_strided_slice %23 {offsets = [0, 32], sizes = [8, 16], strides = [1, 1]} : vector<8x64xf32> to vector<8x16xf32>
      %66 = arith.truncf %65 : vector<8x16xf32> to vector<8x16xbf16>
      %67 = vector.extract_strided_slice %24 {offsets = [0, 32], sizes = [8, 16], strides = [1, 1]} : vector<8x64xf32> to vector<8x16xf32>
      %68 = arith.truncf %67 : vector<8x16xf32> to vector<8x16xbf16>
      %cst_19 = arith.constant dense<0.000000e+00> : vector<8x8xf32>
      %69 = tpu.matmul %64, %66, %cst_19 {dimension_numbers = #tpu.dot_dimension_numbers<[1], [1], [0], [0], [0, 0, 1, 0], [], []>} : vector<8x16xbf16>, vector<8x16xbf16>, vector<8x8xf32> -> vector<8x8xf32>
      %cst_20 = arith.constant dense<0xFF800000> : vector<8xf32>
      %70 = vector.multi_reduction <maximumf>, %69, %cst_20 [1] : vector<8x8xf32> to vector<8xf32>
      %71 = vector.shape_cast %70 : vector<8xf32> to vector<8x1xf32>
      %72 = vector.broadcast %71 : vector<8x1xf32> to vector<8x8xf32>
      %73 = arith.subf %69, %72 : vector<8x8xf32>
      %74 = math.exp %73 : vector<8x8xf32>
      %cst_21 = arith.constant dense<0.000000e+00> : vector<8xf32>
      %75 = vector.multi_reduction <add>, %74, %cst_21 [1] : vector<8x8xf32> to vector<8xf32>
      %76 = vector.shape_cast %75 : vector<8xf32> to vector<8x1xf32>
      %77 = tpu.reciprocal %76 {approx = true} : vector<8x1xf32> -> vector<8x1xf32>
      %78 = vector.broadcast %77 : vector<8x1xf32> to vector<8x8xf32>
      %79 = arith.mulf %74, %78 : vector<8x8xf32>
      %80 = arith.truncf %79 : vector<8x8xf32> to vector<8x8xbf16>
      %cst_22 = arith.constant dense<0.000000e+00> : vector<8x16xf32>
      %81 = tpu.matmul %80, %68, %cst_22 {dimension_numbers = #tpu.dot_dimension_numbers<[1], [0], [0], [1], [0, 0, 1, 1], [], []>} : vector<8x8xbf16>, vector<8x16xbf16>, vector<8x16xf32> -> vector<8x16xf32>
      %82 = vector.extract_strided_slice %22 {offsets = [0, 48], sizes = [8, 16], strides = [1, 1]} : vector<8x64xf32> to vector<8x16xf32>
      %83 = arith.truncf %82 : vector<8x16xf32> to vector<8x16xbf16>
      %84 = vector.extract_strided_slice %23 {offsets = [0, 48], sizes = [8, 16], strides = [1, 1]} : vector<8x64xf32> to vector<8x16xf32>
      %85 = arith.truncf %84 : vector<8x16xf32> to vector<8x16xbf16>
      %86 = vector.extract_strided_slice %24 {offsets = [0, 48], sizes = [8, 16], strides = [1, 1]} : vector<8x64xf32> to vector<8x16xf32>
      %87 = arith.truncf %86 : vector<8x16xf32> to vector<8x16xbf16>
      %cst_23 = arith.constant dense<0.000000e+00> : vector<8x8xf32>
      %88 = tpu.matmul %83, %85, %cst_23 {dimension_numbers = #tpu.dot_dimension_numbers<[1], [1], [0], [0], [0, 0, 1, 0], [], []>} : vector<8x16xbf16>, vector<8x16xbf16>, vector<8x8xf32> -> vector<8x8xf32>
      %cst_24 = arith.constant dense<0xFF800000> : vector<8xf32>
      %89 = vector.multi_reduction <maximumf>, %88, %cst_24 [1] : vector<8x8xf32> to vector<8xf32>
      %90 = vector.shape_cast %89 : vector<8xf32> to vector<8x1xf32>
      %91 = vector.broadcast %90 : vector<8x1xf32> to vector<8x8xf32>
      %92 = arith.subf %88, %91 : vector<8x8xf32>
      %93 = math.exp %92 : vector<8x8xf32>
      %cst_25 = arith.constant dense<0.000000e+00> : vector<8xf32>
      %94 = vector.multi_reduction <add>, %93, %cst_25 [1] : vector<8x8xf32> to vector<8xf32>
      %95 = vector.shape_cast %94 : vector<8xf32> to vector<8x1xf32>
      %96 = tpu.reciprocal %95 {approx = true} : vector<8x1xf32> -> vector<8x1xf32>
      %97 = vector.broadcast %96 : vector<8x1xf32> to vector<8x8xf32>
      %98 = arith.mulf %93, %97 : vector<8x8xf32>
      %99 = arith.truncf %98 : vector<8x8xf32> to vector<8x8xbf16>
      %cst_26 = arith.constant dense<0.000000e+00> : vector<8x16xf32>
      %100 = tpu.matmul %99, %87, %cst_26 {dimension_numbers = #tpu.dot_dimension_numbers<[1], [0], [0], [1], [0, 0, 1, 1], [], []>} : vector<8x8xbf16>, vector<8x16xbf16>, vector<8x16xf32> -> vector<8x16xf32>
      %101 = tpu.concatenate %43, %62, %81, %100 in 1 : vector<8x16xf32>, vector<8x16xf32>, vector<8x16xf32>, vector<8x16xf32> -> vector<8x64xf32>
      %102 = vector.extract_strided_slice %19 {offsets = [8, 0], sizes = [8, 64], strides = [1, 1]} : vector<16x64xf32> to vector<8x64xf32>
      %103 = vector.extract_strided_slice %20 {offsets = [8, 0], sizes = [8, 64], strides = [1, 1]} : vector<16x64xf32> to vector<8x64xf32>
      %104 = vector.extract_strided_slice %21 {offsets = [8, 0], sizes = [8, 64], strides = [1, 1]} : vector<16x64xf32> to vector<8x64xf32>
      %105 = vector.extract_strided_slice %102 {offsets = [0, 0], sizes = [8, 16], strides = [1, 1]} : vector<8x64xf32> to vector<8x16xf32>
      %106 = arith.truncf %105 : vector<8x16xf32> to vector<8x16xbf16>
      %107 = vector.extract_strided_slice %103 {offsets = [0, 0], sizes = [8, 16], strides = [1, 1]} : vector<8x64xf32> to vector<8x16xf32>
      %108 = arith.truncf %107 : vector<8x16xf32> to vector<8x16xbf16>
      %109 = vector.extract_strided_slice %104 {offsets = [0, 0], sizes = [8, 16], strides = [1, 1]} : vector<8x64xf32> to vector<8x16xf32>
      %110 = arith.truncf %109 : vector<8x16xf32> to vector<8x16xbf16>
      %cst_27 = arith.constant dense<0.000000e+00> : vector<8x8xf32>
      %111 = tpu.matmul %106, %108, %cst_27 {dimension_numbers = #tpu.dot_dimension_numbers<[1], [1], [0], [0], [0, 0, 1, 0], [], []>} : vector<8x16xbf16>, vector<8x16xbf16>, vector<8x8xf32> -> vector<8x8xf32>
      %cst_28 = arith.constant dense<0xFF800000> : vector<8xf32>
      %112 = vector.multi_reduction <maximumf>, %111, %cst_28 [1] : vector<8x8xf32> to vector<8xf32>
      %113 = vector.shape_cast %112 : vector<8xf32> to vector<8x1xf32>
      %114 = vector.broadcast %113 : vector<8x1xf32> to vector<8x8xf32>
      %115 = arith.subf %111, %114 : vector<8x8xf32>
      %116 = math.exp %115 : vector<8x8xf32>
      %cst_29 = arith.constant dense<0.000000e+00> : vector<8xf32>
      %117 = vector.multi_reduction <add>, %116, %cst_29 [1] : vector<8x8xf32> to vector<8xf32>
      %118 = vector.shape_cast %117 : vector<8xf32> to vector<8x1xf32>
      %119 = tpu.reciprocal %118 {approx = true} : vector<8x1xf32> -> vector<8x1xf32>
      %120 = vector.broadcast %119 : vector<8x1xf32> to vector<8x8xf32>
      %121 = arith.mulf %116, %120 : vector<8x8xf32>
      %122 = arith.truncf %121 : vector<8x8xf32> to vector<8x8xbf16>
      %cst_30 = arith.constant dense<0.000000e+00> : vector<8x16xf32>
      %123 = tpu.matmul %122, %110, %cst_30 {dimension_numbers = #tpu.dot_dimension_numbers<[1], [0], [0], [1], [0, 0, 1, 1], [], []>} : vector<8x8xbf16>, vector<8x16xbf16>, vector<8x16xf32> -> vector<8x16xf32>
      %124 = vector.extract_strided_slice %102 {offsets = [0, 16], sizes = [8, 16], strides = [1, 1]} : vector<8x64xf32> to vector<8x16xf32>
      %125 = arith.truncf %124 : vector<8x16xf32> to vector<8x16xbf16>
      %126 = vector.extract_strided_slice %103 {offsets = [0, 16], sizes = [8, 16], strides = [1, 1]} : vector<8x64xf32> to vector<8x16xf32>
      %127 = arith.truncf %126 : vector<8x16xf32> to vector<8x16xbf16>
      %128 = vector.extract_strided_slice %104 {offsets = [0, 16], sizes = [8, 16], strides = [1, 1]} : vector<8x64xf32> to vector<8x16xf32>
      %129 = arith.truncf %128 : vector<8x16xf32> to vector<8x16xbf16>
      %cst_31 = arith.constant dense<0.000000e+00> : vector<8x8xf32>
      %130 = tpu.matmul %125, %127, %cst_31 {dimension_numbers = #tpu.dot_dimension_numbers<[1], [1], [0], [0], [0, 0, 1, 0], [], []>} : vector<8x16xbf16>, vector<8x16xbf16>, vector<8x8xf32> -> vector<8x8xf32>
      %cst_32 = arith.constant dense<0xFF800000> : vector<8xf32>
      %131 = vector.multi_reduction <maximumf>, %130, %cst_32 [1] : vector<8x8xf32> to vector<8xf32>
      %132 = vector.shape_cast %131 : vector<8xf32> to vector<8x1xf32>
      %133 = vector.broadcast %132 : vector<8x1xf32> to vector<8x8xf32>
      %134 = arith.subf %130, %133 : vector<8x8xf32>
      %135 = math.exp %134 : vector<8x8xf32>
      %cst_33 = arith.constant dense<0.000000e+00> : vector<8xf32>
      %136 = vector.multi_reduction <add>, %135, %cst_33 [1] : vector<8x8xf32> to vector<8xf32>
      %137 = vector.shape_cast %136 : vector<8xf32> to vector<8x1xf32>
      %138 = tpu.reciprocal %137 {approx = true} : vector<8x1xf32> -> vector<8x1xf32>
      %139 = vector.broadcast %138 : vector<8x1xf32> to vector<8x8xf32>
      %140 = arith.mulf %135, %139 : vector<8x8xf32>
      %141 = arith.truncf %140 : vector<8x8xf32> to vector<8x8xbf16>
      %cst_34 = arith.constant dense<0.000000e+00> : vector<8x16xf32>
      %142 = tpu.matmul %141, %129, %cst_34 {dimension_numbers = #tpu.dot_dimension_numbers<[1], [0], [0], [1], [0, 0, 1, 1], [], []>} : vector<8x8xbf16>, vector<8x16xbf16>, vector<8x16xf32> -> vector<8x16xf32>
      %143 = vector.extract_strided_slice %102 {offsets = [0, 32], sizes = [8, 16], strides = [1, 1]} : vector<8x64xf32> to vector<8x16xf32>
      %144 = arith.truncf %143 : vector<8x16xf32> to vector<8x16xbf16>
      %145 = vector.extract_strided_slice %103 {offsets = [0, 32], sizes = [8, 16], strides = [1, 1]} : vector<8x64xf32> to vector<8x16xf32>
      %146 = arith.truncf %145 : vector<8x16xf32> to vector<8x16xbf16>
      %147 = vector.extract_strided_slice %104 {offsets = [0, 32], sizes = [8, 16], strides = [1, 1]} : vector<8x64xf32> to vector<8x16xf32>
      %148 = arith.truncf %147 : vector<8x16xf32> to vector<8x16xbf16>
      %cst_35 = arith.constant dense<0.000000e+00> : vector<8x8xf32>
      %149 = tpu.matmul %144, %146, %cst_35 {dimension_numbers = #tpu.dot_dimension_numbers<[1], [1], [0], [0], [0, 0, 1, 0], [], []>} : vector<8x16xbf16>, vector<8x16xbf16>, vector<8x8xf32> -> vector<8x8xf32>
      %cst_36 = arith.constant dense<0xFF800000> : vector<8xf32>
      %150 = vector.multi_reduction <maximumf>, %149, %cst_36 [1] : vector<8x8xf32> to vector<8xf32>
      %151 = vector.shape_cast %150 : vector<8xf32> to vector<8x1xf32>
      %152 = vector.broadcast %151 : vector<8x1xf32> to vector<8x8xf32>
      %153 = arith.subf %149, %152 : vector<8x8xf32>
      %154 = math.exp %153 : vector<8x8xf32>
      %cst_37 = arith.constant dense<0.000000e+00> : vector<8xf32>
      %155 = vector.multi_reduction <add>, %154, %cst_37 [1] : vector<8x8xf32> to vector<8xf32>
      %156 = vector.shape_cast %155 : vector<8xf32> to vector<8x1xf32>
      %157 = tpu.reciprocal %156 {approx = true} : vector<8x1xf32> -> vector<8x1xf32>
      %158 = vector.broadcast %157 : vector<8x1xf32> to vector<8x8xf32>
      %159 = arith.mulf %154, %158 : vector<8x8xf32>
      %160 = arith.truncf %159 : vector<8x8xf32> to vector<8x8xbf16>
      %cst_38 = arith.constant dense<0.000000e+00> : vector<8x16xf32>
      %161 = tpu.matmul %160, %148, %cst_38 {dimension_numbers = #tpu.dot_dimension_numbers<[1], [0], [0], [1], [0, 0, 1, 1], [], []>} : vector<8x8xbf16>, vector<8x16xbf16>, vector<8x16xf32> -> vector<8x16xf32>
      %162 = vector.extract_strided_slice %102 {offsets = [0, 48], sizes = [8, 16], strides = [1, 1]} : vector<8x64xf32> to vector<8x16xf32>
      %163 = arith.truncf %162 : vector<8x16xf32> to vector<8x16xbf16>
      %164 = vector.extract_strided_slice %103 {offsets = [0, 48], sizes = [8, 16], strides = [1, 1]} : vector<8x64xf32> to vector<8x16xf32>
      %165 = arith.truncf %164 : vector<8x16xf32> to vector<8x16xbf16>
      %166 = vector.extract_strided_slice %104 {offsets = [0, 48], sizes = [8, 16], strides = [1, 1]} : vector<8x64xf32> to vector<8x16xf32>
      %167 = arith.truncf %166 : vector<8x16xf32> to vector<8x16xbf16>
      %cst_39 = arith.constant dense<0.000000e+00> : vector<8x8xf32>
      %168 = tpu.matmul %163, %165, %cst_39 {dimension_numbers = #tpu.dot_dimension_numbers<[1], [1], [0], [0], [0, 0, 1, 0], [], []>} : vector<8x16xbf16>, vector<8x16xbf16>, vector<8x8xf32> -> vector<8x8xf32>
      %cst_40 = arith.constant dense<0xFF800000> : vector<8xf32>
      %169 = vector.multi_reduction <maximumf>, %168, %cst_40 [1] : vector<8x8xf32> to vector<8xf32>
      %170 = vector.shape_cast %169 : vector<8xf32> to vector<8x1xf32>
      %171 = vector.broadcast %170 : vector<8x1xf32> to vector<8x8xf32>
      %172 = arith.subf %168, %171 : vector<8x8xf32>
      %173 = math.exp %172 : vector<8x8xf32>
      %cst_41 = arith.constant dense<0.000000e+00> : vector<8xf32>
      %174 = vector.multi_reduction <add>, %173, %cst_41 [1] : vector<8x8xf32> to vector<8xf32>
      %175 = vector.shape_cast %174 : vector<8xf32> to vector<8x1xf32>
      %176 = tpu.reciprocal %175 {approx = true} : vector<8x1xf32> -> vector<8x1xf32>
      %177 = vector.broadcast %176 : vector<8x1xf32> to vector<8x8xf32>
      %178 = arith.mulf %173, %177 : vector<8x8xf32>
      %179 = arith.truncf %178 : vector<8x8xf32> to vector<8x8xbf16>
      %cst_42 = arith.constant dense<0.000000e+00> : vector<8x16xf32>
      %180 = tpu.matmul %179, %167, %cst_42 {dimension_numbers = #tpu.dot_dimension_numbers<[1], [0], [0], [1], [0, 0, 1, 1], [], []>} : vector<8x8xbf16>, vector<8x16xbf16>, vector<8x16xf32> -> vector<8x16xf32>
      %181 = tpu.concatenate %123, %142, %161, %180 in 1 : vector<8x16xf32>, vector<8x16xf32>, vector<8x16xf32>, vector<8x16xf32> -> vector<8x64xf32>
      %182 = tpu.concatenate %101, %181 in 0 : vector<8x64xf32>, vector<8x64xf32> -> vector<16x64xf32>
      %183 = arith.truncf %182 : vector<16x64xf32> to vector<16x64xbf16>
      %c0_43 = arith.constant 0 : index
      %c0_44 = arith.constant 0 : index
      %c0_45 = arith.constant 0 : index
      %184 = vector.load %arg10[%c0_43, %c0_44, %c0_45] : memref<1x64x64xbf16, #tpu.memory_space<vmem>>, vector<1x64x64xbf16>
      %185 = vector.shape_cast %184 : vector<1x64x64xbf16> to vector<64x64xbf16>
      %cst_46 = arith.constant dense<0.000000e+00> : vector<16x64xf32>
      %186 = tpu.matmul %183, %185, %cst_46 {dimension_numbers = #tpu.dot_dimension_numbers<[1], [0], [0], [1], [0, 0, 1, 1], [], []>} : vector<16x64xbf16>, vector<64x64xbf16>, vector<16x64xf32> -> vector<16x64xf32>
      %187 = vector.extract_strided_slice %11 {offsets = [1, 0], sizes = [1, 64], strides = [1, 1]} : vector<13x192xf32> to vector<1x64xf32>
      %188 = vector.broadcast %187 : vector<1x64xf32> to vector<16x64xf32>
      %189 = arith.addf %186, %188 : vector<16x64xf32>
      %190 = arith.addf %9, %189 : vector<16x64xf32>
      %191 = vector.extract_strided_slice %11 {offsets = [7, 0], sizes = [1, 64], strides = [1, 1]} : vector<13x192xf32> to vector<1x64xf32>
      %192 = vector.extract_strided_slice %11 {offsets = [8, 0], sizes = [1, 64], strides = [1, 1]} : vector<13x192xf32> to vector<1x64xf32>
      %cst_47 = arith.constant dense<0.000000e+00> : vector<16xf32>
      %193 = vector.multi_reduction <add>, %190, %cst_47 [1] : vector<16x64xf32> to vector<16xf32>
      %194 = vector.shape_cast %193 : vector<16xf32> to vector<16x1xf32>
      %cst_48 = arith.constant 6.400000e+01 : f32
      %195 = vector.broadcast %cst_48 : f32 to vector<16x1xf32>
      %196 = arith.divf %194, %195 : vector<16x1xf32>
      %197 = vector.broadcast %196 : vector<16x1xf32> to vector<16x64xf32>
      %198 = arith.subf %190, %197 : vector<16x64xf32>
      %199 = arith.mulf %198, %198 : vector<16x64xf32>
      %cst_49 = arith.constant dense<0.000000e+00> : vector<16xf32>
      %200 = vector.multi_reduction <add>, %199, %cst_49 [1] : vector<16x64xf32> to vector<16xf32>
      %201 = vector.shape_cast %200 : vector<16xf32> to vector<16x1xf32>
      %cst_50 = arith.constant 6.400000e+01 : f32
      %202 = vector.broadcast %cst_50 : f32 to vector<16x1xf32>
      %203 = arith.divf %201, %202 : vector<16x1xf32>
      %204 = vector.broadcast %196 : vector<16x1xf32> to vector<16x64xf32>
      %205 = arith.subf %190, %204 : vector<16x64xf32>
      %cst_51 = arith.constant 9.99999974E-6 : f32
      %206 = vector.broadcast %cst_51 : f32 to vector<16x1xf32>
      %207 = arith.addf %203, %206 : vector<16x1xf32>
      %208 = math.rsqrt %207 : vector<16x1xf32>
      %209 = vector.broadcast %208 : vector<16x1xf32> to vector<16x64xf32>
      %210 = arith.mulf %205, %209 : vector<16x64xf32>
      %211 = vector.broadcast %191 : vector<1x64xf32> to vector<16x64xf32>
      %212 = arith.mulf %210, %211 : vector<16x64xf32>
      %213 = vector.broadcast %192 : vector<1x64xf32> to vector<16x64xf32>
      %214 = arith.addf %212, %213 : vector<16x64xf32>
      %c0_52 = arith.constant 0 : index
      %c0_53 = arith.constant 0 : index
      %215 = vector.load %arg23[%c0_52, %c0_53] : memref<16x64xbf16, #tpu.memory_space<vmem>>, vector<16x64xbf16>
      %216 = arith.truncf %214 : vector<16x64xf32> to vector<16x64xbf16>
      %c0_54 = arith.constant 0 : index
      %c0_55 = arith.constant 0 : index
      %c0_56 = arith.constant 0 : index
      %217 = vector.load %arg11[%c0_54, %c0_55, %c0_56] : memref<1x64x64xbf16, #tpu.memory_space<vmem>>, vector<1x64x64xbf16>
      %218 = vector.shape_cast %217 : vector<1x64x64xbf16> to vector<64x64xbf16>
      %cst_57 = arith.constant dense<0.000000e+00> : vector<16x64xf32>
      %219 = tpu.matmul %216, %218, %cst_57 {dimension_numbers = #tpu.dot_dimension_numbers<[1], [0], [0], [1], [0, 0, 1, 1], [], []>} : vector<16x64xbf16>, vector<64x64xbf16>, vector<16x64xf32> -> vector<16x64xf32>
      %220 = vector.extract_strided_slice %11 {offsets = [2, 0], sizes = [1, 64], strides = [1, 1]} : vector<13x192xf32> to vector<1x64xf32>
      %221 = vector.broadcast %220 : vector<1x64xf32> to vector<16x64xf32>
      %222 = arith.addf %219, %221 : vector<16x64xf32>
      %c0_58 = arith.constant 0 : index
      %c0_59 = arith.constant 0 : index
      %c0_60 = arith.constant 0 : index
      %223 = vector.load %arg12[%c0_58, %c0_59, %c0_60] : memref<1x64x128xbf16, #tpu.memory_space<vmem>>, vector<1x64x128xbf16>
      %224 = vector.shape_cast %223 : vector<1x64x128xbf16> to vector<64x128xbf16>
      %cst_61 = arith.constant dense<0.000000e+00> : vector<16x128xf32>
      %225 = tpu.matmul %215, %224, %cst_61 {dimension_numbers = #tpu.dot_dimension_numbers<[1], [0], [0], [1], [0, 0, 1, 1], [], []>} : vector<16x64xbf16>, vector<64x128xbf16>, vector<16x128xf32> -> vector<16x128xf32>
      %226 = vector.extract_strided_slice %11 {offsets = [3, 0], sizes = [1, 128], strides = [1, 1]} : vector<13x192xf32> to vector<1x128xf32>
      %227 = vector.broadcast %226 : vector<1x128xf32> to vector<16x128xf32>
      %228 = arith.addf %225, %227 : vector<16x128xf32>
      %229 = vector.extract_strided_slice %228 {offsets = [0, 0], sizes = [16, 64], strides = [1, 1]} : vector<16x128xf32> to vector<16x64xf32>
      %230 = vector.extract_strided_slice %228 {offsets = [0, 64], sizes = [16, 64], strides = [1, 1]} : vector<16x128xf32> to vector<16x64xf32>
      %231 = vector.extract_strided_slice %222 {offsets = [0, 0], sizes = [8, 64], strides = [1, 1]} : vector<16x64xf32> to vector<8x64xf32>
      %232 = vector.extract_strided_slice %229 {offsets = [0, 0], sizes = [8, 64], strides = [1, 1]} : vector<16x64xf32> to vector<8x64xf32>
      %233 = vector.extract_strided_slice %230 {offsets = [0, 0], sizes = [8, 64], strides = [1, 1]} : vector<16x64xf32> to vector<8x64xf32>
      %234 = vector.extract_strided_slice %231 {offsets = [0, 0], sizes = [8, 16], strides = [1, 1]} : vector<8x64xf32> to vector<8x16xf32>
      %235 = arith.truncf %234 : vector<8x16xf32> to vector<8x16xbf16>
      %236 = vector.extract_strided_slice %232 {offsets = [0, 0], sizes = [8, 16], strides = [1, 1]} : vector<8x64xf32> to vector<8x16xf32>
      %237 = arith.truncf %236 : vector<8x16xf32> to vector<8x16xbf16>
      %238 = vector.extract_strided_slice %233 {offsets = [0, 0], sizes = [8, 16], strides = [1, 1]} : vector<8x64xf32> to vector<8x16xf32>
      %239 = arith.truncf %238 : vector<8x16xf32> to vector<8x16xbf16>
      %cst_62 = arith.constant dense<0.000000e+00> : vector<8x8xf32>
      %240 = tpu.matmul %235, %237, %cst_62 {dimension_numbers = #tpu.dot_dimension_numbers<[1], [1], [0], [0], [0, 0, 1, 0], [], []>} : vector<8x16xbf16>, vector<8x16xbf16>, vector<8x8xf32> -> vector<8x8xf32>
      %cst_63 = arith.constant dense<0xFF800000> : vector<8xf32>
      %241 = vector.multi_reduction <maximumf>, %240, %cst_63 [1] : vector<8x8xf32> to vector<8xf32>
      %242 = vector.shape_cast %241 : vector<8xf32> to vector<8x1xf32>
      %243 = vector.broadcast %242 : vector<8x1xf32> to vector<8x8xf32>
      %244 = arith.subf %240, %243 : vector<8x8xf32>
      %245 = math.exp %244 : vector<8x8xf32>
      %cst_64 = arith.constant dense<0.000000e+00> : vector<8xf32>
      %246 = vector.multi_reduction <add>, %245, %cst_64 [1] : vector<8x8xf32> to vector<8xf32>
      %247 = vector.shape_cast %246 : vector<8xf32> to vector<8x1xf32>
      %248 = tpu.reciprocal %247 {approx = true} : vector<8x1xf32> -> vector<8x1xf32>
      %249 = vector.broadcast %248 : vector<8x1xf32> to vector<8x8xf32>
      %250 = arith.mulf %245, %249 : vector<8x8xf32>
      %251 = arith.truncf %250 : vector<8x8xf32> to vector<8x8xbf16>
      %cst_65 = arith.constant dense<0.000000e+00> : vector<8x16xf32>
      %252 = tpu.matmul %251, %239, %cst_65 {dimension_numbers = #tpu.dot_dimension_numbers<[1], [0], [0], [1], [0, 0, 1, 1], [], []>} : vector<8x8xbf16>, vector<8x16xbf16>, vector<8x16xf32> -> vector<8x16xf32>
      %253 = vector.extract_strided_slice %231 {offsets = [0, 16], sizes = [8, 16], strides = [1, 1]} : vector<8x64xf32> to vector<8x16xf32>
      %254 = arith.truncf %253 : vector<8x16xf32> to vector<8x16xbf16>
      %255 = vector.extract_strided_slice %232 {offsets = [0, 16], sizes = [8, 16], strides = [1, 1]} : vector<8x64xf32> to vector<8x16xf32>
      %256 = arith.truncf %255 : vector<8x16xf32> to vector<8x16xbf16>
      %257 = vector.extract_strided_slice %233 {offsets = [0, 16], sizes = [8, 16], strides = [1, 1]} : vector<8x64xf32> to vector<8x16xf32>
      %258 = arith.truncf %257 : vector<8x16xf32> to vector<8x16xbf16>
      %cst_66 = arith.constant dense<0.000000e+00> : vector<8x8xf32>
      %259 = tpu.matmul %254, %256, %cst_66 {dimension_numbers = #tpu.dot_dimension_numbers<[1], [1], [0], [0], [0, 0, 1, 0], [], []>} : vector<8x16xbf16>, vector<8x16xbf16>, vector<8x8xf32> -> vector<8x8xf32>
      %cst_67 = arith.constant dense<0xFF800000> : vector<8xf32>
      %260 = vector.multi_reduction <maximumf>, %259, %cst_67 [1] : vector<8x8xf32> to vector<8xf32>
      %261 = vector.shape_cast %260 : vector<8xf32> to vector<8x1xf32>
      %262 = vector.broadcast %261 : vector<8x1xf32> to vector<8x8xf32>
      %263 = arith.subf %259, %262 : vector<8x8xf32>
      %264 = math.exp %263 : vector<8x8xf32>
      %cst_68 = arith.constant dense<0.000000e+00> : vector<8xf32>
      %265 = vector.multi_reduction <add>, %264, %cst_68 [1] : vector<8x8xf32> to vector<8xf32>
      %266 = vector.shape_cast %265 : vector<8xf32> to vector<8x1xf32>
      %267 = tpu.reciprocal %266 {approx = true} : vector<8x1xf32> -> vector<8x1xf32>
      %268 = vector.broadcast %267 : vector<8x1xf32> to vector<8x8xf32>
      %269 = arith.mulf %264, %268 : vector<8x8xf32>
      %270 = arith.truncf %269 : vector<8x8xf32> to vector<8x8xbf16>
      %cst_69 = arith.constant dense<0.000000e+00> : vector<8x16xf32>
      %271 = tpu.matmul %270, %258, %cst_69 {dimension_numbers = #tpu.dot_dimension_numbers<[1], [0], [0], [1], [0, 0, 1, 1], [], []>} : vector<8x8xbf16>, vector<8x16xbf16>, vector<8x16xf32> -> vector<8x16xf32>
      %272 = vector.extract_strided_slice %231 {offsets = [0, 32], sizes = [8, 16], strides = [1, 1]} : vector<8x64xf32> to vector<8x16xf32>
      %273 = arith.truncf %272 : vector<8x16xf32> to vector<8x16xbf16>
      %274 = vector.extract_strided_slice %232 {offsets = [0, 32], sizes = [8, 16], strides = [1, 1]} : vector<8x64xf32> to vector<8x16xf32>
      %275 = arith.truncf %274 : vector<8x16xf32> to vector<8x16xbf16>
      %276 = vector.extract_strided_slice %233 {offsets = [0, 32], sizes = [8, 16], strides = [1, 1]} : vector<8x64xf32> to vector<8x16xf32>
      %277 = arith.truncf %276 : vector<8x16xf32> to vector<8x16xbf16>
      %cst_70 = arith.constant dense<0.000000e+00> : vector<8x8xf32>
      %278 = tpu.matmul %273, %275, %cst_70 {dimension_numbers = #tpu.dot_dimension_numbers<[1], [1], [0], [0], [0, 0, 1, 0], [], []>} : vector<8x16xbf16>, vector<8x16xbf16>, vector<8x8xf32> -> vector<8x8xf32>
      %cst_71 = arith.constant dense<0xFF800000> : vector<8xf32>
      %279 = vector.multi_reduction <maximumf>, %278, %cst_71 [1] : vector<8x8xf32> to vector<8xf32>
      %280 = vector.shape_cast %279 : vector<8xf32> to vector<8x1xf32>
      %281 = vector.broadcast %280 : vector<8x1xf32> to vector<8x8xf32>
      %282 = arith.subf %278, %281 : vector<8x8xf32>
      %283 = math.exp %282 : vector<8x8xf32>
      %cst_72 = arith.constant dense<0.000000e+00> : vector<8xf32>
      %284 = vector.multi_reduction <add>, %283, %cst_72 [1] : vector<8x8xf32> to vector<8xf32>
      %285 = vector.shape_cast %284 : vector<8xf32> to vector<8x1xf32>
      %286 = tpu.reciprocal %285 {approx = true} : vector<8x1xf32> -> vector<8x1xf32>
      %287 = vector.broadcast %286 : vector<8x1xf32> to vector<8x8xf32>
      %288 = arith.mulf %283, %287 : vector<8x8xf32>
      %289 = arith.truncf %288 : vector<8x8xf32> to vector<8x8xbf16>
      %cst_73 = arith.constant dense<0.000000e+00> : vector<8x16xf32>
      %290 = tpu.matmul %289, %277, %cst_73 {dimension_numbers = #tpu.dot_dimension_numbers<[1], [0], [0], [1], [0, 0, 1, 1], [], []>} : vector<8x8xbf16>, vector<8x16xbf16>, vector<8x16xf32> -> vector<8x16xf32>
      %291 = vector.extract_strided_slice %231 {offsets = [0, 48], sizes = [8, 16], strides = [1, 1]} : vector<8x64xf32> to vector<8x16xf32>
      %292 = arith.truncf %291 : vector<8x16xf32> to vector<8x16xbf16>
      %293 = vector.extract_strided_slice %232 {offsets = [0, 48], sizes = [8, 16], strides = [1, 1]} : vector<8x64xf32> to vector<8x16xf32>
      %294 = arith.truncf %293 : vector<8x16xf32> to vector<8x16xbf16>
      %295 = vector.extract_strided_slice %233 {offsets = [0, 48], sizes = [8, 16], strides = [1, 1]} : vector<8x64xf32> to vector<8x16xf32>
      %296 = arith.truncf %295 : vector<8x16xf32> to vector<8x16xbf16>
      %cst_74 = arith.constant dense<0.000000e+00> : vector<8x8xf32>
      %297 = tpu.matmul %292, %294, %cst_74 {dimension_numbers = #tpu.dot_dimension_numbers<[1], [1], [0], [0], [0, 0, 1, 0], [], []>} : vector<8x16xbf16>, vector<8x16xbf16>, vector<8x8xf32> -> vector<8x8xf32>
      %cst_75 = arith.constant dense<0xFF800000> : vector<8xf32>
      %298 = vector.multi_reduction <maximumf>, %297, %cst_75 [1] : vector<8x8xf32> to vector<8xf32>
      %299 = vector.shape_cast %298 : vector<8xf32> to vector<8x1xf32>
      %300 = vector.broadcast %299 : vector<8x1xf32> to vector<8x8xf32>
      %301 = arith.subf %297, %300 : vector<8x8xf32>
      %302 = math.exp %301 : vector<8x8xf32>
      %cst_76 = arith.constant dense<0.000000e+00> : vector<8xf32>
      %303 = vector.multi_reduction <add>, %302, %cst_76 [1] : vector<8x8xf32> to vector<8xf32>
      %304 = vector.shape_cast %303 : vector<8xf32> to vector<8x1xf32>
      %305 = tpu.reciprocal %304 {approx = true} : vector<8x1xf32> -> vector<8x1xf32>
      %306 = vector.broadcast %305 : vector<8x1xf32> to vector<8x8xf32>
      %307 = arith.mulf %302, %306 : vector<8x8xf32>
      %308 = arith.truncf %307 : vector<8x8xf32> to vector<8x8xbf16>
      %cst_77 = arith.constant dense<0.000000e+00> : vector<8x16xf32>
      %309 = tpu.matmul %308, %296, %cst_77 {dimension_numbers = #tpu.dot_dimension_numbers<[1], [0], [0], [1], [0, 0, 1, 1], [], []>} : vector<8x8xbf16>, vector<8x16xbf16>, vector<8x16xf32> -> vector<8x16xf32>
      %310 = tpu.concatenate %252, %271, %290, %309 in 1 : vector<8x16xf32>, vector<8x16xf32>, vector<8x16xf32>, vector<8x16xf32> -> vector<8x64xf32>
      %311 = vector.extract_strided_slice %222 {offsets = [8, 0], sizes = [8, 64], strides = [1, 1]} : vector<16x64xf32> to vector<8x64xf32>
      %312 = vector.extract_strided_slice %229 {offsets = [8, 0], sizes = [8, 64], strides = [1, 1]} : vector<16x64xf32> to vector<8x64xf32>
      %313 = vector.extract_strided_slice %230 {offsets = [8, 0], sizes = [8, 64], strides = [1, 1]} : vector<16x64xf32> to vector<8x64xf32>
      %314 = vector.extract_strided_slice %311 {offsets = [0, 0], sizes = [8, 16], strides = [1, 1]} : vector<8x64xf32> to vector<8x16xf32>
      %315 = arith.truncf %314 : vector<8x16xf32> to vector<8x16xbf16>
      %316 = vector.extract_strided_slice %312 {offsets = [0, 0], sizes = [8, 16], strides = [1, 1]} : vector<8x64xf32> to vector<8x16xf32>
      %317 = arith.truncf %316 : vector<8x16xf32> to vector<8x16xbf16>
      %318 = vector.extract_strided_slice %313 {offsets = [0, 0], sizes = [8, 16], strides = [1, 1]} : vector<8x64xf32> to vector<8x16xf32>
      %319 = arith.truncf %318 : vector<8x16xf32> to vector<8x16xbf16>
      %cst_78 = arith.constant dense<0.000000e+00> : vector<8x8xf32>
      %320 = tpu.matmul %315, %317, %cst_78 {dimension_numbers = #tpu.dot_dimension_numbers<[1], [1], [0], [0], [0, 0, 1, 0], [], []>} : vector<8x16xbf16>, vector<8x16xbf16>, vector<8x8xf32> -> vector<8x8xf32>
      %cst_79 = arith.constant dense<0xFF800000> : vector<8xf32>
      %321 = vector.multi_reduction <maximumf>, %320, %cst_79 [1] : vector<8x8xf32> to vector<8xf32>
      %322 = vector.shape_cast %321 : vector<8xf32> to vector<8x1xf32>
      %323 = vector.broadcast %322 : vector<8x1xf32> to vector<8x8xf32>
      %324 = arith.subf %320, %323 : vector<8x8xf32>
      %325 = math.exp %324 : vector<8x8xf32>
      %cst_80 = arith.constant dense<0.000000e+00> : vector<8xf32>
      %326 = vector.multi_reduction <add>, %325, %cst_80 [1] : vector<8x8xf32> to vector<8xf32>
      %327 = vector.shape_cast %326 : vector<8xf32> to vector<8x1xf32>
      %328 = tpu.reciprocal %327 {approx = true} : vector<8x1xf32> -> vector<8x1xf32>
      %329 = vector.broadcast %328 : vector<8x1xf32> to vector<8x8xf32>
      %330 = arith.mulf %325, %329 : vector<8x8xf32>
      %331 = arith.truncf %330 : vector<8x8xf32> to vector<8x8xbf16>
      %cst_81 = arith.constant dense<0.000000e+00> : vector<8x16xf32>
      %332 = tpu.matmul %331, %319, %cst_81 {dimension_numbers = #tpu.dot_dimension_numbers<[1], [0], [0], [1], [0, 0, 1, 1], [], []>} : vector<8x8xbf16>, vector<8x16xbf16>, vector<8x16xf32> -> vector<8x16xf32>
      %333 = vector.extract_strided_slice %311 {offsets = [0, 16], sizes = [8, 16], strides = [1, 1]} : vector<8x64xf32> to vector<8x16xf32>
      %334 = arith.truncf %333 : vector<8x16xf32> to vector<8x16xbf16>
      %335 = vector.extract_strided_slice %312 {offsets = [0, 16], sizes = [8, 16], strides = [1, 1]} : vector<8x64xf32> to vector<8x16xf32>
      %336 = arith.truncf %335 : vector<8x16xf32> to vector<8x16xbf16>
      %337 = vector.extract_strided_slice %313 {offsets = [0, 16], sizes = [8, 16], strides = [1, 1]} : vector<8x64xf32> to vector<8x16xf32>
      %338 = arith.truncf %337 : vector<8x16xf32> to vector<8x16xbf16>
      %cst_82 = arith.constant dense<0.000000e+00> : vector<8x8xf32>
      %339 = tpu.matmul %334, %336, %cst_82 {dimension_numbers = #tpu.dot_dimension_numbers<[1], [1], [0], [0], [0, 0, 1, 0], [], []>} : vector<8x16xbf16>, vector<8x16xbf16>, vector<8x8xf32> -> vector<8x8xf32>
      %cst_83 = arith.constant dense<0xFF800000> : vector<8xf32>
      %340 = vector.multi_reduction <maximumf>, %339, %cst_83 [1] : vector<8x8xf32> to vector<8xf32>
      %341 = vector.shape_cast %340 : vector<8xf32> to vector<8x1xf32>
      %342 = vector.broadcast %341 : vector<8x1xf32> to vector<8x8xf32>
      %343 = arith.subf %339, %342 : vector<8x8xf32>
      %344 = math.exp %343 : vector<8x8xf32>
      %cst_84 = arith.constant dense<0.000000e+00> : vector<8xf32>
      %345 = vector.multi_reduction <add>, %344, %cst_84 [1] : vector<8x8xf32> to vector<8xf32>
      %346 = vector.shape_cast %345 : vector<8xf32> to vector<8x1xf32>
      %347 = tpu.reciprocal %346 {approx = true} : vector<8x1xf32> -> vector<8x1xf32>
      %348 = vector.broadcast %347 : vector<8x1xf32> to vector<8x8xf32>
      %349 = arith.mulf %344, %348 : vector<8x8xf32>
      %350 = arith.truncf %349 : vector<8x8xf32> to vector<8x8xbf16>
      %cst_85 = arith.constant dense<0.000000e+00> : vector<8x16xf32>
      %351 = tpu.matmul %350, %338, %cst_85 {dimension_numbers = #tpu.dot_dimension_numbers<[1], [0], [0], [1], [0, 0, 1, 1], [], []>} : vector<8x8xbf16>, vector<8x16xbf16>, vector<8x16xf32> -> vector<8x16xf32>
      %352 = vector.extract_strided_slice %311 {offsets = [0, 32], sizes = [8, 16], strides = [1, 1]} : vector<8x64xf32> to vector<8x16xf32>
      %353 = arith.truncf %352 : vector<8x16xf32> to vector<8x16xbf16>
      %354 = vector.extract_strided_slice %312 {offsets = [0, 32], sizes = [8, 16], strides = [1, 1]} : vector<8x64xf32> to vector<8x16xf32>
      %355 = arith.truncf %354 : vector<8x16xf32> to vector<8x16xbf16>
      %356 = vector.extract_strided_slice %313 {offsets = [0, 32], sizes = [8, 16], strides = [1, 1]} : vector<8x64xf32> to vector<8x16xf32>
      %357 = arith.truncf %356 : vector<8x16xf32> to vector<8x16xbf16>
      %cst_86 = arith.constant dense<0.000000e+00> : vector<8x8xf32>
      %358 = tpu.matmul %353, %355, %cst_86 {dimension_numbers = #tpu.dot_dimension_numbers<[1], [1], [0], [0], [0, 0, 1, 0], [], []>} : vector<8x16xbf16>, vector<8x16xbf16>, vector<8x8xf32> -> vector<8x8xf32>
      %cst_87 = arith.constant dense<0xFF800000> : vector<8xf32>
      %359 = vector.multi_reduction <maximumf>, %358, %cst_87 [1] : vector<8x8xf32> to vector<8xf32>
      %360 = vector.shape_cast %359 : vector<8xf32> to vector<8x1xf32>
      %361 = vector.broadcast %360 : vector<8x1xf32> to vector<8x8xf32>
      %362 = arith.subf %358, %361 : vector<8x8xf32>
      %363 = math.exp %362 : vector<8x8xf32>
      %cst_88 = arith.constant dense<0.000000e+00> : vector<8xf32>
      %364 = vector.multi_reduction <add>, %363, %cst_88 [1] : vector<8x8xf32> to vector<8xf32>
      %365 = vector.shape_cast %364 : vector<8xf32> to vector<8x1xf32>
      %366 = tpu.reciprocal %365 {approx = true} : vector<8x1xf32> -> vector<8x1xf32>
      %367 = vector.broadcast %366 : vector<8x1xf32> to vector<8x8xf32>
      %368 = arith.mulf %363, %367 : vector<8x8xf32>
      %369 = arith.truncf %368 : vector<8x8xf32> to vector<8x8xbf16>
      %cst_89 = arith.constant dense<0.000000e+00> : vector<8x16xf32>
      %370 = tpu.matmul %369, %357, %cst_89 {dimension_numbers = #tpu.dot_dimension_numbers<[1], [0], [0], [1], [0, 0, 1, 1], [], []>} : vector<8x8xbf16>, vector<8x16xbf16>, vector<8x16xf32> -> vector<8x16xf32>
      %371 = vector.extract_strided_slice %311 {offsets = [0, 48], sizes = [8, 16], strides = [1, 1]} : vector<8x64xf32> to vector<8x16xf32>
      %372 = arith.truncf %371 : vector<8x16xf32> to vector<8x16xbf16>
      %373 = vector.extract_strided_slice %312 {offsets = [0, 48], sizes = [8, 16], strides = [1, 1]} : vector<8x64xf32> to vector<8x16xf32>
      %374 = arith.truncf %373 : vector<8x16xf32> to vector<8x16xbf16>
      %375 = vector.extract_strided_slice %313 {offsets = [0, 48], sizes = [8, 16], strides = [1, 1]} : vector<8x64xf32> to vector<8x16xf32>
      %376 = arith.truncf %375 : vector<8x16xf32> to vector<8x16xbf16>
      %cst_90 = arith.constant dense<0.000000e+00> : vector<8x8xf32>
      %377 = tpu.matmul %372, %374, %cst_90 {dimension_numbers = #tpu.dot_dimension_numbers<[1], [1], [0], [0], [0, 0, 1, 0], [], []>} : vector<8x16xbf16>, vector<8x16xbf16>, vector<8x8xf32> -> vector<8x8xf32>
      %cst_91 = arith.constant dense<0xFF800000> : vector<8xf32>
      %378 = vector.multi_reduction <maximumf>, %377, %cst_91 [1] : vector<8x8xf32> to vector<8xf32>
      %379 = vector.shape_cast %378 : vector<8xf32> to vector<8x1xf32>
      %380 = vector.broadcast %379 : vector<8x1xf32> to vector<8x8xf32>
      %381 = arith.subf %377, %380 : vector<8x8xf32>
      %382 = math.exp %381 : vector<8x8xf32>
      %cst_92 = arith.constant dense<0.000000e+00> : vector<8xf32>
      %383 = vector.multi_reduction <add>, %382, %cst_92 [1] : vector<8x8xf32> to vector<8xf32>
      %384 = vector.shape_cast %383 : vector<8xf32> to vector<8x1xf32>
      %385 = tpu.reciprocal %384 {approx = true} : vector<8x1xf32> -> vector<8x1xf32>
      %386 = vector.broadcast %385 : vector<8x1xf32> to vector<8x8xf32>
      %387 = arith.mulf %382, %386 : vector<8x8xf32>
      %388 = arith.truncf %387 : vector<8x8xf32> to vector<8x8xbf16>
      %cst_93 = arith.constant dense<0.000000e+00> : vector<8x16xf32>
      %389 = tpu.matmul %388, %376, %cst_93 {dimension_numbers = #tpu.dot_dimension_numbers<[1], [0], [0], [1], [0, 0, 1, 1], [], []>} : vector<8x8xbf16>, vector<8x16xbf16>, vector<8x16xf32> -> vector<8x16xf32>
      %390 = tpu.concatenate %332, %351, %370, %389 in 1 : vector<8x16xf32>, vector<8x16xf32>, vector<8x16xf32>, vector<8x16xf32> -> vector<8x64xf32>
      %391 = tpu.concatenate %310, %390 in 0 : vector<8x64xf32>, vector<8x64xf32> -> vector<16x64xf32>
      %392 = arith.truncf %391 : vector<16x64xf32> to vector<16x64xbf16>
      %c0_94 = arith.constant 0 : index
      %c0_95 = arith.constant 0 : index
      %c0_96 = arith.constant 0 : index
      %393 = vector.load %arg13[%c0_94, %c0_95, %c0_96] : memref<1x64x64xbf16, #tpu.memory_space<vmem>>, vector<1x64x64xbf16>
      %394 = vector.shape_cast %393 : vector<1x64x64xbf16> to vector<64x64xbf16>
      %cst_97 = arith.constant dense<0.000000e+00> : vector<16x64xf32>
      %395 = tpu.matmul %392, %394, %cst_97 {dimension_numbers = #tpu.dot_dimension_numbers<[1], [0], [0], [1], [0, 0, 1, 1], [], []>} : vector<16x64xbf16>, vector<64x64xbf16>, vector<16x64xf32> -> vector<16x64xf32>
      %396 = vector.extract_strided_slice %11 {offsets = [4, 0], sizes = [1, 64], strides = [1, 1]} : vector<13x192xf32> to vector<1x64xf32>
      %397 = vector.broadcast %396 : vector<1x64xf32> to vector<16x64xf32>
      %398 = arith.addf %395, %397 : vector<16x64xf32>
      %399 = arith.addf %214, %398 : vector<16x64xf32>
      %400 = vector.extract_strided_slice %11 {offsets = [9, 0], sizes = [1, 64], strides = [1, 1]} : vector<13x192xf32> to vector<1x64xf32>
      %401 = vector.extract_strided_slice %11 {offsets = [10, 0], sizes = [1, 64], strides = [1, 1]} : vector<13x192xf32> to vector<1x64xf32>
      %cst_98 = arith.constant dense<0.000000e+00> : vector<16xf32>
      %402 = vector.multi_reduction <add>, %399, %cst_98 [1] : vector<16x64xf32> to vector<16xf32>
      %403 = vector.shape_cast %402 : vector<16xf32> to vector<16x1xf32>
      %cst_99 = arith.constant 6.400000e+01 : f32
      %404 = vector.broadcast %cst_99 : f32 to vector<16x1xf32>
      %405 = arith.divf %403, %404 : vector<16x1xf32>
      %406 = vector.broadcast %405 : vector<16x1xf32> to vector<16x64xf32>
      %407 = arith.subf %399, %406 : vector<16x64xf32>
      %408 = arith.mulf %407, %407 : vector<16x64xf32>
      %cst_100 = arith.constant dense<0.000000e+00> : vector<16xf32>
      %409 = vector.multi_reduction <add>, %408, %cst_100 [1] : vector<16x64xf32> to vector<16xf32>
      %410 = vector.shape_cast %409 : vector<16xf32> to vector<16x1xf32>
      %cst_101 = arith.constant 6.400000e+01 : f32
      %411 = vector.broadcast %cst_101 : f32 to vector<16x1xf32>
      %412 = arith.divf %410, %411 : vector<16x1xf32>
      %413 = vector.broadcast %405 : vector<16x1xf32> to vector<16x64xf32>
      %414 = arith.subf %399, %413 : vector<16x64xf32>
      %cst_102 = arith.constant 9.99999974E-6 : f32
      %415 = vector.broadcast %cst_102 : f32 to vector<16x1xf32>
      %416 = arith.addf %412, %415 : vector<16x1xf32>
      %417 = math.rsqrt %416 : vector<16x1xf32>
      %418 = vector.broadcast %417 : vector<16x1xf32> to vector<16x64xf32>
      %419 = arith.mulf %414, %418 : vector<16x64xf32>
      %420 = vector.broadcast %400 : vector<1x64xf32> to vector<16x64xf32>
      %421 = arith.mulf %419, %420 : vector<16x64xf32>
      %422 = vector.broadcast %401 : vector<1x64xf32> to vector<16x64xf32>
      %423 = arith.addf %421, %422 : vector<16x64xf32>
      %424 = arith.truncf %423 : vector<16x64xf32> to vector<16x64xbf16>
      %c0_103 = arith.constant 0 : index
      %c0_104 = arith.constant 0 : index
      %c0_105 = arith.constant 0 : index
      %425 = vector.load %arg14[%c0_103, %c0_104, %c0_105] : memref<1x64x128xbf16, #tpu.memory_space<vmem>>, vector<1x64x128xbf16>
      %426 = vector.shape_cast %425 : vector<1x64x128xbf16> to vector<64x128xbf16>
      %cst_106 = arith.constant dense<0.000000e+00> : vector<16x128xf32>
      %427 = tpu.matmul %424, %426, %cst_106 {dimension_numbers = #tpu.dot_dimension_numbers<[1], [0], [0], [1], [0, 0, 1, 1], [], []>} : vector<16x64xbf16>, vector<64x128xbf16>, vector<16x128xf32> -> vector<16x128xf32>
      %428 = vector.extract_strided_slice %11 {offsets = [5, 0], sizes = [1, 128], strides = [1, 1]} : vector<13x192xf32> to vector<1x128xf32>
      %429 = vector.broadcast %428 : vector<1x128xf32> to vector<16x128xf32>
      %430 = arith.addf %427, %429 : vector<16x128xf32>
      %cst_107 = arith.constant 0.000000e+00 : f32
      %431 = vector.broadcast %cst_107 : f32 to vector<16x128xf32>
      %432 = arith.maximumf %430, %431 : vector<16x128xf32>
      %433 = arith.truncf %432 : vector<16x128xf32> to vector<16x128xbf16>
      %c0_108 = arith.constant 0 : index
      %c0_109 = arith.constant 0 : index
      %c0_110 = arith.constant 0 : index
      %434 = vector.load %arg15[%c0_108, %c0_109, %c0_110] : memref<1x128x64xbf16, #tpu.memory_space<vmem>>, vector<1x128x64xbf16>
      %435 = vector.shape_cast %434 : vector<1x128x64xbf16> to vector<128x64xbf16>
      %cst_111 = arith.constant dense<0.000000e+00> : vector<16x64xf32>
      %436 = tpu.matmul %433, %435, %cst_111 {dimension_numbers = #tpu.dot_dimension_numbers<[1], [0], [0], [1], [0, 0, 1, 1], [], []>} : vector<16x128xbf16>, vector<128x64xbf16>, vector<16x64xf32> -> vector<16x64xf32>
      %437 = vector.extract_strided_slice %11 {offsets = [6, 0], sizes = [1, 64], strides = [1, 1]} : vector<13x192xf32> to vector<1x64xf32>
      %438 = vector.broadcast %437 : vector<1x64xf32> to vector<16x64xf32>
      %439 = arith.addf %436, %438 : vector<16x64xf32>
      %440 = arith.addf %423, %439 : vector<16x64xf32>
      %441 = vector.extract_strided_slice %11 {offsets = [11, 0], sizes = [1, 64], strides = [1, 1]} : vector<13x192xf32> to vector<1x64xf32>
      %442 = vector.extract_strided_slice %11 {offsets = [12, 0], sizes = [1, 64], strides = [1, 1]} : vector<13x192xf32> to vector<1x64xf32>
      %cst_112 = arith.constant dense<0.000000e+00> : vector<16xf32>
      %443 = vector.multi_reduction <add>, %440, %cst_112 [1] : vector<16x64xf32> to vector<16xf32>
      %444 = vector.shape_cast %443 : vector<16xf32> to vector<16x1xf32>
      %cst_113 = arith.constant 6.400000e+01 : f32
      %445 = vector.broadcast %cst_113 : f32 to vector<16x1xf32>
      %446 = arith.divf %444, %445 : vector<16x1xf32>
      %447 = vector.broadcast %446 : vector<16x1xf32> to vector<16x64xf32>
      %448 = arith.subf %440, %447 : vector<16x64xf32>
      %449 = arith.mulf %448, %448 : vector<16x64xf32>
      %cst_114 = arith.constant dense<0.000000e+00> : vector<16xf32>
      %450 = vector.multi_reduction <add>, %449, %cst_114 [1] : vector<16x64xf32> to vector<16xf32>
      %451 = vector.shape_cast %450 : vector<16xf32> to vector<16x1xf32>
      %cst_115 = arith.constant 6.400000e+01 : f32
      %452 = vector.broadcast %cst_115 : f32 to vector<16x1xf32>
      %453 = arith.divf %451, %452 : vector<16x1xf32>
      %454 = vector.broadcast %446 : vector<16x1xf32> to vector<16x64xf32>
      %455 = arith.subf %440, %454 : vector<16x64xf32>
      %cst_116 = arith.constant 9.99999974E-6 : f32
      %456 = vector.broadcast %cst_116 : f32 to vector<16x1xf32>
      %457 = arith.addf %453, %456 : vector<16x1xf32>
      %458 = math.rsqrt %457 : vector<16x1xf32>
      %459 = vector.broadcast %458 : vector<16x1xf32> to vector<16x64xf32>
      %460 = arith.mulf %455, %459 : vector<16x64xf32>
      %461 = vector.broadcast %441 : vector<1x64xf32> to vector<16x64xf32>
      %462 = arith.mulf %460, %461 : vector<16x64xf32>
      %463 = vector.broadcast %442 : vector<1x64xf32> to vector<16x64xf32>
      %464 = arith.addf %462, %463 : vector<16x64xf32>
      %c0_117 = arith.constant 0 : index
      %c0_118 = arith.constant 0 : index
      %465 = vector.load %arg24[%c0_117, %c0_118] : memref<16x64xf32, #tpu.memory_space<vmem>>, vector<16x64xf32>
      tpu.vector_store %arg24[%c0_117, %c0_118], %464 {strides = array<i32>} : memref<16x64xf32, #tpu.memory_space<vmem>>, vector<16x64xf32>,
      %c3_i32 = arith.constant 3 : i32
      %466 = arith.cmpi eq, %arg1, %c3_i32 : i32
      %467 = arith.extui %466 : i1 to i32
      %c0_i32_119 = arith.constant 0 : i32
      %468 = arith.cmpi ne, %467, %c0_i32_119 : i32
      scf.if %468 {
        %c0_120 = arith.constant 0 : index
        %c0_121 = arith.constant 0 : index
        %469 = vector.load %arg18[%c0_120, %c0_121] : memref<2x64xf32, #tpu.memory_space<vmem>>, vector<1x64xf32>
        %c1 = arith.constant 1 : index
        %c0_122 = arith.constant 0 : index
        %470 = vector.load %arg18[%c1, %c0_122] : memref<2x64xf32, #tpu.memory_space<vmem>>, vector<1x64xf32>
        %cst_123 = arith.constant dense<0.000000e+00> : vector<16xf32>
        %471 = vector.multi_reduction <add>, %464, %cst_123 [1] : vector<16x64xf32> to vector<16xf32>
        %472 = vector.shape_cast %471 : vector<16xf32> to vector<16x1xf32>
        %cst_124 = arith.constant 6.400000e+01 : f32
        %473 = vector.broadcast %cst_124 : f32 to vector<16x1xf32>
        %474 = arith.divf %472, %473 : vector<16x1xf32>
        %475 = vector.broadcast %474 : vector<16x1xf32> to vector<16x64xf32>
        %476 = arith.subf %464, %475 : vector<16x64xf32>
        %477 = arith.mulf %476, %476 : vector<16x64xf32>
        %cst_125 = arith.constant dense<0.000000e+00> : vector<16xf32>
        %478 = vector.multi_reduction <add>, %477, %cst_125 [1] : vector<16x64xf32> to vector<16xf32>
        %479 = vector.shape_cast %478 : vector<16xf32> to vector<16x1xf32>
        %cst_126 = arith.constant 6.400000e+01 : f32
        %480 = vector.broadcast %cst_126 : f32 to vector<16x1xf32>
        %481 = arith.divf %479, %480 : vector<16x1xf32>
        %482 = vector.broadcast %474 : vector<16x1xf32> to vector<16x64xf32>
        %483 = arith.subf %464, %482 : vector<16x64xf32>
        %cst_127 = arith.constant 9.99999974E-6 : f32
        %484 = vector.broadcast %cst_127 : f32 to vector<16x1xf32>
        %485 = arith.addf %481, %484 : vector<16x1xf32>
        %486 = math.rsqrt %485 : vector<16x1xf32>
        %487 = vector.broadcast %486 : vector<16x1xf32> to vector<16x64xf32>
        %488 = arith.mulf %483, %487 : vector<16x64xf32>
        %489 = vector.broadcast %469 : vector<1x64xf32> to vector<16x64xf32>
        %490 = arith.mulf %488, %489 : vector<16x64xf32>
        %491 = vector.broadcast %470 : vector<1x64xf32> to vector<16x64xf32>
        %492 = arith.addf %490, %491 : vector<16x64xf32>
        %493 = arith.truncf %492 : vector<16x64xf32> to vector<16x64xbf16>
        %c0_128 = arith.constant 0 : index
        %c0_129 = arith.constant 0 : index
        %494 = vector.load %arg19[%c0_128, %c0_129] : memref<64x128xbf16, #tpu.memory_space<vmem>>, vector<64x128xbf16>
        %cst_130 = arith.constant dense<0.000000e+00> : vector<16x128xf32>
        %495 = tpu.matmul %493, %494, %cst_130 {dimension_numbers = #tpu.dot_dimension_numbers<[1], [0], [0], [1], [0, 0, 1, 1], [], []>} : vector<16x64xbf16>, vector<64x128xbf16>, vector<16x128xf32> -> vector<16x128xf32>
        %c0_131 = arith.constant 0 : index
        %c0_132 = arith.constant 0 : index
        %496 = vector.load %arg20[%c0_131, %c0_132] : memref<1x128xf32, #tpu.memory_space<vmem>>, vector<1x128xf32>
        %497 = vector.broadcast %496 : vector<1x128xf32> to vector<16x128xf32>
        %498 = arith.addf %495, %497 : vector<16x128xf32>
        %c0_133 = arith.constant 0 : index
        %c0_134 = arith.constant 0 : index
        %499 = vector.load %arg21[%c0_133, %c0_134] : memref<16x128xf32, #tpu.memory_space<vmem>>, vector<16x128xf32>
        tpu.vector_store %arg21[%c0_133, %c0_134], %498 {strides = array<i32>} : memref<16x128xf32, #tpu.memory_space<vmem>>, vector<16x128xf32>,
      } else {
      }
    } else {
    }
    return
  }
  func.func @transform_0(%arg0: i32, %arg1: i32) -> (i32, i32) {
    %c0_i32 = arith.constant 0 : i32
    %c0_i32_0 = arith.constant 0 : i32
    return %arg0, %c0_i32 : i32, i32
  }
  func.func @transform_1(%arg0: i32, %arg1: i32) -> (i32, i32) {
    %c0_i32 = arith.constant 0 : i32
    %c0_i32_0 = arith.constant 0 : i32
    return %arg0, %c0_i32 : i32, i32
  }
  func.func @transform_2(%arg0: i32, %arg1: i32) -> (i32, i32, i32) {
    %c1_i32 = arith.constant 1 : i32
    %0 = arith.minsi %arg1, %c1_i32 : i32
    %c0_i32 = arith.constant 0 : i32
    %c0_i32_0 = arith.constant 0 : i32
    %c0_i32_1 = arith.constant 0 : i32
    return %0, %c0_i32, %c0_i32_0 : i32, i32, i32
  }
  func.func @transform_3(%arg0: i32, %arg1: i32) -> (i32, i32, i32) {
    %c1_i32 = arith.constant 1 : i32
    %0 = arith.minsi %arg1, %c1_i32 : i32
    %c0_i32 = arith.constant 0 : i32
    %c0_i32_0 = arith.constant 0 : i32
    %c0_i32_1 = arith.constant 0 : i32
    return %0, %c0_i32, %c0_i32_0 : i32, i32, i32
  }
  func.func @transform_4(%arg0: i32, %arg1: i32) -> (i32, i32, i32) {
    %c1_i32 = arith.constant 1 : i32
    %0 = arith.minsi %arg1, %c1_i32 : i32
    %c0_i32 = arith.constant 0 : i32
    %c0_i32_0 = arith.constant 0 : i32
    %c0_i32_1 = arith.constant 0 : i32
    return %0, %c0_i32, %c0_i32_0 : i32, i32, i32
  }
  func.func @transform_5(%arg0: i32, %arg1: i32) -> (i32, i32, i32) {
    %c1_i32 = arith.constant 1 : i32
    %0 = arith.minsi %arg1, %c1_i32 : i32
    %c0_i32 = arith.constant 0 : i32
    %c0_i32_0 = arith.constant 0 : i32
    %c0_i32_1 = arith.constant 0 : i32
    return %0, %c0_i32, %c0_i32_0 : i32, i32, i32
  }
  func.func @transform_6(%arg0: i32, %arg1: i32) -> (i32, i32, i32) {
    %c1_i32 = arith.constant 1 : i32
    %0 = arith.minsi %arg1, %c1_i32 : i32
    %c0_i32 = arith.constant 0 : i32
    %c0_i32_0 = arith.constant 0 : i32
    %c0_i32_1 = arith.constant 0 : i32
    return %0, %c0_i32, %c0_i32_0 : i32, i32, i32
  }
  func.func @transform_7(%arg0: i32, %arg1: i32) -> (i32, i32, i32) {
    %c2_i32 = arith.constant 2 : i32
    %0 = arith.subi %arg1, %c2_i32 : i32
    %c0_i32 = arith.constant 0 : i32
    %1 = arith.maxsi %0, %c0_i32 : i32
    %c0_i32_0 = arith.constant 0 : i32
    %c0_i32_1 = arith.constant 0 : i32
    %c0_i32_2 = arith.constant 0 : i32
    return %1, %c0_i32_0, %c0_i32_1 : i32, i32, i32
  }
  func.func @transform_8(%arg0: i32, %arg1: i32) -> (i32, i32, i32) {
    %c2_i32 = arith.constant 2 : i32
    %0 = arith.subi %arg1, %c2_i32 : i32
    %c0_i32 = arith.constant 0 : i32
    %1 = arith.maxsi %0, %c0_i32 : i32
    %c0_i32_0 = arith.constant 0 : i32
    %c0_i32_1 = arith.constant 0 : i32
    %c0_i32_2 = arith.constant 0 : i32
    return %1, %c0_i32_0, %c0_i32_1 : i32, i32, i32
  }
  func.func @transform_9(%arg0: i32, %arg1: i32) -> (i32, i32, i32) {
    %c2_i32 = arith.constant 2 : i32
    %0 = arith.subi %arg1, %c2_i32 : i32
    %c0_i32 = arith.constant 0 : i32
    %1 = arith.maxsi %0, %c0_i32 : i32
    %c0_i32_0 = arith.constant 0 : i32
    %c0_i32_1 = arith.constant 0 : i32
    %c0_i32_2 = arith.constant 0 : i32
    return %1, %c0_i32_0, %c0_i32_1 : i32, i32, i32
  }
  func.func @transform_10(%arg0: i32, %arg1: i32) -> (i32, i32, i32) {
    %c2_i32 = arith.constant 2 : i32
    %0 = arith.subi %arg1, %c2_i32 : i32
    %c0_i32 = arith.constant 0 : i32
    %1 = arith.maxsi %0, %c0_i32 : i32
    %c0_i32_0 = arith.constant 0 : i32
    %c0_i32_1 = arith.constant 0 : i32
    %c0_i32_2 = arith.constant 0 : i32
    return %1, %c0_i32_0, %c0_i32_1 : i32, i32, i32
  }
  func.func @transform_11(%arg0: i32, %arg1: i32) -> (i32, i32, i32) {
    %c2_i32 = arith.constant 2 : i32
    %0 = arith.subi %arg1, %c2_i32 : i32
    %c0_i32 = arith.constant 0 : i32
    %1 = arith.maxsi %0, %c0_i32 : i32
    %c0_i32_0 = arith.constant 0 : i32
    %c0_i32_1 = arith.constant 0 : i32
    %c0_i32_2 = arith.constant 0 : i32
    return %1, %c0_i32_0, %c0_i32_1 : i32, i32, i32
  }
  func.func @transform_12(%arg0: i32, %arg1: i32) -> (i32, i32, i32) {
    %c2_i32 = arith.constant 2 : i32
    %0 = arith.subi %arg1, %c2_i32 : i32
    %c0_i32 = arith.constant 0 : i32
    %1 = arith.maxsi %0, %c0_i32 : i32
    %c0_i32_0 = arith.constant 0 : i32
    %c0_i32_1 = arith.constant 0 : i32
    %c0_i32_2 = arith.constant 0 : i32
    return %1, %c0_i32_0, %c0_i32_1 : i32, i32, i32
  }
  func.func @transform_13(%arg0: i32, %arg1: i32) -> (i32, i32, i32) {
    %c2_i32 = arith.constant 2 : i32
    %0 = arith.subi %arg1, %c2_i32 : i32
    %c0_i32 = arith.constant 0 : i32
    %1 = arith.maxsi %0, %c0_i32 : i32
    %c0_i32_0 = arith.constant 0 : i32
    %c0_i32_1 = arith.constant 0 : i32
    %c0_i32_2 = arith.constant 0 : i32
    return %1, %c0_i32_0, %c0_i32_1 : i32, i32, i32
  }
  func.func @transform_14(%arg0: i32, %arg1: i32) -> (i32, i32, i32) {
    %c2_i32 = arith.constant 2 : i32
    %0 = arith.subi %arg1, %c2_i32 : i32
    %c0_i32 = arith.constant 0 : i32
    %1 = arith.maxsi %0, %c0_i32 : i32
    %c0_i32_0 = arith.constant 0 : i32
    %c0_i32_1 = arith.constant 0 : i32
    %c0_i32_2 = arith.constant 0 : i32
    return %1, %c0_i32_0, %c0_i32_1 : i32, i32, i32
  }
  func.func @transform_15(%arg0: i32, %arg1: i32) -> (i32, i32) {
    %c0_i32 = arith.constant 0 : i32
    %c0_i32_0 = arith.constant 0 : i32
    %c0_i32_1 = arith.constant 0 : i32
    return %c0_i32, %c0_i32_0 : i32, i32
  }
  func.func @transform_16(%arg0: i32, %arg1: i32) -> (i32, i32) {
    %c0_i32 = arith.constant 0 : i32
    %c0_i32_0 = arith.constant 0 : i32
    %c0_i32_1 = arith.constant 0 : i32
    return %c0_i32, %c0_i32_0 : i32, i32
  }
  func.func @transform_17(%arg0: i32, %arg1: i32) -> (i32, i32) {
    %c0_i32 = arith.constant 0 : i32
    %c0_i32_0 = arith.constant 0 : i32
    %c0_i32_1 = arith.constant 0 : i32
    return %c0_i32, %c0_i32_0 : i32, i32
  }
  func.func @transform_18(%arg0: i32, %arg1: i32) -> (i32, i32) {
    %c0_i32 = arith.constant 0 : i32
    %c0_i32_0 = arith.constant 0 : i32
    %c0_i32_1 = arith.constant 0 : i32
    return %c0_i32, %c0_i32_0 : i32, i32
  }
  func.func @transform_19(%arg0: i32, %arg1: i32) -> (i32, i32) {
    %c0_i32 = arith.constant 0 : i32
    %c0_i32_0 = arith.constant 0 : i32
    return %arg0, %c0_i32 : i32, i32
  }
}

</mosaic_0001>

<llo_original>
// kernel: transformer_forward.1
$region0: #{transformer_forward.1}
  #allocation0 [shape = 'u32[]', space=smem, size = 0x4, offset = 0x4, fixed_abs, tag = 'smem constant byte address 0x4 - core index']
  #allocation1 [shape = 'u32[144,128]{1,0:T(1,128)}', space=vmem, size = 0x12000, scoped, tag = 'internal scratch']
  #allocation2 [shape = 'f32[16,64]{1,0:T(8,128)}', space=vmem, size = 0x2000, scoped, tag = 'scratch operand']
  #allocation3 [shape = 'bf16[16,64]{1,0:T(16,128)(2,1)}', space=vmem, size = 0x1000, scoped, tag = 'scratch operand']
  #allocation4 [shape = 'f32[16,64]{1,0:T(8,128)}', space=vmem, size = 0x2000, scoped, tag = 'scratch operand']
  %s0 = inlined_call_operand.vmem [shape: f32[16,64], index: 0, kind: input, shape index: {}]
  %s1 = inlined_call_operand.vmem [shape: f32[16,64], index: 1, kind: input, shape index: {}]
  %s2 = inlined_call_operand.vmem [shape: bf16[2,64,192], index: 2, kind: input, shape index: {}]
  %s3 = inlined_call_operand.vmem [shape: bf16[2,64,64], index: 3, kind: input, shape index: {}]
  %s4 = inlined_call_operand.vmem [shape: bf16[2,64,128], index: 4, kind: input, shape index: {}]
  %s5 = inlined_call_operand.vmem [shape: bf16[2,128,64], index: 5, kind: input, shape index: {}]
  %s6 = inlined_call_operand.vmem [shape: f32[2,8,192], index: 6, kind: input, shape index: {}]
  %s7 = inlined_call_operand.vmem [shape: bf16[2,64,192], index: 7, kind: input, shape index: {}]
  %s8 = inlined_call_operand.vmem [shape: bf16[2,64,64], index: 8, kind: input, shape index: {}]
  %s9 = inlined_call_operand.vmem [shape: bf16[2,64,64], index: 9, kind: input, shape index: {}]
  %s10 = inlined_call_operand.vmem [shape: bf16[2,64,128], index: 10, kind: input, shape index: {}]
  %s11 = inlined_call_operand.vmem [shape: bf16[2,64,64], index: 11, kind: input, shape index: {}]
  %s12 = inlined_call_operand.vmem [shape: bf16[2,64,128], index: 12, kind: input, shape index: {}]
  %s13 = inlined_call_operand.vmem [shape: bf16[2,128,64], index: 13, kind: input, shape index: {}]
  %s14 = inlined_call_operand.vmem [shape: f32[2,13,192], index: 14, kind: input, shape index: {}]
  %s15 = inlined_call_operand.vmem [shape: f32[2,64], index: 15, kind: input, shape index: {}]
  %s16 = inlined_call_operand.vmem [shape: f32[2,64], index: 16, kind: input, shape index: {}]
  %s17 = inlined_call_operand.vmem [shape: bf16[64,128], index: 17, kind: input, shape index: {}]
  %s18 = inlined_call_operand.vmem [shape: f32[1,128], index: 18, kind: input, shape index: {}]
  %s19 = inlined_call_operand.vmem [shape: f32[16,128], index: 19, kind: output, shape index: {}]
  %s20 = sld [smem:[#allocation0]]
  $region129: #{transformer_forward.1} parent=0
    _
  %s22 = ssub.s32 1, %s20
  %s23 = scalar_select 0, %s22, %s20
  loop: start=0, step=1, limit=6
  $region2: #{transformer_forward.1} parent=0 // loop_pre_header
    _
  $region3: #{transformer_forward.1} parent=0 // loop_header
    %s25 = sphi 0, %s29
    %p26 = scmp.ge.s32.totalorder %s25, 6
    %s32 = sphi 0, %s44
    %s33 = sphi 0, %s40
    %s34 = sphi 0, %s32
    %s35 = sphi 0, %s33
    %s36 = sphi 0, %s34
    %s37 = sphi 0, %s35
    %s47 = sphi 0, %s49
    %s50 = sphi 0, %s47
    %s51 = sphi 0, %s50
    %s67 = sphi 0, %s51
    %s73 = sphi 0, %s75
    %s76 = sphi 0, %s73
    %s77 = sphi 0, %s76
    %s93 = sphi 0, %s77
    %s103 = sphi 0, %s105
    %s106 = sphi 0, %s103
    %s107 = sphi 0, %s106
    %s123 = sphi 0, %s107
    %s133 = sphi 0, %s135
    %s136 = sphi 0, %s133
    %s137 = sphi 0, %s136
    %s153 = sphi 0, %s137
    %s163 = sphi 0, %s165
    %s166 = sphi 0, %s163
    %s167 = sphi 0, %s166
    %s183 = sphi 0, %s167
    %s193 = sphi 0, %s195
    %s196 = sphi 0, %s193
    %s197 = sphi 0, %s196
    %s213 = sphi 0, %s197
    %s223 = sphi 0, %s225
    %s226 = sphi 0, %s223
    %s227 = sphi 0, %s226
    %s243 = sphi 0, %s227
    %s255 = sphi 0, %s257
    %s258 = sphi 0, %s255
    %s259 = sphi 0, %s258
    %s275 = sphi 0, %s259
    %s287 = sphi 0, %s289
    %s290 = sphi 0, %s287
    %s291 = sphi 0, %s290
    %s307 = sphi 0, %s291
    %s319 = sphi 0, %s321
    %s322 = sphi 0, %s319
    %s323 = sphi 0, %s322
    %s339 = sphi 0, %s323
    %s351 = sphi 0, %s353
    %s354 = sphi 0, %s351
    %s355 = sphi 0, %s354
    %s371 = sphi 0, %s355
    %s383 = sphi 0, %s385
    %s386 = sphi 0, %s383
    %s387 = sphi 0, %s386
    %s403 = sphi 0, %s387
    %s415 = sphi 0, %s417
    %s418 = sphi 0, %s415
    %s419 = sphi 0, %s418
    %s435 = sphi 0, %s419
    %s447 = sphi 0, %s449
    %s450 = sphi 0, %s447
    %s451 = sphi 0, %s450
    %s467 = sphi 0, %s451
    %s479 = sphi 0, %s481
    %s482 = sphi 0, %s479
    %s483 = sphi 0, %s482
    %s499 = sphi 0, %s483
    %s503 = sphi 0, %s503
    %s505 = sphi 0, %s503
    %s506 = sphi 0, %s505
    %s520 = sphi 0, %s506
    %s524 = sphi 0, %s524
    %s526 = sphi 0, %s524
    %s527 = sphi 0, %s526
    %s541 = sphi 0, %s527
    %s545 = sphi 0, %s545
    %s547 = sphi 0, %s545
    %s548 = sphi 0, %s547
    %s562 = sphi 0, %s548
    %s566 = sphi 0, %s566
    %s568 = sphi 0, %s566
    %s569 = sphi 0, %s568
    %s583 = sphi 0, %s569
    %s589 = sphi 0, %s591
    %s592 = sphi 0, %s589
    %s593 = sphi 0, %s592
    %s609 = sphi 0, %s593
  $region4: #{transformer_forward.1} parent=0 // loop_header_branch
    %28 = sbr.rel (%p26) target = $region8
  $region5: #{transformer_forward.1} parent=0 // loop_body
    %s30 = ssub.s32 %s25, 1
    %s31 = ssub.s32 %s25, 2
    %s38 = sadd.s32 1, %s33
    %p39 = scmp.ge.s32.totalorder %s38, 4
    %s40 = scalar_select %p39, 0, %s38
    %s41 = sadd.s32 1, %s32
    %s42 = scalar_select %p39, %s41, %s32
    %p43 = scmp.ge.s32.totalorder %s42, 1
    %s44 = scalar_select %p43, 0, %s42
    %s45 = ssub.s32 %s32, %s44
    %p46 = scmp.eq.s32.totalorder %s45, 0
    %s48 = sadd.s32 %s47, 1
    %s49 = scalar_select %p46, %s47, %s48
    %p52 = pneg %p46
    %p53 = scmp.eq.s32.totalorder %s25, 3
    %p54 = por %p52, %p53
    %p55 = scmp.ne.s32.totalorder %s47, %s50
    %p56 = scmp.eq.s32.totalorder %s25, 0
    %p57 = por %p55, %p56
    %p58 = scmp.ne.s32.totalorder %s47, %s50
    %p59 = scmp.eq.s32.totalorder %s30, 3
    %p60 = por %p58, %p59
    %p61 = scmp.ne.s32.totalorder %s50, %s51
    %p62 = scmp.eq.s32.totalorder %s30, 0
    %p63 = por %p61, %p62
    %p64 = scmp.ne.s32.totalorder %s50, %s51
    %p65 = scmp.eq.s32.totalorder %s31, 3
    %p66 = por %p64, %p65
    %p68 = scmp.ne.s32.totalorder %s51, %s67
    %p69 = scmp.eq.s32.totalorder %s31, 0
    %p70 = por %p68, %p69
    %s71 = ssub.s32 %s32, %s44
    %p72 = scmp.eq.s32.totalorder %s71, 0
    %s74 = sadd.s32 %s73, 1
    %s75 = scalar_select %p72, %s73, %s74
    %p78 = pneg %p72
    %p79 = scmp.eq.s32.totalorder %s25, 3
    %p80 = por %p78, %p79
    %p81 = scmp.ne.s32.totalorder %s73, %s76
    %p82 = scmp.eq.s32.totalorder %s25, 0
    %p83 = por %p81, %p82
    %p84 = scmp.ne.s32.totalorder %s73, %s76
    %p85 = scmp.eq.s32.totalorder %s30, 3
    %p86 = por %p84, %p85
    %p87 = scmp.ne.s32.totalorder %s76, %s77
    %p88 = scmp.eq.s32.totalorder %s30, 0
    %p89 = por %p87, %p88
    %p90 = scmp.ne.s32.totalorder %s76, %s77
    %p91 = scmp.eq.s32.totalorder %s31, 3
    %p92 = por %p90, %p91
    %p94 = scmp.ne.s32.totalorder %s77, %s93
    %p95 = scmp.eq.s32.totalorder %s31, 0
    %p96 = por %p94, %p95
    %p97 = scmp.lt.s32.totalorder %s33, 1
    %s98 = scalar_select %p97, %s33, 1
    %p99 = scmp.lt.s32.totalorder %s40, 1
    %s100 = scalar_select %p99, %s40, 1
    %s101 = ssub.s32 %s98, %s100
    %p102 = scmp.eq.s32.totalorder %s101, 0
    %s104 = sadd.s32 %s103, 1
    %s105 = scalar_select %p102, %s103, %s104
    %p108 = pneg %p102
    %p109 = scmp.eq.s32.totalorder %s25, 3
    %p110 = por %p108, %p109
    %p111 = scmp.ne.s32.totalorder %s103, %s106
    %p112 = scmp.eq.s32.totalorder %s25, 0
    %p113 = por %p111, %p112
    %p114 = scmp.ne.s32.totalorder %s103, %s106
    %p115 = scmp.eq.s32.totalorder %s30, 3
    %p116 = por %p114, %p115
    %p117 = scmp.ne.s32.totalorder %s106, %s107
    %p118 = scmp.eq.s32.totalorder %s30, 0
    %p119 = por %p117, %p118
    %p120 = scmp.ne.s32.totalorder %s106, %s107
    %p121 = scmp.eq.s32.totalorder %s31, 3
    %p122 = por %p120, %p121
    %p124 = scmp.ne.s32.totalorder %s107, %s123
    %p125 = scmp.eq.s32.totalorder %s31, 0
    %p126 = por %p124, %p125
    %p127 = scmp.lt.s32.totalorder %s33, 1
    %s128 = scalar_select %p127, %s33, 1
    %p129 = scmp.lt.s32.totalorder %s40, 1
    %s130 = scalar_select %p129, %s40, 1
    %s131 = ssub.s32 %s128, %s130
    %p132 = scmp.eq.s32.totalorder %s131, 0
    %s134 = sadd.s32 %s133, 1
    %s135 = scalar_select %p132, %s133, %s134
    %p138 = pneg %p132
    %p139 = scmp.eq.s32.totalorder %s25, 3
    %p140 = por %p138, %p139
    %p141 = scmp.ne.s32.totalorder %s133, %s136
    %p142 = scmp.eq.s32.totalorder %s25, 0
    %p143 = por %p141, %p142
    %p144 = scmp.ne.s32.totalorder %s133, %s136
    %p145 = scmp.eq.s32.totalorder %s30, 3
    %p146 = por %p144, %p145
    %p147 = scmp.ne.s32.totalorder %s136, %s137
    %p148 = scmp.eq.s32.totalorder %s30, 0
    %p149 = por %p147, %p148
    %p150 = scmp.ne.s32.totalorder %s136, %s137
    %p151 = scmp.eq.s32.totalorder %s31, 3
    %p152 = por %p150, %p151
    %p154 = scmp.ne.s32.totalorder %s137, %s153
    %p155 = scmp.eq.s32.totalorder %s31, 0
    %p156 = por %p154, %p155
    %p157 = scmp.lt.s32.totalorder %s33, 1
    %s158 = scalar_select %p157, %s33, 1
    %p159 = scmp.lt.s32.totalorder %s40, 1
    %s160 = scalar_select %p159, %s40, 1
    %s161 = ssub.s32 %s158, %s160
    %p162 = scmp.eq.s32.totalorder %s161, 0
    %s164 = sadd.s32 %s163, 1
    %s165 = scalar_select %p162, %s163, %s164
    %p168 = pneg %p162
    %p169 = scmp.eq.s32.totalorder %s25, 3
    %p170 = por %p168, %p169
    %p171 = scmp.ne.s32.totalorder %s163, %s166
    %p172 = scmp.eq.s32.totalorder %s25, 0
    %p173 = por %p171, %p172
    %p174 = scmp.ne.s32.totalorder %s163, %s166
    %p175 = scmp.eq.s32.totalorder %s30, 3
    %p176 = por %p174, %p175
    %p177 = scmp.ne.s32.totalorder %s166, %s167
    %p178 = scmp.eq.s32.totalorder %s30, 0
    %p179 = por %p177, %p178
    %p180 = scmp.ne.s32.totalorder %s166, %s167
    %p181 = scmp.eq.s32.totalorder %s31, 3
    %p182 = por %p180, %p181
    %p184 = scmp.ne.s32.totalorder %s167, %s183
    %p185 = scmp.eq.s32.totalorder %s31, 0
    %p186 = por %p184, %p185
    %p187 = scmp.lt.s32.totalorder %s33, 1
    %s188 = scalar_select %p187, %s33, 1
    %p189 = scmp.lt.s32.totalorder %s40, 1
    %s190 = scalar_select %p189, %s40, 1
    %s191 = ssub.s32 %s188, %s190
    %p192 = scmp.eq.s32.totalorder %s191, 0
    %s194 = sadd.s32 %s193, 1
    %s195 = scalar_select %p192, %s193, %s194
    %p198 = pneg %p192
    %p199 = scmp.eq.s32.totalorder %s25, 3
    %p200 = por %p198, %p199
    %p201 = scmp.ne.s32.totalorder %s193, %s196
    %p202 = scmp.eq.s32.totalorder %s25, 0
    %p203 = por %p201, %p202
    %p204 = scmp.ne.s32.totalorder %s193, %s196
    %p205 = scmp.eq.s32.totalorder %s30, 3
    %p206 = por %p204, %p205
    %p207 = scmp.ne.s32.totalorder %s196, %s197
    %p208 = scmp.eq.s32.totalorder %s30, 0
    %p209 = por %p207, %p208
    %p210 = scmp.ne.s32.totalorder %s196, %s197
    %p211 = scmp.eq.s32.totalorder %s31, 3
    %p212 = por %p210, %p211
    %p214 = scmp.ne.s32.totalorder %s197, %s213
    %p215 = scmp.eq.s32.totalorder %s31, 0
    %p216 = por %p214, %p215
    %p217 = scmp.lt.s32.totalorder %s33, 1
    %s218 = scalar_select %p217, %s33, 1
    %p219 = scmp.lt.s32.totalorder %s40, 1
    %s220 = scalar_select %p219, %s40, 1
    %s221 = ssub.s32 %s218, %s220
    %p222 = scmp.eq.s32.totalorder %s221, 0
    %s224 = sadd.s32 %s223, 1
    %s225 = scalar_select %p222, %s223, %s224
    %p228 = pneg %p222
    %p229 = scmp.eq.s32.totalorder %s25, 3
    %p230 = por %p228, %p229
    %p231 = scmp.ne.s32.totalorder %s223, %s226
    %p232 = scmp.eq.s32.totalorder %s25, 0
    %p233 = por %p231, %p232
    %p234 = scmp.ne.s32.totalorder %s223, %s226
    %p235 = scmp.eq.s32.totalorder %s30, 3
    %p236 = por %p234, %p235
    %p237 = scmp.ne.s32.totalorder %s226, %s227
    %p238 = scmp.eq.s32.totalorder %s30, 0
    %p239 = por %p237, %p238
    %p240 = scmp.ne.s32.totalorder %s226, %s227
    %p241 = scmp.eq.s32.totalorder %s31, 3
    %p242 = por %p240, %p241
    %p244 = scmp.ne.s32.totalorder %s227, %s243
    %p245 = scmp.eq.s32.totalorder %s31, 0
    %p246 = por %p244, %p245
    %s247 = ssub.s32 %s33, 2
    %p248 = scmp.gt.s32.totalorder %s247, 0
    %s249 = scalar_select %p248, %s247, 0
    %s250 = ssub.s32 %s40, 2
    %p251 = scmp.gt.s32.totalorder %s250, 0
    %s252 = scalar_select %p251, %s250, 0
    %s253 = ssub.s32 %s249, %s252
    %p254 = scmp.eq.s32.totalorder %s253, 0
    %s256 = sadd.s32 %s255, 1
    %s257 = scalar_select %p254, %s255, %s256
    %p260 = pneg %p254
    %p261 = scmp.eq.s32.totalorder %s25, 3
    %p262 = por %p260, %p261
    %p263 = scmp.ne.s32.totalorder %s255, %s258
    %p264 = scmp.eq.s32.totalorder %s25, 0
    %p265 = por %p263, %p264
    %p266 = scmp.ne.s32.totalorder %s255, %s258
    %p267 = scmp.eq.s32.totalorder %s30, 3
    %p268 = por %p266, %p267
    %p269 = scmp.ne.s32.totalorder %s258, %s259
    %p270 = scmp.eq.s32.totalorder %s30, 0
    %p271 = por %p269, %p270
    %p272 = scmp.ne.s32.totalorder %s258, %s259
    %p273 = scmp.eq.s32.totalorder %s31, 3
    %p274 = por %p272, %p273
    %p276 = scmp.ne.s32.totalorder %s259, %s275
    %p277 = scmp.eq.s32.totalorder %s31, 0
    %p278 = por %p276, %p277
    %s279 = ssub.s32 %s33, 2
    %p280 = scmp.gt.s32.totalorder %s279, 0
    %s281 = scalar_select %p280, %s279, 0
    %s282 = ssub.s32 %s40, 2
    %p283 = scmp.gt.s32.totalorder %s282, 0
    %s284 = scalar_select %p283, %s282, 0
    %s285 = ssub.s32 %s281, %s284
    %p286 = scmp.eq.s32.totalorder %s285, 0
    %s288 = sadd.s32 %s287, 1
    %s289 = scalar_select %p286, %s287, %s288
    %p292 = pneg %p286
    %p293 = scmp.eq.s32.totalorder %s25, 3
    %p294 = por %p292, %p293
    %p295 = scmp.ne.s32.totalorder %s287, %s290
    %p296 = scmp.eq.s32.totalorder %s25, 0
    %p297 = por %p295, %p296
    %p298 = scmp.ne.s32.totalorder %s287, %s290
    %p299 = scmp.eq.s32.totalorder %s30, 3
    %p300 = por %p298, %p299
    %p301 = scmp.ne.s32.totalorder %s290, %s291
    %p302 = scmp.eq.s32.totalorder %s30, 0
    %p303 = por %p301, %p302
    %p304 = scmp.ne.s32.totalorder %s290, %s291
    %p305 = scmp.eq.s32.totalorder %s31, 3
    %p306 = por %p304, %p305
    %p308 = scmp.ne.s32.totalorder %s291, %s307
    %p309 = scmp.eq.s32.totalorder %s31, 0
    %p310 = por %p308, %p309
    %s311 = ssub.s32 %s33, 2
    %p312 = scmp.gt.s32.totalorder %s311, 0
    %s313 = scalar_select %p312, %s311, 0
    %s314 = ssub.s32 %s40, 2
    %p315 = scmp.gt.s32.totalorder %s314, 0
    %s316 = scalar_select %p315, %s314, 0
    %s317 = ssub.s32 %s313, %s316
    %p318 = scmp.eq.s32.totalorder %s317, 0
    %s320 = sadd.s32 %s319, 1
    %s321 = scalar_select %p318, %s319, %s320
    %p324 = pneg %p318
    %p325 = scmp.eq.s32.totalorder %s25, 3
    %p326 = por %p324, %p325
    %p327 = scmp.ne.s32.totalorder %s319, %s322
    %p328 = scmp.eq.s32.totalorder %s25, 0
    %p329 = por %p327, %p328
    %p330 = scmp.ne.s32.totalorder %s319, %s322
    %p331 = scmp.eq.s32.totalorder %s30, 3
    %p332 = por %p330, %p331
    %p333 = scmp.ne.s32.totalorder %s322, %s323
    %p334 = scmp.eq.s32.totalorder %s30, 0
    %p335 = por %p333, %p334
    %p336 = scmp.ne.s32.totalorder %s322, %s323
    %p337 = scmp.eq.s32.totalorder %s31, 3
    %p338 = por %p336, %p337
    %p340 = scmp.ne.s32.totalorder %s323, %s339
    %p341 = scmp.eq.s32.totalorder %s31, 0
    %p342 = por %p340, %p341
    %s343 = ssub.s32 %s33, 2
    %p344 = scmp.gt.s32.totalorder %s343, 0
    %s345 = scalar_select %p344, %s343, 0
    %s346 = ssub.s32 %s40, 2
    %p347 = scmp.gt.s32.totalorder %s346, 0
    %s348 = scalar_select %p347, %s346, 0
    %s349 = ssub.s32 %s345, %s348
    %p350 = scmp.eq.s32.totalorder %s349, 0
    %s352 = sadd.s32 %s351, 1
    %s353 = scalar_select %p350, %s351, %s352
    %p356 = pneg %p350
    %p357 = scmp.eq.s32.totalorder %s25, 3
    %p358 = por %p356, %p357
    %p359 = scmp.ne.s32.totalorder %s351, %s354
    %p360 = scmp.eq.s32.totalorder %s25, 0
    %p361 = por %p359, %p360
    %p362 = scmp.ne.s32.totalorder %s351, %s354
    %p363 = scmp.eq.s32.totalorder %s30, 3
    %p364 = por %p362, %p363
    %p365 = scmp.ne.s32.totalorder %s354, %s355
    %p366 = scmp.eq.s32.totalorder %s30, 0
    %p367 = por %p365, %p366
    %p368 = scmp.ne.s32.totalorder %s354, %s355
    %p369 = scmp.eq.s32.totalorder %s31, 3
    %p370 = por %p368, %p369
    %p372 = scmp.ne.s32.totalorder %s355, %s371
    %p373 = scmp.eq.s32.totalorder %s31, 0
    %p374 = por %p372, %p373
    %s375 = ssub.s32 %s33, 2
    %p376 = scmp.gt.s32.totalorder %s375, 0
    %s377 = scalar_select %p376, %s375, 0
    %s378 = ssub.s32 %s40, 2
    %p379 = scmp.gt.s32.totalorder %s378, 0
    %s380 = scalar_select %p379, %s378, 0
    %s381 = ssub.s32 %s377, %s380
    %p382 = scmp.eq.s32.totalorder %s381, 0
    %s384 = sadd.s32 %s383, 1
    %s385 = scalar_select %p382, %s383, %s384
    %p388 = pneg %p382
    %p389 = scmp.eq.s32.totalorder %s25, 3
    %p390 = por %p388, %p389
    %p391 = scmp.ne.s32.totalorder %s383, %s386
    %p392 = scmp.eq.s32.totalorder %s25, 0
    %p393 = por %p391, %p392
    %p394 = scmp.ne.s32.totalorder %s383, %s386
    %p395 = scmp.eq.s32.totalorder %s30, 3
    %p396 = por %p394, %p395
    %p397 = scmp.ne.s32.totalorder %s386, %s387
    %p398 = scmp.eq.s32.totalorder %s30, 0
    %p399 = por %p397, %p398
    %p400 = scmp.ne.s32.totalorder %s386, %s387
    %p401 = scmp.eq.s32.totalorder %s31, 3
    %p402 = por %p400, %p401
    %p404 = scmp.ne.s32.totalorder %s387, %s403
    %p405 = scmp.eq.s32.totalorder %s31, 0
    %p406 = por %p404, %p405
    %s407 = ssub.s32 %s33, 2
    %p408 = scmp.gt.s32.totalorder %s407, 0
    %s409 = scalar_select %p408, %s407, 0
    %s410 = ssub.s32 %s40, 2
    %p411 = scmp.gt.s32.totalorder %s410, 0
    %s412 = scalar_select %p411, %s410, 0
    %s413 = ssub.s32 %s409, %s412
    %p414 = scmp.eq.s32.totalorder %s413, 0
    %s416 = sadd.s32 %s415, 1
    %s417 = scalar_select %p414, %s415, %s416
    %p420 = pneg %p414
    %p421 = scmp.eq.s32.totalorder %s25, 3
    %p422 = por %p420, %p421
    %p423 = scmp.ne.s32.totalorder %s415, %s418
    %p424 = scmp.eq.s32.totalorder %s25, 0
    %p425 = por %p423, %p424
    %p426 = scmp.ne.s32.totalorder %s415, %s418
    %p427 = scmp.eq.s32.totalorder %s30, 3
    %p428 = por %p426, %p427
    %p429 = scmp.ne.s32.totalorder %s418, %s419
    %p430 = scmp.eq.s32.totalorder %s30, 0
    %p431 = por %p429, %p430
    %p432 = scmp.ne.s32.totalorder %s418, %s419
    %p433 = scmp.eq.s32.totalorder %s31, 3
    %p434 = por %p432, %p433
    %p436 = scmp.ne.s32.totalorder %s419, %s435
    %p437 = scmp.eq.s32.totalorder %s31, 0
    %p438 = por %p436, %p437
    %s439 = ssub.s32 %s33, 2
    %p440 = scmp.gt.s32.totalorder %s439, 0
    %s441 = scalar_select %p440, %s439, 0
    %s442 = ssub.s32 %s40, 2
    %p443 = scmp.gt.s32.totalorder %s442, 0
    %s444 = scalar_select %p443, %s442, 0
    %s445 = ssub.s32 %s441, %s444
    %p446 = scmp.eq.s32.totalorder %s445, 0
    %s448 = sadd.s32 %s447, 1
    %s449 = scalar_select %p446, %s447, %s448
    %p452 = pneg %p446
    %p453 = scmp.eq.s32.totalorder %s25, 3
    %p454 = por %p452, %p453
    %p455 = scmp.ne.s32.totalorder %s447, %s450
    %p456 = scmp.eq.s32.totalorder %s25, 0
    %p457 = por %p455, %p456
    %p458 = scmp.ne.s32.totalorder %s447, %s450
    %p459 = scmp.eq.s32.totalorder %s30, 3
    %p460 = por %p458, %p459
    %p461 = scmp.ne.s32.totalorder %s450, %s451
    %p462 = scmp.eq.s32.totalorder %s30, 0
    %p463 = por %p461, %p462
    %p464 = scmp.ne.s32.totalorder %s450, %s451
    %p465 = scmp.eq.s32.totalorder %s31, 3
    %p466 = por %p464, %p465
    %p468 = scmp.ne.s32.totalorder %s451, %s467
    %p469 = scmp.eq.s32.totalorder %s31, 0
    %p470 = por %p468, %p469
    %s471 = ssub.s32 %s33, 2
    %p472 = scmp.gt.s32.totalorder %s471, 0
    %s473 = scalar_select %p472, %s471, 0
    %s474 = ssub.s32 %s40, 2
    %p475 = scmp.gt.s32.totalorder %s474, 0
    %s476 = scalar_select %p475, %s474, 0
    %s477 = ssub.s32 %s473, %s476
    %p478 = scmp.eq.s32.totalorder %s477, 0
    %s480 = sadd.s32 %s479, 1
    %s481 = scalar_select %p478, %s479, %s480
    %p484 = pneg %p478
    %p485 = scmp.eq.s32.totalorder %s25, 3
    %p486 = por %p484, %p485
    %p487 = scmp.ne.s32.totalorder %s479, %s482
    %p488 = scmp.eq.s32.totalorder %s25, 0
    %p489 = por %p487, %p488
    %p490 = scmp.ne.s32.totalorder %s479, %s482
    %p491 = scmp.eq.s32.totalorder %s30, 3
    %p492 = por %p490, %p491
    %p493 = scmp.ne.s32.totalorder %s482, %s483
    %p494 = scmp.eq.s32.totalorder %s30, 0
    %p495 = por %p493, %p494
    %p496 = scmp.ne.s32.totalorder %s482, %s483
    %p497 = scmp.eq.s32.totalorder %s31, 3
    %p498 = por %p496, %p497
    %p500 = scmp.ne.s32.totalorder %s483, %s499
    %p501 = scmp.eq.s32.totalorder %s31, 0
    %p502 = por %p500, %p501
    %s504 = sadd.s32 %s503, 1
    %p507 = scmp.eq.s32.totalorder %s25, 3
    %p508 = scmp.ne.s32.totalorder %s503, %s505
    %p509 = scmp.eq.s32.totalorder %s25, 0
    %p510 = por %p508, %p509
    %p511 = scmp.ne.s32.totalorder %s503, %s505
    %p512 = scmp.eq.s32.totalorder %s30, 3
    %p513 = por %p511, %p512
    %p514 = scmp.ne.s32.totalorder %s505, %s506
    %p515 = scmp.eq.s32.totalorder %s30, 0
    %p516 = por %p514, %p515
    %p517 = scmp.ne.s32.totalorder %s505, %s506
    %p518 = scmp.eq.s32.totalorder %s31, 3
    %p519 = por %p517, %p518
    %p521 = scmp.ne.s32.totalorder %s506, %s520
    %p522 = scmp.eq.s32.totalorder %s31, 0
    %p523 = por %p521, %p522
    %s525 = sadd.s32 %s524, 1
    %p528 = scmp.eq.s32.totalorder %s25, 3
    %p529 = scmp.ne.s32.totalorder %s524, %s526
    %p530 = scmp.eq.s32.totalorder %s25, 0
    %p531 = por %p529, %p530
    %p532 = scmp.ne.s32.totalorder %s524, %s526
    %p533 = scmp.eq.s32.totalorder %s30, 3
    %p534 = por %p532, %p533
    %p535 = scmp.ne.s32.totalorder %s526, %s527
    %p536 = scmp.eq.s32.totalorder %s30, 0
    %p537 = por %p535, %p536
    %p538 = scmp.ne.s32.totalorder %s526, %s527
    %p539 = scmp.eq.s32.totalorder %s31, 3
    %p540 = por %p538, %p539
    %p542 = scmp.ne.s32.totalorder %s527, %s541
    %p543 = scmp.eq.s32.totalorder %s31, 0
    %p544 = por %p542, %p543
    %s546 = sadd.s32 %s545, 1
    %p549 = scmp.eq.s32.totalorder %s25, 3
    %p550 = scmp.ne.s32.totalorder %s545, %s547
    %p551 = scmp.eq.s32.totalorder %s25, 0
    %p552 = por %p550, %p551
    %p553 = scmp.ne.s32.totalorder %s545, %s547
    %p554 = scmp.eq.s32.totalorder %s30, 3
    %p555 = por %p553, %p554
    %p556 = scmp.ne.s32.totalorder %s547, %s548
    %p557 = scmp.eq.s32.totalorder %s30, 0
    %p558 = por %p556, %p557
    %p559 = scmp.ne.s32.totalorder %s547, %s548
    %p560 = scmp.eq.s32.totalorder %s31, 3
    %p561 = por %p559, %p560
    %p563 = scmp.ne.s32.totalorder %s548, %s562
    %p564 = scmp.eq.s32.totalorder %s31, 0
    %p565 = por %p563, %p564
    %s567 = sadd.s32 %s566, 1
    %p570 = scmp.eq.s32.totalorder %s25, 3
    %p571 = scmp.ne.s32.totalorder %s566, %s568
    %p572 = scmp.eq.s32.totalorder %s25, 0
    %p573 = por %p571, %p572
    %p574 = scmp.ne.s32.totalorder %s566, %s568
    %p575 = scmp.eq.s32.totalorder %s30, 3
    %p576 = por %p574, %p575
    %p577 = scmp.ne.s32.totalorder %s568, %s569
    %p578 = scmp.eq.s32.totalorder %s30, 0
    %p579 = por %p577, %p578
    %p580 = scmp.ne.s32.totalorder %s568, %s569
    %p581 = scmp.eq.s32.totalorder %s31, 3
    %p582 = por %p580, %p581
    %p584 = scmp.ne.s32.totalorder %s569, %s583
    %p585 = scmp.eq.s32.totalorder %s31, 0
    %p586 = por %p584, %p585
    %s587 = ssub.s32 %s32, %s44
    %p588 = scmp.eq.s32.totalorder %s587, 0
    %s590 = sadd.s32 %s589, 1
    %s591 = scalar_select %p588, %s589, %s590
    %p594 = pneg %p588
    %p595 = scmp.eq.s32.totalorder %s25, 3
    %p596 = por %p594, %p595
    %p597 = scmp.ne.s32.totalorder %s589, %s592
    %p598 = scmp.eq.s32.totalorder %s25, 0
    %p599 = por %p597, %p598
    %p600 = scmp.ne.s32.totalorder %s589, %s592
    %p601 = scmp.eq.s32.totalorder %s30, 3
    %p602 = por %p600, %p601
    %p603 = scmp.ne.s32.totalorder %s592, %s593
    %p604 = scmp.eq.s32.totalorder %s30, 0
    %p605 = por %p603, %p604
    %p606 = scmp.ne.s32.totalorder %s592, %s593
    %p607 = scmp.eq.s32.totalorder %s31, 3
    %p608 = por %p606, %p607
    %p610 = scmp.ne.s32.totalorder %s593, %s609
    %p611 = scmp.eq.s32.totalorder %s31, 0
    %p612 = por %p610, %p611
    %p613 = scmp.le.s32.totalorder 1, %s25
    %p614 = scmp.lt.s32.totalorder %s25, 5
    %p615 = pnand %p613, %p614
    %p616 = pneg %p615
    // Predicated region
    $region9: #{transformer_forward.1} parent=5 // pred_check
      _
    $region10: #{transformer_forward.1} parent=5 // pred_check_branch
      %618 = sbr.rel (%p615) target = $region12
    $region11: #{transformer_forward.1} parent=5 // pred_region
      %s619 = ssub.s32 %s25, 1
      // Predicated region
      $region13: #{transformer_forward.1} parent=11 // pred_check
        %p620 = pneg %p63
      $region14: #{transformer_forward.1} parent=11 // pred_check_branch
        %622 = sbr.rel (%p620) target = $region16
      $region15: #{transformer_forward.1} parent=11 // pred_region
        %s623 = smul.u32 2, %s34
        %p624 = scmp.lt.s32.totalorder %s623, 1
        %s625 = scalar_select %p624, %s623, 1
        %s626 = smul.addr %s625, 8
        %s627 = scalar_lea.vmem %s0, %s626
        %s628 = smul.u32 2, %s34
      $region16: #{transformer_forward.1} parent=11 // pred_fallthru
        _
      // Predicated region
      $region17: #{transformer_forward.1} parent=11 // pred_check
        %p629 = pneg %p89
      $region18: #{transformer_forward.1} parent=11 // pred_check_branch
        %631 = sbr.rel (%p629) target = $region20
      $region19: #{transformer_forward.1} parent=11 // pred_region
        %s632 = smul.u32 2, %s34
        %p633 = scmp.lt.s32.totalorder %s632, 1
        %s634 = scalar_select %p633, %s632, 1
        %s635 = smul.addr %s634, 8
        %s636 = scalar_lea.vmem %s1, %s635
        %s637 = smul.u32 2, %s34
      $region20: #{transformer_forward.1} parent=11 // pred_fallthru
        _
      // Predicated region
      $region21: #{transformer_forward.1} parent=11 // pred_check
        %p638 = pneg %p516
      $region22: #{transformer_forward.1} parent=11 // pred_check_branch
        %640 = sbr.rel (%p638) target = $region24
      $region23: #{transformer_forward.1} parent=11 // pred_region
        _
      $region24: #{transformer_forward.1} parent=11 // pred_fallthru
        _
      // Predicated region
      $region25: #{transformer_forward.1} parent=11 // pred_check
        %p641 = pneg %p537
      $region26: #{transformer_forward.1} parent=11 // pred_check_branch
        %643 = sbr.rel (%p641) target = $region28
      $region27: #{transformer_forward.1} parent=11 // pred_region
        _
      $region28: #{transformer_forward.1} parent=11 // pred_fallthru
        _
      // Predicated region
      $region29: #{transformer_forward.1} parent=11 // pred_check
        %p644 = pneg %p558
      $region30: #{transformer_forward.1} parent=11 // pred_check_branch
        %646 = sbr.rel (%p644) target = $region32
      $region31: #{transformer_forward.1} parent=11 // pred_region
        _
      $region32: #{transformer_forward.1} parent=11 // pred_fallthru
        _
      // Predicated region
      $region33: #{transformer_forward.1} parent=11 // pred_check
        %p647 = pneg %p579
      $region34: #{transformer_forward.1} parent=11 // pred_check_branch
        %649 = sbr.rel (%p647) target = $region36
      $region35: #{transformer_forward.1} parent=11 // pred_region
        _
      $region36: #{transformer_forward.1} parent=11 // pred_fallthru
        _
    $region12: #{transformer_forward.1} parent=5 // pred_fallthru
      _
    %p650 = scmp.lt.s32.totalorder %s25, 4
    // Predicated region
    $region37: #{transformer_forward.1} parent=5 // pred_check
      %p651 = pneg %p650
    $region38: #{transformer_forward.1} parent=5 // pred_check_branch
      %653 = sbr.rel (%p651) target = $region40
    $region39: #{transformer_forward.1} parent=5 // pred_region
      // Predicated region
      $region41: #{transformer_forward.1} parent=39 // pred_check
        %p654 = pneg %p113
      $region42: #{transformer_forward.1} parent=39 // pred_check_branch
        %656 = sbr.rel (%p654) target = $region44
      $region43: #{transformer_forward.1} parent=39 // pred_region
        %p657 = scmp.lt.s32.totalorder %s33, 1
        %s658 = scalar_select %p657, %s33, 1
        %p659 = scmp.lt.s32.totalorder %s658, 1
        %s660 = scalar_select %p659, %s658, 1
        %s661 = smul.addr %s660, 16
        %s662 = smul.addr %s661, 4
        %s663 = scalar_lea.vmem %s2, %s662
        %p664 = scmp.lt.s32.totalorder %s33, 1
        %s665 = scalar_select %p664, %s33, 1
      $region44: #{transformer_forward.1} parent=39 // pred_fallthru
        _
      // Predicated region
      $region45: #{transformer_forward.1} parent=39 // pred_check
        %p666 = pneg %p143
      $region46: #{transformer_forward.1} parent=39 // pred_check_branch
        %668 = sbr.rel (%p666) target = $region48
      $region47: #{transformer_forward.1} parent=39 // pred_region
        %p669 = scmp.lt.s32.totalorder %s33, 1
        %s670 = scalar_select %p669, %s33, 1
        %p671 = scmp.lt.s32.totalorder %s670, 1
        %s672 = scalar_select %p671, %s670, 1
        %s673 = smul.addr %s672, 8
        %s674 = smul.addr %s673, 4
        %s675 = scalar_lea.vmem %s3, %s674
        %p676 = scmp.lt.s32.totalorder %s33, 1
        %s677 = scalar_select %p676, %s33, 1
      $region48: #{transformer_forward.1} parent=39 // pred_fallthru
        _
      // Predicated region
      $region49: #{transformer_forward.1} parent=39 // pred_check
        %p678 = pneg %p173
      $region50: #{transformer_forward.1} parent=39 // pred_check_branch
        %680 = sbr.rel (%p678) target = $region52
      $region51: #{transformer_forward.1} parent=39 // pred_region
        %p681 = scmp.lt.s32.totalorder %s33, 1
        %s682 = scalar_select %p681, %s33, 1
        %p683 = scmp.lt.s32.totalorder %s682, 1
        %s684 = scalar_select %p683, %s682, 1
        %s685 = smul.addr %s684, 8
        %s686 = smul.addr %s685, 4
        %s687 = scalar_lea.vmem %s4, %s686
        %p688 = scmp.lt.s32.totalorder %s33, 1
        %s689 = scalar_select %p688, %s33, 1
      $region52: #{transformer_forward.1} parent=39 // pred_fallthru
        _
      // Predicated region
      $region53: #{transformer_forward.1} parent=39 // pred_check
        %p690 = pneg %p203
      $region54: #{transformer_forward.1} parent=39 // pred_check_branch
        %692 = sbr.rel (%p690) target = $region56
      $region55: #{transformer_forward.1} parent=39 // pred_region
        %p693 = scmp.lt.s32.totalorder %s33, 1
        %s694 = scalar_select %p693, %s33, 1
        %p695 = scmp.lt.s32.totalorder %s694, 1
        %s696 = scalar_select %p695, %s694, 1
        %s697 = smul.addr %s696, 16
        %s698 = smul.addr %s697, 4
        %s699 = scalar_lea.vmem %s5, %s698
        %p700 = scmp.lt.s32.totalorder %s33, 1
        %s701 = scalar_select %p700, %s33, 1
      $region56: #{transformer_forward.1} parent=39 // pred_fallthru
        _
      // Predicated region
      $region57: #{transformer_forward.1} parent=39 // pred_check
        %p702 = pneg %p233
      $region58: #{transformer_forward.1} parent=39 // pred_check_branch
        %704 = sbr.rel (%p702) target = $region60
      $region59: #{transformer_forward.1} parent=39 // pred_region
        %p705 = scmp.lt.s32.totalorder %s33, 1
        %s706 = scalar_select %p705, %s33, 1
        %p707 = scmp.lt.s32.totalorder %s706, 1
        %s708 = scalar_select %p707, %s706, 1
        %s709 = smul.addr %s708, 2
        %s710 = smul.addr %s709, 8
        %s711 = scalar_lea.vmem %s6, %s710
        %p712 = scmp.lt.s32.totalorder %s33, 1
        %s713 = scalar_select %p712, %s33, 1
      $region60: #{transformer_forward.1} parent=39 // pred_fallthru
        _
      // Predicated region
      $region61: #{transformer_forward.1} parent=39 // pred_check
        %p714 = pneg %p265
      $region62: #{transformer_forward.1} parent=39 // pred_check_branch
        %716 = sbr.rel (%p714) target = $region64
      $region63: #{transformer_forward.1} parent=39 // pred_region
        %s717 = ssub.s32 %s33, 2
        %p718 = scmp.gt.s32.totalorder %s717, 0
        %s719 = scalar_select %p718, %s717, 0
        %p720 = scmp.lt.s32.totalorder %s719, 1
        %s721 = scalar_select %p720, %s719, 1
        %s722 = smul.addr %s721, 16
        %s723 = smul.addr %s722, 4
        %s724 = scalar_lea.vmem %s7, %s723
        %s725 = ssub.s32 %s33, 2
        %p726 = scmp.gt.s32.totalorder %s725, 0
        %s727 = scalar_select %p726, %s725, 0
      $region64: #{transformer_forward.1} parent=39 // pred_fallthru
        _
      // Predicated region
      $region65: #{transformer_forward.1} parent=39 // pred_check
        %p728 = pneg %p297
      $region66: #{transformer_forward.1} parent=39 // pred_check_branch
        %730 = sbr.rel (%p728) target = $region68
      $region67: #{transformer_forward.1} parent=39 // pred_region
        %s731 = ssub.s32 %s33, 2
        %p732 = scmp.gt.s32.totalorder %s731, 0
        %s733 = scalar_select %p732, %s731, 0
        %p734 = scmp.lt.s32.totalorder %s733, 1
        %s735 = scalar_select %p734, %s733, 1
        %s736 = smul.addr %s735, 8
        %s737 = smul.addr %s736, 4
        %s738 = scalar_lea.vmem %s8, %s737
        %s739 = ssub.s32 %s33, 2
        %p740 = scmp.gt.s32.totalorder %s739, 0
        %s741 = scalar_select %p740, %s739, 0
      $region68: #{transformer_forward.1} parent=39 // pred_fallthru
        _
      // Predicated region
      $region69: #{transformer_forward.1} parent=39 // pred_check
        %p742 = pneg %p329
      $region70: #{transformer_forward.1} parent=39 // pred_check_branch
        %744 = sbr.rel (%p742) target = $region72
      $region71: #{transformer_forward.1} parent=39 // pred_region
        %s745 = ssub.s32 %s33, 2
        %p746 = scmp.gt.s32.totalorder %s745, 0
        %s747 = scalar_select %p746, %s745, 0
        %p748 = scmp.lt.s32.totalorder %s747, 1
        %s749 = scalar_select %p748, %s747, 1
        %s750 = smul.addr %s749, 8
        %s751 = smul.addr %s750, 4
        %s752 = scalar_lea.vmem %s9, %s751
        %s753 = ssub.s32 %s33, 2
        %p754 = scmp.gt.s32.totalorder %s753, 0
        %s755 = scalar_select %p754, %s753, 0
      $region72: #{transformer_forward.1} parent=39 // pred_fallthru
        _
      // Predicated region
      $region73: #{transformer_forward.1} parent=39 // pred_check
        %p756 = pneg %p361
      $region74: #{transformer_forward.1} parent=39 // pred_check_branch
        %758 = sbr.rel (%p756) target = $region76
      $region75: #{transformer_forward.1} parent=39 // pred_region
        %s759 = ssub.s32 %s33, 2
        %p760 = scmp.gt.s32.totalorder %s759, 0
        %s761 = scalar_select %p760, %s759, 0
        %p762 = scmp.lt.s32.totalorder %s761, 1
        %s763 = scalar_select %p762, %s761, 1
        %s764 = smul.addr %s763, 8
        %s765 = smul.addr %s764, 4
        %s766 = scalar_lea.vmem %s10, %s765
        %s767 = ssub.s32 %s33, 2
        %p768 = scmp.gt.s32.totalorder %s767, 0
        %s769 = scalar_select %p768, %s767, 0
      $region76: #{transformer_forward.1} parent=39 // pred_fallthru
        _
      // Predicated region
      $region77: #{transformer_forward.1} parent=39 // pred_check
        %p770 = pneg %p393
      $region78: #{transformer_forward.1} parent=39 // pred_check_branch
        %772 = sbr.rel (%p770) target = $region80
      $region79: #{transformer_forward.1} parent=39 // pred_region
        %s773 = ssub.s32 %s33, 2
        %p774 = scmp.gt.s32.totalorder %s773, 0
        %s775 = scalar_select %p774, %s773, 0
        %p776 = scmp.lt.s32.totalorder %s775, 1
        %s777 = scalar_select %p776, %s775, 1
        %s778 = smul.addr %s777, 8
        %s779 = smul.addr %s778, 4
        %s780 = scalar_lea.vmem %s11, %s779
        %s781 = ssub.s32 %s33, 2
        %p782 = scmp.gt.s32.totalorder %s781, 0
        %s783 = scalar_select %p782, %s781, 0
      $region80: #{transformer_forward.1} parent=39 // pred_fallthru
        _
      // Predicated region
      $region81: #{transformer_forward.1} parent=39 // pred_check
        %p784 = pneg %p425
      $region82: #{transformer_forward.1} parent=39 // pred_check_branch
        %786 = sbr.rel (%p784) target = $region84
      $region83: #{transformer_forward.1} parent=39 // pred_region
        %s787 = ssub.s32 %s33, 2
        %p788 = scmp.gt.s32.totalorder %s787, 0
        %s789 = scalar_select %p788, %s787, 0
        %p790 = scmp.lt.s32.totalorder %s789, 1
        %s791 = scalar_select %p790, %s789, 1
        %s792 = smul.addr %s791, 8
        %s793 = smul.addr %s792, 4
        %s794 = scalar_lea.vmem %s12, %s793
        %s795 = ssub.s32 %s33, 2
        %p796 = scmp.gt.s32.totalorder %s795, 0
        %s797 = scalar_select %p796, %s795, 0
      $region84: #{transformer_forward.1} parent=39 // pred_fallthru
        _
      // Predicated region
      $region85: #{transformer_forward.1} parent=39 // pred_check
        %p798 = pneg %p457
      $region86: #{transformer_forward.1} parent=39 // pred_check_branch
        %800 = sbr.rel (%p798) target = $region88
      $region87: #{transformer_forward.1} parent=39 // pred_region
        %s801 = ssub.s32 %s33, 2
        %p802 = scmp.gt.s32.totalorder %s801, 0
        %s803 = scalar_select %p802, %s801, 0
        %p804 = scmp.lt.s32.totalorder %s803, 1
        %s805 = scalar_select %p804, %s803, 1
        %s806 = smul.addr %s805, 16
        %s807 = smul.addr %s806, 4
        %s808 = scalar_lea.vmem %s13, %s807
        %s809 = ssub.s32 %s33, 2
        %p810 = scmp.gt.s32.totalorder %s809, 0
        %s811 = scalar_select %p810, %s809, 0
      $region88: #{transformer_forward.1} parent=39 // pred_fallthru
        _
      // Predicated region
      $region89: #{transformer_forward.1} parent=39 // pred_check
        %p812 = pneg %p489
      $region90: #{transformer_forward.1} parent=39 // pred_check_branch
        %814 = sbr.rel (%p812) target = $region92
      $region91: #{transformer_forward.1} parent=39 // pred_region
        %s815 = ssub.s32 %s33, 2
        %p816 = scmp.gt.s32.totalorder %s815, 0
        %s817 = scalar_select %p816, %s815, 0
        %p818 = scmp.lt.s32.totalorder %s817, 1
        %s819 = scalar_select %p818, %s817, 1
        %s820 = smul.addr %s819, 4
        %s821 = smul.addr %s820, 8
        %s822 = scalar_lea.vmem %s14, %s821
        %s823 = ssub.s32 %s33, 2
        %p824 = scmp.gt.s32.totalorder %s823, 0
        %s825 = scalar_select %p824, %s823, 0
      $region92: #{transformer_forward.1} parent=39 // pred_fallthru
        _
    $region40: #{transformer_forward.1} parent=5 // pred_fallthru
      _
    %p826 = scmp.le.s32.totalorder 1, %s25
    %p827 = scmp.lt.s32.totalorder %s25, 5
    %p828 = pnand %p826, %p827
    %p829 = pneg %p828
    // Predicated region
    $region93: #{transformer_forward.1} parent=5 // pred_check
      _
    $region94: #{transformer_forward.1} parent=5 // pred_check_branch
      %831 = sbr.rel (%p828) target = $region96
    $region95: #{transformer_forward.1} parent=5 // pred_region
      %s832 = ssub.s32 %s25, 1
      %s833 = smul.u32 2, %s34
      %p834 = scmp.lt.s32.totalorder %s833, 1
      %s835 = scalar_select %p834, %s833, 1
      %s836 = smul.addr %s835, 8
      %s837 = scalar_lea.vmem %s0, %s836
      %p838 = pneg %p63
      %p839 = pneg %p60
      %s840 = smul.u32 2, %s34
      %p841 = scmp.lt.s32.totalorder %s840, 1
      %s842 = scalar_select %p841, %s840, 1
      %s843 = smul.addr %s842, 8
      %s844 = scalar_lea.vmem %s1, %s843
      %p845 = pneg %p89
      %p846 = pneg %p86
      %p847 = scmp.lt.s32.totalorder %s35, 1
      %s848 = scalar_select %p847, %s35, 1
      %p849 = scmp.lt.s32.totalorder %s848, 1
      %s850 = scalar_select %p849, %s848, 1
      %s851 = smul.addr %s850, 16
      %s852 = smul.addr %s851, 4
      %s853 = scalar_lea.vmem %s2, %s852
      %p854 = pneg %p119
      %p855 = pneg %p116
      %p856 = scmp.lt.s32.totalorder %s35, 1
      %s857 = scalar_select %p856, %s35, 1
      %p858 = scmp.lt.s32.totalorder %s857, 1
      %s859 = scalar_select %p858, %s857, 1
      %s860 = smul.addr %s859, 8
      %s861 = smul.addr %s860, 4
      %s862 = scalar_lea.vmem %s3, %s861
      %p863 = pneg %p149
      %p864 = pneg %p146
      %p865 = scmp.lt.s32.totalorder %s35, 1
      %s866 = scalar_select %p865, %s35, 1
      %p867 = scmp.lt.s32.totalorder %s866, 1
      %s868 = scalar_select %p867, %s866, 1
      %s869 = smul.addr %s868, 8
      %s870 = smul.addr %s869, 4
      %s871 = scalar_lea.vmem %s4, %s870
      %p872 = pneg %p179
      %p873 = pneg %p176
      %p874 = scmp.lt.s32.totalorder %s35, 1
      %s875 = scalar_select %p874, %s35, 1
      %p876 = scmp.lt.s32.totalorder %s875, 1
      %s877 = scalar_select %p876, %s875, 1
      %s878 = smul.addr %s877, 16
      %s879 = smul.addr %s878, 4
      %s880 = scalar_lea.vmem %s5, %s879
      %p881 = pneg %p209
      %p882 = pneg %p206
      %p883 = scmp.lt.s32.totalorder %s35, 1
      %s884 = scalar_select %p883, %s35, 1
      %p885 = scmp.lt.s32.totalorder %s884, 1
      %s886 = scalar_select %p885, %s884, 1
      %s887 = smul.addr %s886, 2
      %s888 = smul.addr %s887, 8
      %s889 = scalar_lea.vmem %s6, %s888
      %p890 = pneg %p239
      %p891 = pneg %p236
      %s892 = ssub.s32 %s35, 2
      %p893 = scmp.gt.s32.totalorder %s892, 0
      %s894 = scalar_select %p893, %s892, 0
      %p895 = scmp.lt.s32.totalorder %s894, 1
      %s896 = scalar_select %p895, %s894, 1
      %s897 = smul.addr %s896, 16
      %s898 = smul.addr %s897, 4
      %s899 = scalar_lea.vmem %s7, %s898
      %p900 = pneg %p271
      %p901 = pneg %p268
      %s902 = ssub.s32 %s35, 2
      %p903 = scmp.gt.s32.totalorder %s902, 0
      %s904 = scalar_select %p903, %s902, 0
      %p905 = scmp.lt.s32.totalorder %s904, 1
      %s906 = scalar_select %p905, %s904, 1
      %s907 = smul.addr %s906, 8
      %s908 = smul.addr %s907, 4
      %s909 = scalar_lea.vmem %s8, %s908
      %p910 = pneg %p303
      %p911 = pneg %p300
      %s912 = ssub.s32 %s35, 2
      %p913 = scmp.gt.s32.totalorder %s912, 0
      %s914 = scalar_select %p913, %s912, 0
      %p915 = scmp.lt.s32.totalorder %s914, 1
      %s916 = scalar_select %p915, %s914, 1
      %s917 = smul.addr %s916, 8
      %s918 = smul.addr %s917, 4
      %s919 = scalar_lea.vmem %s9, %s918
      %p920 = pneg %p335
      %p921 = pneg %p332
      %s922 = ssub.s32 %s35, 2
      %p923 = scmp.gt.s32.totalorder %s922, 0
      %s924 = scalar_select %p923, %s922, 0
      %p925 = scmp.lt.s32.totalorder %s924, 1
      %s926 = scalar_select %p925, %s924, 1
      %s927 = smul.addr %s926, 8
      %s928 = smul.addr %s927, 4
      %s929 = scalar_lea.vmem %s10, %s928
      %p930 = pneg %p367
      %p931 = pneg %p364
      %s932 = ssub.s32 %s35, 2
      %p933 = scmp.gt.s32.totalorder %s932, 0
      %s934 = scalar_select %p933, %s932, 0
      %p935 = scmp.lt.s32.totalorder %s934, 1
      %s936 = scalar_select %p935, %s934, 1
      %s937 = smul.addr %s936, 8
      %s938 = smul.addr %s937, 4
      %s939 = scalar_lea.vmem %s11, %s938
      %p940 = pneg %p399
      %p941 = pneg %p396
      %s942 = ssub.s32 %s35, 2
      %p943 = scmp.gt.s32.totalorder %s942, 0
      %s944 = scalar_select %p943, %s942, 0
      %p945 = scmp.lt.s32.totalorder %s944, 1
      %s946 = scalar_select %p945, %s944, 1
      %s947 = smul.addr %s946, 8
      %s948 = smul.addr %s947, 4
      %s949 = scalar_lea.vmem %s12, %s948
      %p950 = pneg %p431
      %p951 = pneg %p428
      %s952 = ssub.s32 %s35, 2
      %p953 = scmp.gt.s32.totalorder %s952, 0
      %s954 = scalar_select %p953, %s952, 0
      %p955 = scmp.lt.s32.totalorder %s954, 1
      %s956 = scalar_select %p955, %s954, 1
      %s957 = smul.addr %s956, 16
      %s958 = smul.addr %s957, 4
      %s959 = scalar_lea.vmem %s13, %s958
      %p960 = pneg %p463
      %p961 = pneg %p460
      %s962 = ssub.s32 %s35, 2
      %p963 = scmp.gt.s32.totalorder %s962, 0
      %s964 = scalar_select %p963, %s962, 0
      %p965 = scmp.lt.s32.totalorder %s964, 1
      %s966 = scalar_select %p965, %s964, 1
      %s967 = smul.addr %s966, 4
      %s968 = smul.addr %s967, 8
      %s969 = scalar_lea.vmem %s14, %s968
      %p970 = pneg %p495
      %p971 = pneg %p492
      %p972 = pneg %p516
      %p973 = pneg %p513
      %p974 = pneg %p537
      %p975 = pneg %p534
      %p976 = pneg %p558
      %p977 = pneg %p555
      %p978 = pneg %p579
      %p979 = pneg %p576
      %p980 = pneg %p605
      %p981 = pneg %p602
      %s982 = smul.u32 2, %s34
      %p983 = scmp.lt.s32.totalorder %s982, 1
      %s984 = scalar_select %p983, %s982, 1
      %s985 = smul.addr %s984, 8
      %s986 = scalar_lea.vmem %s19, %s985
      %s987 = smul.u32 2, %s34
      %p988 = scmp.lt.s32.totalorder %s987, 1
      %s989 = scalar_select %p988, %s987, 1
      %s990 = smul.addr %s989, 8
      %s991 = scalar_lea.vmem %s0, %s990
      %s992 = smul.u32 2, %s34
      %s993 = smul.u32 2, %s34
      %p994 = scmp.lt.s32.totalorder %s993, 1
      %s995 = scalar_select %p994, %s993, 1
      %s996 = smul.addr %s995, 8
      %s997 = scalar_lea.vmem %s1, %s996
      %s998 = smul.u32 2, %s34
      %p999 = scmp.lt.s32.totalorder %s35, 1
      %s1000 = scalar_select %p999, %s35, 1
      %p1001 = scmp.lt.s32.totalorder %s1000, 1
      %s1002 = scalar_select %p1001, %s1000, 1
      %s1003 = smul.addr %s1002, 16
      %s1004 = smul.addr %s1003, 4
      %s1005 = scalar_lea.vmem %s2, %s1004
      %p1006 = scmp.lt.s32.totalorder %s35, 1
      %s1007 = scalar_select %p1006, %s35, 1
      %p1008 = scmp.lt.s32.totalorder %s35, 1
      %s1009 = scalar_select %p1008, %s35, 1
      %p1010 = scmp.lt.s32.totalorder %s1009, 1
      %s1011 = scalar_select %p1010, %s1009, 1
      %s1012 = smul.addr %s1011, 8
      %s1013 = smul.addr %s1012, 4
      %s1014 = scalar_lea.vmem %s3, %s1013
      %p1015 = scmp.lt.s32.totalorder %s35, 1
      %s1016 = scalar_select %p1015, %s35, 1
      %p1017 = scmp.lt.s32.totalorder %s35, 1
      %s1018 = scalar_select %p1017, %s35, 1
      %p1019 = scmp.lt.s32.totalorder %s1018, 1
      %s1020 = scalar_select %p1019, %s1018, 1
      %s1021 = smul.addr %s1020, 8
      %s1022 = smul.addr %s1021, 4
      %s1023 = scalar_lea.vmem %s4, %s1022
      %p1024 = scmp.lt.s32.totalorder %s35, 1
      %s1025 = scalar_select %p1024, %s35, 1
      %p1026 = scmp.lt.s32.totalorder %s35, 1
      %s1027 = scalar_select %p1026, %s35, 1
      %p1028 = scmp.lt.s32.totalorder %s1027, 1
      %s1029 = scalar_select %p1028, %s1027, 1
      %s1030 = smul.addr %s1029, 16
      %s1031 = smul.addr %s1030, 4
      %s1032 = scalar_lea.vmem %s5, %s1031
      %p1033 = scmp.lt.s32.totalorder %s35, 1
      %s1034 = scalar_select %p1033, %s35, 1
      %p1035 = scmp.lt.s32.totalorder %s35, 1
      %s1036 = scalar_select %p1035, %s35, 1
      %p1037 = scmp.lt.s32.totalorder %s1036, 1
      %s1038 = scalar_select %p1037, %s1036, 1
      %s1039 = smul.addr %s1038, 2
      %s1040 = smul.addr %s1039, 8
      %s1041 = scalar_lea.vmem %s6, %s1040
      %p1042 = scmp.lt.s32.totalorder %s35, 1
      %s1043 = scalar_select %p1042, %s35, 1
      %s1044 = ssub.s32 %s35, 2
      %p1045 = scmp.gt.s32.totalorder %s1044, 0
      %s1046 = scalar_select %p1045, %s1044, 0
      %p1047 = scmp.lt.s32.totalorder %s1046, 1
      %s1048 = scalar_select %p1047, %s1046, 1
      %s1049 = smul.addr %s1048, 16
      %s1050 = smul.addr %s1049, 4
      %s1051 = scalar_lea.vmem %s7, %s1050
      %s1052 = ssub.s32 %s35, 2
      %p1053 = scmp.gt.s32.totalorder %s1052, 0
      %s1054 = scalar_select %p1053, %s1052, 0
      %s1055 = ssub.s32 %s35, 2
      %p1056 = scmp.gt.s32.totalorder %s1055, 0
      %s1057 = scalar_select %p1056, %s1055, 0
      %p1058 = scmp.lt.s32.totalorder %s1057, 1
      %s1059 = scalar_select %p1058, %s1057, 1
      %s1060 = smul.addr %s1059, 8
      %s1061 = smul.addr %s1060, 4
      %s1062 = scalar_lea.vmem %s8, %s1061
      %s1063 = ssub.s32 %s35, 2
      %p1064 = scmp.gt.s32.totalorder %s1063, 0
      %s1065 = scalar_select %p1064, %s1063, 0
      %s1066 = ssub.s32 %s35, 2
      %p1067 = scmp.gt.s32.totalorder %s1066, 0
      %s1068 = scalar_select %p1067, %s1066, 0
      %p1069 = scmp.lt.s32.totalorder %s1068, 1
      %s1070 = scalar_select %p1069, %s1068, 1
      %s1071 = smul.addr %s1070, 8
      %s1072 = smul.addr %s1071, 4
      %s1073 = scalar_lea.vmem %s9, %s1072
      %s1074 = ssub.s32 %s35, 2
      %p1075 = scmp.gt.s32.totalorder %s1074, 0
      %s1076 = scalar_select %p1075, %s1074, 0
      %s1077 = ssub.s32 %s35, 2
      %p1078 = scmp.gt.s32.totalorder %s1077, 0
      %s1079 = scalar_select %p1078, %s1077, 0
      %p1080 = scmp.lt.s32.totalorder %s1079, 1
      %s1081 = scalar_select %p1080, %s1079, 1
      %s1082 = smul.addr %s1081, 8
      %s1083 = smul.addr %s1082, 4
      %s1084 = scalar_lea.vmem %s10, %s1083
      %s1085 = ssub.s32 %s35, 2
      %p1086 = scmp.gt.s32.totalorder %s1085, 0
      %s1087 = scalar_select %p1086, %s1085, 0
      %s1088 = ssub.s32 %s35, 2
      %p1089 = scmp.gt.s32.totalorder %s1088, 0
      %s1090 = scalar_select %p1089, %s1088, 0
      %p1091 = scmp.lt.s32.totalorder %s1090, 1
      %s1092 = scalar_select %p1091, %s1090, 1
      %s1093 = smul.addr %s1092, 8
      %s1094 = smul.addr %s1093, 4
      %s1095 = scalar_lea.vmem %s11, %s1094
      %s1096 = ssub.s32 %s35, 2
      %p1097 = scmp.gt.s32.totalorder %s1096, 0
      %s1098 = scalar_select %p1097, %s1096, 0
      %s1099 = ssub.s32 %s35, 2
      %p1100 = scmp.gt.s32.totalorder %s1099, 0
      %s1101 = scalar_select %p1100, %s1099, 0
      %p1102 = scmp.lt.s32.totalorder %s1101, 1
      %s1103 = scalar_select %p1102, %s1101, 1
      %s1104 = smul.addr %s1103, 8
      %s1105 = smul.addr %s1104, 4
      %s1106 = scalar_lea.vmem %s12, %s1105
      %s1107 = ssub.s32 %s35, 2
      %p1108 = scmp.gt.s32.totalorder %s1107, 0
      %s1109 = scalar_select %p1108, %s1107, 0
      %s1110 = ssub.s32 %s35, 2
      %p1111 = scmp.gt.s32.totalorder %s1110, 0
      %s1112 = scalar_select %p1111, %s1110, 0
      %p1113 = scmp.lt.s32.totalorder %s1112, 1
      %s1114 = scalar_select %p1113, %s1112, 1
      %s1115 = smul.addr %s1114, 16
      %s1116 = smul.addr %s1115, 4
      %s1117 = scalar_lea.vmem %s13, %s1116
      %s1118 = ssub.s32 %s35, 2
      %p1119 = scmp.gt.s32.totalorder %s1118, 0
      %s1120 = scalar_select %p1119, %s1118, 0
      %s1121 = ssub.s32 %s35, 2
      %p1122 = scmp.gt.s32.totalorder %s1121, 0
      %s1123 = scalar_select %p1122, %s1121, 0
      %p1124 = scmp.lt.s32.totalorder %s1123, 1
      %s1125 = scalar_select %p1124, %s1123, 1
      %s1126 = smul.addr %s1125, 4
      %s1127 = smul.addr %s1126, 8
      %s1128 = scalar_lea.vmem %s14, %s1127
      %s1129 = ssub.s32 %s35, 2
      %p1130 = scmp.gt.s32.totalorder %s1129, 0
      %s1131 = scalar_select %p1130, %s1129, 0
      %s1132 = smul.u32 2, %s34
      %p1133 = scmp.lt.s32.totalorder %s1132, 1
      %s1134 = scalar_select %p1133, %s1132, 1
      %s1135 = smul.addr %s1134, 8
      %s1136 = scalar_lea.vmem %s19, %s1135
      %s1137 = smul.u32 2, %s34
      %p1139 = scmp.eq.s32.totalorder %s35, 0
      // Predicated region
      $region97: #{transformer_forward.1} parent=95 // pred_check
        %p1140 = pneg %p1139
      $region98: #{transformer_forward.1} parent=95 // pred_check_branch
        %1142 = sbr.rel (%p1140) target = $region100
      $region99: #{transformer_forward.1} parent=95 // pred_region
        %v1143 = vld [vmem:[%s991] sm:$0xff]
        %v1144 = vld [vmem:[%s991 + $0x8] sm:$0xff]
        %vm1145 = vcmask 523264
        %1146 = vst.msk [vmem:[#allocation2] sm:$0xff] %vm1145, %v1143
        %1147 = vst.msk [vmem:[#allocation2 + $0x8] sm:$0xff] %vm1145, %v1144
        %v1148 = vld [vmem:[%s997] sm:$0xff]
        %v1149 = vld [vmem:[%s997 + $0x8] sm:$0xff]
        %1150 = vst.msk [vmem:[#allocation4] sm:$0xff] %vm1145, %v1148
        %1151 = vst.msk [vmem:[#allocation4 + $0x8] sm:$0xff] %vm1145, %v1149
      $region100: #{transformer_forward.1} parent=95 // pred_fallthru
        _
      %p1152 = scmp.lt.s32.totalorder %s35, 2
      // Predicated region
      $region101: #{transformer_forward.1} parent=95 // pred_check
        %p1153 = pneg %p1152
      $region102: #{transformer_forward.1} parent=95 // pred_check_branch
        %1155 = sbr.rel (%p1153) target = $region104
      $region103: #{transformer_forward.1} parent=95 // pred_region
        %v1156 = vld [vmem:[#allocation2] sm:$0xff]
        %v1157 = vld [vmem:[#allocation2 + $0x8] sm:$0xff]
        %v1158 = vld [vmem:[%s1041] sm:$0xff]
        %v1159 = vld [vmem:[%s1041 + $0x8] sm:$0xff]
        %v1160 = vpack.c.bf16 %v1157, %v1156
        %v1161 = vld [vmem:[%s1005] sm:$0xff]
        %v1162 = vld [vmem:[%s1005 + $0x8] sm:$0xff]
        %v1163 = vld [vmem:[%s1005 + $0x10] sm:$0xff]
        %v1164 = vld [vmem:[%s1005 + $0x18] sm:$0xff]
        %v1165 = vld [vmem:[%s1005 + $0x20] sm:$0xff]
        %v1166 = vld [vmem:[%s1005 + $0x28] sm:$0xff]
        %v1167 = vld [vmem:[%s1005 + $0x30] sm:$0xff]
        %v1168 = vld [vmem:[%s1005 + $0x38] sm:$0xff]
        %v1169 = vlaneseq
        %v1170 = vshrl.u32 %v1169, 7
        %v1171 = vsub.s32 0, %v1170
        %v1172 = vrot.slane %v1158, %v1171
        %v1173 = vlaneseq
        %v1174 = vshrl.u32 %v1173, 7
        %v1175 = vsub.s32 0, %v1174
        %v1176 = vrot.slane %v1159, %v1175
        %v1185 = vunpack.c.l.b16 %v1161
        %v1186 = vunpack.c.h.b16 %v1161
        %v1187 = vunpack.c.l.b16 %v1162
        %v1188 = vunpack.c.h.b16 %v1162
        %v1189 = vunpack.c.l.b16 %v1163
        %v1190 = vunpack.c.h.b16 %v1163
        %v1191 = vunpack.c.l.b16 %v1164
        %v1192 = vunpack.c.h.b16 %v1164
        %v1193 = vunpack.c.l.b16 %v1165
        %v1194 = vunpack.c.h.b16 %v1165
        %v1195 = vunpack.c.l.b16 %v1166
        %v1196 = vunpack.c.h.b16 %v1166
        %v1197 = vunpack.c.l.b16 %v1167
        %v1198 = vunpack.c.h.b16 %v1167
        %v1199 = vunpack.c.l.b16 %v1168
        %v1200 = vunpack.c.h.b16 %v1168
        %v1201 = vpack.c.b16 %v1187, %v1185
        %v1202 = vpack.c.b16 %v1188, %v1186
        %v1203 = vpack.c.b16 %v1191, %v1189
        %v1204 = vpack.c.b16 %v1192, %v1190
        %v1205 = vpack.c.b16 %v1195, %v1193
        %v1206 = vpack.c.b16 %v1196, %v1194
        %v1207 = vpack.c.b16 %v1199, %v1197
        %v1208 = vpack.c.b16 %v1200, %v1198
        %vm1217 = vcmask 523264
        %v1219 = vsel %vm1217, %v1160, 0
        %1221 = vmatprep.subr.bf16.mxu0 %v1202
        %1222 = vmatpush1.bf16.msra.mxu0 %v1201
        %1223 = vmatprep.subr.bf16.mxu0 %v1204
        %1224 = vmatpush1.bf16.msra.mxu0 %v1203
        %1225 = vmatprep.subr.bf16.mxu0 %v1206
        %1226 = vmatpush1.bf16.msra.mxu0 %v1205
        %1227 = vmatprep.subr.bf16.mxu0 %v1208
        %1228 = vmatpush1.bf16.msra.mxu0 %v1207
        %1229 = vmatprep.subr.bf16.mxu0 0
        %1230 = vmatpush1.bf16.msra.mxu0 0
        %1231 = vmatprep.subr.bf16.mxu0 0
        %1232 = vmatpush1.bf16.msra.mxu0 0
        %1233 = vmatprep.subr.bf16.mxu0 0
        %1234 = vmatpush1.bf16.msra.mxu0 0
        %1235 = vmatprep.subr.bf16.mxu0 0
        %1236 = vmatpush1.bf16.msra.mxu0 0
        %1237 = vmatprep.subr.bf16.mxu0 0
        %1238 = vmatpush1.bf16.msra.mxu0 0
        %1239 = vmatprep.subr.bf16.mxu0 0
        %1240 = vmatpush1.bf16.msra.mxu0 0
        %1241 = vmatprep.subr.bf16.mxu0 0
        %1242 = vmatpush1.bf16.msra.mxu0 0
        %1243 = vmatprep.subr.bf16.mxu0 0
        %1244 = vmatpush1.bf16.msra.mxu0 0
        %1245 = vmatprep.subr.bf16.mxu0 0
        %1246 = vmatpush1.bf16.msra.mxu0 0
        %1247 = vmatprep.subr.bf16.mxu0 0
        %1248 = vmatpush1.bf16.msra.mxu0 0
        %1249 = vmatprep.subr.bf16.mxu0 0
        %1250 = vmatpush1.bf16.msra.mxu0 0
        %1251 = vmatprep.subr.bf16.mxu0 0
        %1252 = vmatpush1.bf16.msra.mxu0 0
        %1253 = vmatprep.mubr.bf16.mxu0 0
        %1254 = vmatmul.mubr.bf16.gmra.mrb[0].mxu0 %v1219
        %v1255 = vpop.f32.mrb[0].mxu0
        %v1256 = vadd.f32 %v1172, %v1255
        %v1257 = vpop.f32.mrb[0].mxu0
        %v1258 = vadd.f32 %v1176, %v1257
        %v1259 = vpop.f32.mrb[0].mxu0
        %v1260 = vadd.f32 %v1172, %v1259
        %v1261 = vpop.f32.mrb[0].mxu0
        %v1262 = vadd.f32 %v1176, %v1261
        %1263 = vdwg.mxu0
        %v1264 = vpack.c.bf16 %v1256, %v1256
        %v1265 = vpack.c.bf16 %v1258, %v1258
        %1267 = vrot.lane.b32.xlu0 %v1264, 64
        %v1268 = vpop.permute.xlu0 %1267
        %vm1269 = vcmask 130048
        %v1271 = vsel %vm1269, %v1264, 0
        %v1274 = vsel %vm1269, %v1268, 0
        %1276 = vmatprep.subr.bf16.mxu0 0
        %1277 = vmatpush1.bf16.xpose.msra.mxu0 %v1274
        %1278 = vmatprep.subr.bf16.mxu0 0
        %1279 = vmatpush1.bf16.xpose.msra.mxu0 0
        %1280 = vmatprep.subr.bf16.mxu0 0
        %1281 = vmatpush1.bf16.xpose.msra.mxu0 0
        %1282 = vmatprep.subr.bf16.mxu0 0
        %1283 = vmatpush1.bf16.xpose.msra.mxu0 0
        %1284 = vmatprep.subr.bf16.mxu0 0
        %1285 = vmatpush1.bf16.xpose.msra.mxu0 0
        %1286 = vmatprep.subr.bf16.mxu0 0
        %1287 = vmatpush1.bf16.xpose.msra.mxu0 0
        %1288 = vmatprep.subr.bf16.mxu0 0
        %1289 = vmatpush1.bf16.xpose.msra.mxu0 0
        %1290 = vmatprep.subr.bf16.mxu0 0
        %1291 = vmatpush1.bf16.xpose.msra.mxu0 0
        %1292 = vmatprep.subr.bf16.mxu0 0
        %1293 = vmatpush1.bf16.xpose.msra.mxu0 0
        %1294 = vmatprep.subr.bf16.mxu0 0
        %1295 = vmatpush1.bf16.xpose.msra.mxu0 0
        %1296 = vmatprep.subr.bf16.mxu0 0
        %1297 = vmatpush1.bf16.xpose.msra.mxu0 0
        %1298 = vmatprep.subr.bf16.mxu0 0
        %1299 = vmatpush1.bf16.xpose.msra.mxu0 0
        %1300 = vmatprep.subr.bf16.mxu0 0
        %1301 = vmatpush1.bf16.xpose.msra.mxu0 0
        %1302 = vmatprep.subr.bf16.mxu0 0
        %1303 = vmatpush1.bf16.xpose.msra.mxu0 0
        %1304 = vmatprep.subr.bf16.mxu0 0
        %1305 = vmatpush1.bf16.xpose.msra.mxu0 0
        %1306 = vmatprep.subr.bf16.mxu0 0
        %1307 = vmatpush1.bf16.xpose.msra.mxu0 0
        %1308 = vmatprep.mubr.bf16.mxu0 0
        %1309 = vmatmul.mubr.bf16.gmra.mrb[0].mxu0 %v1271
        %v1310 = vpop.f32.mrb[0].mxu0
        %v1311 = vadd.f32 0.0, %v1310
        %v1312 = vpop.f32.mrb[0].mxu0
        %v1313 = vpop.f32.mrb[0].mxu0
        %v1314 = vpop.f32.mrb[0].mxu0
        %1315 = vdwg.mxu0
        %vm1316 = vcmask 64512
        %v1317 = vsel %vm1316, %v1311, -inf
        %1318 = vmax.xlane.f32.xlu0 %v1317
        %v1319 = vpop.xlane.xlu0 %1318
        %v1320 = vsub.f32 %v1311, %v1319
        %v1321 = vmul.f32 %v1320, 1.442695
        %v1322 = vpow.pop %v1321
        %v1323 = vsel %vm1316, %v1322, 0.0
        %1324 = vadd.xlane.f32.xlu0 %v1323
        %v1325 = vpop.xlane.xlu0 %1324
        %v1326 = vrcp.pop %v1325
        %v1327 = vmul.f32 %v1322, %v1326
        %v1328 = vpack.c.bf16 %v1327, %v1327
        %v1330 = vsel %vm1316, %v1328, 0
        %vm1332 = vcmask 1043456
        %v1334 = vsel %vm1332, %v1265, 0
        %1336 = vmatprep.subr.bf16.mxu0 0
        %1337 = vmatpush1.bf16.msra.mxu0 %v1334
        %1338 = vmatprep.subr.bf16.mxu0 0
        %1339 = vmatpush1.bf16.msra.mxu0 0
        %1340 = vmatprep.subr.bf16.mxu0 0
        %1341 = vmatpush1.bf16.msra.mxu0 0
        %1342 = vmatprep.subr.bf16.mxu0 0
        %1343 = vmatpush1.bf16.msra.mxu0 0
        %1344 = vmatprep.subr.bf16.mxu0 0
        %1345 = vmatpush1.bf16.msra.mxu0 0
        %1346 = vmatprep.subr.bf16.mxu0 0
        %1347 = vmatpush1.bf16.msra.mxu0 0
        %1348 = vmatprep.subr.bf16.mxu0 0
        %1349 = vmatpush1.bf16.msra.mxu0 0
        %1350 = vmatprep.subr.bf16.mxu0 0
        %1351 = vmatpush1.bf16.msra.mxu0 0
        %1352 = vmatprep.subr.bf16.mxu0 0
        %1353 = vmatpush1.bf16.msra.mxu0 0
        %1354 = vmatprep.subr.bf16.mxu0 0
        %1355 = vmatpush1.bf16.msra.mxu0 0
        %1356 = vmatprep.subr.bf16.mxu0 0
        %1357 = vmatpush1.bf16.msra.mxu0 0
        %1358 = vmatprep.subr.bf16.mxu0 0
        %1359 = vmatpush1.bf16.msra.mxu0 0
        %1360 = vmatprep.subr.bf16.mxu0 0
        %1361 = vmatpush1.bf16.msra.mxu0 0
        %1362 = vmatprep.subr.bf16.mxu0 0
        %1363 = vmatpush1.bf16.msra.mxu0 0
        %1364 = vmatprep.subr.bf16.mxu0 0
        %1365 = vmatpush1.bf16.msra.mxu0 0
        %1366 = vmatprep.subr.bf16.mxu0 0
        %1367 = vmatpush1.bf16.msra.mxu0 0
        %1368 = vmatprep.mubr.bf16.mxu0 0
        %1369 = vmatmul.mubr.bf16.gmra.mrb[0].mxu0 %v1330
        %v1370 = vpop.f32.mrb[0].mxu0
        %v1371 = vadd.f32 0.0, %v1370
        %v1372 = vpop.f32.mrb[0].mxu0
        %v1373 = vpop.f32.mrb[0].mxu0
        %v1374 = vpop.f32.mrb[0].mxu0
        %1375 = vdwg.mxu0
        %1376 = vrot.lane.b32.xlu0 %v1264, 112
        %v1377 = vpop.permute.xlu0 %1376
        %1378 = vrot.lane.b32.xlu0 %v1264, 48
        %v1379 = vpop.permute.xlu0 %1378
        %v1381 = vsel %vm1269, %v1377, 0
        %v1384 = vsel %vm1269, %v1379, 0
        %1386 = vmatprep.subr.bf16.mxu0 0
        %1387 = vmatpush1.bf16.xpose.msra.mxu0 %v1384
        %1388 = vmatprep.subr.bf16.mxu0 0
        %1389 = vmatpush1.bf16.xpose.msra.mxu0 0
        %1390 = vmatprep.subr.bf16.mxu0 0
        %1391 = vmatpush1.bf16.xpose.msra.mxu0 0
        %1392 = vmatprep.subr.bf16.mxu0 0
        %1393 = vmatpush1.bf16.xpose.msra.mxu0 0
        %1394 = vmatprep.subr.bf16.mxu0 0
        %1395 = vmatpush1.bf16.xpose.msra.mxu0 0
        %1396 = vmatprep.subr.bf16.mxu0 0
        %1397 = vmatpush1.bf16.xpose.msra.mxu0 0
        %1398 = vmatprep.subr.bf16.mxu0 0
        %1399 = vmatpush1.bf16.xpose.msra.mxu0 0
        %1400 = vmatprep.subr.bf16.mxu0 0
        %1401 = vmatpush1.bf16.xpose.msra.mxu0 0
        %1402 = vmatprep.subr.bf16.mxu0 0
        %1403 = vmatpush1.bf16.xpose.msra.mxu0 0
        %1404 = vmatprep.subr.bf16.mxu0 0
        %1405 = vmatpush1.bf16.xpose.msra.mxu0 0
        %1406 = vmatprep.subr.bf16.mxu0 0
        %1407 = vmatpush1.bf16.xpose.msra.mxu0 0
        %1408 = vmatprep.subr.bf16.mxu0 0
        %1409 = vmatpush1.bf16.xpose.msra.mxu0 0
        %1410 = vmatprep.subr.bf16.mxu0 0
        %1411 = vmatpush1.bf16.xpose.msra.mxu0 0
        %1412 = vmatprep.subr.bf16.mxu0 0
        %1413 = vmatpush1.bf16.xpose.msra.mxu0 0
        %1414 = vmatprep.subr.bf16.mxu0 0
        %1415 = vmatpush1.bf16.xpose.msra.mxu0 0
        %1416 = vmatprep.subr.bf16.mxu0 0
        %1417 = vmatpush1.bf16.xpose.msra.mxu0 0
        %1418 = vmatprep.mubr.bf16.mxu0 0
        %1419 = vmatmul.mubr.bf16.gmra.mrb[0].mxu0 %v1381
        %v1420 = vpop.f32.mrb[0].mxu0
        %v1421 = vadd.f32 0.0, %v1420
        %v1422 = vpop.f32.mrb[0].mxu0
        %v1423 = vpop.f32.mrb[0].mxu0
        %v1424 = vpop.f32.mrb[0].mxu0
        %1425 = vdwg.mxu0
        %v1426 = vsel %vm1316, %v1421, -inf
        %1427 = vmax.xlane.f32.xlu0 %v1426
        %v1428 = vpop.xlane.xlu0 %1427
        %v1429 = vsub.f32 %v1421, %v1428
        %v1430 = vmul.f32 %v1429, 1.442695
        %v1431 = vpow.pop %v1430
        %v1432 = vsel %vm1316, %v1431, 0.0
        %1433 = vadd.xlane.f32.xlu0 %v1432
        %v1434 = vpop.xlane.xlu0 %1433
        %v1435 = vrcp.pop %v1434
        %v1436 = vmul.f32 %v1431, %v1435
        %v1437 = vpack.c.bf16 %v1436, %v1436
        %1439 = vrot.lane.b32.xlu0 %v1265, 112
        %v1440 = vpop.permute.xlu0 %1439
        %v1442 = vsel %vm1316, %v1437, 0
        %v1445 = vsel %vm1332, %v1440, 0
        %1447 = vmatprep.subr.bf16.mxu0 0
        %1448 = vmatpush1.bf16.msra.mxu0 %v1445
        %1449 = vmatprep.subr.bf16.mxu0 0
        %1450 = vmatpush1.bf16.msra.mxu0 0
        %1451 = vmatprep.subr.bf16.mxu0 0
        %1452 = vmatpush1.bf16.msra.mxu0 0
        %1453 = vmatprep.subr.bf16.mxu0 0
        %1454 = vmatpush1.bf16.msra.mxu0 0
        %1455 = vmatprep.subr.bf16.mxu0 0
        %1456 = vmatpush1.bf16.msra.mxu0 0
        %1457 = vmatprep.subr.bf16.mxu0 0
        %1458 = vmatpush1.bf16.msra.mxu0 0
        %1459 = vmatprep.subr.bf16.mxu0 0
        %1460 = vmatpush1.bf16.msra.mxu0 0
        %1461 = vmatprep.subr.bf16.mxu0 0
        %1462 = vmatpush1.bf16.msra.mxu0 0
        %1463 = vmatprep.subr.bf16.mxu0 0
        %1464 = vmatpush1.bf16.msra.mxu0 0
        %1465 = vmatprep.subr.bf16.mxu0 0
        %1466 = vmatpush1.bf16.msra.mxu0 0
        %1467 = vmatprep.subr.bf16.mxu0 0
        %1468 = vmatpush1.bf16.msra.mxu0 0
        %1469 = vmatprep.subr.bf16.mxu0 0
        %1470 = vmatpush1.bf16.msra.mxu0 0
        %1471 = vmatprep.subr.bf16.mxu0 0
        %1472 = vmatpush1.bf16.msra.mxu0 0
        %1473 = vmatprep.subr.bf16.mxu0 0
        %1474 = vmatpush1.bf16.msra.mxu0 0
        %1475 = vmatprep.subr.bf16.mxu0 0
        %1476 = vmatpush1.bf16.msra.mxu0 0
        %1477 = vmatprep.subr.bf16.mxu0 0
        %1478 = vmatpush1.bf16.msra.mxu0 0
        %1479 = vmatprep.mubr.bf16.mxu0 0
        %1480 = vmatmul.mubr.bf16.gmra.mrb[0].mxu0 %v1442
        %v1481 = vpop.f32.mrb[0].mxu0
        %v1482 = vadd.f32 0.0, %v1481
        %v1483 = vpop.f32.mrb[0].mxu0
        %v1484 = vpop.f32.mrb[0].mxu0
        %v1485 = vpop.f32.mrb[0].mxu0
        %1486 = vdwg.mxu0
        %1487 = vrot.lane.b32.xlu0 %v1264, 96
        %v1488 = vpop.permute.xlu0 %1487
        %1489 = vrot.lane.b32.xlu0 %v1264, 32
        %v1490 = vpop.permute.xlu0 %1489
        %v1492 = vsel %vm1269, %v1488, 0
        %v1495 = vsel %vm1269, %v1490, 0
        %1497 = vmatprep.subr.bf16.mxu0 0
        %1498 = vmatpush1.bf16.xpose.msra.mxu0 %v1495
        %1499 = vmatprep.subr.bf16.mxu0 0
        %1500 = vmatpush1.bf16.xpose.msra.mxu0 0
        %1501 = vmatprep.subr.bf16.mxu0 0
        %1502 = vmatpush1.bf16.xpose.msra.mxu0 0
        %1503 = vmatprep.subr.bf16.mxu0 0
        %1504 = vmatpush1.bf16.xpose.msra.mxu0 0
        %1505 = vmatprep.subr.bf16.mxu0 0
        %1506 = vmatpush1.bf16.xpose.msra.mxu0 0
        %1507 = vmatprep.subr.bf16.mxu0 0
        %1508 = vmatpush1.bf16.xpose.msra.mxu0 0
        %1509 = vmatprep.subr.bf16.mxu0 0
        %1510 = vmatpush1.bf16.xpose.msra.mxu0 0
        %1511 = vmatprep.subr.bf16.mxu0 0
        %1512 = vmatpush1.bf16.xpose.msra.mxu0 0
        %1513 = vmatprep.subr.bf16.mxu0 0
        %1514 = vmatpush1.bf16.xpose.msra.mxu0 0
        %1515 = vmatprep.subr.bf16.mxu0 0
        %1516 = vmatpush1.bf16.xpose.msra.mxu0 0
        %1517 = vmatprep.subr.bf16.mxu0 0
        %1518 = vmatpush1.bf16.xpose.msra.mxu0 0
        %1519 = vmatprep.subr.bf16.mxu0 0
        %1520 = vmatpush1.bf16.xpose.msra.mxu0 0
        %1521 = vmatprep.subr.bf16.mxu0 0
        %1522 = vmatpush1.bf16.xpose.msra.mxu0 0
        %1523 = vmatprep.subr.bf16.mxu0 0
        %1524 = vmatpush1.bf16.xpose.msra.mxu0 0
        %1525 = vmatprep.subr.bf16.mxu0 0
        %1526 = vmatpush1.bf16.xpose.msra.mxu0 0
        %1527 = vmatprep.subr.bf16.mxu0 0
        %1528 = vmatpush1.bf16.xpose.msra.mxu0 0
        %1529 = vmatprep.mubr.bf16.mxu0 0
        %1530 = vmatmul.mubr.bf16.gmra.mrb[0].mxu0 %v1492
        %v1531 = vpop.f32.mrb[0].mxu0
        %v1532 = vadd.f32 0.0, %v1531
        %v1533 = vpop.f32.mrb[0].mxu0
        %v1534 = vpop.f32.mrb[0].mxu0
        %v1535 = vpop.f32.mrb[0].mxu0
        %1536 = vdwg.mxu0
        %v1537 = vsel %vm1316, %v1532, -inf
        %1538 = vmax.xlane.f32.xlu0 %v1537
        %v1539 = vpop.xlane.xlu0 %1538
        %v1540 = vsub.f32 %v1532, %v1539
        %v1541 = vmul.f32 %v1540, 1.442695
        %v1542 = vpow.pop %v1541
        %v1543 = vsel %vm1316, %v1542, 0.0
        %1544 = vadd.xlane.f32.xlu0 %v1543
        %v1545 = vpop.xlane.xlu0 %1544
        %v1546 = vrcp.pop %v1545
        %v1547 = vmul.f32 %v1542, %v1546
        %v1548 = vpack.c.bf16 %v1547, %v1547
        %1549 = vrot.lane.b32.xlu0 %v1265, 96
        %v1550 = vpop.permute.xlu0 %1549
        %v1552 = vsel %vm1316, %v1548, 0
        %v1555 = vsel %vm1332, %v1550, 0
        %1557 = vmatprep.subr.bf16.mxu0 0
        %1558 = vmatpush1.bf16.msra.mxu0 %v1555
        %1559 = vmatprep.subr.bf16.mxu0 0
        %1560 = vmatpush1.bf16.msra.mxu0 0
        %1561 = vmatprep.subr.bf16.mxu0 0
        %1562 = vmatpush1.bf16.msra.mxu0 0
        %1563 = vmatprep.subr.bf16.mxu0 0
        %1564 = vmatpush1.bf16.msra.mxu0 0
        %1565 = vmatprep.subr.bf16.mxu0 0
        %1566 = vmatpush1.bf16.msra.mxu0 0
        %1567 = vmatprep.subr.bf16.mxu0 0
        %1568 = vmatpush1.bf16.msra.mxu0 0
        %1569 = vmatprep.subr.bf16.mxu0 0
        %1570 = vmatpush1.bf16.msra.mxu0 0
        %1571 = vmatprep.subr.bf16.mxu0 0
        %1572 = vmatpush1.bf16.msra.mxu0 0
        %1573 = vmatprep.subr.bf16.mxu0 0
        %1574 = vmatpush1.bf16.msra.mxu0 0
        %1575 = vmatprep.subr.bf16.mxu0 0
        %1576 = vmatpush1.bf16.msra.mxu0 0
        %1577 = vmatprep.subr.bf16.mxu0 0
        %1578 = vmatpush1.bf16.msra.mxu0 0
        %1579 = vmatprep.subr.bf16.mxu0 0
        %1580 = vmatpush1.bf16.msra.mxu0 0
        %1581 = vmatprep.subr.bf16.mxu0 0
        %1582 = vmatpush1.bf16.msra.mxu0 0
        %1583 = vmatprep.subr.bf16.mxu0 0
        %1584 = vmatpush1.bf16.msra.mxu0 0
        %1585 = vmatprep.subr.bf16.mxu0 0
        %1586 = vmatpush1.bf16.msra.mxu0 0
        %1587 = vmatprep.subr.bf16.mxu0 0
        %1588 = vmatpush1.bf16.msra.mxu0 0
        %1589 = vmatprep.mubr.bf16.mxu0 0
        %1590 = vmatmul.mubr.bf16.gmra.mrb[0].mxu0 %v1552
        %v1591 = vpop.f32.mrb[0].mxu0
        %v1592 = vadd.f32 0.0, %v1591
        %v1593 = vpop.f32.mrb[0].mxu0
        %v1594 = vpop.f32.mrb[0].mxu0
        %v1595 = vpop.f32.mrb[0].mxu0
        %1596 = vdwg.mxu0
        %1597 = vrot.lane.b32.xlu0 %v1264, 80
        %v1598 = vpop.permute.xlu0 %1597
        %1599 = vrot.lane.b32.xlu0 %v1264, 16
        %v1600 = vpop.permute.xlu0 %1599
        %v1602 = vsel %vm1269, %v1598, 0
        %v1605 = vsel %vm1269, %v1600, 0
        %1607 = vmatprep.subr.bf16.mxu0 0
        %1608 = vmatpush1.bf16.xpose.msra.mxu0 %v1605
        %1609 = vmatprep.subr.bf16.mxu0 0
        %1610 = vmatpush1.bf16.xpose.msra.mxu0 0
        %1611 = vmatprep.subr.bf16.mxu0 0
        %1612 = vmatpush1.bf16.xpose.msra.mxu0 0
        %1613 = vmatprep.subr.bf16.mxu0 0
        %1614 = vmatpush1.bf16.xpose.msra.mxu0 0
        %1615 = vmatprep.subr.bf16.mxu0 0
        %1616 = vmatpush1.bf16.xpose.msra.mxu0 0
        %1617 = vmatprep.subr.bf16.mxu0 0
        %1618 = vmatpush1.bf16.xpose.msra.mxu0 0
        %1619 = vmatprep.subr.bf16.mxu0 0
        %1620 = vmatpush1.bf16.xpose.msra.mxu0 0
        %1621 = vmatprep.subr.bf16.mxu0 0
        %1622 = vmatpush1.bf16.xpose.msra.mxu0 0
        %1623 = vmatprep.subr.bf16.mxu0 0
        %1624 = vmatpush1.bf16.xpose.msra.mxu0 0
        %1625 = vmatprep.subr.bf16.mxu0 0
        %1626 = vmatpush1.bf16.xpose.msra.mxu0 0
        %1627 = vmatprep.subr.bf16.mxu0 0
        %1628 = vmatpush1.bf16.xpose.msra.mxu0 0
        %1629 = vmatprep.subr.bf16.mxu0 0
        %1630 = vmatpush1.bf16.xpose.msra.mxu0 0
        %1631 = vmatprep.subr.bf16.mxu0 0
        %1632 = vmatpush1.bf16.xpose.msra.mxu0 0
        %1633 = vmatprep.subr.bf16.mxu0 0
        %1634 = vmatpush1.bf16.xpose.msra.mxu0 0
        %1635 = vmatprep.subr.bf16.mxu0 0
        %1636 = vmatpush1.bf16.xpose.msra.mxu0 0
        %1637 = vmatprep.subr.bf16.mxu0 0
        %1638 = vmatpush1.bf16.xpose.msra.mxu0 0
        %1639 = vmatprep.mubr.bf16.mxu0 0
        %1640 = vmatmul.mubr.bf16.gmra.mrb[0].mxu0 %v1602
        %v1641 = vpop.f32.mrb[0].mxu0
        %v1642 = vadd.f32 0.0, %v1641
        %v1643 = vpop.f32.mrb[0].mxu0
        %v1644 = vpop.f32.mrb[0].mxu0
        %v1645 = vpop.f32.mrb[0].mxu0
        %1646 = vdwg.mxu0
        %v1647 = vsel %vm1316, %v1642, -inf
        %1648 = vmax.xlane.f32.xlu0 %v1647
        %v1649 = vpop.xlane.xlu0 %1648
        %v1650 = vsub.f32 %v1642, %v1649
        %v1651 = vmul.f32 %v1650, 1.442695
        %v1652 = vpow.pop %v1651
        %v1653 = vsel %vm1316, %v1652, 0.0
        %1654 = vadd.xlane.f32.xlu0 %v1653
        %v1655 = vpop.xlane.xlu0 %1654
        %v1656 = vrcp.pop %v1655
        %v1657 = vmul.f32 %v1652, %v1656
        %v1658 = vpack.c.bf16 %v1657, %v1657
        %1659 = vrot.lane.b32.xlu0 %v1265, 80
        %v1660 = vpop.permute.xlu0 %1659
        %v1662 = vsel %vm1316, %v1658, 0
        %v1665 = vsel %vm1332, %v1660, 0
        %1667 = vmatprep.subr.bf16.mxu0 0
        %1668 = vmatpush1.bf16.msra.mxu0 %v1665
        %1669 = vmatprep.subr.bf16.mxu0 0
        %1670 = vmatpush1.bf16.msra.mxu0 0
        %1671 = vmatprep.subr.bf16.mxu0 0
        %1672 = vmatpush1.bf16.msra.mxu0 0
        %1673 = vmatprep.subr.bf16.mxu0 0
        %1674 = vmatpush1.bf16.msra.mxu0 0
        %1675 = vmatprep.subr.bf16.mxu0 0
        %1676 = vmatpush1.bf16.msra.mxu0 0
        %1677 = vmatprep.subr.bf16.mxu0 0
        %1678 = vmatpush1.bf16.msra.mxu0 0
        %1679 = vmatprep.subr.bf16.mxu0 0
        %1680 = vmatpush1.bf16.msra.mxu0 0
        %1681 = vmatprep.subr.bf16.mxu0 0
        %1682 = vmatpush1.bf16.msra.mxu0 0
        %1683 = vmatprep.subr.bf16.mxu0 0
        %1684 = vmatpush1.bf16.msra.mxu0 0
        %1685 = vmatprep.subr.bf16.mxu0 0
        %1686 = vmatpush1.bf16.msra.mxu0 0
        %1687 = vmatprep.subr.bf16.mxu0 0
        %1688 = vmatpush1.bf16.msra.mxu0 0
        %1689 = vmatprep.subr.bf16.mxu0 0
        %1690 = vmatpush1.bf16.msra.mxu0 0
        %1691 = vmatprep.subr.bf16.mxu0 0
        %1692 = vmatpush1.bf16.msra.mxu0 0
        %1693 = vmatprep.subr.bf16.mxu0 0
        %1694 = vmatpush1.bf16.msra.mxu0 0
        %1695 = vmatprep.subr.bf16.mxu0 0
        %1696 = vmatpush1.bf16.msra.mxu0 0
        %1697 = vmatprep.subr.bf16.mxu0 0
        %1698 = vmatpush1.bf16.msra.mxu0 0
        %1699 = vmatprep.mubr.bf16.mxu0 0
        %1700 = vmatmul.mubr.bf16.gmra.mrb[0].mxu0 %v1662
        %v1701 = vpop.f32.mrb[0].mxu0
        %v1702 = vadd.f32 0.0, %v1701
        %v1703 = vpop.f32.mrb[0].mxu0
        %v1704 = vpop.f32.mrb[0].mxu0
        %v1705 = vpop.f32.mrb[0].mxu0
        %1706 = vdwg.mxu0
        %1708 = vrot.lane.b32.xlu0 %v1482, 16
        %v1709 = vpop.permute.xlu0 %1708
        %1712 = vrot.lane.b32.xlu0 %v1592, 32
        %v1713 = vpop.permute.xlu0 %1712
        %1716 = vrot.lane.b32.xlu0 %v1702, 48
        %v1717 = vpop.permute.xlu0 %1716
        %v1719 = vsel %vm1269, %v1371, %v1709
        %vm1720 = vcmask 261120
        %v1721 = vsel %vm1720, %v1719, %v1713
        %vm1722 = vcmask 392192
        %v1723 = vsel %vm1722, %v1721, %v1717
        %v1724 = vpack.c.bf16 %v1260, %v1260
        %v1725 = vpack.c.bf16 %v1262, %v1262
        %1727 = vrot.lane.b32.xlu0 %v1724, 64
        %v1728 = vpop.permute.xlu0 %1727
        %v1730 = vsel %vm1269, %v1724, 0
        %v1733 = vsel %vm1269, %v1728, 0
        %1735 = vmatprep.subr.bf16.mxu0 0
        %1736 = vmatpush1.bf16.xpose.msra.mxu0 %v1733
        %1737 = vmatprep.subr.bf16.mxu0 0
        %1738 = vmatpush1.bf16.xpose.msra.mxu0 0
        %1739 = vmatprep.subr.bf16.mxu0 0
        %1740 = vmatpush1.bf16.xpose.msra.mxu0 0
        %1741 = vmatprep.subr.bf16.mxu0 0
        %1742 = vmatpush1.bf16.xpose.msra.mxu0 0
        %1743 = vmatprep.subr.bf16.mxu0 0
        %1744 = vmatpush1.bf16.xpose.msra.mxu0 0
        %1745 = vmatprep.subr.bf16.mxu0 0
        %1746 = vmatpush1.bf16.xpose.msra.mxu0 0
        %1747 = vmatprep.subr.bf16.mxu0 0
        %1748 = vmatpush1.bf16.xpose.msra.mxu0 0
        %1749 = vmatprep.subr.bf16.mxu0 0
        %1750 = vmatpush1.bf16.xpose.msra.mxu0 0
        %1751 = vmatprep.subr.bf16.mxu0 0
        %1752 = vmatpush1.bf16.xpose.msra.mxu0 0
        %1753 = vmatprep.subr.bf16.mxu0 0
        %1754 = vmatpush1.bf16.xpose.msra.mxu0 0
        %1755 = vmatprep.subr.bf16.mxu0 0
        %1756 = vmatpush1.bf16.xpose.msra.mxu0 0
        %1757 = vmatprep.subr.bf16.mxu0 0
        %1758 = vmatpush1.bf16.xpose.msra.mxu0 0
        %1759 = vmatprep.subr.bf16.mxu0 0
        %1760 = vmatpush1.bf16.xpose.msra.mxu0 0
        %1761 = vmatprep.subr.bf16.mxu0 0
        %1762 = vmatpush1.bf16.xpose.msra.mxu0 0
        %1763 = vmatprep.subr.bf16.mxu0 0
        %1764 = vmatpush1.bf16.xpose.msra.mxu0 0
        %1765 = vmatprep.subr.bf16.mxu0 0
        %1766 = vmatpush1.bf16.xpose.msra.mxu0 0
        %1767 = vmatprep.mubr.bf16.mxu0 0
        %1768 = vmatmul.mubr.bf16.gmra.mrb[0].mxu0 %v1730
        %v1769 = vpop.f32.mrb[0].mxu0
        %v1770 = vadd.f32 0.0, %v1769
        %v1771 = vpop.f32.mrb[0].mxu0
        %v1772 = vpop.f32.mrb[0].mxu0
        %v1773 = vpop.f32.mrb[0].mxu0
        %1774 = vdwg.mxu0
        %v1775 = vsel %vm1316, %v1770, -inf
        %1776 = vmax.xlane.f32.xlu0 %v1775
        %v1777 = vpop.xlane.xlu0 %1776
        %v1778 = vsub.f32 %v1770, %v1777
        %v1779 = vmul.f32 %v1778, 1.442695
        %v1780 = vpow.pop %v1779
        %v1781 = vsel %vm1316, %v1780, 0.0
        %1782 = vadd.xlane.f32.xlu0 %v1781
        %v1783 = vpop.xlane.xlu0 %1782
        %v1784 = vrcp.pop %v1783
        %v1785 = vmul.f32 %v1780, %v1784
        %v1786 = vpack.c.bf16 %v1785, %v1785
        %v1788 = vsel %vm1316, %v1786, 0
        %v1791 = vsel %vm1332, %v1725, 0
        %1793 = vmatprep.subr.bf16.mxu0 0
        %1794 = vmatpush1.bf16.msra.mxu0 %v1791
        %1795 = vmatprep.subr.bf16.mxu0 0
        %1796 = vmatpush1.bf16.msra.mxu0 0
        %1797 = vmatprep.subr.bf16.mxu0 0
        %1798 = vmatpush1.bf16.msra.mxu0 0
        %1799 = vmatprep.subr.bf16.mxu0 0
        %1800 = vmatpush1.bf16.msra.mxu0 0
        %1801 = vmatprep.subr.bf16.mxu0 0
        %1802 = vmatpush1.bf16.msra.mxu0 0
        %1803 = vmatprep.subr.bf16.mxu0 0
        %1804 = vmatpush1.bf16.msra.mxu0 0
        %1805 = vmatprep.subr.bf16.mxu0 0
        %1806 = vmatpush1.bf16.msra.mxu0 0
        %1807 = vmatprep.subr.bf16.mxu0 0
        %1808 = vmatpush1.bf16.msra.mxu0 0
        %1809 = vmatprep.subr.bf16.mxu0 0
        %1810 = vmatpush1.bf16.msra.mxu0 0
        %1811 = vmatprep.subr.bf16.mxu0 0
        %1812 = vmatpush1.bf16.msra.mxu0 0
        %1813 = vmatprep.subr.bf16.mxu0 0
        %1814 = vmatpush1.bf16.msra.mxu0 0
        %1815 = vmatprep.subr.bf16.mxu0 0
        %1816 = vmatpush1.bf16.msra.mxu0 0
        %1817 = vmatprep.subr.bf16.mxu0 0
        %1818 = vmatpush1.bf16.msra.mxu0 0
        %1819 = vmatprep.subr.bf16.mxu0 0
        %1820 = vmatpush1.bf16.msra.mxu0 0
        %1821 = vmatprep.subr.bf16.mxu0 0
        %1822 = vmatpush1.bf16.msra.mxu0 0
        %1823 = vmatprep.subr.bf16.mxu0 0
        %1824 = vmatpush1.bf16.msra.mxu0 0
        %1825 = vmatprep.mubr.bf16.mxu0 0
        %1826 = vmatmul.mubr.bf16.gmra.mrb[0].mxu0 %v1788
        %v1827 = vpop.f32.mrb[0].mxu0
        %v1828 = vadd.f32 0.0, %v1827
        %v1829 = vpop.f32.mrb[0].mxu0
        %v1830 = vpop.f32.mrb[0].mxu0
        %v1831 = vpop.f32.mrb[0].mxu0
        %1832 = vdwg.mxu0
        %1833 = vrot.lane.b32.xlu0 %v1724, 112
        %v1834 = vpop.permute.xlu0 %1833
        %1835 = vrot.lane.b32.xlu0 %v1724, 48
        %v1836 = vpop.permute.xlu0 %1835
        %v1838 = vsel %vm1269, %v1834, 0
        %v1841 = vsel %vm1269, %v1836, 0
        %1843 = vmatprep.subr.bf16.mxu0 0
        %1844 = vmatpush1.bf16.xpose.msra.mxu0 %v1841
        %1845 = vmatprep.subr.bf16.mxu0 0
        %1846 = vmatpush1.bf16.xpose.msra.mxu0 0
        %1847 = vmatprep.subr.bf16.mxu0 0
        %1848 = vmatpush1.bf16.xpose.msra.mxu0 0
        %1849 = vmatprep.subr.bf16.mxu0 0
        %1850 = vmatpush1.bf16.xpose.msra.mxu0 0
        %1851 = vmatprep.subr.bf16.mxu0 0
        %1852 = vmatpush1.bf16.xpose.msra.mxu0 0
        %1853 = vmatprep.subr.bf16.mxu0 0
        %1854 = vmatpush1.bf16.xpose.msra.mxu0 0
        %1855 = vmatprep.subr.bf16.mxu0 0
        %1856 = vmatpush1.bf16.xpose.msra.mxu0 0
        %1857 = vmatprep.subr.bf16.mxu0 0
        %1858 = vmatpush1.bf16.xpose.msra.mxu0 0
        %1859 = vmatprep.subr.bf16.mxu0 0
        %1860 = vmatpush1.bf16.xpose.msra.mxu0 0
        %1861 = vmatprep.subr.bf16.mxu0 0
        %1862 = vmatpush1.bf16.xpose.msra.mxu0 0
        %1863 = vmatprep.subr.bf16.mxu0 0
        %1864 = vmatpush1.bf16.xpose.msra.mxu0 0
        %1865 = vmatprep.subr.bf16.mxu0 0
        %1866 = vmatpush1.bf16.xpose.msra.mxu0 0
        %1867 = vmatprep.subr.bf16.mxu0 0
        %1868 = vmatpush1.bf16.xpose.msra.mxu0 0
        %1869 = vmatprep.subr.bf16.mxu0 0
        %1870 = vmatpush1.bf16.xpose.msra.mxu0 0
        %1871 = vmatprep.subr.bf16.mxu0 0
        %1872 = vmatpush1.bf16.xpose.msra.mxu0 0
        %1873 = vmatprep.subr.bf16.mxu0 0
        %1874 = vmatpush1.bf16.xpose.msra.mxu0 0
        %1875 = vmatprep.mubr.bf16.mxu0 0
        %1876 = vmatmul.mubr.bf16.gmra.mrb[0].mxu0 %v1838
        %v1877 = vpop.f32.mrb[0].mxu0
        %v1878 = vadd.f32 0.0, %v1877
        %v1879 = vpop.f32.mrb[0].mxu0
        %v1880 = vpop.f32.mrb[0].mxu0
        %v1881 = vpop.f32.mrb[0].mxu0
        %1882 = vdwg.mxu0
        %v1883 = vsel %vm1316, %v1878, -inf
        %1884 = vmax.xlane.f32.xlu0 %v1883
        %v1885 = vpop.xlane.xlu0 %1884
        %v1886 = vsub.f32 %v1878, %v1885
        %v1887 = vmul.f32 %v1886, 1.442695
        %v1888 = vpow.pop %v1887
        %v1889 = vsel %vm1316, %v1888, 0.0
        %1890 = vadd.xlane.f32.xlu0 %v1889
        %v1891 = vpop.xlane.xlu0 %1890
        %v1892 = vrcp.pop %v1891
        %v1893 = vmul.f32 %v1888, %v1892
        %v1894 = vpack.c.bf16 %v1893, %v1893
        %1896 = vrot.lane.b32.xlu0 %v1725, 112
        %v1897 = vpop.permute.xlu0 %1896
        %v1899 = vsel %vm1316, %v1894, 0
        %v1902 = vsel %vm1332, %v1897, 0
        %1904 = vmatprep.subr.bf16.mxu0 0
        %1905 = vmatpush1.bf16.msra.mxu0 %v1902
        %1906 = vmatprep.subr.bf16.mxu0 0
        %1907 = vmatpush1.bf16.msra.mxu0 0
        %1908 = vmatprep.subr.bf16.mxu0 0
        %1909 = vmatpush1.bf16.msra.mxu0 0
        %1910 = vmatprep.subr.bf16.mxu0 0
        %1911 = vmatpush1.bf16.msra.mxu0 0
        %1912 = vmatprep.subr.bf16.mxu0 0
        %1913 = vmatpush1.bf16.msra.mxu0 0
        %1914 = vmatprep.subr.bf16.mxu0 0
        %1915 = vmatpush1.bf16.msra.mxu0 0
        %1916 = vmatprep.subr.bf16.mxu0 0
        %1917 = vmatpush1.bf16.msra.mxu0 0
        %1918 = vmatprep.subr.bf16.mxu0 0
        %1919 = vmatpush1.bf16.msra.mxu0 0
        %1920 = vmatprep.subr.bf16.mxu0 0
        %1921 = vmatpush1.bf16.msra.mxu0 0
        %1922 = vmatprep.subr.bf16.mxu0 0
        %1923 = vmatpush1.bf16.msra.mxu0 0
        %1924 = vmatprep.subr.bf16.mxu0 0
        %1925 = vmatpush1.bf16.msra.mxu0 0
        %1926 = vmatprep.subr.bf16.mxu0 0
        %1927 = vmatpush1.bf16.msra.mxu0 0
        %1928 = vmatprep.subr.bf16.mxu0 0
        %1929 = vmatpush1.bf16.msra.mxu0 0
        %1930 = vmatprep.subr.bf16.mxu0 0
        %1931 = vmatpush1.bf16.msra.mxu0 0
        %1932 = vmatprep.subr.bf16.mxu0 0
        %1933 = vmatpush1.bf16.msra.mxu0 0
        %1934 = vmatprep.subr.bf16.mxu0 0
        %1935 = vmatpush1.bf16.msra.mxu0 0
        %1936 = vmatprep.mubr.bf16.mxu0 0
        %1937 = vmatmul.mubr.bf16.gmra.mrb[0].mxu0 %v1899
        %v1938 = vpop.f32.mrb[0].mxu0
        %v1939 = vadd.f32 0.0, %v1938
        %v1940 = vpop.f32.mrb[0].mxu0
        %v1941 = vpop.f32.mrb[0].mxu0
        %v1942 = vpop.f32.mrb[0].mxu0
        %1943 = vdwg.mxu0
        %1944 = vrot.lane.b32.xlu0 %v1724, 96
        %v1945 = vpop.permute.xlu0 %1944
        %1946 = vrot.lane.b32.xlu0 %v1724, 32
        %v1947 = vpop.permute.xlu0 %1946
        %v1949 = vsel %vm1269, %v1945, 0
        %v1952 = vsel %vm1269, %v1947, 0
        %1954 = vmatprep.subr.bf16.mxu0 0
        %1955 = vmatpush1.bf16.xpose.msra.mxu0 %v1952
        %1956 = vmatprep.subr.bf16.mxu0 0
        %1957 = vmatpush1.bf16.xpose.msra.mxu0 0
        %1958 = vmatprep.subr.bf16.mxu0 0
        %1959 = vmatpush1.bf16.xpose.msra.mxu0 0
        %1960 = vmatprep.subr.bf16.mxu0 0
        %1961 = vmatpush1.bf16.xpose.msra.mxu0 0
        %1962 = vmatprep.subr.bf16.mxu0 0
        %1963 = vmatpush1.bf16.xpose.msra.mxu0 0
        %1964 = vmatprep.subr.bf16.mxu0 0
        %1965 = vmatpush1.bf16.xpose.msra.mxu0 0
        %1966 = vmatprep.subr.bf16.mxu0 0
        %1967 = vmatpush1.bf16.xpose.msra.mxu0 0
        %1968 = vmatprep.subr.bf16.mxu0 0
        %1969 = vmatpush1.bf16.xpose.msra.mxu0 0
        %1970 = vmatprep.subr.bf16.mxu0 0
        %1971 = vmatpush1.bf16.xpose.msra.mxu0 0
        %1972 = vmatprep.subr.bf16.mxu0 0
        %1973 = vmatpush1.bf16.xpose.msra.mxu0 0
        %1974 = vmatprep.subr.bf16.mxu0 0
        %1975 = vmatpush1.bf16.xpose.msra.mxu0 0
        %1976 = vmatprep.subr.bf16.mxu0 0
        %1977 = vmatpush1.bf16.xpose.msra.mxu0 0
        %1978 = vmatprep.subr.bf16.mxu0 0
        %1979 = vmatpush1.bf16.xpose.msra.mxu0 0
        %1980 = vmatprep.subr.bf16.mxu0 0
        %1981 = vmatpush1.bf16.xpose.msra.mxu0 0
        %1982 = vmatprep.subr.bf16.mxu0 0
        %1983 = vmatpush1.bf16.xpose.msra.mxu0 0
        %1984 = vmatprep.subr.bf16.mxu0 0
        %1985 = vmatpush1.bf16.xpose.msra.mxu0 0
        %1986 = vmatprep.mubr.bf16.mxu0 0
        %1987 = vmatmul.mubr.bf16.gmra.mrb[0].mxu0 %v1949
        %v1988 = vpop.f32.mrb[0].mxu0
        %v1989 = vadd.f32 0.0, %v1988
        %v1990 = vpop.f32.mrb[0].mxu0
        %v1991 = vpop.f32.mrb[0].mxu0
        %v1992 = vpop.f32.mrb[0].mxu0
        %1993 = vdwg.mxu0
        %v1994 = vsel %vm1316, %v1989, -inf
        %1995 = vmax.xlane.f32.xlu0 %v1994
        %v1996 = vpop.xlane.xlu0 %1995
        %v1997 = vsub.f32 %v1989, %v1996
        %v1998 = vmul.f32 %v1997, 1.442695
        %v1999 = vpow.pop %v1998
        %v2000 = vsel %vm1316, %v1999, 0.0
        %2001 = vadd.xlane.f32.xlu0 %v2000
        %v2002 = vpop.xlane.xlu0 %2001
        %v2003 = vrcp.pop %v2002
        %v2004 = vmul.f32 %v1999, %v2003
        %v2005 = vpack.c.bf16 %v2004, %v2004
        %2006 = vrot.lane.b32.xlu0 %v1725, 96
        %v2007 = vpop.permute.xlu0 %2006
        %v2009 = vsel %vm1316, %v2005, 0
        %v2012 = vsel %vm1332, %v2007, 0
        %2014 = vmatprep.subr.bf16.mxu0 0
        %2015 = vmatpush1.bf16.msra.mxu0 %v2012
        %2016 = vmatprep.subr.bf16.mxu0 0
        %2017 = vmatpush1.bf16.msra.mxu0 0
        %2018 = vmatprep.subr.bf16.mxu0 0
        %2019 = vmatpush1.bf16.msra.mxu0 0
        %2020 = vmatprep.subr.bf16.mxu0 0
        %2021 = vmatpush1.bf16.msra.mxu0 0
        %2022 = vmatprep.subr.bf16.mxu0 0
        %2023 = vmatpush1.bf16.msra.mxu0 0
        %2024 = vmatprep.subr.bf16.mxu0 0
        %2025 = vmatpush1.bf16.msra.mxu0 0
        %2026 = vmatprep.subr.bf16.mxu0 0
        %2027 = vmatpush1.bf16.msra.mxu0 0
        %2028 = vmatprep.subr.bf16.mxu0 0
        %2029 = vmatpush1.bf16.msra.mxu0 0
        %2030 = vmatprep.subr.bf16.mxu0 0
        %2031 = vmatpush1.bf16.msra.mxu0 0
        %2032 = vmatprep.subr.bf16.mxu0 0
        %2033 = vmatpush1.bf16.msra.mxu0 0
        %2034 = vmatprep.subr.bf16.mxu0 0
        %2035 = vmatpush1.bf16.msra.mxu0 0
        %2036 = vmatprep.subr.bf16.mxu0 0
        %2037 = vmatpush1.bf16.msra.mxu0 0
        %2038 = vmatprep.subr.bf16.mxu0 0
        %2039 = vmatpush1.bf16.msra.mxu0 0
        %2040 = vmatprep.subr.bf16.mxu0 0
        %2041 = vmatpush1.bf16.msra.mxu0 0
        %2042 = vmatprep.subr.bf16.mxu0 0
        %2043 = vmatpush1.bf16.msra.mxu0 0
        %2044 = vmatprep.subr.bf16.mxu0 0
        %2045 = vmatpush1.bf16.msra.mxu0 0
        %2046 = vmatprep.mubr.bf16.mxu0 0
        %2047 = vmatmul.mubr.bf16.gmra.mrb[0].mxu0 %v2009
        %v2048 = vpop.f32.mrb[0].mxu0
        %v2049 = vadd.f32 0.0, %v2048
        %v2050 = vpop.f32.mrb[0].mxu0
        %v2051 = vpop.f32.mrb[0].mxu0
        %v2052 = vpop.f32.mrb[0].mxu0
        %2053 = vdwg.mxu0
        %2054 = vrot.lane.b32.xlu0 %v1724, 80
        %v2055 = vpop.permute.xlu0 %2054
        %2056 = vrot.lane.b32.xlu0 %v1724, 16
        %v2057 = vpop.permute.xlu0 %2056
        %v2059 = vsel %vm1269, %v2055, 0
        %v2062 = vsel %vm1269, %v2057, 0
        %2064 = vmatprep.subr.bf16.mxu0 0
        %2065 = vmatpush1.bf16.xpose.msra.mxu0 %v2062
        %2066 = vmatprep.subr.bf16.mxu0 0
        %2067 = vmatpush1.bf16.xpose.msra.mxu0 0
        %2068 = vmatprep.subr.bf16.mxu0 0
        %2069 = vmatpush1.bf16.xpose.msra.mxu0 0
        %2070 = vmatprep.subr.bf16.mxu0 0
        %2071 = vmatpush1.bf16.xpose.msra.mxu0 0
        %2072 = vmatprep.subr.bf16.mxu0 0
        %2073 = vmatpush1.bf16.xpose.msra.mxu0 0
        %2074 = vmatprep.subr.bf16.mxu0 0
        %2075 = vmatpush1.bf16.xpose.msra.mxu0 0
        %2076 = vmatprep.subr.bf16.mxu0 0
        %2077 = vmatpush1.bf16.xpose.msra.mxu0 0
        %2078 = vmatprep.subr.bf16.mxu0 0
        %2079 = vmatpush1.bf16.xpose.msra.mxu0 0
        %2080 = vmatprep.subr.bf16.mxu0 0
        %2081 = vmatpush1.bf16.xpose.msra.mxu0 0
        %2082 = vmatprep.subr.bf16.mxu0 0
        %2083 = vmatpush1.bf16.xpose.msra.mxu0 0
        %2084 = vmatprep.subr.bf16.mxu0 0
        %2085 = vmatpush1.bf16.xpose.msra.mxu0 0
        %2086 = vmatprep.subr.bf16.mxu0 0
        %2087 = vmatpush1.bf16.xpose.msra.mxu0 0
        %2088 = vmatprep.subr.bf16.mxu0 0
        %2089 = vmatpush1.bf16.xpose.msra.mxu0 0
        %2090 = vmatprep.subr.bf16.mxu0 0
        %2091 = vmatpush1.bf16.xpose.msra.mxu0 0
        %2092 = vmatprep.subr.bf16.mxu0 0
        %2093 = vmatpush1.bf16.xpose.msra.mxu0 0
        %2094 = vmatprep.subr.bf16.mxu0 0
        %2095 = vmatpush1.bf16.xpose.msra.mxu0 0
        %2096 = vmatprep.mubr.bf16.mxu0 0
        %2097 = vmatmul.mubr.bf16.gmra.mrb[0].mxu0 %v2059
        %v2098 = vpop.f32.mrb[0].mxu0
        %v2099 = vadd.f32 0.0, %v2098
        %v2100 = vpop.f32.mrb[0].mxu0
        %v2101 = vpop.f32.mrb[0].mxu0
        %v2102 = vpop.f32.mrb[0].mxu0
        %2103 = vdwg.mxu0
        %v2104 = vsel %vm1316, %v2099, -inf
        %2105 = vmax.xlane.f32.xlu0 %v2104
        %v2106 = vpop.xlane.xlu0 %2105
        %v2107 = vsub.f32 %v2099, %v2106
        %v2108 = vmul.f32 %v2107, 1.442695
        %v2109 = vpow.pop %v2108
        %v2110 = vsel %vm1316, %v2109, 0.0
        %2111 = vadd.xlane.f32.xlu0 %v2110
        %v2112 = vpop.xlane.xlu0 %2111
        %v2113 = vrcp.pop %v2112
        %v2114 = vmul.f32 %v2109, %v2113
        %v2115 = vpack.c.bf16 %v2114, %v2114
        %2116 = vrot.lane.b32.xlu0 %v1725, 80
        %v2117 = vpop.permute.xlu0 %2116
        %v2119 = vsel %vm1316, %v2115, 0
        %v2122 = vsel %vm1332, %v2117, 0
        %2124 = vmatprep.subr.bf16.mxu0 0
        %2125 = vmatpush1.bf16.msra.mxu0 %v2122
        %2126 = vmatprep.subr.bf16.mxu0 0
        %2127 = vmatpush1.bf16.msra.mxu0 0
        %2128 = vmatprep.subr.bf16.mxu0 0
        %2129 = vmatpush1.bf16.msra.mxu0 0
        %2130 = vmatprep.subr.bf16.mxu0 0
        %2131 = vmatpush1.bf16.msra.mxu0 0
        %2132 = vmatprep.subr.bf16.mxu0 0
        %2133 = vmatpush1.bf16.msra.mxu0 0
        %2134 = vmatprep.subr.bf16.mxu0 0
        %2135 = vmatpush1.bf16.msra.mxu0 0
        %2136 = vmatprep.subr.bf16.mxu0 0
        %2137 = vmatpush1.bf16.msra.mxu0 0
        %2138 = vmatprep.subr.bf16.mxu0 0
        %2139 = vmatpush1.bf16.msra.mxu0 0
        %2140 = vmatprep.subr.bf16.mxu0 0
        %2141 = vmatpush1.bf16.msra.mxu0 0
        %2142 = vmatprep.subr.bf16.mxu0 0
        %2143 = vmatpush1.bf16.msra.mxu0 0
        %2144 = vmatprep.subr.bf16.mxu0 0
        %2145 = vmatpush1.bf16.msra.mxu0 0
        %2146 = vmatprep.subr.bf16.mxu0 0
        %2147 = vmatpush1.bf16.msra.mxu0 0
        %2148 = vmatprep.subr.bf16.mxu0 0
        %2149 = vmatpush1.bf16.msra.mxu0 0
        %2150 = vmatprep.subr.bf16.mxu0 0
        %2151 = vmatpush1.bf16.msra.mxu0 0
        %2152 = vmatprep.subr.bf16.mxu0 0
        %2153 = vmatpush1.bf16.msra.mxu0 0
        %2154 = vmatprep.subr.bf16.mxu0 0
        %2155 = vmatpush1.bf16.msra.mxu0 0
        %2156 = vmatprep.mubr.bf16.mxu0 0
        %2157 = vmatmul.mubr.bf16.gmra.mrb[0].mxu0 %v2119
        %v2158 = vpop.f32.mrb[0].mxu0
        %v2159 = vadd.f32 0.0, %v2158
        %v2160 = vpop.f32.mrb[0].mxu0
        %v2161 = vpop.f32.mrb[0].mxu0
        %v2162 = vpop.f32.mrb[0].mxu0
        %2163 = vdwg.mxu0
        %2165 = vrot.lane.b32.xlu0 %v1939, 16
        %v2166 = vpop.permute.xlu0 %2165
        %2169 = vrot.lane.b32.xlu0 %v2049, 32
        %v2170 = vpop.permute.xlu0 %2169
        %2173 = vrot.lane.b32.xlu0 %v2159, 48
        %v2174 = vpop.permute.xlu0 %2173
        %v2176 = vsel %vm1269, %v1828, %v2166
        %v2177 = vsel %vm1720, %v2176, %v2170
        %v2178 = vsel %vm1722, %v2177, %v2174
        %v2179 = vpack.c.bf16 %v2178, %v1723
        %v2180 = vld [vmem:[%s1014] sm:$0xf]
        %v2181 = vld [vmem:[%s1014 + $0x4] sm:$0xf]
        %v2182 = vld [vmem:[%s1014 + $0x8] sm:$0xf]
        %v2183 = vld [vmem:[%s1014 + $0xc] sm:$0xf]
        %v2184 = vld [vmem:[%s1014 + $0x10] sm:$0xf]
        %v2185 = vld [vmem:[%s1014 + $0x14] sm:$0xf]
        %v2186 = vld [vmem:[%s1014 + $0x18] sm:$0xf]
        %v2187 = vld [vmem:[%s1014 + $0x1c] sm:$0xf]
        %v2188 = vlaneseq
        %v2189 = vshrl.u32 %v2188, 7
        %v2190 = vsub.s32 1, %v2189
        %v2191 = vrot.slane %v1158, %v2190
        %v2200 = vunpack.c.l.b16 %v2180
        %v2201 = vunpack.c.l.b16 %v2181
        %v2202 = vunpack.c.l.b16 %v2182
        %v2203 = vunpack.c.l.b16 %v2183
        %v2204 = vunpack.c.l.b16 %v2184
        %v2205 = vunpack.c.l.b16 %v2185
        %v2206 = vunpack.c.l.b16 %v2186
        %v2207 = vunpack.c.l.b16 %v2187
        %v2208 = vpack.c.b16 %v2201, %v2200
        %v2209 = vpack.c.b16 %v2203, %v2202
        %v2210 = vpack.c.b16 %v2205, %v2204
        %v2211 = vpack.c.b16 %v2207, %v2206
        %v2217 = vsel %vm1217, %v2179, 0
        %2219 = vmatprep.subr.bf16.mxu0 0
        %2220 = vmatpush1.bf16.msra.mxu0 %v2208
        %2221 = vmatprep.subr.bf16.mxu0 0
        %2222 = vmatpush1.bf16.msra.mxu0 %v2209
        %2223 = vmatprep.subr.bf16.mxu0 0
        %2224 = vmatpush1.bf16.msra.mxu0 %v2210
        %2225 = vmatprep.subr.bf16.mxu0 0
        %2226 = vmatpush1.bf16.msra.mxu0 %v2211
        %2227 = vmatprep.subr.bf16.mxu0 0
        %2228 = vmatpush1.bf16.msra.mxu0 0
        %2229 = vmatprep.subr.bf16.mxu0 0
        %2230 = vmatpush1.bf16.msra.mxu0 0
        %2231 = vmatprep.subr.bf16.mxu0 0
        %2232 = vmatpush1.bf16.msra.mxu0 0
        %2233 = vmatprep.subr.bf16.mxu0 0
        %2234 = vmatpush1.bf16.msra.mxu0 0
        %2235 = vmatprep.subr.bf16.mxu0 0
        %2236 = vmatpush1.bf16.msra.mxu0 0
        %2237 = vmatprep.subr.bf16.mxu0 0
        %2238 = vmatpush1.bf16.msra.mxu0 0
        %2239 = vmatprep.subr.bf16.mxu0 0
        %2240 = vmatpush1.bf16.msra.mxu0 0
        %2241 = vmatprep.subr.bf16.mxu0 0
        %2242 = vmatpush1.bf16.msra.mxu0 0
        %2243 = vmatprep.subr.bf16.mxu0 0
        %2244 = vmatpush1.bf16.msra.mxu0 0
        %2245 = vmatprep.subr.bf16.mxu0 0
        %2246 = vmatpush1.bf16.msra.mxu0 0
        %2247 = vmatprep.subr.bf16.mxu0 0
        %2248 = vmatpush1.bf16.msra.mxu0 0
        %2249 = vmatprep.subr.bf16.mxu0 0
        %2250 = vmatpush1.bf16.msra.mxu0 0
        %2251 = vmatprep.mubr.bf16.mxu0 0
        %2252 = vmatmul.mubr.bf16.gmra.mrb[0].mxu0 %v2217
        %v2253 = vpop.f32.mrb[0].mxu0
        %v2254 = vadd.f32 %v2191, %v2253
        %v2255 = vpop.f32.mrb[0].mxu0
        %v2256 = vpop.f32.mrb[0].mxu0
        %v2257 = vadd.f32 %v2191, %v2256
        %v2258 = vpop.f32.mrb[0].mxu0
        %2259 = vdwg.mxu0
        %v2260 = vadd.f32 %v1156, %v2254
        %v2261 = vadd.f32 %v1157, %v2257
        %v2262 = vsel %vm1217, %v2260, 0.0
        %2263 = vadd.xlane.f32.xlu0 %v2262
        %v2264 = vpop.xlane.xlu0 %2263
        %v2265 = vsel %vm1217, %v2261, 0.0
        %2266 = vadd.xlane.f32.xlu0 %v2265
        %v2267 = vpop.xlane.xlu0 %2266
        %v2268 = vrcp.pop 64.0
        %v2269 = vmul.f32 %v2264, %v2268
        %v2270 = vmul.f32 %v2267, %v2268
        %v2271 = vsub.f32 %v2260, %v2269
        %v2272 = vsub.f32 %v2261, %v2270
        %v2273 = vmul.f32 %v2271, %v2271
        %v2274 = vmul.f32 %v2272, %v2272
        %v2275 = vsel %vm1217, %v2273, 0.0
        %2276 = vadd.xlane.f32.xlu0 %v2275
        %v2277 = vpop.xlane.xlu0 %2276
        %v2278 = vsel %vm1217, %v2274, 0.0
        %2279 = vadd.xlane.f32.xlu0 %v2278
        %v2280 = vpop.xlane.xlu0 %2279
        %v2281 = vmul.f32 %v2277, %v2268
        %v2282 = vmul.f32 %v2280, %v2268
        %v2283 = vadd.f32 %v2281, 1e-05
        %v2284 = vadd.f32 %v2282, 1e-05
        %v2285 = vrsqrt.pop %v2283
        %v2286 = vrsqrt.pop %v2284
        %v2287 = vmul.f32 %v2271, %v2285
        %v2288 = vmul.f32 %v2272, %v2286
        %v2289 = vlaneseq
        %v2290 = vshrl.u32 %v2289, 7
        %v2291 = vsub.s32 4, %v2290
        %v2292 = vrot.slane %v1158, %v2291
        %v2293 = vmul.f32 %v2287, %v2292
        %v2294 = vmul.f32 %v2288, %v2292
        %v2295 = vlaneseq
        %v2296 = vshrl.u32 %v2295, 7
        %v2297 = vsub.s32 5, %v2296
        %v2298 = vrot.slane %v1158, %v2297
        %v2299 = vadd.f32 %v2293, %v2298
        %v2300 = vadd.f32 %v2294, %v2298
        %v2301 = vpack.c.bf16 %v2300, %v2299
        %v2302 = vld [vmem:[%s1023] sm:$0xf]
        %v2303 = vld [vmem:[%s1023 + $0x4] sm:$0xf]
        %v2304 = vld [vmem:[%s1023 + $0x8] sm:$0xf]
        %v2305 = vld [vmem:[%s1023 + $0xc] sm:$0xf]
        %v2306 = vld [vmem:[%s1023 + $0x10] sm:$0xf]
        %v2307 = vld [vmem:[%s1023 + $0x14] sm:$0xf]
        %v2308 = vld [vmem:[%s1023 + $0x18] sm:$0xf]
        %v2309 = vld [vmem:[%s1023 + $0x1c] sm:$0xf]
        %v2310 = vlaneseq
        %v2311 = vshrl.u32 %v2310, 7
        %v2312 = vsub.s32 2, %v2311
        %v2313 = vrot.slane %v1158, %v2312
        %v2322 = vunpack.c.l.b16 %v2302
        %v2323 = vunpack.c.l.b16 %v2303
        %v2324 = vunpack.c.l.b16 %v2304
        %v2325 = vunpack.c.l.b16 %v2305
        %v2326 = vunpack.c.l.b16 %v2306
        %v2327 = vunpack.c.l.b16 %v2307
        %v2328 = vunpack.c.l.b16 %v2308
        %v2329 = vunpack.c.l.b16 %v2309
        %v2330 = vpack.c.b16 %v2323, %v2322
        %v2331 = vpack.c.b16 %v2325, %v2324
        %v2332 = vpack.c.b16 %v2327, %v2326
        %v2333 = vpack.c.b16 %v2329, %v2328
        %v2339 = vsel %vm1217, %v2301, 0
        %2341 = vmatprep.subr.bf16.mxu0 0
        %2342 = vmatpush1.bf16.msra.mxu0 %v2330
        %2343 = vmatprep.subr.bf16.mxu0 0
        %2344 = vmatpush1.bf16.msra.mxu0 %v2331
        %2345 = vmatprep.subr.bf16.mxu0 0
        %2346 = vmatpush1.bf16.msra.mxu0 %v2332
        %2347 = vmatprep.subr.bf16.mxu0 0
        %2348 = vmatpush1.bf16.msra.mxu0 %v2333
        %2349 = vmatprep.subr.bf16.mxu0 0
        %2350 = vmatpush1.bf16.msra.mxu0 0
        %2351 = vmatprep.subr.bf16.mxu0 0
        %2352 = vmatpush1.bf16.msra.mxu0 0
        %2353 = vmatprep.subr.bf16.mxu0 0
        %2354 = vmatpush1.bf16.msra.mxu0 0
        %2355 = vmatprep.subr.bf16.mxu0 0
        %2356 = vmatpush1.bf16.msra.mxu0 0
        %2357 = vmatprep.subr.bf16.mxu0 0
        %2358 = vmatpush1.bf16.msra.mxu0 0
        %2359 = vmatprep.subr.bf16.mxu0 0
        %2360 = vmatpush1.bf16.msra.mxu0 0
        %2361 = vmatprep.subr.bf16.mxu0 0
        %2362 = vmatpush1.bf16.msra.mxu0 0
        %2363 = vmatprep.subr.bf16.mxu0 0
        %2364 = vmatpush1.bf16.msra.mxu0 0
        %2365 = vmatprep.subr.bf16.mxu0 0
        %2366 = vmatpush1.bf16.msra.mxu0 0
        %2367 = vmatprep.subr.bf16.mxu0 0
        %2368 = vmatpush1.bf16.msra.mxu0 0
        %2369 = vmatprep.subr.bf16.mxu0 0
        %2370 = vmatpush1.bf16.msra.mxu0 0
        %2371 = vmatprep.subr.bf16.mxu0 0
        %2372 = vmatpush1.bf16.msra.mxu0 0
        %2373 = vmatprep.mubr.bf16.mxu0 0
        %2374 = vmatmul.mubr.bf16.gmra.mrb[0].mxu0 %v2339
        %v2375 = vpop.f32.mrb[0].mxu0
        %v2376 = vadd.f32 %v2313, %v2375
        %v2377 = vpop.f32.mrb[0].mxu0
        %v2378 = vpop.f32.mrb[0].mxu0
        %v2379 = vadd.f32 %v2313, %v2378
        %v2380 = vpop.f32.mrb[0].mxu0
        %2381 = vdwg.mxu0
        %v2382 = vmax.f32 %v2376, 0.0
        %v2383 = vmax.f32 %v2379, 0.0
        %v2384 = vpack.c.bf16 %v2383, %v2382
        %v2385 = vld [vmem:[%s1032] sm:$0xf]
        %v2386 = vld [vmem:[%s1032 + $0x4] sm:$0xf]
        %v2387 = vld [vmem:[%s1032 + $0x8] sm:$0xf]
        %v2388 = vld [vmem:[%s1032 + $0xc] sm:$0xf]
        %v2389 = vld [vmem:[%s1032 + $0x10] sm:$0xf]
        %v2390 = vld [vmem:[%s1032 + $0x14] sm:$0xf]
        %v2391 = vld [vmem:[%s1032 + $0x18] sm:$0xf]
        %v2392 = vld [vmem:[%s1032 + $0x1c] sm:$0xf]
        %v2393 = vld [vmem:[%s1032 + $0x20] sm:$0xf]
        %v2394 = vld [vmem:[%s1032 + $0x24] sm:$0xf]
        %v2395 = vld [vmem:[%s1032 + $0x28] sm:$0xf]
        %v2396 = vld [vmem:[%s1032 + $0x2c] sm:$0xf]
        %v2397 = vld [vmem:[%s1032 + $0x30] sm:$0xf]
        %v2398 = vld [vmem:[%s1032 + $0x34] sm:$0xf]
        %v2399 = vld [vmem:[%s1032 + $0x38] sm:$0xf]
        %v2400 = vld [vmem:[%s1032 + $0x3c] sm:$0xf]
        %v2401 = vlaneseq
        %v2402 = vshrl.u32 %v2401, 7
        %v2403 = vsub.s32 3, %v2402
        %v2404 = vrot.slane %v1158, %v2403
        %v2421 = vunpack.c.l.b16 %v2385
        %v2422 = vunpack.c.l.b16 %v2386
        %v2423 = vunpack.c.l.b16 %v2387
        %v2424 = vunpack.c.l.b16 %v2388
        %v2425 = vunpack.c.l.b16 %v2389
        %v2426 = vunpack.c.l.b16 %v2390
        %v2427 = vunpack.c.l.b16 %v2391
        %v2428 = vunpack.c.l.b16 %v2392
        %v2429 = vunpack.c.l.b16 %v2393
        %v2430 = vunpack.c.l.b16 %v2394
        %v2431 = vunpack.c.l.b16 %v2395
        %v2432 = vunpack.c.l.b16 %v2396
        %v2433 = vunpack.c.l.b16 %v2397
        %v2434 = vunpack.c.l.b16 %v2398
        %v2435 = vunpack.c.l.b16 %v2399
        %v2436 = vunpack.c.l.b16 %v2400
        %v2437 = vpack.c.b16 %v2422, %v2421
        %v2438 = vpack.c.b16 %v2424, %v2423
        %v2439 = vpack.c.b16 %v2426, %v2425
        %v2440 = vpack.c.b16 %v2428, %v2427
        %v2441 = vpack.c.b16 %v2430, %v2429
        %v2442 = vpack.c.b16 %v2432, %v2431
        %v2443 = vpack.c.b16 %v2434, %v2433
        %v2444 = vpack.c.b16 %v2436, %v2435
        %2453 = vmatprep.subr.bf16.mxu0 0
        %2454 = vmatpush1.bf16.msra.mxu0 %v2437
        %2455 = vmatprep.subr.bf16.mxu0 0
        %2456 = vmatpush1.bf16.msra.mxu0 %v2438
        %2457 = vmatprep.subr.bf16.mxu0 0
        %2458 = vmatpush1.bf16.msra.mxu0 %v2439
        %2459 = vmatprep.subr.bf16.mxu0 0
        %2460 = vmatpush1.bf16.msra.mxu0 %v2440
        %2461 = vmatprep.subr.bf16.mxu0 0
        %2462 = vmatpush1.bf16.msra.mxu0 %v2441
        %2463 = vmatprep.subr.bf16.mxu0 0
        %2464 = vmatpush1.bf16.msra.mxu0 %v2442
        %2465 = vmatprep.subr.bf16.mxu0 0
        %2466 = vmatpush1.bf16.msra.mxu0 %v2443
        %2467 = vmatprep.subr.bf16.mxu0 0
        %2468 = vmatpush1.bf16.msra.mxu0 %v2444
        %2469 = vmatprep.subr.bf16.mxu0 0
        %2470 = vmatpush1.bf16.msra.mxu0 0
        %2471 = vmatprep.subr.bf16.mxu0 0
        %2472 = vmatpush1.bf16.msra.mxu0 0
        %2473 = vmatprep.subr.bf16.mxu0 0
        %2474 = vmatpush1.bf16.msra.mxu0 0
        %2475 = vmatprep.subr.bf16.mxu0 0
        %2476 = vmatpush1.bf16.msra.mxu0 0
        %2477 = vmatprep.subr.bf16.mxu0 0
        %2478 = vmatpush1.bf16.msra.mxu0 0
        %2479 = vmatprep.subr.bf16.mxu0 0
        %2480 = vmatpush1.bf16.msra.mxu0 0
        %2481 = vmatprep.subr.bf16.mxu0 0
        %2482 = vmatpush1.bf16.msra.mxu0 0
        %2483 = vmatprep.subr.bf16.mxu0 0
        %2484 = vmatpush1.bf16.msra.mxu0 0
        %2485 = vmatprep.mubr.bf16.mxu0 0
        %2486 = vmatmul.mubr.bf16.gmra.mrb[0].mxu0 %v2384
        %v2487 = vpop.f32.mrb[0].mxu0
        %v2488 = vadd.f32 %v2404, %v2487
        %v2489 = vpop.f32.mrb[0].mxu0
        %v2490 = vpop.f32.mrb[0].mxu0
        %v2491 = vadd.f32 %v2404, %v2490
        %v2492 = vpop.f32.mrb[0].mxu0
        %2493 = vdwg.mxu0
        %v2494 = vadd.f32 %v2299, %v2488
        %v2495 = vadd.f32 %v2300, %v2491
        %v2496 = vsel %vm1217, %v2494, 0.0
        %2497 = vadd.xlane.f32.xlu0 %v2496
        %v2498 = vpop.xlane.xlu0 %2497
        %v2499 = vsel %vm1217, %v2495, 0.0
        %2500 = vadd.xlane.f32.xlu0 %v2499
        %v2501 = vpop.xlane.xlu0 %2500
        %v2502 = vmul.f32 %v2498, %v2268
        %v2503 = vmul.f32 %v2501, %v2268
        %v2504 = vsub.f32 %v2494, %v2502
        %v2505 = vsub.f32 %v2495, %v2503
        %v2506 = vmul.f32 %v2504, %v2504
        %v2507 = vmul.f32 %v2505, %v2505
        %v2508 = vsel %vm1217, %v2506, 0.0
        %2509 = vadd.xlane.f32.xlu0 %v2508
        %v2510 = vpop.xlane.xlu0 %2509
        %v2511 = vsel %vm1217, %v2507, 0.0
        %2512 = vadd.xlane.f32.xlu0 %v2511
        %v2513 = vpop.xlane.xlu0 %2512
        %v2514 = vmul.f32 %v2510, %v2268
        %v2515 = vmul.f32 %v2513, %v2268
        %v2516 = vadd.f32 %v2514, 1e-05
        %v2517 = vadd.f32 %v2515, 1e-05
        %v2518 = vrsqrt.pop %v2516
        %v2519 = vrsqrt.pop %v2517
        %v2520 = vmul.f32 %v2504, %v2518
        %v2521 = vmul.f32 %v2505, %v2519
        %v2522 = vlaneseq
        %v2523 = vshrl.u32 %v2522, 7
        %v2524 = vsub.s32 6, %v2523
        %v2525 = vrot.slane %v1158, %v2524
        %v2526 = vmul.f32 %v2520, %v2525
        %v2527 = vmul.f32 %v2521, %v2525
        %v2528 = vlaneseq
        %v2529 = vshrl.u32 %v2528, 7
        %v2530 = vsub.s32 7, %v2529
        %v2531 = vrot.slane %v1158, %v2530
        %v2532 = vadd.f32 %v2526, %v2531
        %v2533 = vadd.f32 %v2527, %v2531
        %2534 = vst.msk [vmem:[#allocation2] sm:$0xff] %vm1217, %v2532
        %2535 = vst.msk [vmem:[#allocation2 + $0x8] sm:$0xff] %vm1217, %v2533
        %p2536 = scmp.eq.s32.totalorder %s35, 1
        // Predicated region
        $region105: #{transformer_forward.1} parent=103 // pred_check
          %p2537 = pneg %p2536
        $region106: #{transformer_forward.1} parent=103 // pred_check_branch
          %2539 = sbr.rel (%p2537) target = $region108
        $region107: #{transformer_forward.1} parent=103 // pred_region
          %v2540 = vld [vmem:[%s15] sm:$0x1]
          %v2541 = vld [vmem:[%s15 + $0x1] sm:$0x1]
          %v2542 = vsel %vm1217, %v2532, 0.0
          %2543 = vadd.xlane.f32.xlu0 %v2542
          %v2544 = vpop.xlane.xlu0 %2543
          %v2545 = vsel %vm1217, %v2533, 0.0
          %2546 = vadd.xlane.f32.xlu0 %v2545
          %v2547 = vpop.xlane.xlu0 %2546
          %v2548 = vmul.f32 %v2544, %v2268
          %v2549 = vmul.f32 %v2547, %v2268
          %v2550 = vsub.f32 %v2532, %v2548
          %v2551 = vsub.f32 %v2533, %v2549
          %v2552 = vmul.f32 %v2550, %v2550
          %v2553 = vmul.f32 %v2551, %v2551
          %v2554 = vsel %vm1217, %v2552, 0.0
          %2555 = vadd.xlane.f32.xlu0 %v2554
          %v2556 = vpop.xlane.xlu0 %2555
          %v2557 = vsel %vm1217, %v2553, 0.0
          %2558 = vadd.xlane.f32.xlu0 %v2557
          %v2559 = vpop.xlane.xlu0 %2558
          %v2560 = vmul.f32 %v2556, %v2268
          %v2561 = vmul.f32 %v2559, %v2268
          %v2562 = vadd.f32 %v2560, 1e-05
          %v2563 = vadd.f32 %v2561, 1e-05
          %v2564 = vrsqrt.pop %v2562
          %v2565 = vrsqrt.pop %v2563
          %v2566 = vmul.f32 %v2550, %v2564
          %v2567 = vmul.f32 %v2551, %v2565
          %v2568 = vlaneseq
          %v2569 = vshrl.u32 %v2568, 7
          %v2570 = vsub.s32 0, %v2569
          %v2571 = vrot.slane %v2540, %v2570
          %v2572 = vmul.f32 %v2566, %v2571
          %v2573 = vmul.f32 %v2567, %v2571
          %v2574 = vlaneseq
          %v2575 = vshrl.u32 %v2574, 7
          %v2576 = vsub.s32 0, %v2575
          %v2577 = vrot.slane %v2541, %v2576
          %v2578 = vadd.f32 %v2572, %v2577
          %v2579 = vadd.f32 %v2573, %v2577
          %v2580 = vpack.c.bf16 %v2579, %v2578
          %2581 = vst.msk [vmem:[#allocation3] sm:$0xff] %vm1217, %v2580
        $region108: #{transformer_forward.1} parent=103 // pred_fallthru
          _
      $region104: #{transformer_forward.1} parent=95 // pred_fallthru
        _
      %p2582 = scmp.ge.s32.totalorder %s35, 2
      // Predicated region
      $region109: #{transformer_forward.1} parent=95 // pred_check
        %p2583 = pneg %p2582
      $region110: #{transformer_forward.1} parent=95 // pred_check_branch
        %2585 = sbr.rel (%p2583) target = $region112
      $region111: #{transformer_forward.1} parent=95 // pred_region
        %v2586 = vld [vmem:[#allocation4] sm:$0xff]
        %v2587 = vld [vmem:[#allocation4 + $0x8] sm:$0xff]
        %v2588 = vld [vmem:[%s1128] sm:$0xff]
        %v2589 = vld [vmem:[%s1128 + $0x8] sm:$0xff]
        %v2590 = vld [vmem:[%s1128 + $0x10] sm:$0x1f]
        %v2591 = vpack.c.bf16 %v2587, %v2586
        %v2592 = vld [vmem:[%s1051] sm:$0xff]
        %v2593 = vld [vmem:[%s1051 + $0x8] sm:$0xff]
        %v2594 = vld [vmem:[%s1051 + $0x10] sm:$0xff]
        %v2595 = vld [vmem:[%s1051 + $0x18] sm:$0xff]
        %v2596 = vld [vmem:[%s1051 + $0x20] sm:$0xff]
        %v2597 = vld [vmem:[%s1051 + $0x28] sm:$0xff]
        %v2598 = vld [vmem:[%s1051 + $0x30] sm:$0xff]
        %v2599 = vld [vmem:[%s1051 + $0x38] sm:$0xff]
        %v2600 = vlaneseq
        %v2601 = vshrl.u32 %v2600, 7
        %v2602 = vsub.s32 0, %v2601
        %v2603 = vrot.slane %v2588, %v2602
        %v2604 = vlaneseq
        %v2605 = vshrl.u32 %v2604, 7
        %v2606 = vsub.s32 0, %v2605
        %v2607 = vrot.slane %v2589, %v2606
        %v2616 = vunpack.c.l.b16 %v2592
        %v2617 = vunpack.c.h.b16 %v2592
        %v2618 = vunpack.c.l.b16 %v2593
        %v2619 = vunpack.c.h.b16 %v2593
        %v2620 = vunpack.c.l.b16 %v2594
        %v2621 = vunpack.c.h.b16 %v2594
        %v2622 = vunpack.c.l.b16 %v2595
        %v2623 = vunpack.c.h.b16 %v2595
        %v2624 = vunpack.c.l.b16 %v2596
        %v2625 = vunpack.c.h.b16 %v2596
        %v2626 = vunpack.c.l.b16 %v2597
        %v2627 = vunpack.c.h.b16 %v2597
        %v2628 = vunpack.c.l.b16 %v2598
        %v2629 = vunpack.c.h.b16 %v2598
        %v2630 = vunpack.c.l.b16 %v2599
        %v2631 = vunpack.c.h.b16 %v2599
        %v2632 = vpack.c.b16 %v2618, %v2616
        %v2633 = vpack.c.b16 %v2619, %v2617
        %v2634 = vpack.c.b16 %v2622, %v2620
        %v2635 = vpack.c.b16 %v2623, %v2621
        %v2636 = vpack.c.b16 %v2626, %v2624
        %v2637 = vpack.c.b16 %v2627, %v2625
        %v2638 = vpack.c.b16 %v2630, %v2628
        %v2639 = vpack.c.b16 %v2631, %v2629
        %vm2648 = vcmask 523264
        %v2650 = vsel %vm2648, %v2591, 0
        %2652 = vmatprep.subr.bf16.mxu0 %v2633
        %2653 = vmatpush1.bf16.msra.mxu0 %v2632
        %2654 = vmatprep.subr.bf16.mxu0 %v2635
        %2655 = vmatpush1.bf16.msra.mxu0 %v2634
        %2656 = vmatprep.subr.bf16.mxu0 %v2637
        %2657 = vmatpush1.bf16.msra.mxu0 %v2636
        %2658 = vmatprep.subr.bf16.mxu0 %v2639
        %2659 = vmatpush1.bf16.msra.mxu0 %v2638
        %2660 = vmatprep.subr.bf16.mxu0 0
        %2661 = vmatpush1.bf16.msra.mxu0 0
        %2662 = vmatprep.subr.bf16.mxu0 0
        %2663 = vmatpush1.bf16.msra.mxu0 0
        %2664 = vmatprep.subr.bf16.mxu0 0
        %2665 = vmatpush1.bf16.msra.mxu0 0
        %2666 = vmatprep.subr.bf16.mxu0 0
        %2667 = vmatpush1.bf16.msra.mxu0 0
        %2668 = vmatprep.subr.bf16.mxu0 0
        %2669 = vmatpush1.bf16.msra.mxu0 0
        %2670 = vmatprep.subr.bf16.mxu0 0
        %2671 = vmatpush1.bf16.msra.mxu0 0
        %2672 = vmatprep.subr.bf16.mxu0 0
        %2673 = vmatpush1.bf16.msra.mxu0 0
        %2674 = vmatprep.subr.bf16.mxu0 0
        %2675 = vmatpush1.bf16.msra.mxu0 0
        %2676 = vmatprep.subr.bf16.mxu0 0
        %2677 = vmatpush1.bf16.msra.mxu0 0
        %2678 = vmatprep.subr.bf16.mxu0 0
        %2679 = vmatpush1.bf16.msra.mxu0 0
        %2680 = vmatprep.subr.bf16.mxu0 0
        %2681 = vmatpush1.bf16.msra.mxu0 0
        %2682 = vmatprep.subr.bf16.mxu0 0
        %2683 = vmatpush1.bf16.msra.mxu0 0
        %2684 = vmatprep.mubr.bf16.mxu0 0
        %2685 = vmatmul.mubr.bf16.gmra.mrb[0].mxu0 %v2650
        %v2686 = vpop.f32.mrb[0].mxu0
        %v2687 = vadd.f32 %v2603, %v2686
        %v2688 = vpop.f32.mrb[0].mxu0
        %v2689 = vadd.f32 %v2607, %v2688
        %v2690 = vpop.f32.mrb[0].mxu0
        %v2691 = vadd.f32 %v2603, %v2690
        %v2692 = vpop.f32.mrb[0].mxu0
        %v2693 = vadd.f32 %v2607, %v2692
        %2694 = vdwg.mxu0
        %v2695 = vpack.c.bf16 %v2687, %v2687
        %v2696 = vpack.c.bf16 %v2689, %v2689
        %2698 = vrot.lane.b32.xlu0 %v2695, 64
        %v2699 = vpop.permute.xlu0 %2698
        %vm2700 = vcmask 130048
        %v2702 = vsel %vm2700, %v2695, 0
        %v2705 = vsel %vm2700, %v2699, 0
        %2707 = vmatprep.subr.bf16.mxu0 0
        %2708 = vmatpush1.bf16.xpose.msra.mxu0 %v2705
        %2709 = vmatprep.subr.bf16.mxu0 0
        %2710 = vmatpush1.bf16.xpose.msra.mxu0 0
        %2711 = vmatprep.subr.bf16.mxu0 0
        %2712 = vmatpush1.bf16.xpose.msra.mxu0 0
        %2713 = vmatprep.subr.bf16.mxu0 0
        %2714 = vmatpush1.bf16.xpose.msra.mxu0 0
        %2715 = vmatprep.subr.bf16.mxu0 0
        %2716 = vmatpush1.bf16.xpose.msra.mxu0 0
        %2717 = vmatprep.subr.bf16.mxu0 0
        %2718 = vmatpush1.bf16.xpose.msra.mxu0 0
        %2719 = vmatprep.subr.bf16.mxu0 0
        %2720 = vmatpush1.bf16.xpose.msra.mxu0 0
        %2721 = vmatprep.subr.bf16.mxu0 0
        %2722 = vmatpush1.bf16.xpose.msra.mxu0 0
        %2723 = vmatprep.subr.bf16.mxu0 0
        %2724 = vmatpush1.bf16.xpose.msra.mxu0 0
        %2725 = vmatprep.subr.bf16.mxu0 0
        %2726 = vmatpush1.bf16.xpose.msra.mxu0 0
        %2727 = vmatprep.subr.bf16.mxu0 0
        %2728 = vmatpush1.bf16.xpose.msra.mxu0 0
        %2729 = vmatprep.subr.bf16.mxu0 0
        %2730 = vmatpush1.bf16.xpose.msra.mxu0 0
        %2731 = vmatprep.subr.bf16.mxu0 0
        %2732 = vmatpush1.bf16.xpose.msra.mxu0 0
        %2733 = vmatprep.subr.bf16.mxu0 0
        %2734 = vmatpush1.bf16.xpose.msra.mxu0 0
        %2735 = vmatprep.subr.bf16.mxu0 0
        %2736 = vmatpush1.bf16.xpose.msra.mxu0 0
        %2737 = vmatprep.subr.bf16.mxu0 0
        %2738 = vmatpush1.bf16.xpose.msra.mxu0 0
        %2739 = vmatprep.mubr.bf16.mxu0 0
        %2740 = vmatmul.mubr.bf16.gmra.mrb[0].mxu0 %v2702
        %v2741 = vpop.f32.mrb[0].mxu0
        %v2742 = vadd.f32 0.0, %v2741
        %v2743 = vpop.f32.mrb[0].mxu0
        %v2744 = vpop.f32.mrb[0].mxu0
        %v2745 = vpop.f32.mrb[0].mxu0
        %2746 = vdwg.mxu0
        %vm2747 = vcmask 64512
        %v2748 = vsel %vm2747, %v2742, -inf
        %2749 = vmax.xlane.f32.xlu0 %v2748
        %v2750 = vpop.xlane.xlu0 %2749
        %v2751 = vsub.f32 %v2742, %v2750
        %v2752 = vmul.f32 %v2751, 1.442695
        %v2753 = vpow.pop %v2752
        %v2754 = vsel %vm2747, %v2753, 0.0
        %2755 = vadd.xlane.f32.xlu0 %v2754
        %v2756 = vpop.xlane.xlu0 %2755
        %v2757 = vrcp.pop %v2756
        %v2758 = vmul.f32 %v2753, %v2757
        %v2759 = vpack.c.bf16 %v2758, %v2758
        %v2761 = vsel %vm2747, %v2759, 0
        %vm2763 = vcmask 1043456
        %v2765 = vsel %vm2763, %v2696, 0
        %2767 = vmatprep.subr.bf16.mxu0 0
        %2768 = vmatpush1.bf16.msra.mxu0 %v2765
        %2769 = vmatprep.subr.bf16.mxu0 0
        %2770 = vmatpush1.bf16.msra.mxu0 0
        %2771 = vmatprep.subr.bf16.mxu0 0
        %2772 = vmatpush1.bf16.msra.mxu0 0
        %2773 = vmatprep.subr.bf16.mxu0 0
        %2774 = vmatpush1.bf16.msra.mxu0 0
        %2775 = vmatprep.subr.bf16.mxu0 0
        %2776 = vmatpush1.bf16.msra.mxu0 0
        %2777 = vmatprep.subr.bf16.mxu0 0
        %2778 = vmatpush1.bf16.msra.mxu0 0
        %2779 = vmatprep.subr.bf16.mxu0 0
        %2780 = vmatpush1.bf16.msra.mxu0 0
        %2781 = vmatprep.subr.bf16.mxu0 0
        %2782 = vmatpush1.bf16.msra.mxu0 0
        %2783 = vmatprep.subr.bf16.mxu0 0
        %2784 = vmatpush1.bf16.msra.mxu0 0
        %2785 = vmatprep.subr.bf16.mxu0 0
        %2786 = vmatpush1.bf16.msra.mxu0 0
        %2787 = vmatprep.subr.bf16.mxu0 0
        %2788 = vmatpush1.bf16.msra.mxu0 0
        %2789 = vmatprep.subr.bf16.mxu0 0
        %2790 = vmatpush1.bf16.msra.mxu0 0
        %2791 = vmatprep.subr.bf16.mxu0 0
        %2792 = vmatpush1.bf16.msra.mxu0 0
        %2793 = vmatprep.subr.bf16.mxu0 0
        %2794 = vmatpush1.bf16.msra.mxu0 0
        %2795 = vmatprep.subr.bf16.mxu0 0
        %2796 = vmatpush1.bf16.msra.mxu0 0
        %2797 = vmatprep.subr.bf16.mxu0 0
        %2798 = vmatpush1.bf16.msra.mxu0 0
        %2799 = vmatprep.mubr.bf16.mxu0 0
        %2800 = vmatmul.mubr.bf16.gmra.mrb[0].mxu0 %v2761
        %v2801 = vpop.f32.mrb[0].mxu0
        %v2802 = vadd.f32 0.0, %v2801
        %v2803 = vpop.f32.mrb[0].mxu0
        %v2804 = vpop.f32.mrb[0].mxu0
        %v2805 = vpop.f32.mrb[0].mxu0
        %2806 = vdwg.mxu0
        %2807 = vrot.lane.b32.xlu0 %v2695, 112
        %v2808 = vpop.permute.xlu0 %2807
        %2809 = vrot.lane.b32.xlu0 %v2695, 48
        %v2810 = vpop.permute.xlu0 %2809
        %v2812 = vsel %vm2700, %v2808, 0
        %v2815 = vsel %vm2700, %v2810, 0
        %2817 = vmatprep.subr.bf16.mxu0 0
        %2818 = vmatpush1.bf16.xpose.msra.mxu0 %v2815
        %2819 = vmatprep.subr.bf16.mxu0 0
        %2820 = vmatpush1.bf16.xpose.msra.mxu0 0
        %2821 = vmatprep.subr.bf16.mxu0 0
        %2822 = vmatpush1.bf16.xpose.msra.mxu0 0
        %2823 = vmatprep.subr.bf16.mxu0 0
        %2824 = vmatpush1.bf16.xpose.msra.mxu0 0
        %2825 = vmatprep.subr.bf16.mxu0 0
        %2826 = vmatpush1.bf16.xpose.msra.mxu0 0
        %2827 = vmatprep.subr.bf16.mxu0 0
        %2828 = vmatpush1.bf16.xpose.msra.mxu0 0
        %2829 = vmatprep.subr.bf16.mxu0 0
        %2830 = vmatpush1.bf16.xpose.msra.mxu0 0
        %2831 = vmatprep.subr.bf16.mxu0 0
        %2832 = vmatpush1.bf16.xpose.msra.mxu0 0
        %2833 = vmatprep.subr.bf16.mxu0 0
        %2834 = vmatpush1.bf16.xpose.msra.mxu0 0
        %2835 = vmatprep.subr.bf16.mxu0 0
        %2836 = vmatpush1.bf16.xpose.msra.mxu0 0
        %2837 = vmatprep.subr.bf16.mxu0 0
        %2838 = vmatpush1.bf16.xpose.msra.mxu0 0
        %2839 = vmatprep.subr.bf16.mxu0 0
        %2840 = vmatpush1.bf16.xpose.msra.mxu0 0
        %2841 = vmatprep.subr.bf16.mxu0 0
        %2842 = vmatpush1.bf16.xpose.msra.mxu0 0
        %2843 = vmatprep.subr.bf16.mxu0 0
        %2844 = vmatpush1.bf16.xpose.msra.mxu0 0
        %2845 = vmatprep.subr.bf16.mxu0 0
        %2846 = vmatpush1.bf16.xpose.msra.mxu0 0
        %2847 = vmatprep.subr.bf16.mxu0 0
        %2848 = vmatpush1.bf16.xpose.msra.mxu0 0
        %2849 = vmatprep.mubr.bf16.mxu0 0
        %2850 = vmatmul.mubr.bf16.gmra.mrb[0].mxu0 %v2812
        %v2851 = vpop.f32.mrb[0].mxu0
        %v2852 = vadd.f32 0.0, %v2851
        %v2853 = vpop.f32.mrb[0].mxu0
        %v2854 = vpop.f32.mrb[0].mxu0
        %v2855 = vpop.f32.mrb[0].mxu0
        %2856 = vdwg.mxu0
        %v2857 = vsel %vm2747, %v2852, -inf
        %2858 = vmax.xlane.f32.xlu0 %v2857
        %v2859 = vpop.xlane.xlu0 %2858
        %v2860 = vsub.f32 %v2852, %v2859
        %v2861 = vmul.f32 %v2860, 1.442695
        %v2862 = vpow.pop %v2861
        %v2863 = vsel %vm2747, %v2862, 0.0
        %2864 = vadd.xlane.f32.xlu0 %v2863
        %v2865 = vpop.xlane.xlu0 %2864
        %v2866 = vrcp.pop %v2865
        %v2867 = vmul.f32 %v2862, %v2866
        %v2868 = vpack.c.bf16 %v2867, %v2867
        %2870 = vrot.lane.b32.xlu0 %v2696, 112
        %v2871 = vpop.permute.xlu0 %2870
        %v2873 = vsel %vm2747, %v2868, 0
        %v2876 = vsel %vm2763, %v2871, 0
        %2878 = vmatprep.subr.bf16.mxu0 0
        %2879 = vmatpush1.bf16.msra.mxu0 %v2876
        %2880 = vmatprep.subr.bf16.mxu0 0
        %2881 = vmatpush1.bf16.msra.mxu0 0
        %2882 = vmatprep.subr.bf16.mxu0 0
        %2883 = vmatpush1.bf16.msra.mxu0 0
        %2884 = vmatprep.subr.bf16.mxu0 0
        %2885 = vmatpush1.bf16.msra.mxu0 0
        %2886 = vmatprep.subr.bf16.mxu0 0
        %2887 = vmatpush1.bf16.msra.mxu0 0
        %2888 = vmatprep.subr.bf16.mxu0 0
        %2889 = vmatpush1.bf16.msra.mxu0 0
        %2890 = vmatprep.subr.bf16.mxu0 0
        %2891 = vmatpush1.bf16.msra.mxu0 0
        %2892 = vmatprep.subr.bf16.mxu0 0
        %2893 = vmatpush1.bf16.msra.mxu0 0
        %2894 = vmatprep.subr.bf16.mxu0 0
        %2895 = vmatpush1.bf16.msra.mxu0 0
        %2896 = vmatprep.subr.bf16.mxu0 0
        %2897 = vmatpush1.bf16.msra.mxu0 0
        %2898 = vmatprep.subr.bf16.mxu0 0
        %2899 = vmatpush1.bf16.msra.mxu0 0
        %2900 = vmatprep.subr.bf16.mxu0 0
        %2901 = vmatpush1.bf16.msra.mxu0 0
        %2902 = vmatprep.subr.bf16.mxu0 0
        %2903 = vmatpush1.bf16.msra.mxu0 0
        %2904 = vmatprep.subr.bf16.mxu0 0
        %2905 = vmatpush1.bf16.msra.mxu0 0
        %2906 = vmatprep.subr.bf16.mxu0 0
        %2907 = vmatpush1.bf16.msra.mxu0 0
        %2908 = vmatprep.subr.bf16.mxu0 0
        %2909 = vmatpush1.bf16.msra.mxu0 0
        %2910 = vmatprep.mubr.bf16.mxu0 0
        %2911 = vmatmul.mubr.bf16.gmra.mrb[0].mxu0 %v2873
        %v2912 = vpop.f32.mrb[0].mxu0
        %v2913 = vadd.f32 0.0, %v2912
        %v2914 = vpop.f32.mrb[0].mxu0
        %v2915 = vpop.f32.mrb[0].mxu0
        %v2916 = vpop.f32.mrb[0].mxu0
        %2917 = vdwg.mxu0
        %2918 = vrot.lane.b32.xlu0 %v2695, 96
        %v2919 = vpop.permute.xlu0 %2918
        %2920 = vrot.lane.b32.xlu0 %v2695, 32
        %v2921 = vpop.permute.xlu0 %2920
        %v2923 = vsel %vm2700, %v2919, 0
        %v2926 = vsel %vm2700, %v2921, 0
        %2928 = vmatprep.subr.bf16.mxu0 0
        %2929 = vmatpush1.bf16.xpose.msra.mxu0 %v2926
        %2930 = vmatprep.subr.bf16.mxu0 0
        %2931 = vmatpush1.bf16.xpose.msra.mxu0 0
        %2932 = vmatprep.subr.bf16.mxu0 0
        %2933 = vmatpush1.bf16.xpose.msra.mxu0 0
        %2934 = vmatprep.subr.bf16.mxu0 0
        %2935 = vmatpush1.bf16.xpose.msra.mxu0 0
        %2936 = vmatprep.subr.bf16.mxu0 0
        %2937 = vmatpush1.bf16.xpose.msra.mxu0 0
        %2938 = vmatprep.subr.bf16.mxu0 0
        %2939 = vmatpush1.bf16.xpose.msra.mxu0 0
        %2940 = vmatprep.subr.bf16.mxu0 0
        %2941 = vmatpush1.bf16.xpose.msra.mxu0 0
        %2942 = vmatprep.subr.bf16.mxu0 0
        %2943 = vmatpush1.bf16.xpose.msra.mxu0 0
        %2944 = vmatprep.subr.bf16.mxu0 0
        %2945 = vmatpush1.bf16.xpose.msra.mxu0 0
        %2946 = vmatprep.subr.bf16.mxu0 0
        %2947 = vmatpush1.bf16.xpose.msra.mxu0 0
        %2948 = vmatprep.subr.bf16.mxu0 0
        %2949 = vmatpush1.bf16.xpose.msra.mxu0 0
        %2950 = vmatprep.subr.bf16.mxu0 0
        %2951 = vmatpush1.bf16.xpose.msra.mxu0 0
        %2952 = vmatprep.subr.bf16.mxu0 0
        %2953 = vmatpush1.bf16.xpose.msra.mxu0 0
        %2954 = vmatprep.subr.bf16.mxu0 0
        %2955 = vmatpush1.bf16.xpose.msra.mxu0 0
        %2956 = vmatprep.subr.bf16.mxu0 0
        %2957 = vmatpush1.bf16.xpose.msra.mxu0 0
        %2958 = vmatprep.subr.bf16.mxu0 0
        %2959 = vmatpush1.bf16.xpose.msra.mxu0 0
        %2960 = vmatprep.mubr.bf16.mxu0 0
        %2961 = vmatmul.mubr.bf16.gmra.mrb[0].mxu0 %v2923
        %v2962 = vpop.f32.mrb[0].mxu0
        %v2963 = vadd.f32 0.0, %v2962
        %v2964 = vpop.f32.mrb[0].mxu0
        %v2965 = vpop.f32.mrb[0].mxu0
        %v2966 = vpop.f32.mrb[0].mxu0
        %2967 = vdwg.mxu0
        %v2968 = vsel %vm2747, %v2963, -inf
        %2969 = vmax.xlane.f32.xlu0 %v2968
        %v2970 = vpop.xlane.xlu0 %2969
        %v2971 = vsub.f32 %v2963, %v2970
        %v2972 = vmul.f32 %v2971, 1.442695
        %v2973 = vpow.pop %v2972
        %v2974 = vsel %vm2747, %v2973, 0.0
        %2975 = vadd.xlane.f32.xlu0 %v2974
        %v2976 = vpop.xlane.xlu0 %2975
        %v2977 = vrcp.pop %v2976
        %v2978 = vmul.f32 %v2973, %v2977
        %v2979 = vpack.c.bf16 %v2978, %v2978
        %2980 = vrot.lane.b32.xlu0 %v2696, 96
        %v2981 = vpop.permute.xlu0 %2980
        %v2983 = vsel %vm2747, %v2979, 0
        %v2986 = vsel %vm2763, %v2981, 0
        %2988 = vmatprep.subr.bf16.mxu0 0
        %2989 = vmatpush1.bf16.msra.mxu0 %v2986
        %2990 = vmatprep.subr.bf16.mxu0 0
        %2991 = vmatpush1.bf16.msra.mxu0 0
        %2992 = vmatprep.subr.bf16.mxu0 0
        %2993 = vmatpush1.bf16.msra.mxu0 0
        %2994 = vmatprep.subr.bf16.mxu0 0
        %2995 = vmatpush1.bf16.msra.mxu0 0
        %2996 = vmatprep.subr.bf16.mxu0 0
        %2997 = vmatpush1.bf16.msra.mxu0 0
        %2998 = vmatprep.subr.bf16.mxu0 0
        %2999 = vmatpush1.bf16.msra.mxu0 0
        %3000 = vmatprep.subr.bf16.mxu0 0
        %3001 = vmatpush1.bf16.msra.mxu0 0
        %3002 = vmatprep.subr.bf16.mxu0 0
        %3003 = vmatpush1.bf16.msra.mxu0 0
        %3004 = vmatprep.subr.bf16.mxu0 0
        %3005 = vmatpush1.bf16.msra.mxu0 0
        %3006 = vmatprep.subr.bf16.mxu0 0
        %3007 = vmatpush1.bf16.msra.mxu0 0
        %3008 = vmatprep.subr.bf16.mxu0 0
        %3009 = vmatpush1.bf16.msra.mxu0 0
        %3010 = vmatprep.subr.bf16.mxu0 0
        %3011 = vmatpush1.bf16.msra.mxu0 0
        %3012 = vmatprep.subr.bf16.mxu0 0
        %3013 = vmatpush1.bf16.msra.mxu0 0
        %3014 = vmatprep.subr.bf16.mxu0 0
        %3015 = vmatpush1.bf16.msra.mxu0 0
        %3016 = vmatprep.subr.bf16.mxu0 0
        %3017 = vmatpush1.bf16.msra.mxu0 0
        %3018 = vmatprep.subr.bf16.mxu0 0
        %3019 = vmatpush1.bf16.msra.mxu0 0
        %3020 = vmatprep.mubr.bf16.mxu0 0
        %3021 = vmatmul.mubr.bf16.gmra.mrb[0].mxu0 %v2983
        %v3022 = vpop.f32.mrb[0].mxu0
        %v3023 = vadd.f32 0.0, %v3022
        %v3024 = vpop.f32.mrb[0].mxu0
        %v3025 = vpop.f32.mrb[0].mxu0
        %v3026 = vpop.f32.mrb[0].mxu0
        %3027 = vdwg.mxu0
        %3028 = vrot.lane.b32.xlu0 %v2695, 80
        %v3029 = vpop.permute.xlu0 %3028
        %3030 = vrot.lane.b32.xlu0 %v2695, 16
        %v3031 = vpop.permute.xlu0 %3030
        %v3033 = vsel %vm2700, %v3029, 0
        %v3036 = vsel %vm2700, %v3031, 0
        %3038 = vmatprep.subr.bf16.mxu0 0
        %3039 = vmatpush1.bf16.xpose.msra.mxu0 %v3036
        %3040 = vmatprep.subr.bf16.mxu0 0
        %3041 = vmatpush1.bf16.xpose.msra.mxu0 0
        %3042 = vmatprep.subr.bf16.mxu0 0
        %3043 = vmatpush1.bf16.xpose.msra.mxu0 0
        %3044 = vmatprep.subr.bf16.mxu0 0
        %3045 = vmatpush1.bf16.xpose.msra.mxu0 0
        %3046 = vmatprep.subr.bf16.mxu0 0
        %3047 = vmatpush1.bf16.xpose.msra.mxu0 0
        %3048 = vmatprep.subr.bf16.mxu0 0
        %3049 = vmatpush1.bf16.xpose.msra.mxu0 0
        %3050 = vmatprep.subr.bf16.mxu0 0
        %3051 = vmatpush1.bf16.xpose.msra.mxu0 0
        %3052 = vmatprep.subr.bf16.mxu0 0
        %3053 = vmatpush1.bf16.xpose.msra.mxu0 0
        %3054 = vmatprep.subr.bf16.mxu0 0
        %3055 = vmatpush1.bf16.xpose.msra.mxu0 0
        %3056 = vmatprep.subr.bf16.mxu0 0
        %3057 = vmatpush1.bf16.xpose.msra.mxu0 0
        %3058 = vmatprep.subr.bf16.mxu0 0
        %3059 = vmatpush1.bf16.xpose.msra.mxu0 0
        %3060 = vmatprep.subr.bf16.mxu0 0
        %3061 = vmatpush1.bf16.xpose.msra.mxu0 0
        %3062 = vmatprep.subr.bf16.mxu0 0
        %3063 = vmatpush1.bf16.xpose.msra.mxu0 0
        %3064 = vmatprep.subr.bf16.mxu0 0
        %3065 = vmatpush1.bf16.xpose.msra.mxu0 0
        %3066 = vmatprep.subr.bf16.mxu0 0
        %3067 = vmatpush1.bf16.xpose.msra.mxu0 0
        %3068 = vmatprep.subr.bf16.mxu0 0
        %3069 = vmatpush1.bf16.xpose.msra.mxu0 0
        %3070 = vmatprep.mubr.bf16.mxu0 0
        %3071 = vmatmul.mubr.bf16.gmra.mrb[0].mxu0 %v3033
        %v3072 = vpop.f32.mrb[0].mxu0
        %v3073 = vadd.f32 0.0, %v3072
        %v3074 = vpop.f32.mrb[0].mxu0
        %v3075 = vpop.f32.mrb[0].mxu0
        %v3076 = vpop.f32.mrb[0].mxu0
        %3077 = vdwg.mxu0
        %v3078 = vsel %vm2747, %v3073, -inf
        %3079 = vmax.xlane.f32.xlu0 %v3078
        %v3080 = vpop.xlane.xlu0 %3079
        %v3081 = vsub.f32 %v3073, %v3080
        %v3082 = vmul.f32 %v3081, 1.442695
        %v3083 = vpow.pop %v3082
        %v3084 = vsel %vm2747, %v3083, 0.0
        %3085 = vadd.xlane.f32.xlu0 %v3084
        %v3086 = vpop.xlane.xlu0 %3085
        %v3087 = vrcp.pop %v3086
        %v3088 = vmul.f32 %v3083, %v3087
        %v3089 = vpack.c.bf16 %v3088, %v3088
        %3090 = vrot.lane.b32.xlu0 %v2696, 80
        %v3091 = vpop.permute.xlu0 %3090
        %v3093 = vsel %vm2747, %v3089, 0
        %v3096 = vsel %vm2763, %v3091, 0
        %3098 = vmatprep.subr.bf16.mxu0 0
        %3099 = vmatpush1.bf16.msra.mxu0 %v3096
        %3100 = vmatprep.subr.bf16.mxu0 0
        %3101 = vmatpush1.bf16.msra.mxu0 0
        %3102 = vmatprep.subr.bf16.mxu0 0
        %3103 = vmatpush1.bf16.msra.mxu0 0
        %3104 = vmatprep.subr.bf16.mxu0 0
        %3105 = vmatpush1.bf16.msra.mxu0 0
        %3106 = vmatprep.subr.bf16.mxu0 0
        %3107 = vmatpush1.bf16.msra.mxu0 0
        %3108 = vmatprep.subr.bf16.mxu0 0
        %3109 = vmatpush1.bf16.msra.mxu0 0
        %3110 = vmatprep.subr.bf16.mxu0 0
        %3111 = vmatpush1.bf16.msra.mxu0 0
        %3112 = vmatprep.subr.bf16.mxu0 0
        %3113 = vmatpush1.bf16.msra.mxu0 0
        %3114 = vmatprep.subr.bf16.mxu0 0
        %3115 = vmatpush1.bf16.msra.mxu0 0
        %3116 = vmatprep.subr.bf16.mxu0 0
        %3117 = vmatpush1.bf16.msra.mxu0 0
        %3118 = vmatprep.subr.bf16.mxu0 0
        %3119 = vmatpush1.bf16.msra.mxu0 0
        %3120 = vmatprep.subr.bf16.mxu0 0
        %3121 = vmatpush1.bf16.msra.mxu0 0
        %3122 = vmatprep.subr.bf16.mxu0 0
        %3123 = vmatpush1.bf16.msra.mxu0 0
        %3124 = vmatprep.subr.bf16.mxu0 0
        %3125 = vmatpush1.bf16.msra.mxu0 0
        %3126 = vmatprep.subr.bf16.mxu0 0
        %3127 = vmatpush1.bf16.msra.mxu0 0
        %3128 = vmatprep.subr.bf16.mxu0 0
        %3129 = vmatpush1.bf16.msra.mxu0 0
        %3130 = vmatprep.mubr.bf16.mxu0 0
        %3131 = vmatmul.mubr.bf16.gmra.mrb[0].mxu0 %v3093
        %v3132 = vpop.f32.mrb[0].mxu0
        %v3133 = vadd.f32 0.0, %v3132
        %v3134 = vpop.f32.mrb[0].mxu0
        %v3135 = vpop.f32.mrb[0].mxu0
        %v3136 = vpop.f32.mrb[0].mxu0
        %3137 = vdwg.mxu0
        %3139 = vrot.lane.b32.xlu0 %v2913, 16
        %v3140 = vpop.permute.xlu0 %3139
        %3143 = vrot.lane.b32.xlu0 %v3023, 32
        %v3144 = vpop.permute.xlu0 %3143
        %3147 = vrot.lane.b32.xlu0 %v3133, 48
        %v3148 = vpop.permute.xlu0 %3147
        %v3150 = vsel %vm2700, %v2802, %v3140
        %vm3151 = vcmask 261120
        %v3152 = vsel %vm3151, %v3150, %v3144
        %vm3153 = vcmask 392192
        %v3154 = vsel %vm3153, %v3152, %v3148
        %v3155 = vpack.c.bf16 %v2691, %v2691
        %v3156 = vpack.c.bf16 %v2693, %v2693
        %3158 = vrot.lane.b32.xlu0 %v3155, 64
        %v3159 = vpop.permute.xlu0 %3158
        %v3161 = vsel %vm2700, %v3155, 0
        %v3164 = vsel %vm2700, %v3159, 0
        %3166 = vmatprep.subr.bf16.mxu0 0
        %3167 = vmatpush1.bf16.xpose.msra.mxu0 %v3164
        %3168 = vmatprep.subr.bf16.mxu0 0
        %3169 = vmatpush1.bf16.xpose.msra.mxu0 0
        %3170 = vmatprep.subr.bf16.mxu0 0
        %3171 = vmatpush1.bf16.xpose.msra.mxu0 0
        %3172 = vmatprep.subr.bf16.mxu0 0
        %3173 = vmatpush1.bf16.xpose.msra.mxu0 0
        %3174 = vmatprep.subr.bf16.mxu0 0
        %3175 = vmatpush1.bf16.xpose.msra.mxu0 0
        %3176 = vmatprep.subr.bf16.mxu0 0
        %3177 = vmatpush1.bf16.xpose.msra.mxu0 0
        %3178 = vmatprep.subr.bf16.mxu0 0
        %3179 = vmatpush1.bf16.xpose.msra.mxu0 0
        %3180 = vmatprep.subr.bf16.mxu0 0
        %3181 = vmatpush1.bf16.xpose.msra.mxu0 0
        %3182 = vmatprep.subr.bf16.mxu0 0
        %3183 = vmatpush1.bf16.xpose.msra.mxu0 0
        %3184 = vmatprep.subr.bf16.mxu0 0
        %3185 = vmatpush1.bf16.xpose.msra.mxu0 0
        %3186 = vmatprep.subr.bf16.mxu0 0
        %3187 = vmatpush1.bf16.xpose.msra.mxu0 0
        %3188 = vmatprep.subr.bf16.mxu0 0
        %3189 = vmatpush1.bf16.xpose.msra.mxu0 0
        %3190 = vmatprep.subr.bf16.mxu0 0
        %3191 = vmatpush1.bf16.xpose.msra.mxu0 0
        %3192 = vmatprep.subr.bf16.mxu0 0
        %3193 = vmatpush1.bf16.xpose.msra.mxu0 0
        %3194 = vmatprep.subr.bf16.mxu0 0
        %3195 = vmatpush1.bf16.xpose.msra.mxu0 0
        %3196 = vmatprep.subr.bf16.mxu0 0
        %3197 = vmatpush1.bf16.xpose.msra.mxu0 0
        %3198 = vmatprep.mubr.bf16.mxu0 0
        %3199 = vmatmul.mubr.bf16.gmra.mrb[0].mxu0 %v3161
        %v3200 = vpop.f32.mrb[0].mxu0
        %v3201 = vadd.f32 0.0, %v3200
        %v3202 = vpop.f32.mrb[0].mxu0
        %v3203 = vpop.f32.mrb[0].mxu0
        %v3204 = vpop.f32.mrb[0].mxu0
        %3205 = vdwg.mxu0
        %v3206 = vsel %vm2747, %v3201, -inf
        %3207 = vmax.xlane.f32.xlu0 %v3206
        %v3208 = vpop.xlane.xlu0 %3207
        %v3209 = vsub.f32 %v3201, %v3208
        %v3210 = vmul.f32 %v3209, 1.442695
        %v3211 = vpow.pop %v3210
        %v3212 = vsel %vm2747, %v3211, 0.0
        %3213 = vadd.xlane.f32.xlu0 %v3212
        %v3214 = vpop.xlane.xlu0 %3213
        %v3215 = vrcp.pop %v3214
        %v3216 = vmul.f32 %v3211, %v3215
        %v3217 = vpack.c.bf16 %v3216, %v3216
        %v3219 = vsel %vm2747, %v3217, 0
        %v3222 = vsel %vm2763, %v3156, 0
        %3224 = vmatprep.subr.bf16.mxu0 0
        %3225 = vmatpush1.bf16.msra.mxu0 %v3222
        %3226 = vmatprep.subr.bf16.mxu0 0
        %3227 = vmatpush1.bf16.msra.mxu0 0
        %3228 = vmatprep.subr.bf16.mxu0 0
        %3229 = vmatpush1.bf16.msra.mxu0 0
        %3230 = vmatprep.subr.bf16.mxu0 0
        %3231 = vmatpush1.bf16.msra.mxu0 0
        %3232 = vmatprep.subr.bf16.mxu0 0
        %3233 = vmatpush1.bf16.msra.mxu0 0
        %3234 = vmatprep.subr.bf16.mxu0 0
        %3235 = vmatpush1.bf16.msra.mxu0 0
        %3236 = vmatprep.subr.bf16.mxu0 0
        %3237 = vmatpush1.bf16.msra.mxu0 0
        %3238 = vmatprep.subr.bf16.mxu0 0
        %3239 = vmatpush1.bf16.msra.mxu0 0
        %3240 = vmatprep.subr.bf16.mxu0 0
        %3241 = vmatpush1.bf16.msra.mxu0 0
        %3242 = vmatprep.subr.bf16.mxu0 0
        %3243 = vmatpush1.bf16.msra.mxu0 0
        %3244 = vmatprep.subr.bf16.mxu0 0
        %3245 = vmatpush1.bf16.msra.mxu0 0
        %3246 = vmatprep.subr.bf16.mxu0 0
        %3247 = vmatpush1.bf16.msra.mxu0 0
        %3248 = vmatprep.subr.bf16.mxu0 0
        %3249 = vmatpush1.bf16.msra.mxu0 0
        %3250 = vmatprep.subr.bf16.mxu0 0
        %3251 = vmatpush1.bf16.msra.mxu0 0
        %3252 = vmatprep.subr.bf16.mxu0 0
        %3253 = vmatpush1.bf16.msra.mxu0 0
        %3254 = vmatprep.subr.bf16.mxu0 0
        %3255 = vmatpush1.bf16.msra.mxu0 0
        %3256 = vmatprep.mubr.bf16.mxu0 0
        %3257 = vmatmul.mubr.bf16.gmra.mrb[0].mxu0 %v3219
        %v3258 = vpop.f32.mrb[0].mxu0
        %v3259 = vadd.f32 0.0, %v3258
        %v3260 = vpop.f32.mrb[0].mxu0
        %v3261 = vpop.f32.mrb[0].mxu0
        %v3262 = vpop.f32.mrb[0].mxu0
        %3263 = vdwg.mxu0
        %3264 = vrot.lane.b32.xlu0 %v3155, 112
        %v3265 = vpop.permute.xlu0 %3264
        %3266 = vrot.lane.b32.xlu0 %v3155, 48
        %v3267 = vpop.permute.xlu0 %3266
        %v3269 = vsel %vm2700, %v3265, 0
        %v3272 = vsel %vm2700, %v3267, 0
        %3274 = vmatprep.subr.bf16.mxu0 0
        %3275 = vmatpush1.bf16.xpose.msra.mxu0 %v3272
        %3276 = vmatprep.subr.bf16.mxu0 0
        %3277 = vmatpush1.bf16.xpose.msra.mxu0 0
        %3278 = vmatprep.subr.bf16.mxu0 0
        %3279 = vmatpush1.bf16.xpose.msra.mxu0 0
        %3280 = vmatprep.subr.bf16.mxu0 0
        %3281 = vmatpush1.bf16.xpose.msra.mxu0 0
        %3282 = vmatprep.subr.bf16.mxu0 0
        %3283 = vmatpush1.bf16.xpose.msra.mxu0 0
        %3284 = vmatprep.subr.bf16.mxu0 0
        %3285 = vmatpush1.bf16.xpose.msra.mxu0 0
        %3286 = vmatprep.subr.bf16.mxu0 0
        %3287 = vmatpush1.bf16.xpose.msra.mxu0 0
        %3288 = vmatprep.subr.bf16.mxu0 0
        %3289 = vmatpush1.bf16.xpose.msra.mxu0 0
        %3290 = vmatprep.subr.bf16.mxu0 0
        %3291 = vmatpush1.bf16.xpose.msra.mxu0 0
        %3292 = vmatprep.subr.bf16.mxu0 0
        %3293 = vmatpush1.bf16.xpose.msra.mxu0 0
        %3294 = vmatprep.subr.bf16.mxu0 0
        %3295 = vmatpush1.bf16.xpose.msra.mxu0 0
        %3296 = vmatprep.subr.bf16.mxu0 0
        %3297 = vmatpush1.bf16.xpose.msra.mxu0 0
        %3298 = vmatprep.subr.bf16.mxu0 0
        %3299 = vmatpush1.bf16.xpose.msra.mxu0 0
        %3300 = vmatprep.subr.bf16.mxu0 0
        %3301 = vmatpush1.bf16.xpose.msra.mxu0 0
        %3302 = vmatprep.subr.bf16.mxu0 0
        %3303 = vmatpush1.bf16.xpose.msra.mxu0 0
        %3304 = vmatprep.subr.bf16.mxu0 0
        %3305 = vmatpush1.bf16.xpose.msra.mxu0 0
        %3306 = vmatprep.mubr.bf16.mxu0 0
        %3307 = vmatmul.mubr.bf16.gmra.mrb[0].mxu0 %v3269
        %v3308 = vpop.f32.mrb[0].mxu0
        %v3309 = vadd.f32 0.0, %v3308
        %v3310 = vpop.f32.mrb[0].mxu0
        %v3311 = vpop.f32.mrb[0].mxu0
        %v3312 = vpop.f32.mrb[0].mxu0
        %3313 = vdwg.mxu0
        %v3314 = vsel %vm2747, %v3309, -inf
        %3315 = vmax.xlane.f32.xlu0 %v3314
        %v3316 = vpop.xlane.xlu0 %3315
        %v3317 = vsub.f32 %v3309, %v3316
        %v3318 = vmul.f32 %v3317, 1.442695
        %v3319 = vpow.pop %v3318
        %v3320 = vsel %vm2747, %v3319, 0.0
        %3321 = vadd.xlane.f32.xlu0 %v3320
        %v3322 = vpop.xlane.xlu0 %3321
        %v3323 = vrcp.pop %v3322
        %v3324 = vmul.f32 %v3319, %v3323
        %v3325 = vpack.c.bf16 %v3324, %v3324
        %3327 = vrot.lane.b32.xlu0 %v3156, 112
        %v3328 = vpop.permute.xlu0 %3327
        %v3330 = vsel %vm2747, %v3325, 0
        %v3333 = vsel %vm2763, %v3328, 0
        %3335 = vmatprep.subr.bf16.mxu0 0
        %3336 = vmatpush1.bf16.msra.mxu0 %v3333
        %3337 = vmatprep.subr.bf16.mxu0 0
        %3338 = vmatpush1.bf16.msra.mxu0 0
        %3339 = vmatprep.subr.bf16.mxu0 0
        %3340 = vmatpush1.bf16.msra.mxu0 0
        %3341 = vmatprep.subr.bf16.mxu0 0
        %3342 = vmatpush1.bf16.msra.mxu0 0
        %3343 = vmatprep.subr.bf16.mxu0 0
        %3344 = vmatpush1.bf16.msra.mxu0 0
        %3345 = vmatprep.subr.bf16.mxu0 0
        %3346 = vmatpush1.bf16.msra.mxu0 0
        %3347 = vmatprep.subr.bf16.mxu0 0
        %3348 = vmatpush1.bf16.msra.mxu0 0
        %3349 = vmatprep.subr.bf16.mxu0 0
        %3350 = vmatpush1.bf16.msra.mxu0 0
        %3351 = vmatprep.subr.bf16.mxu0 0
        %3352 = vmatpush1.bf16.msra.mxu0 0
        %3353 = vmatprep.subr.bf16.mxu0 0
        %3354 = vmatpush1.bf16.msra.mxu0 0
        %3355 = vmatprep.subr.bf16.mxu0 0
        %3356 = vmatpush1.bf16.msra.mxu0 0
        %3357 = vmatprep.subr.bf16.mxu0 0
        %3358 = vmatpush1.bf16.msra.mxu0 0
        %3359 = vmatprep.subr.bf16.mxu0 0
        %3360 = vmatpush1.bf16.msra.mxu0 0
        %3361 = vmatprep.subr.bf16.mxu0 0
        %3362 = vmatpush1.bf16.msra.mxu0 0
        %3363 = vmatprep.subr.bf16.mxu0 0
        %3364 = vmatpush1.bf16.msra.mxu0 0
        %3365 = vmatprep.subr.bf16.mxu0 0
        %3366 = vmatpush1.bf16.msra.mxu0 0
        %3367 = vmatprep.mubr.bf16.mxu0 0
        %3368 = vmatmul.mubr.bf16.gmra.mrb[0].mxu0 %v3330
        %v3369 = vpop.f32.mrb[0].mxu0
        %v3370 = vadd.f32 0.0, %v3369
        %v3371 = vpop.f32.mrb[0].mxu0
        %v3372 = vpop.f32.mrb[0].mxu0
        %v3373 = vpop.f32.mrb[0].mxu0
        %3374 = vdwg.mxu0
        %3375 = vrot.lane.b32.xlu0 %v3155, 96
        %v3376 = vpop.permute.xlu0 %3375
        %3377 = vrot.lane.b32.xlu0 %v3155, 32
        %v3378 = vpop.permute.xlu0 %3377
        %v3380 = vsel %vm2700, %v3376, 0
        %v3383 = vsel %vm2700, %v3378, 0
        %3385 = vmatprep.subr.bf16.mxu0 0
        %3386 = vmatpush1.bf16.xpose.msra.mxu0 %v3383
        %3387 = vmatprep.subr.bf16.mxu0 0
        %3388 = vmatpush1.bf16.xpose.msra.mxu0 0
        %3389 = vmatprep.subr.bf16.mxu0 0
        %3390 = vmatpush1.bf16.xpose.msra.mxu0 0
        %3391 = vmatprep.subr.bf16.mxu0 0
        %3392 = vmatpush1.bf16.xpose.msra.mxu0 0
        %3393 = vmatprep.subr.bf16.mxu0 0
        %3394 = vmatpush1.bf16.xpose.msra.mxu0 0
        %3395 = vmatprep.subr.bf16.mxu0 0
        %3396 = vmatpush1.bf16.xpose.msra.mxu0 0
        %3397 = vmatprep.subr.bf16.mxu0 0
        %3398 = vmatpush1.bf16.xpose.msra.mxu0 0
        %3399 = vmatprep.subr.bf16.mxu0 0
        %3400 = vmatpush1.bf16.xpose.msra.mxu0 0
        %3401 = vmatprep.subr.bf16.mxu0 0
        %3402 = vmatpush1.bf16.xpose.msra.mxu0 0
        %3403 = vmatprep.subr.bf16.mxu0 0
        %3404 = vmatpush1.bf16.xpose.msra.mxu0 0
        %3405 = vmatprep.subr.bf16.mxu0 0
        %3406 = vmatpush1.bf16.xpose.msra.mxu0 0
        %3407 = vmatprep.subr.bf16.mxu0 0
        %3408 = vmatpush1.bf16.xpose.msra.mxu0 0
        %3409 = vmatprep.subr.bf16.mxu0 0
        %3410 = vmatpush1.bf16.xpose.msra.mxu0 0
        %3411 = vmatprep.subr.bf16.mxu0 0
        %3412 = vmatpush1.bf16.xpose.msra.mxu0 0
        %3413 = vmatprep.subr.bf16.mxu0 0
        %3414 = vmatpush1.bf16.xpose.msra.mxu0 0
        %3415 = vmatprep.subr.bf16.mxu0 0
        %3416 = vmatpush1.bf16.xpose.msra.mxu0 0
        %3417 = vmatprep.mubr.bf16.mxu0 0
        %3418 = vmatmul.mubr.bf16.gmra.mrb[0].mxu0 %v3380
        %v3419 = vpop.f32.mrb[0].mxu0
        %v3420 = vadd.f32 0.0, %v3419
        %v3421 = vpop.f32.mrb[0].mxu0
        %v3422 = vpop.f32.mrb[0].mxu0
        %v3423 = vpop.f32.mrb[0].mxu0
        %3424 = vdwg.mxu0
        %v3425 = vsel %vm2747, %v3420, -inf
        %3426 = vmax.xlane.f32.xlu0 %v3425
        %v3427 = vpop.xlane.xlu0 %3426
        %v3428 = vsub.f32 %v3420, %v3427
        %v3429 = vmul.f32 %v3428, 1.442695
        %v3430 = vpow.pop %v3429
        %v3431 = vsel %vm2747, %v3430, 0.0
        %3432 = vadd.xlane.f32.xlu0 %v3431
        %v3433 = vpop.xlane.xlu0 %3432
        %v3434 = vrcp.pop %v3433
        %v3435 = vmul.f32 %v3430, %v3434
        %v3436 = vpack.c.bf16 %v3435, %v3435
        %3437 = vrot.lane.b32.xlu0 %v3156, 96
        %v3438 = vpop.permute.xlu0 %3437
        %v3440 = vsel %vm2747, %v3436, 0
        %v3443 = vsel %vm2763, %v3438, 0
        %3445 = vmatprep.subr.bf16.mxu0 0
        %3446 = vmatpush1.bf16.msra.mxu0 %v3443
        %3447 = vmatprep.subr.bf16.mxu0 0
        %3448 = vmatpush1.bf16.msra.mxu0 0
        %3449 = vmatprep.subr.bf16.mxu0 0
        %3450 = vmatpush1.bf16.msra.mxu0 0
        %3451 = vmatprep.subr.bf16.mxu0 0
        %3452 = vmatpush1.bf16.msra.mxu0 0
        %3453 = vmatprep.subr.bf16.mxu0 0
        %3454 = vmatpush1.bf16.msra.mxu0 0
        %3455 = vmatprep.subr.bf16.mxu0 0
        %3456 = vmatpush1.bf16.msra.mxu0 0
        %3457 = vmatprep.subr.bf16.mxu0 0
        %3458 = vmatpush1.bf16.msra.mxu0 0
        %3459 = vmatprep.subr.bf16.mxu0 0
        %3460 = vmatpush1.bf16.msra.mxu0 0
        %3461 = vmatprep.subr.bf16.mxu0 0
        %3462 = vmatpush1.bf16.msra.mxu0 0
        %3463 = vmatprep.subr.bf16.mxu0 0
        %3464 = vmatpush1.bf16.msra.mxu0 0
        %3465 = vmatprep.subr.bf16.mxu0 0
        %3466 = vmatpush1.bf16.msra.mxu0 0
        %3467 = vmatprep.subr.bf16.mxu0 0
        %3468 = vmatpush1.bf16.msra.mxu0 0
        %3469 = vmatprep.subr.bf16.mxu0 0
        %3470 = vmatpush1.bf16.msra.mxu0 0
        %3471 = vmatprep.subr.bf16.mxu0 0
        %3472 = vmatpush1.bf16.msra.mxu0 0
        %3473 = vmatprep.subr.bf16.mxu0 0
        %3474 = vmatpush1.bf16.msra.mxu0 0
        %3475 = vmatprep.subr.bf16.mxu0 0
        %3476 = vmatpush1.bf16.msra.mxu0 0
        %3477 = vmatprep.mubr.bf16.mxu0 0
        %3478 = vmatmul.mubr.bf16.gmra.mrb[0].mxu0 %v3440
        %v3479 = vpop.f32.mrb[0].mxu0
        %v3480 = vadd.f32 0.0, %v3479
        %v3481 = vpop.f32.mrb[0].mxu0
        %v3482 = vpop.f32.mrb[0].mxu0
        %v3483 = vpop.f32.mrb[0].mxu0
        %3484 = vdwg.mxu0
        %3485 = vrot.lane.b32.xlu0 %v3155, 80
        %v3486 = vpop.permute.xlu0 %3485
        %3487 = vrot.lane.b32.xlu0 %v3155, 16
        %v3488 = vpop.permute.xlu0 %3487
        %v3490 = vsel %vm2700, %v3486, 0
        %v3493 = vsel %vm2700, %v3488, 0
        %3495 = vmatprep.subr.bf16.mxu0 0
        %3496 = vmatpush1.bf16.xpose.msra.mxu0 %v3493
        %3497 = vmatprep.subr.bf16.mxu0 0
        %3498 = vmatpush1.bf16.xpose.msra.mxu0 0
        %3499 = vmatprep.subr.bf16.mxu0 0
        %3500 = vmatpush1.bf16.xpose.msra.mxu0 0
        %3501 = vmatprep.subr.bf16.mxu0 0
        %3502 = vmatpush1.bf16.xpose.msra.mxu0 0
        %3503 = vmatprep.subr.bf16.mxu0 0
        %3504 = vmatpush1.bf16.xpose.msra.mxu0 0
        %3505 = vmatprep.subr.bf16.mxu0 0
        %3506 = vmatpush1.bf16.xpose.msra.mxu0 0
        %3507 = vmatprep.subr.bf16.mxu0 0
        %3508 = vmatpush1.bf16.xpose.msra.mxu0 0
        %3509 = vmatprep.subr.bf16.mxu0 0
        %3510 = vmatpush1.bf16.xpose.msra.mxu0 0
        %3511 = vmatprep.subr.bf16.mxu0 0
        %3512 = vmatpush1.bf16.xpose.msra.mxu0 0
        %3513 = vmatprep.subr.bf16.mxu0 0
        %3514 = vmatpush1.bf16.xpose.msra.mxu0 0
        %3515 = vmatprep.subr.bf16.mxu0 0
        %3516 = vmatpush1.bf16.xpose.msra.mxu0 0
        %3517 = vmatprep.subr.bf16.mxu0 0
        %3518 = vmatpush1.bf16.xpose.msra.mxu0 0
        %3519 = vmatprep.subr.bf16.mxu0 0
        %3520 = vmatpush1.bf16.xpose.msra.mxu0 0
        %3521 = vmatprep.subr.bf16.mxu0 0
        %3522 = vmatpush1.bf16.xpose.msra.mxu0 0
        %3523 = vmatprep.subr.bf16.mxu0 0
        %3524 = vmatpush1.bf16.xpose.msra.mxu0 0
        %3525 = vmatprep.subr.bf16.mxu0 0
        %3526 = vmatpush1.bf16.xpose.msra.mxu0 0
        %3527 = vmatprep.mubr.bf16.mxu0 0
        %3528 = vmatmul.mubr.bf16.gmra.mrb[0].mxu0 %v3490
        %v3529 = vpop.f32.mrb[0].mxu0
        %v3530 = vadd.f32 0.0, %v3529
        %v3531 = vpop.f32.mrb[0].mxu0
        %v3532 = vpop.f32.mrb[0].mxu0
        %v3533 = vpop.f32.mrb[0].mxu0
        %3534 = vdwg.mxu0
        %v3535 = vsel %vm2747, %v3530, -inf
        %3536 = vmax.xlane.f32.xlu0 %v3535
        %v3537 = vpop.xlane.xlu0 %3536
        %v3538 = vsub.f32 %v3530, %v3537
        %v3539 = vmul.f32 %v3538, 1.442695
        %v3540 = vpow.pop %v3539
        %v3541 = vsel %vm2747, %v3540, 0.0
        %3542 = vadd.xlane.f32.xlu0 %v3541
        %v3543 = vpop.xlane.xlu0 %3542
        %v3544 = vrcp.pop %v3543
        %v3545 = vmul.f32 %v3540, %v3544
        %v3546 = vpack.c.bf16 %v3545, %v3545
        %3547 = vrot.lane.b32.xlu0 %v3156, 80
        %v3548 = vpop.permute.xlu0 %3547
        %v3550 = vsel %vm2747, %v3546, 0
        %v3553 = vsel %vm2763, %v3548, 0
        %3555 = vmatprep.subr.bf16.mxu0 0
        %3556 = vmatpush1.bf16.msra.mxu0 %v3553
        %3557 = vmatprep.subr.bf16.mxu0 0
        %3558 = vmatpush1.bf16.msra.mxu0 0
        %3559 = vmatprep.subr.bf16.mxu0 0
        %3560 = vmatpush1.bf16.msra.mxu0 0
        %3561 = vmatprep.subr.bf16.mxu0 0
        %3562 = vmatpush1.bf16.msra.mxu0 0
        %3563 = vmatprep.subr.bf16.mxu0 0
        %3564 = vmatpush1.bf16.msra.mxu0 0
        %3565 = vmatprep.subr.bf16.mxu0 0
        %3566 = vmatpush1.bf16.msra.mxu0 0
        %3567 = vmatprep.subr.bf16.mxu0 0
        %3568 = vmatpush1.bf16.msra.mxu0 0
        %3569 = vmatprep.subr.bf16.mxu0 0
        %3570 = vmatpush1.bf16.msra.mxu0 0
        %3571 = vmatprep.subr.bf16.mxu0 0
        %3572 = vmatpush1.bf16.msra.mxu0 0
        %3573 = vmatprep.subr.bf16.mxu0 0
        %3574 = vmatpush1.bf16.msra.mxu0 0
        %3575 = vmatprep.subr.bf16.mxu0 0
        %3576 = vmatpush1.bf16.msra.mxu0 0
        %3577 = vmatprep.subr.bf16.mxu0 0
        %3578 = vmatpush1.bf16.msra.mxu0 0
        %3579 = vmatprep.subr.bf16.mxu0 0
        %3580 = vmatpush1.bf16.msra.mxu0 0
        %3581 = vmatprep.subr.bf16.mxu0 0
        %3582 = vmatpush1.bf16.msra.mxu0 0
        %3583 = vmatprep.subr.bf16.mxu0 0
        %3584 = vmatpush1.bf16.msra.mxu0 0
        %3585 = vmatprep.subr.bf16.mxu0 0
        %3586 = vmatpush1.bf16.msra.mxu0 0
        %3587 = vmatprep.mubr.bf16.mxu0 0
        %3588 = vmatmul.mubr.bf16.gmra.mrb[0].mxu0 %v3550
        %v3589 = vpop.f32.mrb[0].mxu0
        %v3590 = vadd.f32 0.0, %v3589
        %v3591 = vpop.f32.mrb[0].mxu0
        %v3592 = vpop.f32.mrb[0].mxu0
        %v3593 = vpop.f32.mrb[0].mxu0
        %3594 = vdwg.mxu0
        %3596 = vrot.lane.b32.xlu0 %v3370, 16
        %v3597 = vpop.permute.xlu0 %3596
        %3600 = vrot.lane.b32.xlu0 %v3480, 32
        %v3601 = vpop.permute.xlu0 %3600
        %3604 = vrot.lane.b32.xlu0 %v3590, 48
        %v3605 = vpop.permute.xlu0 %3604
        %v3607 = vsel %vm2700, %v3259, %v3597
        %v3608 = vsel %vm3151, %v3607, %v3601
        %v3609 = vsel %vm3153, %v3608, %v3605
        %v3610 = vpack.c.bf16 %v3609, %v3154
        %v3611 = vld [vmem:[%s1062] sm:$0xf]
        %v3612 = vld [vmem:[%s1062 + $0x4] sm:$0xf]
        %v3613 = vld [vmem:[%s1062 + $0x8] sm:$0xf]
        %v3614 = vld [vmem:[%s1062 + $0xc] sm:$0xf]
        %v3615 = vld [vmem:[%s1062 + $0x10] sm:$0xf]
        %v3616 = vld [vmem:[%s1062 + $0x14] sm:$0xf]
        %v3617 = vld [vmem:[%s1062 + $0x18] sm:$0xf]
        %v3618 = vld [vmem:[%s1062 + $0x1c] sm:$0xf]
        %v3619 = vlaneseq
        %v3620 = vshrl.u32 %v3619, 7
        %v3621 = vsub.s32 1, %v3620
        %v3622 = vrot.slane %v2588, %v3621
        %v3631 = vunpack.c.l.b16 %v3611
        %v3632 = vunpack.c.l.b16 %v3612
        %v3633 = vunpack.c.l.b16 %v3613
        %v3634 = vunpack.c.l.b16 %v3614
        %v3635 = vunpack.c.l.b16 %v3615
        %v3636 = vunpack.c.l.b16 %v3616
        %v3637 = vunpack.c.l.b16 %v3617
        %v3638 = vunpack.c.l.b16 %v3618
        %v3639 = vpack.c.b16 %v3632, %v3631
        %v3640 = vpack.c.b16 %v3634, %v3633
        %v3641 = vpack.c.b16 %v3636, %v3635
        %v3642 = vpack.c.b16 %v3638, %v3637
        %v3648 = vsel %vm2648, %v3610, 0
        %3650 = vmatprep.subr.bf16.mxu0 0
        %3651 = vmatpush1.bf16.msra.mxu0 %v3639
        %3652 = vmatprep.subr.bf16.mxu0 0
        %3653 = vmatpush1.bf16.msra.mxu0 %v3640
        %3654 = vmatprep.subr.bf16.mxu0 0
        %3655 = vmatpush1.bf16.msra.mxu0 %v3641
        %3656 = vmatprep.subr.bf16.mxu0 0
        %3657 = vmatpush1.bf16.msra.mxu0 %v3642
        %3658 = vmatprep.subr.bf16.mxu0 0
        %3659 = vmatpush1.bf16.msra.mxu0 0
        %3660 = vmatprep.subr.bf16.mxu0 0
        %3661 = vmatpush1.bf16.msra.mxu0 0
        %3662 = vmatprep.subr.bf16.mxu0 0
        %3663 = vmatpush1.bf16.msra.mxu0 0
        %3664 = vmatprep.subr.bf16.mxu0 0
        %3665 = vmatpush1.bf16.msra.mxu0 0
        %3666 = vmatprep.subr.bf16.mxu0 0
        %3667 = vmatpush1.bf16.msra.mxu0 0
        %3668 = vmatprep.subr.bf16.mxu0 0
        %3669 = vmatpush1.bf16.msra.mxu0 0
        %3670 = vmatprep.subr.bf16.mxu0 0
        %3671 = vmatpush1.bf16.msra.mxu0 0
        %3672 = vmatprep.subr.bf16.mxu0 0
        %3673 = vmatpush1.bf16.msra.mxu0 0
        %3674 = vmatprep.subr.bf16.mxu0 0
        %3675 = vmatpush1.bf16.msra.mxu0 0
        %3676 = vmatprep.subr.bf16.mxu0 0
        %3677 = vmatpush1.bf16.msra.mxu0 0
        %3678 = vmatprep.subr.bf16.mxu0 0
        %3679 = vmatpush1.bf16.msra.mxu0 0
        %3680 = vmatprep.subr.bf16.mxu0 0
        %3681 = vmatpush1.bf16.msra.mxu0 0
        %3682 = vmatprep.mubr.bf16.mxu0 0
        %3683 = vmatmul.mubr.bf16.gmra.mrb[0].mxu0 %v3648
        %v3684 = vpop.f32.mrb[0].mxu0
        %v3685 = vadd.f32 %v3622, %v3684
        %v3686 = vpop.f32.mrb[0].mxu0
        %v3687 = vpop.f32.mrb[0].mxu0
        %v3688 = vadd.f32 %v3622, %v3687
        %v3689 = vpop.f32.mrb[0].mxu0
        %3690 = vdwg.mxu0
        %v3691 = vadd.f32 %v2586, %v3685
        %v3692 = vadd.f32 %v2587, %v3688
        %v3693 = vsel %vm2648, %v3691, 0.0
        %3694 = vadd.xlane.f32.xlu0 %v3693
        %v3695 = vpop.xlane.xlu0 %3694
        %v3696 = vsel %vm2648, %v3692, 0.0
        %3697 = vadd.xlane.f32.xlu0 %v3696
        %v3698 = vpop.xlane.xlu0 %3697
        %v3699 = vrcp.pop 64.0
        %v3700 = vmul.f32 %v3695, %v3699
        %v3701 = vmul.f32 %v3698, %v3699
        %v3702 = vsub.f32 %v3691, %v3700
        %v3703 = vsub.f32 %v3692, %v3701
        %v3704 = vmul.f32 %v3702, %v3702
        %v3705 = vmul.f32 %v3703, %v3703
        %v3706 = vsel %vm2648, %v3704, 0.0
        %3707 = vadd.xlane.f32.xlu0 %v3706
        %v3708 = vpop.xlane.xlu0 %3707
        %v3709 = vsel %vm2648, %v3705, 0.0
        %3710 = vadd.xlane.f32.xlu0 %v3709
        %v3711 = vpop.xlane.xlu0 %3710
        %v3712 = vmul.f32 %v3708, %v3699
        %v3713 = vmul.f32 %v3711, %v3699
        %v3714 = vadd.f32 %v3712, 1e-05
        %v3715 = vadd.f32 %v3713, 1e-05
        %v3716 = vrsqrt.pop %v3714
        %v3717 = vrsqrt.pop %v3715
        %v3718 = vmul.f32 %v3702, %v3716
        %v3719 = vmul.f32 %v3703, %v3717
        %v3720 = vlaneseq
        %v3721 = vshrl.u32 %v3720, 7
        %v3722 = vsub.s32 7, %v3721
        %v3723 = vrot.slane %v2588, %v3722
        %v3724 = vmul.f32 %v3718, %v3723
        %v3725 = vmul.f32 %v3719, %v3723
        %v3726 = vlaneseq
        %v3727 = vshrl.u32 %v3726, 7
        %v3728 = vsub.s32 0, %v3727
        %v3729 = vrot.slane %v2590, %v3728
        %v3730 = vadd.f32 %v3724, %v3729
        %v3731 = vadd.f32 %v3725, %v3729
        %v3732 = vld [vmem:[#allocation3] sm:$0xff]
        %v3733 = vpack.c.bf16 %v3731, %v3730
        %v3734 = vld [vmem:[%s1073] sm:$0xf]
        %v3735 = vld [vmem:[%s1073 + $0x4] sm:$0xf]
        %v3736 = vld [vmem:[%s1073 + $0x8] sm:$0xf]
        %v3737 = vld [vmem:[%s1073 + $0xc] sm:$0xf]
        %v3738 = vld [vmem:[%s1073 + $0x10] sm:$0xf]
        %v3739 = vld [vmem:[%s1073 + $0x14] sm:$0xf]
        %v3740 = vld [vmem:[%s1073 + $0x18] sm:$0xf]
        %v3741 = vld [vmem:[%s1073 + $0x1c] sm:$0xf]
        %v3742 = vlaneseq
        %v3743 = vshrl.u32 %v3742, 7
        %v3744 = vsub.s32 2, %v3743
        %v3745 = vrot.slane %v2588, %v3744
        %v3754 = vunpack.c.l.b16 %v3734
        %v3755 = vunpack.c.l.b16 %v3735
        %v3756 = vunpack.c.l.b16 %v3736
        %v3757 = vunpack.c.l.b16 %v3737
        %v3758 = vunpack.c.l.b16 %v3738
        %v3759 = vunpack.c.l.b16 %v3739
        %v3760 = vunpack.c.l.b16 %v3740
        %v3761 = vunpack.c.l.b16 %v3741
        %v3762 = vpack.c.b16 %v3755, %v3754
        %v3763 = vpack.c.b16 %v3757, %v3756
        %v3764 = vpack.c.b16 %v3759, %v3758
        %v3765 = vpack.c.b16 %v3761, %v3760
        %v3771 = vsel %vm2648, %v3733, 0
        %3773 = vmatprep.subr.bf16.mxu0 0
        %3774 = vmatpush1.bf16.msra.mxu0 %v3762
        %3775 = vmatprep.subr.bf16.mxu0 0
        %3776 = vmatpush1.bf16.msra.mxu0 %v3763
        %3777 = vmatprep.subr.bf16.mxu0 0
        %3778 = vmatpush1.bf16.msra.mxu0 %v3764
        %3779 = vmatprep.subr.bf16.mxu0 0
        %3780 = vmatpush1.bf16.msra.mxu0 %v3765
        %3781 = vmatprep.subr.bf16.mxu0 0
        %3782 = vmatpush1.bf16.msra.mxu0 0
        %3783 = vmatprep.subr.bf16.mxu0 0
        %3784 = vmatpush1.bf16.msra.mxu0 0
        %3785 = vmatprep.subr.bf16.mxu0 0
        %3786 = vmatpush1.bf16.msra.mxu0 0
        %3787 = vmatprep.subr.bf16.mxu0 0
        %3788 = vmatpush1.bf16.msra.mxu0 0
        %3789 = vmatprep.subr.bf16.mxu0 0
        %3790 = vmatpush1.bf16.msra.mxu0 0
        %3791 = vmatprep.subr.bf16.mxu0 0
        %3792 = vmatpush1.bf16.msra.mxu0 0
        %3793 = vmatprep.subr.bf16.mxu0 0
        %3794 = vmatpush1.bf16.msra.mxu0 0
        %3795 = vmatprep.subr.bf16.mxu0 0
        %3796 = vmatpush1.bf16.msra.mxu0 0
        %3797 = vmatprep.subr.bf16.mxu0 0
        %3798 = vmatpush1.bf16.msra.mxu0 0
        %3799 = vmatprep.subr.bf16.mxu0 0
        %3800 = vmatpush1.bf16.msra.mxu0 0
        %3801 = vmatprep.subr.bf16.mxu0 0
        %3802 = vmatpush1.bf16.msra.mxu0 0
        %3803 = vmatprep.subr.bf16.mxu0 0
        %3804 = vmatpush1.bf16.msra.mxu0 0
        %3805 = vmatprep.mubr.bf16.mxu0 0
        %3806 = vmatmul.mubr.bf16.gmra.mrb[0].mxu0 %v3771
        %v3807 = vpop.f32.mrb[0].mxu0
        %v3808 = vadd.f32 %v3745, %v3807
        %v3809 = vpop.f32.mrb[0].mxu0
        %v3810 = vpop.f32.mrb[0].mxu0
        %v3811 = vadd.f32 %v3745, %v3810
        %v3812 = vpop.f32.mrb[0].mxu0
        %3813 = vdwg.mxu0
        %v3814 = vld [vmem:[%s1084] sm:$0xf]
        %v3815 = vld [vmem:[%s1084 + $0x4] sm:$0xf]
        %v3816 = vld [vmem:[%s1084 + $0x8] sm:$0xf]
        %v3817 = vld [vmem:[%s1084 + $0xc] sm:$0xf]
        %v3818 = vld [vmem:[%s1084 + $0x10] sm:$0xf]
        %v3819 = vld [vmem:[%s1084 + $0x14] sm:$0xf]
        %v3820 = vld [vmem:[%s1084 + $0x18] sm:$0xf]
        %v3821 = vld [vmem:[%s1084 + $0x1c] sm:$0xf]
        %v3822 = vlaneseq
        %v3823 = vshrl.u32 %v3822, 7
        %v3824 = vsub.s32 3, %v3823
        %v3825 = vrot.slane %v2588, %v3824
        %v3834 = vunpack.c.l.b16 %v3814
        %v3835 = vunpack.c.l.b16 %v3815
        %v3836 = vunpack.c.l.b16 %v3816
        %v3837 = vunpack.c.l.b16 %v3817
        %v3838 = vunpack.c.l.b16 %v3818
        %v3839 = vunpack.c.l.b16 %v3819
        %v3840 = vunpack.c.l.b16 %v3820
        %v3841 = vunpack.c.l.b16 %v3821
        %v3842 = vpack.c.b16 %v3835, %v3834
        %v3843 = vpack.c.b16 %v3837, %v3836
        %v3844 = vpack.c.b16 %v3839, %v3838
        %v3845 = vpack.c.b16 %v3841, %v3840
        %v3851 = vsel %vm2648, %v3732, 0
        %3853 = vmatprep.subr.bf16.mxu0 0
        %3854 = vmatpush1.bf16.msra.mxu0 %v3842
        %3855 = vmatprep.subr.bf16.mxu0 0
        %3856 = vmatpush1.bf16.msra.mxu0 %v3843
        %3857 = vmatprep.subr.bf16.mxu0 0
        %3858 = vmatpush1.bf16.msra.mxu0 %v3844
        %3859 = vmatprep.subr.bf16.mxu0 0
        %3860 = vmatpush1.bf16.msra.mxu0 %v3845
        %3861 = vmatprep.subr.bf16.mxu0 0
        %3862 = vmatpush1.bf16.msra.mxu0 0
        %3863 = vmatprep.subr.bf16.mxu0 0
        %3864 = vmatpush1.bf16.msra.mxu0 0
        %3865 = vmatprep.subr.bf16.mxu0 0
        %3866 = vmatpush1.bf16.msra.mxu0 0
        %3867 = vmatprep.subr.bf16.mxu0 0
        %3868 = vmatpush1.bf16.msra.mxu0 0
        %3869 = vmatprep.subr.bf16.mxu0 0
        %3870 = vmatpush1.bf16.msra.mxu0 0
        %3871 = vmatprep.subr.bf16.mxu0 0
        %3872 = vmatpush1.bf16.msra.mxu0 0
        %3873 = vmatprep.subr.bf16.mxu0 0
        %3874 = vmatpush1.bf16.msra.mxu0 0
        %3875 = vmatprep.subr.bf16.mxu0 0
        %3876 = vmatpush1.bf16.msra.mxu0 0
        %3877 = vmatprep.subr.bf16.mxu0 0
        %3878 = vmatpush1.bf16.msra.mxu0 0
        %3879 = vmatprep.subr.bf16.mxu0 0
        %3880 = vmatpush1.bf16.msra.mxu0 0
        %3881 = vmatprep.subr.bf16.mxu0 0
        %3882 = vmatpush1.bf16.msra.mxu0 0
        %3883 = vmatprep.subr.bf16.mxu0 0
        %3884 = vmatpush1.bf16.msra.mxu0 0
        %3885 = vmatprep.mubr.bf16.mxu0 0
        %3886 = vmatmul.mubr.bf16.gmra.mrb[0].mxu0 %v3851
        %v3887 = vpop.f32.mrb[0].mxu0
        %v3888 = vadd.f32 %v3825, %v3887
        %v3889 = vpop.f32.mrb[0].mxu0
        %v3890 = vpop.f32.mrb[0].mxu0
        %v3891 = vadd.f32 %v3825, %v3890
        %v3892 = vpop.f32.mrb[0].mxu0
        %3893 = vdwg.mxu0
        %v3894 = vpack.c.bf16 %v3808, %v3808
        %v3895 = vpack.c.bf16 %v3888, %v3888
        %v3897 = vsel %vm2700, %v3894, 0
        %v3900 = vsel %vm2700, %v3895, 0
        %3902 = vmatprep.subr.bf16.mxu0 0
        %3903 = vmatpush1.bf16.xpose.msra.mxu0 %v3900
        %3904 = vmatprep.subr.bf16.mxu0 0
        %3905 = vmatpush1.bf16.xpose.msra.mxu0 0
        %3906 = vmatprep.subr.bf16.mxu0 0
        %3907 = vmatpush1.bf16.xpose.msra.mxu0 0
        %3908 = vmatprep.subr.bf16.mxu0 0
        %3909 = vmatpush1.bf16.xpose.msra.mxu0 0
        %3910 = vmatprep.subr.bf16.mxu0 0
        %3911 = vmatpush1.bf16.xpose.msra.mxu0 0
        %3912 = vmatprep.subr.bf16.mxu0 0
        %3913 = vmatpush1.bf16.xpose.msra.mxu0 0
        %3914 = vmatprep.subr.bf16.mxu0 0
        %3915 = vmatpush1.bf16.xpose.msra.mxu0 0
        %3916 = vmatprep.subr.bf16.mxu0 0
        %3917 = vmatpush1.bf16.xpose.msra.mxu0 0
        %3918 = vmatprep.subr.bf16.mxu0 0
        %3919 = vmatpush1.bf16.xpose.msra.mxu0 0
        %3920 = vmatprep.subr.bf16.mxu0 0
        %3921 = vmatpush1.bf16.xpose.msra.mxu0 0
        %3922 = vmatprep.subr.bf16.mxu0 0
        %3923 = vmatpush1.bf16.xpose.msra.mxu0 0
        %3924 = vmatprep.subr.bf16.mxu0 0
        %3925 = vmatpush1.bf16.xpose.msra.mxu0 0
        %3926 = vmatprep.subr.bf16.mxu0 0
        %3927 = vmatpush1.bf16.xpose.msra.mxu0 0
        %3928 = vmatprep.subr.bf16.mxu0 0
        %3929 = vmatpush1.bf16.xpose.msra.mxu0 0
        %3930 = vmatprep.subr.bf16.mxu0 0
        %3931 = vmatpush1.bf16.xpose.msra.mxu0 0
        %3932 = vmatprep.subr.bf16.mxu0 0
        %3933 = vmatpush1.bf16.xpose.msra.mxu0 0
        %3934 = vmatprep.mubr.bf16.mxu0 0
        %3935 = vmatmul.mubr.bf16.gmra.mrb[0].mxu0 %v3897
        %v3936 = vpop.f32.mrb[0].mxu0
        %v3937 = vadd.f32 0.0, %v3936
        %v3938 = vpop.f32.mrb[0].mxu0
        %v3939 = vpop.f32.mrb[0].mxu0
        %v3940 = vpop.f32.mrb[0].mxu0
        %3941 = vdwg.mxu0
        %v3942 = vsel %vm2747, %v3937, -inf
        %3943 = vmax.xlane.f32.xlu0 %v3942
        %v3944 = vpop.xlane.xlu0 %3943
        %v3945 = vsub.f32 %v3937, %v3944
        %v3946 = vmul.f32 %v3945, 1.442695
        %v3947 = vpow.pop %v3946
        %v3948 = vsel %vm2747, %v3947, 0.0
        %3949 = vadd.xlane.f32.xlu0 %v3948
        %v3950 = vpop.xlane.xlu0 %3949
        %v3951 = vrcp.pop %v3950
        %v3952 = vmul.f32 %v3947, %v3951
        %v3953 = vpack.c.bf16 %v3952, %v3952
        %3955 = vrot.lane.b32.xlu0 %v3895, 64
        %v3956 = vpop.permute.xlu0 %3955
        %v3958 = vsel %vm2747, %v3953, 0
        %v3961 = vsel %vm2763, %v3956, 0
        %3963 = vmatprep.subr.bf16.mxu0 0
        %3964 = vmatpush1.bf16.msra.mxu0 %v3961
        %3965 = vmatprep.subr.bf16.mxu0 0
        %3966 = vmatpush1.bf16.msra.mxu0 0
        %3967 = vmatprep.subr.bf16.mxu0 0
        %3968 = vmatpush1.bf16.msra.mxu0 0
        %3969 = vmatprep.subr.bf16.mxu0 0
        %3970 = vmatpush1.bf16.msra.mxu0 0
        %3971 = vmatprep.subr.bf16.mxu0 0
        %3972 = vmatpush1.bf16.msra.mxu0 0
        %3973 = vmatprep.subr.bf16.mxu0 0
        %3974 = vmatpush1.bf16.msra.mxu0 0
        %3975 = vmatprep.subr.bf16.mxu0 0
        %3976 = vmatpush1.bf16.msra.mxu0 0
        %3977 = vmatprep.subr.bf16.mxu0 0
        %3978 = vmatpush1.bf16.msra.mxu0 0
        %3979 = vmatprep.subr.bf16.mxu0 0
        %3980 = vmatpush1.bf16.msra.mxu0 0
        %3981 = vmatprep.subr.bf16.mxu0 0
        %3982 = vmatpush1.bf16.msra.mxu0 0
        %3983 = vmatprep.subr.bf16.mxu0 0
        %3984 = vmatpush1.bf16.msra.mxu0 0
        %3985 = vmatprep.subr.bf16.mxu0 0
        %3986 = vmatpush1.bf16.msra.mxu0 0
        %3987 = vmatprep.subr.bf16.mxu0 0
        %3988 = vmatpush1.bf16.msra.mxu0 0
        %3989 = vmatprep.subr.bf16.mxu0 0
        %3990 = vmatpush1.bf16.msra.mxu0 0
        %3991 = vmatprep.subr.bf16.mxu0 0
        %3992 = vmatpush1.bf16.msra.mxu0 0
        %3993 = vmatprep.subr.bf16.mxu0 0
        %3994 = vmatpush1.bf16.msra.mxu0 0
        %3995 = vmatprep.mubr.bf16.mxu0 0
        %3996 = vmatmul.mubr.bf16.gmra.mrb[0].mxu0 %v3958
        %v3997 = vpop.f32.mrb[0].mxu0
        %v3998 = vadd.f32 0.0, %v3997
        %v3999 = vpop.f32.mrb[0].mxu0
        %v4000 = vpop.f32.mrb[0].mxu0
        %v4001 = vpop.f32.mrb[0].mxu0
        %4002 = vdwg.mxu0
        %4004 = vrot.lane.b32.xlu0 %v3894, 112
        %v4005 = vpop.permute.xlu0 %4004
        %4006 = vrot.lane.b32.xlu0 %v3895, 112
        %v4007 = vpop.permute.xlu0 %4006
        %v4009 = vsel %vm2700, %v4005, 0
        %v4012 = vsel %vm2700, %v4007, 0
        %4014 = vmatprep.subr.bf16.mxu0 0
        %4015 = vmatpush1.bf16.xpose.msra.mxu0 %v4012
        %4016 = vmatprep.subr.bf16.mxu0 0
        %4017 = vmatpush1.bf16.xpose.msra.mxu0 0
        %4018 = vmatprep.subr.bf16.mxu0 0
        %4019 = vmatpush1.bf16.xpose.msra.mxu0 0
        %4020 = vmatprep.subr.bf16.mxu0 0
        %4021 = vmatpush1.bf16.xpose.msra.mxu0 0
        %4022 = vmatprep.subr.bf16.mxu0 0
        %4023 = vmatpush1.bf16.xpose.msra.mxu0 0
        %4024 = vmatprep.subr.bf16.mxu0 0
        %4025 = vmatpush1.bf16.xpose.msra.mxu0 0
        %4026 = vmatprep.subr.bf16.mxu0 0
        %4027 = vmatpush1.bf16.xpose.msra.mxu0 0
        %4028 = vmatprep.subr.bf16.mxu0 0
        %4029 = vmatpush1.bf16.xpose.msra.mxu0 0
        %4030 = vmatprep.subr.bf16.mxu0 0
        %4031 = vmatpush1.bf16.xpose.msra.mxu0 0
        %4032 = vmatprep.subr.bf16.mxu0 0
        %4033 = vmatpush1.bf16.xpose.msra.mxu0 0
        %4034 = vmatprep.subr.bf16.mxu0 0
        %4035 = vmatpush1.bf16.xpose.msra.mxu0 0
        %4036 = vmatprep.subr.bf16.mxu0 0
        %4037 = vmatpush1.bf16.xpose.msra.mxu0 0
        %4038 = vmatprep.subr.bf16.mxu0 0
        %4039 = vmatpush1.bf16.xpose.msra.mxu0 0
        %4040 = vmatprep.subr.bf16.mxu0 0
        %4041 = vmatpush1.bf16.xpose.msra.mxu0 0
        %4042 = vmatprep.subr.bf16.mxu0 0
        %4043 = vmatpush1.bf16.xpose.msra.mxu0 0
        %4044 = vmatprep.subr.bf16.mxu0 0
        %4045 = vmatpush1.bf16.xpose.msra.mxu0 0
        %4046 = vmatprep.mubr.bf16.mxu0 0
        %4047 = vmatmul.mubr.bf16.gmra.mrb[0].mxu0 %v4009
        %v4048 = vpop.f32.mrb[0].mxu0
        %v4049 = vadd.f32 0.0, %v4048
        %v4050 = vpop.f32.mrb[0].mxu0
        %v4051 = vpop.f32.mrb[0].mxu0
        %v4052 = vpop.f32.mrb[0].mxu0
        %4053 = vdwg.mxu0
        %v4054 = vsel %vm2747, %v4049, -inf
        %4055 = vmax.xlane.f32.xlu0 %v4054
        %v4056 = vpop.xlane.xlu0 %4055
        %v4057 = vsub.f32 %v4049, %v4056
        %v4058 = vmul.f32 %v4057, 1.442695
        %v4059 = vpow.pop %v4058
        %v4060 = vsel %vm2747, %v4059, 0.0
        %4061 = vadd.xlane.f32.xlu0 %v4060
        %v4062 = vpop.xlane.xlu0 %4061
        %v4063 = vrcp.pop %v4062
        %v4064 = vmul.f32 %v4059, %v4063
        %v4065 = vpack.c.bf16 %v4064, %v4064
        %4066 = vrot.lane.b32.xlu0 %v3895, 48
        %v4067 = vpop.permute.xlu0 %4066
        %v4069 = vsel %vm2747, %v4065, 0
        %v4072 = vsel %vm2763, %v4067, 0
        %4074 = vmatprep.subr.bf16.mxu0 0
        %4075 = vmatpush1.bf16.msra.mxu0 %v4072
        %4076 = vmatprep.subr.bf16.mxu0 0
        %4077 = vmatpush1.bf16.msra.mxu0 0
        %4078 = vmatprep.subr.bf16.mxu0 0
        %4079 = vmatpush1.bf16.msra.mxu0 0
        %4080 = vmatprep.subr.bf16.mxu0 0
        %4081 = vmatpush1.bf16.msra.mxu0 0
        %4082 = vmatprep.subr.bf16.mxu0 0
        %4083 = vmatpush1.bf16.msra.mxu0 0
        %4084 = vmatprep.subr.bf16.mxu0 0
        %4085 = vmatpush1.bf16.msra.mxu0 0
        %4086 = vmatprep.subr.bf16.mxu0 0
        %4087 = vmatpush1.bf16.msra.mxu0 0
        %4088 = vmatprep.subr.bf16.mxu0 0
        %4089 = vmatpush1.bf16.msra.mxu0 0
        %4090 = vmatprep.subr.bf16.mxu0 0
        %4091 = vmatpush1.bf16.msra.mxu0 0
        %4092 = vmatprep.subr.bf16.mxu0 0
        %4093 = vmatpush1.bf16.msra.mxu0 0
        %4094 = vmatprep.subr.bf16.mxu0 0
        %4095 = vmatpush1.bf16.msra.mxu0 0
        %4096 = vmatprep.subr.bf16.mxu0 0
        %4097 = vmatpush1.bf16.msra.mxu0 0
        %4098 = vmatprep.subr.bf16.mxu0 0
        %4099 = vmatpush1.bf16.msra.mxu0 0
        %4100 = vmatprep.subr.bf16.mxu0 0
        %4101 = vmatpush1.bf16.msra.mxu0 0
        %4102 = vmatprep.subr.bf16.mxu0 0
        %4103 = vmatpush1.bf16.msra.mxu0 0
        %4104 = vmatprep.subr.bf16.mxu0 0
        %4105 = vmatpush1.bf16.msra.mxu0 0
        %4106 = vmatprep.mubr.bf16.mxu0 0
        %4107 = vmatmul.mubr.bf16.gmra.mrb[0].mxu0 %v4069
        %v4108 = vpop.f32.mrb[0].mxu0
        %v4109 = vadd.f32 0.0, %v4108
        %v4110 = vpop.f32.mrb[0].mxu0
        %v4111 = vpop.f32.mrb[0].mxu0
        %v4112 = vpop.f32.mrb[0].mxu0
        %4113 = vdwg.mxu0
        %4114 = vrot.lane.b32.xlu0 %v3894, 96
        %v4115 = vpop.permute.xlu0 %4114
        %4116 = vrot.lane.b32.xlu0 %v3895, 96
        %v4117 = vpop.permute.xlu0 %4116
        %v4119 = vsel %vm2700, %v4115, 0
        %v4122 = vsel %vm2700, %v4117, 0
        %4124 = vmatprep.subr.bf16.mxu0 0
        %4125 = vmatpush1.bf16.xpose.msra.mxu0 %v4122
        %4126 = vmatprep.subr.bf16.mxu0 0
        %4127 = vmatpush1.bf16.xpose.msra.mxu0 0
        %4128 = vmatprep.subr.bf16.mxu0 0
        %4129 = vmatpush1.bf16.xpose.msra.mxu0 0
        %4130 = vmatprep.subr.bf16.mxu0 0
        %4131 = vmatpush1.bf16.xpose.msra.mxu0 0
        %4132 = vmatprep.subr.bf16.mxu0 0
        %4133 = vmatpush1.bf16.xpose.msra.mxu0 0
        %4134 = vmatprep.subr.bf16.mxu0 0
        %4135 = vmatpush1.bf16.xpose.msra.mxu0 0
        %4136 = vmatprep.subr.bf16.mxu0 0
        %4137 = vmatpush1.bf16.xpose.msra.mxu0 0
        %4138 = vmatprep.subr.bf16.mxu0 0
        %4139 = vmatpush1.bf16.xpose.msra.mxu0 0
        %4140 = vmatprep.subr.bf16.mxu0 0
        %4141 = vmatpush1.bf16.xpose.msra.mxu0 0
        %4142 = vmatprep.subr.bf16.mxu0 0
        %4143 = vmatpush1.bf16.xpose.msra.mxu0 0
        %4144 = vmatprep.subr.bf16.mxu0 0
        %4145 = vmatpush1.bf16.xpose.msra.mxu0 0
        %4146 = vmatprep.subr.bf16.mxu0 0
        %4147 = vmatpush1.bf16.xpose.msra.mxu0 0
        %4148 = vmatprep.subr.bf16.mxu0 0
        %4149 = vmatpush1.bf16.xpose.msra.mxu0 0
        %4150 = vmatprep.subr.bf16.mxu0 0
        %4151 = vmatpush1.bf16.xpose.msra.mxu0 0
        %4152 = vmatprep.subr.bf16.mxu0 0
        %4153 = vmatpush1.bf16.xpose.msra.mxu0 0
        %4154 = vmatprep.subr.bf16.mxu0 0
        %4155 = vmatpush1.bf16.xpose.msra.mxu0 0
        %4156 = vmatprep.mubr.bf16.mxu0 0
        %4157 = vmatmul.mubr.bf16.gmra.mrb[0].mxu0 %v4119
        %v4158 = vpop.f32.mrb[0].mxu0
        %v4159 = vadd.f32 0.0, %v4158
        %v4160 = vpop.f32.mrb[0].mxu0
        %v4161 = vpop.f32.mrb[0].mxu0
        %v4162 = vpop.f32.mrb[0].mxu0
        %4163 = vdwg.mxu0
        %v4164 = vsel %vm2747, %v4159, -inf
        %4165 = vmax.xlane.f32.xlu0 %v4164
        %v4166 = vpop.xlane.xlu0 %4165
        %v4167 = vsub.f32 %v4159, %v4166
        %v4168 = vmul.f32 %v4167, 1.442695
        %v4169 = vpow.pop %v4168
        %v4170 = vsel %vm2747, %v4169, 0.0
        %4171 = vadd.xlane.f32.xlu0 %v4170
        %v4172 = vpop.xlane.xlu0 %4171
        %v4173 = vrcp.pop %v4172
        %v4174 = vmul.f32 %v4169, %v4173
        %v4175 = vpack.c.bf16 %v4174, %v4174
        %4176 = vrot.lane.b32.xlu0 %v3895, 32
        %v4177 = vpop.permute.xlu0 %4176
        %v4179 = vsel %vm2747, %v4175, 0
        %v4182 = vsel %vm2763, %v4177, 0
        %4184 = vmatprep.subr.bf16.mxu0 0
        %4185 = vmatpush1.bf16.msra.mxu0 %v4182
        %4186 = vmatprep.subr.bf16.mxu0 0
        %4187 = vmatpush1.bf16.msra.mxu0 0
        %4188 = vmatprep.subr.bf16.mxu0 0
        %4189 = vmatpush1.bf16.msra.mxu0 0
        %4190 = vmatprep.subr.bf16.mxu0 0
        %4191 = vmatpush1.bf16.msra.mxu0 0
        %4192 = vmatprep.subr.bf16.mxu0 0
        %4193 = vmatpush1.bf16.msra.mxu0 0
        %4194 = vmatprep.subr.bf16.mxu0 0
        %4195 = vmatpush1.bf16.msra.mxu0 0
        %4196 = vmatprep.subr.bf16.mxu0 0
        %4197 = vmatpush1.bf16.msra.mxu0 0
        %4198 = vmatprep.subr.bf16.mxu0 0
        %4199 = vmatpush1.bf16.msra.mxu0 0
        %4200 = vmatprep.subr.bf16.mxu0 0
        %4201 = vmatpush1.bf16.msra.mxu0 0
        %4202 = vmatprep.subr.bf16.mxu0 0
        %4203 = vmatpush1.bf16.msra.mxu0 0
        %4204 = vmatprep.subr.bf16.mxu0 0
        %4205 = vmatpush1.bf16.msra.mxu0 0
        %4206 = vmatprep.subr.bf16.mxu0 0
        %4207 = vmatpush1.bf16.msra.mxu0 0
        %4208 = vmatprep.subr.bf16.mxu0 0
        %4209 = vmatpush1.bf16.msra.mxu0 0
        %4210 = vmatprep.subr.bf16.mxu0 0
        %4211 = vmatpush1.bf16.msra.mxu0 0
        %4212 = vmatprep.subr.bf16.mxu0 0
        %4213 = vmatpush1.bf16.msra.mxu0 0
        %4214 = vmatprep.subr.bf16.mxu0 0
        %4215 = vmatpush1.bf16.msra.mxu0 0
        %4216 = vmatprep.mubr.bf16.mxu0 0
        %4217 = vmatmul.mubr.bf16.gmra.mrb[0].mxu0 %v4179
        %v4218 = vpop.f32.mrb[0].mxu0
        %v4219 = vadd.f32 0.0, %v4218
        %v4220 = vpop.f32.mrb[0].mxu0
        %v4221 = vpop.f32.mrb[0].mxu0
        %v4222 = vpop.f32.mrb[0].mxu0
        %4223 = vdwg.mxu0
        %4224 = vrot.lane.b32.xlu0 %v3894, 80
        %v4225 = vpop.permute.xlu0 %4224
        %4226 = vrot.lane.b32.xlu0 %v3895, 80
        %v4227 = vpop.permute.xlu0 %4226
        %v4229 = vsel %vm2700, %v4225, 0
        %v4232 = vsel %vm2700, %v4227, 0
        %4234 = vmatprep.subr.bf16.mxu0 0
        %4235 = vmatpush1.bf16.xpose.msra.mxu0 %v4232
        %4236 = vmatprep.subr.bf16.mxu0 0
        %4237 = vmatpush1.bf16.xpose.msra.mxu0 0
        %4238 = vmatprep.subr.bf16.mxu0 0
        %4239 = vmatpush1.bf16.xpose.msra.mxu0 0
        %4240 = vmatprep.subr.bf16.mxu0 0
        %4241 = vmatpush1.bf16.xpose.msra.mxu0 0
        %4242 = vmatprep.subr.bf16.mxu0 0
        %4243 = vmatpush1.bf16.xpose.msra.mxu0 0
        %4244 = vmatprep.subr.bf16.mxu0 0
        %4245 = vmatpush1.bf16.xpose.msra.mxu0 0
        %4246 = vmatprep.subr.bf16.mxu0 0
        %4247 = vmatpush1.bf16.xpose.msra.mxu0 0
        %4248 = vmatprep.subr.bf16.mxu0 0
        %4249 = vmatpush1.bf16.xpose.msra.mxu0 0
        %4250 = vmatprep.subr.bf16.mxu0 0
        %4251 = vmatpush1.bf16.xpose.msra.mxu0 0
        %4252 = vmatprep.subr.bf16.mxu0 0
        %4253 = vmatpush1.bf16.xpose.msra.mxu0 0
        %4254 = vmatprep.subr.bf16.mxu0 0
        %4255 = vmatpush1.bf16.xpose.msra.mxu0 0
        %4256 = vmatprep.subr.bf16.mxu0 0
        %4257 = vmatpush1.bf16.xpose.msra.mxu0 0
        %4258 = vmatprep.subr.bf16.mxu0 0
        %4259 = vmatpush1.bf16.xpose.msra.mxu0 0
        %4260 = vmatprep.subr.bf16.mxu0 0
        %4261 = vmatpush1.bf16.xpose.msra.mxu0 0
        %4262 = vmatprep.subr.bf16.mxu0 0
        %4263 = vmatpush1.bf16.xpose.msra.mxu0 0
        %4264 = vmatprep.subr.bf16.mxu0 0
        %4265 = vmatpush1.bf16.xpose.msra.mxu0 0
        %4266 = vmatprep.mubr.bf16.mxu0 0
        %4267 = vmatmul.mubr.bf16.gmra.mrb[0].mxu0 %v4229
        %v4268 = vpop.f32.mrb[0].mxu0
        %v4269 = vadd.f32 0.0, %v4268
        %v4270 = vpop.f32.mrb[0].mxu0
        %v4271 = vpop.f32.mrb[0].mxu0
        %v4272 = vpop.f32.mrb[0].mxu0
        %4273 = vdwg.mxu0
        %v4274 = vsel %vm2747, %v4269, -inf
        %4275 = vmax.xlane.f32.xlu0 %v4274
        %v4276 = vpop.xlane.xlu0 %4275
        %v4277 = vsub.f32 %v4269, %v4276
        %v4278 = vmul.f32 %v4277, 1.442695
        %v4279 = vpow.pop %v4278
        %v4280 = vsel %vm2747, %v4279, 0.0
        %4281 = vadd.xlane.f32.xlu0 %v4280
        %v4282 = vpop.xlane.xlu0 %4281
        %v4283 = vrcp.pop %v4282
        %v4284 = vmul.f32 %v4279, %v4283
        %v4285 = vpack.c.bf16 %v4284, %v4284
        %4286 = vrot.lane.b32.xlu0 %v3895, 16
        %v4287 = vpop.permute.xlu0 %4286
        %v4289 = vsel %vm2747, %v4285, 0
        %v4292 = vsel %vm2763, %v4287, 0
        %4294 = vmatprep.subr.bf16.mxu0 0
        %4295 = vmatpush1.bf16.msra.mxu0 %v4292
        %4296 = vmatprep.subr.bf16.mxu0 0
        %4297 = vmatpush1.bf16.msra.mxu0 0
        %4298 = vmatprep.subr.bf16.mxu0 0
        %4299 = vmatpush1.bf16.msra.mxu0 0
        %4300 = vmatprep.subr.bf16.mxu0 0
        %4301 = vmatpush1.bf16.msra.mxu0 0
        %4302 = vmatprep.subr.bf16.mxu0 0
        %4303 = vmatpush1.bf16.msra.mxu0 0
        %4304 = vmatprep.subr.bf16.mxu0 0
        %4305 = vmatpush1.bf16.msra.mxu0 0
        %4306 = vmatprep.subr.bf16.mxu0 0
        %4307 = vmatpush1.bf16.msra.mxu0 0
        %4308 = vmatprep.subr.bf16.mxu0 0
        %4309 = vmatpush1.bf16.msra.mxu0 0
        %4310 = vmatprep.subr.bf16.mxu0 0
        %4311 = vmatpush1.bf16.msra.mxu0 0
        %4312 = vmatprep.subr.bf16.mxu0 0
        %4313 = vmatpush1.bf16.msra.mxu0 0
        %4314 = vmatprep.subr.bf16.mxu0 0
        %4315 = vmatpush1.bf16.msra.mxu0 0
        %4316 = vmatprep.subr.bf16.mxu0 0
        %4317 = vmatpush1.bf16.msra.mxu0 0
        %4318 = vmatprep.subr.bf16.mxu0 0
        %4319 = vmatpush1.bf16.msra.mxu0 0
        %4320 = vmatprep.subr.bf16.mxu0 0
        %4321 = vmatpush1.bf16.msra.mxu0 0
        %4322 = vmatprep.subr.bf16.mxu0 0
        %4323 = vmatpush1.bf16.msra.mxu0 0
        %4324 = vmatprep.subr.bf16.mxu0 0
        %4325 = vmatpush1.bf16.msra.mxu0 0
        %4326 = vmatprep.mubr.bf16.mxu0 0
        %4327 = vmatmul.mubr.bf16.gmra.mrb[0].mxu0 %v4289
        %v4328 = vpop.f32.mrb[0].mxu0
        %v4329 = vadd.f32 0.0, %v4328
        %v4330 = vpop.f32.mrb[0].mxu0
        %v4331 = vpop.f32.mrb[0].mxu0
        %v4332 = vpop.f32.mrb[0].mxu0
        %4333 = vdwg.mxu0
        %4335 = vrot.lane.b32.xlu0 %v4109, 16
        %v4336 = vpop.permute.xlu0 %4335
        %4339 = vrot.lane.b32.xlu0 %v4219, 32
        %v4340 = vpop.permute.xlu0 %4339
        %4343 = vrot.lane.b32.xlu0 %v4329, 48
        %v4344 = vpop.permute.xlu0 %4343
        %v4346 = vsel %vm2700, %v3998, %v4336
        %v4347 = vsel %vm3151, %v4346, %v4340
        %v4348 = vsel %vm3153, %v4347, %v4344
        %v4349 = vpack.c.bf16 %v3811, %v3811
        %v4350 = vpack.c.bf16 %v3891, %v3891
        %v4352 = vsel %vm2700, %v4349, 0
        %v4355 = vsel %vm2700, %v4350, 0
        %4357 = vmatprep.subr.bf16.mxu0 0
        %4358 = vmatpush1.bf16.xpose.msra.mxu0 %v4355
        %4359 = vmatprep.subr.bf16.mxu0 0
        %4360 = vmatpush1.bf16.xpose.msra.mxu0 0
        %4361 = vmatprep.subr.bf16.mxu0 0
        %4362 = vmatpush1.bf16.xpose.msra.mxu0 0
        %4363 = vmatprep.subr.bf16.mxu0 0
        %4364 = vmatpush1.bf16.xpose.msra.mxu0 0
        %4365 = vmatprep.subr.bf16.mxu0 0
        %4366 = vmatpush1.bf16.xpose.msra.mxu0 0
        %4367 = vmatprep.subr.bf16.mxu0 0
        %4368 = vmatpush1.bf16.xpose.msra.mxu0 0
        %4369 = vmatprep.subr.bf16.mxu0 0
        %4370 = vmatpush1.bf16.xpose.msra.mxu0 0
        %4371 = vmatprep.subr.bf16.mxu0 0
        %4372 = vmatpush1.bf16.xpose.msra.mxu0 0
        %4373 = vmatprep.subr.bf16.mxu0 0
        %4374 = vmatpush1.bf16.xpose.msra.mxu0 0
        %4375 = vmatprep.subr.bf16.mxu0 0
        %4376 = vmatpush1.bf16.xpose.msra.mxu0 0
        %4377 = vmatprep.subr.bf16.mxu0 0
        %4378 = vmatpush1.bf16.xpose.msra.mxu0 0
        %4379 = vmatprep.subr.bf16.mxu0 0
        %4380 = vmatpush1.bf16.xpose.msra.mxu0 0
        %4381 = vmatprep.subr.bf16.mxu0 0
        %4382 = vmatpush1.bf16.xpose.msra.mxu0 0
        %4383 = vmatprep.subr.bf16.mxu0 0
        %4384 = vmatpush1.bf16.xpose.msra.mxu0 0
        %4385 = vmatprep.subr.bf16.mxu0 0
        %4386 = vmatpush1.bf16.xpose.msra.mxu0 0
        %4387 = vmatprep.subr.bf16.mxu0 0
        %4388 = vmatpush1.bf16.xpose.msra.mxu0 0
        %4389 = vmatprep.mubr.bf16.mxu0 0
        %4390 = vmatmul.mubr.bf16.gmra.mrb[0].mxu0 %v4352
        %v4391 = vpop.f32.mrb[0].mxu0
        %v4392 = vadd.f32 0.0, %v4391
        %v4393 = vpop.f32.mrb[0].mxu0
        %v4394 = vpop.f32.mrb[0].mxu0
        %v4395 = vpop.f32.mrb[0].mxu0
        %4396 = vdwg.mxu0
        %v4397 = vsel %vm2747, %v4392, -inf
        %4398 = vmax.xlane.f32.xlu0 %v4397
        %v4399 = vpop.xlane.xlu0 %4398
        %v4400 = vsub.f32 %v4392, %v4399
        %v4401 = vmul.f32 %v4400, 1.442695
        %v4402 = vpow.pop %v4401
        %v4403 = vsel %vm2747, %v4402, 0.0
        %4404 = vadd.xlane.f32.xlu0 %v4403
        %v4405 = vpop.xlane.xlu0 %4404
        %v4406 = vrcp.pop %v4405
        %v4407 = vmul.f32 %v4402, %v4406
        %v4408 = vpack.c.bf16 %v4407, %v4407
        %4410 = vrot.lane.b32.xlu0 %v4350, 64
        %v4411 = vpop.permute.xlu0 %4410
        %v4413 = vsel %vm2747, %v4408, 0
        %v4416 = vsel %vm2763, %v4411, 0
        %4418 = vmatprep.subr.bf16.mxu0 0
        %4419 = vmatpush1.bf16.msra.mxu0 %v4416
        %4420 = vmatprep.subr.bf16.mxu0 0
        %4421 = vmatpush1.bf16.msra.mxu0 0
        %4422 = vmatprep.subr.bf16.mxu0 0
        %4423 = vmatpush1.bf16.msra.mxu0 0
        %4424 = vmatprep.subr.bf16.mxu0 0
        %4425 = vmatpush1.bf16.msra.mxu0 0
        %4426 = vmatprep.subr.bf16.mxu0 0
        %4427 = vmatpush1.bf16.msra.mxu0 0
        %4428 = vmatprep.subr.bf16.mxu0 0
        %4429 = vmatpush1.bf16.msra.mxu0 0
        %4430 = vmatprep.subr.bf16.mxu0 0
        %4431 = vmatpush1.bf16.msra.mxu0 0
        %4432 = vmatprep.subr.bf16.mxu0 0
        %4433 = vmatpush1.bf16.msra.mxu0 0
        %4434 = vmatprep.subr.bf16.mxu0 0
        %4435 = vmatpush1.bf16.msra.mxu0 0
        %4436 = vmatprep.subr.bf16.mxu0 0
        %4437 = vmatpush1.bf16.msra.mxu0 0
        %4438 = vmatprep.subr.bf16.mxu0 0
        %4439 = vmatpush1.bf16.msra.mxu0 0
        %4440 = vmatprep.subr.bf16.mxu0 0
        %4441 = vmatpush1.bf16.msra.mxu0 0
        %4442 = vmatprep.subr.bf16.mxu0 0
        %4443 = vmatpush1.bf16.msra.mxu0 0
        %4444 = vmatprep.subr.bf16.mxu0 0
        %4445 = vmatpush1.bf16.msra.mxu0 0
        %4446 = vmatprep.subr.bf16.mxu0 0
        %4447 = vmatpush1.bf16.msra.mxu0 0
        %4448 = vmatprep.subr.bf16.mxu0 0
        %4449 = vmatpush1.bf16.msra.mxu0 0
        %4450 = vmatprep.mubr.bf16.mxu0 0
        %4451 = vmatmul.mubr.bf16.gmra.mrb[0].mxu0 %v4413
        %v4452 = vpop.f32.mrb[0].mxu0
        %v4453 = vadd.f32 0.0, %v4452
        %v4454 = vpop.f32.mrb[0].mxu0
        %v4455 = vpop.f32.mrb[0].mxu0
        %v4456 = vpop.f32.mrb[0].mxu0
        %4457 = vdwg.mxu0
        %4459 = vrot.lane.b32.xlu0 %v4349, 112
        %v4460 = vpop.permute.xlu0 %4459
        %4461 = vrot.lane.b32.xlu0 %v4350, 112
        %v4462 = vpop.permute.xlu0 %4461
        %v4464 = vsel %vm2700, %v4460, 0
        %v4467 = vsel %vm2700, %v4462, 0
        %4469 = vmatprep.subr.bf16.mxu0 0
        %4470 = vmatpush1.bf16.xpose.msra.mxu0 %v4467
        %4471 = vmatprep.subr.bf16.mxu0 0
        %4472 = vmatpush1.bf16.xpose.msra.mxu0 0
        %4473 = vmatprep.subr.bf16.mxu0 0
        %4474 = vmatpush1.bf16.xpose.msra.mxu0 0
        %4475 = vmatprep.subr.bf16.mxu0 0
        %4476 = vmatpush1.bf16.xpose.msra.mxu0 0
        %4477 = vmatprep.subr.bf16.mxu0 0
        %4478 = vmatpush1.bf16.xpose.msra.mxu0 0
        %4479 = vmatprep.subr.bf16.mxu0 0
        %4480 = vmatpush1.bf16.xpose.msra.mxu0 0
        %4481 = vmatprep.subr.bf16.mxu0 0
        %4482 = vmatpush1.bf16.xpose.msra.mxu0 0
        %4483 = vmatprep.subr.bf16.mxu0 0
        %4484 = vmatpush1.bf16.xpose.msra.mxu0 0
        %4485 = vmatprep.subr.bf16.mxu0 0
        %4486 = vmatpush1.bf16.xpose.msra.mxu0 0
        %4487 = vmatprep.subr.bf16.mxu0 0
        %4488 = vmatpush1.bf16.xpose.msra.mxu0 0
        %4489 = vmatprep.subr.bf16.mxu0 0
        %4490 = vmatpush1.bf16.xpose.msra.mxu0 0
        %4491 = vmatprep.subr.bf16.mxu0 0
        %4492 = vmatpush1.bf16.xpose.msra.mxu0 0
        %4493 = vmatprep.subr.bf16.mxu0 0
        %4494 = vmatpush1.bf16.xpose.msra.mxu0 0
        %4495 = vmatprep.subr.bf16.mxu0 0
        %4496 = vmatpush1.bf16.xpose.msra.mxu0 0
        %4497 = vmatprep.subr.bf16.mxu0 0
        %4498 = vmatpush1.bf16.xpose.msra.mxu0 0
        %4499 = vmatprep.subr.bf16.mxu0 0
        %4500 = vmatpush1.bf16.xpose.msra.mxu0 0
        %4501 = vmatprep.mubr.bf16.mxu0 0
        %4502 = vmatmul.mubr.bf16.gmra.mrb[0].mxu0 %v4464
        %v4503 = vpop.f32.mrb[0].mxu0
        %v4504 = vadd.f32 0.0, %v4503
        %v4505 = vpop.f32.mrb[0].mxu0
        %v4506 = vpop.f32.mrb[0].mxu0
        %v4507 = vpop.f32.mrb[0].mxu0
        %4508 = vdwg.mxu0
        %v4509 = vsel %vm2747, %v4504, -inf
        %4510 = vmax.xlane.f32.xlu0 %v4509
        %v4511 = vpop.xlane.xlu0 %4510
        %v4512 = vsub.f32 %v4504, %v4511
        %v4513 = vmul.f32 %v4512, 1.442695
        %v4514 = vpow.pop %v4513
        %v4515 = vsel %vm2747, %v4514, 0.0
        %4516 = vadd.xlane.f32.xlu0 %v4515
        %v4517 = vpop.xlane.xlu0 %4516
        %v4518 = vrcp.pop %v4517
        %v4519 = vmul.f32 %v4514, %v4518
        %v4520 = vpack.c.bf16 %v4519, %v4519
        %4521 = vrot.lane.b32.xlu0 %v4350, 48
        %v4522 = vpop.permute.xlu0 %4521
        %v4524 = vsel %vm2747, %v4520, 0
        %v4527 = vsel %vm2763, %v4522, 0
        %4529 = vmatprep.subr.bf16.mxu0 0
        %4530 = vmatpush1.bf16.msra.mxu0 %v4527
        %4531 = vmatprep.subr.bf16.mxu0 0
        %4532 = vmatpush1.bf16.msra.mxu0 0
        %4533 = vmatprep.subr.bf16.mxu0 0
        %4534 = vmatpush1.bf16.msra.mxu0 0
        %4535 = vmatprep.subr.bf16.mxu0 0
        %4536 = vmatpush1.bf16.msra.mxu0 0
        %4537 = vmatprep.subr.bf16.mxu0 0
        %4538 = vmatpush1.bf16.msra.mxu0 0
        %4539 = vmatprep.subr.bf16.mxu0 0
        %4540 = vmatpush1.bf16.msra.mxu0 0
        %4541 = vmatprep.subr.bf16.mxu0 0
        %4542 = vmatpush1.bf16.msra.mxu0 0
        %4543 = vmatprep.subr.bf16.mxu0 0
        %4544 = vmatpush1.bf16.msra.mxu0 0
        %4545 = vmatprep.subr.bf16.mxu0 0
        %4546 = vmatpush1.bf16.msra.mxu0 0
        %4547 = vmatprep.subr.bf16.mxu0 0
        %4548 = vmatpush1.bf16.msra.mxu0 0
        %4549 = vmatprep.subr.bf16.mxu0 0
        %4550 = vmatpush1.bf16.msra.mxu0 0
        %4551 = vmatprep.subr.bf16.mxu0 0
        %4552 = vmatpush1.bf16.msra.mxu0 0
        %4553 = vmatprep.subr.bf16.mxu0 0
        %4554 = vmatpush1.bf16.msra.mxu0 0
        %4555 = vmatprep.subr.bf16.mxu0 0
        %4556 = vmatpush1.bf16.msra.mxu0 0
        %4557 = vmatprep.subr.bf16.mxu0 0
        %4558 = vmatpush1.bf16.msra.mxu0 0
        %4559 = vmatprep.subr.bf16.mxu0 0
        %4560 = vmatpush1.bf16.msra.mxu0 0
        %4561 = vmatprep.mubr.bf16.mxu0 0
        %4562 = vmatmul.mubr.bf16.gmra.mrb[0].mxu0 %v4524
        %v4563 = vpop.f32.mrb[0].mxu0
        %v4564 = vadd.f32 0.0, %v4563
        %v4565 = vpop.f32.mrb[0].mxu0
        %v4566 = vpop.f32.mrb[0].mxu0
        %v4567 = vpop.f32.mrb[0].mxu0
        %4568 = vdwg.mxu0
        %4569 = vrot.lane.b32.xlu0 %v4349, 96
        %v4570 = vpop.permute.xlu0 %4569
        %4571 = vrot.lane.b32.xlu0 %v4350, 96
        %v4572 = vpop.permute.xlu0 %4571
        %v4574 = vsel %vm2700, %v4570, 0
        %v4577 = vsel %vm2700, %v4572, 0
        %4579 = vmatprep.subr.bf16.mxu0 0
        %4580 = vmatpush1.bf16.xpose.msra.mxu0 %v4577
        %4581 = vmatprep.subr.bf16.mxu0 0
        %4582 = vmatpush1.bf16.xpose.msra.mxu0 0
        %4583 = vmatprep.subr.bf16.mxu0 0
        %4584 = vmatpush1.bf16.xpose.msra.mxu0 0
        %4585 = vmatprep.subr.bf16.mxu0 0
        %4586 = vmatpush1.bf16.xpose.msra.mxu0 0
        %4587 = vmatprep.subr.bf16.mxu0 0
        %4588 = vmatpush1.bf16.xpose.msra.mxu0 0
        %4589 = vmatprep.subr.bf16.mxu0 0
        %4590 = vmatpush1.bf16.xpose.msra.mxu0 0
        %4591 = vmatprep.subr.bf16.mxu0 0
        %4592 = vmatpush1.bf16.xpose.msra.mxu0 0
        %4593 = vmatprep.subr.bf16.mxu0 0
        %4594 = vmatpush1.bf16.xpose.msra.mxu0 0
        %4595 = vmatprep.subr.bf16.mxu0 0
        %4596 = vmatpush1.bf16.xpose.msra.mxu0 0
        %4597 = vmatprep.subr.bf16.mxu0 0
        %4598 = vmatpush1.bf16.xpose.msra.mxu0 0
        %4599 = vmatprep.subr.bf16.mxu0 0
        %4600 = vmatpush1.bf16.xpose.msra.mxu0 0
        %4601 = vmatprep.subr.bf16.mxu0 0
        %4602 = vmatpush1.bf16.xpose.msra.mxu0 0
        %4603 = vmatprep.subr.bf16.mxu0 0
        %4604 = vmatpush1.bf16.xpose.msra.mxu0 0
        %4605 = vmatprep.subr.bf16.mxu0 0
        %4606 = vmatpush1.bf16.xpose.msra.mxu0 0
        %4607 = vmatprep.subr.bf16.mxu0 0
        %4608 = vmatpush1.bf16.xpose.msra.mxu0 0
        %4609 = vmatprep.subr.bf16.mxu0 0
        %4610 = vmatpush1.bf16.xpose.msra.mxu0 0
        %4611 = vmatprep.mubr.bf16.mxu0 0
        %4612 = vmatmul.mubr.bf16.gmra.mrb[0].mxu0 %v4574
        %v4613 = vpop.f32.mrb[0].mxu0
        %v4614 = vadd.f32 0.0, %v4613
        %v4615 = vpop.f32.mrb[0].mxu0
        %v4616 = vpop.f32.mrb[0].mxu0
        %v4617 = vpop.f32.mrb[0].mxu0
        %4618 = vdwg.mxu0
        %v4619 = vsel %vm2747, %v4614, -inf
        %4620 = vmax.xlane.f32.xlu0 %v4619
        %v4621 = vpop.xlane.xlu0 %4620
        %v4622 = vsub.f32 %v4614, %v4621
        %v4623 = vmul.f32 %v4622, 1.442695
        %v4624 = vpow.pop %v4623
        %v4625 = vsel %vm2747, %v4624, 0.0
        %4626 = vadd.xlane.f32.xlu0 %v4625
        %v4627 = vpop.xlane.xlu0 %4626
        %v4628 = vrcp.pop %v4627
        %v4629 = vmul.f32 %v4624, %v4628
        %v4630 = vpack.c.bf16 %v4629, %v4629
        %4631 = vrot.lane.b32.xlu0 %v4350, 32
        %v4632 = vpop.permute.xlu0 %4631
        %v4634 = vsel %vm2747, %v4630, 0
        %v4637 = vsel %vm2763, %v4632, 0
        %4639 = vmatprep.subr.bf16.mxu0 0
        %4640 = vmatpush1.bf16.msra.mxu0 %v4637
        %4641 = vmatprep.subr.bf16.mxu0 0
        %4642 = vmatpush1.bf16.msra.mxu0 0
        %4643 = vmatprep.subr.bf16.mxu0 0
        %4644 = vmatpush1.bf16.msra.mxu0 0
        %4645 = vmatprep.subr.bf16.mxu0 0
        %4646 = vmatpush1.bf16.msra.mxu0 0
        %4647 = vmatprep.subr.bf16.mxu0 0
        %4648 = vmatpush1.bf16.msra.mxu0 0
        %4649 = vmatprep.subr.bf16.mxu0 0
        %4650 = vmatpush1.bf16.msra.mxu0 0
        %4651 = vmatprep.subr.bf16.mxu0 0
        %4652 = vmatpush1.bf16.msra.mxu0 0
        %4653 = vmatprep.subr.bf16.mxu0 0
        %4654 = vmatpush1.bf16.msra.mxu0 0
        %4655 = vmatprep.subr.bf16.mxu0 0
        %4656 = vmatpush1.bf16.msra.mxu0 0
        %4657 = vmatprep.subr.bf16.mxu0 0
        %4658 = vmatpush1.bf16.msra.mxu0 0
        %4659 = vmatprep.subr.bf16.mxu0 0
        %4660 = vmatpush1.bf16.msra.mxu0 0
        %4661 = vmatprep.subr.bf16.mxu0 0
        %4662 = vmatpush1.bf16.msra.mxu0 0
        %4663 = vmatprep.subr.bf16.mxu0 0
        %4664 = vmatpush1.bf16.msra.mxu0 0
        %4665 = vmatprep.subr.bf16.mxu0 0
        %4666 = vmatpush1.bf16.msra.mxu0 0
        %4667 = vmatprep.subr.bf16.mxu0 0
        %4668 = vmatpush1.bf16.msra.mxu0 0
        %4669 = vmatprep.subr.bf16.mxu0 0
        %4670 = vmatpush1.bf16.msra.mxu0 0
        %4671 = vmatprep.mubr.bf16.mxu0 0
        %4672 = vmatmul.mubr.bf16.gmra.mrb[0].mxu0 %v4634
        %v4673 = vpop.f32.mrb[0].mxu0
        %v4674 = vadd.f32 0.0, %v4673
        %v4675 = vpop.f32.mrb[0].mxu0
        %v4676 = vpop.f32.mrb[0].mxu0
        %v4677 = vpop.f32.mrb[0].mxu0
        %4678 = vdwg.mxu0
        %4679 = vrot.lane.b32.xlu0 %v4349, 80
        %v4680 = vpop.permute.xlu0 %4679
        %4681 = vrot.lane.b32.xlu0 %v4350, 80
        %v4682 = vpop.permute.xlu0 %4681
        %v4684 = vsel %vm2700, %v4680, 0
        %v4687 = vsel %vm2700, %v4682, 0
        %4689 = vmatprep.subr.bf16.mxu0 0
        %4690 = vmatpush1.bf16.xpose.msra.mxu0 %v4687
        %4691 = vmatprep.subr.bf16.mxu0 0
        %4692 = vmatpush1.bf16.xpose.msra.mxu0 0
        %4693 = vmatprep.subr.bf16.mxu0 0
        %4694 = vmatpush1.bf16.xpose.msra.mxu0 0
        %4695 = vmatprep.subr.bf16.mxu0 0
        %4696 = vmatpush1.bf16.xpose.msra.mxu0 0
        %4697 = vmatprep.subr.bf16.mxu0 0
        %4698 = vmatpush1.bf16.xpose.msra.mxu0 0
        %4699 = vmatprep.subr.bf16.mxu0 0
        %4700 = vmatpush1.bf16.xpose.msra.mxu0 0
        %4701 = vmatprep.subr.bf16.mxu0 0
        %4702 = vmatpush1.bf16.xpose.msra.mxu0 0
        %4703 = vmatprep.subr.bf16.mxu0 0
        %4704 = vmatpush1.bf16.xpose.msra.mxu0 0
        %4705 = vmatprep.subr.bf16.mxu0 0
        %4706 = vmatpush1.bf16.xpose.msra.mxu0 0
        %4707 = vmatprep.subr.bf16.mxu0 0
        %4708 = vmatpush1.bf16.xpose.msra.mxu0 0
        %4709 = vmatprep.subr.bf16.mxu0 0
        %4710 = vmatpush1.bf16.xpose.msra.mxu0 0
        %4711 = vmatprep.subr.bf16.mxu0 0
        %4712 = vmatpush1.bf16.xpose.msra.mxu0 0
        %4713 = vmatprep.subr.bf16.mxu0 0
        %4714 = vmatpush1.bf16.xpose.msra.mxu0 0
        %4715 = vmatprep.subr.bf16.mxu0 0
        %4716 = vmatpush1.bf16.xpose.msra.mxu0 0
        %4717 = vmatprep.subr.bf16.mxu0 0
        %4718 = vmatpush1.bf16.xpose.msra.mxu0 0
        %4719 = vmatprep.subr.bf16.mxu0 0
        %4720 = vmatpush1.bf16.xpose.msra.mxu0 0
        %4721 = vmatprep.mubr.bf16.mxu0 0
        %4722 = vmatmul.mubr.bf16.gmra.mrb[0].mxu0 %v4684
        %v4723 = vpop.f32.mrb[0].mxu0
        %v4724 = vadd.f32 0.0, %v4723
        %v4725 = vpop.f32.mrb[0].mxu0
        %v4726 = vpop.f32.mrb[0].mxu0
        %v4727 = vpop.f32.mrb[0].mxu0
        %4728 = vdwg.mxu0
        %v4729 = vsel %vm2747, %v4724, -inf
        %4730 = vmax.xlane.f32.xlu0 %v4729
        %v4731 = vpop.xlane.xlu0 %4730
        %v4732 = vsub.f32 %v4724, %v4731
        %v4733 = vmul.f32 %v4732, 1.442695
        %v4734 = vpow.pop %v4733
        %v4735 = vsel %vm2747, %v4734, 0.0
        %4736 = vadd.xlane.f32.xlu0 %v4735
        %v4737 = vpop.xlane.xlu0 %4736
        %v4738 = vrcp.pop %v4737
        %v4739 = vmul.f32 %v4734, %v4738
        %v4740 = vpack.c.bf16 %v4739, %v4739
        %4741 = vrot.lane.b32.xlu0 %v4350, 16
        %v4742 = vpop.permute.xlu0 %4741
        %v4744 = vsel %vm2747, %v4740, 0
        %v4747 = vsel %vm2763, %v4742, 0
        %4749 = vmatprep.subr.bf16.mxu0 0
        %4750 = vmatpush1.bf16.msra.mxu0 %v4747
        %4751 = vmatprep.subr.bf16.mxu0 0
        %4752 = vmatpush1.bf16.msra.mxu0 0
        %4753 = vmatprep.subr.bf16.mxu0 0
        %4754 = vmatpush1.bf16.msra.mxu0 0
        %4755 = vmatprep.subr.bf16.mxu0 0
        %4756 = vmatpush1.bf16.msra.mxu0 0
        %4757 = vmatprep.subr.bf16.mxu0 0
        %4758 = vmatpush1.bf16.msra.mxu0 0
        %4759 = vmatprep.subr.bf16.mxu0 0
        %4760 = vmatpush1.bf16.msra.mxu0 0
        %4761 = vmatprep.subr.bf16.mxu0 0
        %4762 = vmatpush1.bf16.msra.mxu0 0
        %4763 = vmatprep.subr.bf16.mxu0 0
        %4764 = vmatpush1.bf16.msra.mxu0 0
        %4765 = vmatprep.subr.bf16.mxu0 0
        %4766 = vmatpush1.bf16.msra.mxu0 0
        %4767 = vmatprep.subr.bf16.mxu0 0
        %4768 = vmatpush1.bf16.msra.mxu0 0
        %4769 = vmatprep.subr.bf16.mxu0 0
        %4770 = vmatpush1.bf16.msra.mxu0 0
        %4771 = vmatprep.subr.bf16.mxu0 0
        %4772 = vmatpush1.bf16.msra.mxu0 0
        %4773 = vmatprep.subr.bf16.mxu0 0
        %4774 = vmatpush1.bf16.msra.mxu0 0
        %4775 = vmatprep.subr.bf16.mxu0 0
        %4776 = vmatpush1.bf16.msra.mxu0 0
        %4777 = vmatprep.subr.bf16.mxu0 0
        %4778 = vmatpush1.bf16.msra.mxu0 0
        %4779 = vmatprep.subr.bf16.mxu0 0
        %4780 = vmatpush1.bf16.msra.mxu0 0
        %4781 = vmatprep.mubr.bf16.mxu0 0
        %4782 = vmatmul.mubr.bf16.gmra.mrb[0].mxu0 %v4744
        %v4783 = vpop.f32.mrb[0].mxu0
        %v4784 = vadd.f32 0.0, %v4783
        %v4785 = vpop.f32.mrb[0].mxu0
        %v4786 = vpop.f32.mrb[0].mxu0
        %v4787 = vpop.f32.mrb[0].mxu0
        %4788 = vdwg.mxu0
        %4790 = vrot.lane.b32.xlu0 %v4564, 16
        %v4791 = vpop.permute.xlu0 %4790
        %4794 = vrot.lane.b32.xlu0 %v4674, 32
        %v4795 = vpop.permute.xlu0 %4794
        %4798 = vrot.lane.b32.xlu0 %v4784, 48
        %v4799 = vpop.permute.xlu0 %4798
        %v4801 = vsel %vm2700, %v4453, %v4791
        %v4802 = vsel %vm3151, %v4801, %v4795
        %v4803 = vsel %vm3153, %v4802, %v4799
        %v4804 = vpack.c.bf16 %v4803, %v4348
        %v4805 = vld [vmem:[%s1095] sm:$0xf]
        %v4806 = vld [vmem:[%s1095 + $0x4] sm:$0xf]
        %v4807 = vld [vmem:[%s1095 + $0x8] sm:$0xf]
        %v4808 = vld [vmem:[%s1095 + $0xc] sm:$0xf]
        %v4809 = vld [vmem:[%s1095 + $0x10] sm:$0xf]
        %v4810 = vld [vmem:[%s1095 + $0x14] sm:$0xf]
        %v4811 = vld [vmem:[%s1095 + $0x18] sm:$0xf]
        %v4812 = vld [vmem:[%s1095 + $0x1c] sm:$0xf]
        %v4813 = vlaneseq
        %v4814 = vshrl.u32 %v4813, 7
        %v4815 = vsub.s32 4, %v4814
        %v4816 = vrot.slane %v2588, %v4815
        %v4825 = vunpack.c.l.b16 %v4805
        %v4826 = vunpack.c.l.b16 %v4806
        %v4827 = vunpack.c.l.b16 %v4807
        %v4828 = vunpack.c.l.b16 %v4808
        %v4829 = vunpack.c.l.b16 %v4809
        %v4830 = vunpack.c.l.b16 %v4810
        %v4831 = vunpack.c.l.b16 %v4811
        %v4832 = vunpack.c.l.b16 %v4812
        %v4833 = vpack.c.b16 %v4826, %v4825
        %v4834 = vpack.c.b16 %v4828, %v4827
        %v4835 = vpack.c.b16 %v4830, %v4829
        %v4836 = vpack.c.b16 %v4832, %v4831
        %v4842 = vsel %vm2648, %v4804, 0
        %4844 = vmatprep.subr.bf16.mxu0 0
        %4845 = vmatpush1.bf16.msra.mxu0 %v4833
        %4846 = vmatprep.subr.bf16.mxu0 0
        %4847 = vmatpush1.bf16.msra.mxu0 %v4834
        %4848 = vmatprep.subr.bf16.mxu0 0
        %4849 = vmatpush1.bf16.msra.mxu0 %v4835
        %4850 = vmatprep.subr.bf16.mxu0 0
        %4851 = vmatpush1.bf16.msra.mxu0 %v4836
        %4852 = vmatprep.subr.bf16.mxu0 0
        %4853 = vmatpush1.bf16.msra.mxu0 0
        %4854 = vmatprep.subr.bf16.mxu0 0
        %4855 = vmatpush1.bf16.msra.mxu0 0
        %4856 = vmatprep.subr.bf16.mxu0 0
        %4857 = vmatpush1.bf16.msra.mxu0 0
        %4858 = vmatprep.subr.bf16.mxu0 0
        %4859 = vmatpush1.bf16.msra.mxu0 0
        %4860 = vmatprep.subr.bf16.mxu0 0
        %4861 = vmatpush1.bf16.msra.mxu0 0
        %4862 = vmatprep.subr.bf16.mxu0 0
        %4863 = vmatpush1.bf16.msra.mxu0 0
        %4864 = vmatprep.subr.bf16.mxu0 0
        %4865 = vmatpush1.bf16.msra.mxu0 0
        %4866 = vmatprep.subr.bf16.mxu0 0
        %4867 = vmatpush1.bf16.msra.mxu0 0
        %4868 = vmatprep.subr.bf16.mxu0 0
        %4869 = vmatpush1.bf16.msra.mxu0 0
        %4870 = vmatprep.subr.bf16.mxu0 0
        %4871 = vmatpush1.bf16.msra.mxu0 0
        %4872 = vmatprep.subr.bf16.mxu0 0
        %4873 = vmatpush1.bf16.msra.mxu0 0
        %4874 = vmatprep.subr.bf16.mxu0 0
        %4875 = vmatpush1.bf16.msra.mxu0 0
        %4876 = vmatprep.mubr.bf16.mxu0 0
        %4877 = vmatmul.mubr.bf16.gmra.mrb[0].mxu0 %v4842
        %v4878 = vpop.f32.mrb[0].mxu0
        %v4879 = vadd.f32 %v4816, %v4878
        %v4880 = vpop.f32.mrb[0].mxu0
        %v4881 = vpop.f32.mrb[0].mxu0
        %v4882 = vadd.f32 %v4816, %v4881
        %v4883 = vpop.f32.mrb[0].mxu0
        %4884 = vdwg.mxu0
        %v4885 = vadd.f32 %v3730, %v4879
        %v4886 = vadd.f32 %v3731, %v4882
        %v4887 = vsel %vm2648, %v4885, 0.0
        %4888 = vadd.xlane.f32.xlu0 %v4887
        %v4889 = vpop.xlane.xlu0 %4888
        %v4890 = vsel %vm2648, %v4886, 0.0
        %4891 = vadd.xlane.f32.xlu0 %v4890
        %v4892 = vpop.xlane.xlu0 %4891
        %v4893 = vmul.f32 %v4889, %v3699
        %v4894 = vmul.f32 %v4892, %v3699
        %v4895 = vsub.f32 %v4885, %v4893
        %v4896 = vsub.f32 %v4886, %v4894
        %v4897 = vmul.f32 %v4895, %v4895
        %v4898 = vmul.f32 %v4896, %v4896
        %v4899 = vsel %vm2648, %v4897, 0.0
        %4900 = vadd.xlane.f32.xlu0 %v4899
        %v4901 = vpop.xlane.xlu0 %4900
        %v4902 = vsel %vm2648, %v4898, 0.0
        %4903 = vadd.xlane.f32.xlu0 %v4902
        %v4904 = vpop.xlane.xlu0 %4903
        %v4905 = vmul.f32 %v4901, %v3699
        %v4906 = vmul.f32 %v4904, %v3699
        %v4907 = vadd.f32 %v4905, 1e-05
        %v4908 = vadd.f32 %v4906, 1e-05
        %v4909 = vrsqrt.pop %v4907
        %v4910 = vrsqrt.pop %v4908
        %v4911 = vmul.f32 %v4895, %v4909
        %v4912 = vmul.f32 %v4896, %v4910
        %v4913 = vlaneseq
        %v4914 = vshrl.u32 %v4913, 7
        %v4915 = vsub.s32 1, %v4914
        %v4916 = vrot.slane %v2590, %v4915
        %v4917 = vmul.f32 %v4911, %v4916
        %v4918 = vmul.f32 %v4912, %v4916
        %v4919 = vlaneseq
        %v4920 = vshrl.u32 %v4919, 7
        %v4921 = vsub.s32 2, %v4920
        %v4922 = vrot.slane %v2590, %v4921
        %v4923 = vadd.f32 %v4917, %v4922
        %v4924 = vadd.f32 %v4918, %v4922
        %v4925 = vpack.c.bf16 %v4924, %v4923
        %v4926 = vld [vmem:[%s1106] sm:$0xf]
        %v4927 = vld [vmem:[%s1106 + $0x4] sm:$0xf]
        %v4928 = vld [vmem:[%s1106 + $0x8] sm:$0xf]
        %v4929 = vld [vmem:[%s1106 + $0xc] sm:$0xf]
        %v4930 = vld [vmem:[%s1106 + $0x10] sm:$0xf]
        %v4931 = vld [vmem:[%s1106 + $0x14] sm:$0xf]
        %v4932 = vld [vmem:[%s1106 + $0x18] sm:$0xf]
        %v4933 = vld [vmem:[%s1106 + $0x1c] sm:$0xf]
        %v4934 = vlaneseq
        %v4935 = vshrl.u32 %v4934, 7
        %v4936 = vsub.s32 5, %v4935
        %v4937 = vrot.slane %v2588, %v4936
        %v4946 = vunpack.c.l.b16 %v4926
        %v4947 = vunpack.c.l.b16 %v4927
        %v4948 = vunpack.c.l.b16 %v4928
        %v4949 = vunpack.c.l.b16 %v4929
        %v4950 = vunpack.c.l.b16 %v4930
        %v4951 = vunpack.c.l.b16 %v4931
        %v4952 = vunpack.c.l.b16 %v4932
        %v4953 = vunpack.c.l.b16 %v4933
        %v4954 = vpack.c.b16 %v4947, %v4946
        %v4955 = vpack.c.b16 %v4949, %v4948
        %v4956 = vpack.c.b16 %v4951, %v4950
        %v4957 = vpack.c.b16 %v4953, %v4952
        %v4963 = vsel %vm2648, %v4925, 0
        %4965 = vmatprep.subr.bf16.mxu0 0
        %4966 = vmatpush1.bf16.msra.mxu0 %v4954
        %4967 = vmatprep.subr.bf16.mxu0 0
        %4968 = vmatpush1.bf16.msra.mxu0 %v4955
        %4969 = vmatprep.subr.bf16.mxu0 0
        %4970 = vmatpush1.bf16.msra.mxu0 %v4956
        %4971 = vmatprep.subr.bf16.mxu0 0
        %4972 = vmatpush1.bf16.msra.mxu0 %v4957
        %4973 = vmatprep.subr.bf16.mxu0 0
        %4974 = vmatpush1.bf16.msra.mxu0 0
        %4975 = vmatprep.subr.bf16.mxu0 0
        %4976 = vmatpush1.bf16.msra.mxu0 0
        %4977 = vmatprep.subr.bf16.mxu0 0
        %4978 = vmatpush1.bf16.msra.mxu0 0
        %4979 = vmatprep.subr.bf16.mxu0 0
        %4980 = vmatpush1.bf16.msra.mxu0 0
        %4981 = vmatprep.subr.bf16.mxu0 0
        %4982 = vmatpush1.bf16.msra.mxu0 0
        %4983 = vmatprep.subr.bf16.mxu0 0
        %4984 = vmatpush1.bf16.msra.mxu0 0
        %4985 = vmatprep.subr.bf16.mxu0 0
        %4986 = vmatpush1.bf16.msra.mxu0 0
        %4987 = vmatprep.subr.bf16.mxu0 0
        %4988 = vmatpush1.bf16.msra.mxu0 0
        %4989 = vmatprep.subr.bf16.mxu0 0
        %4990 = vmatpush1.bf16.msra.mxu0 0
        %4991 = vmatprep.subr.bf16.mxu0 0
        %4992 = vmatpush1.bf16.msra.mxu0 0
        %4993 = vmatprep.subr.bf16.mxu0 0
        %4994 = vmatpush1.bf16.msra.mxu0 0
        %4995 = vmatprep.subr.bf16.mxu0 0
        %4996 = vmatpush1.bf16.msra.mxu0 0
        %4997 = vmatprep.mubr.bf16.mxu0 0
        %4998 = vmatmul.mubr.bf16.gmra.mrb[0].mxu0 %v4963
        %v4999 = vpop.f32.mrb[0].mxu0
        %v5000 = vadd.f32 %v4937, %v4999
        %v5001 = vpop.f32.mrb[0].mxu0
        %v5002 = vpop.f32.mrb[0].mxu0
        %v5003 = vadd.f32 %v4937, %v5002
        %v5004 = vpop.f32.mrb[0].mxu0
        %5005 = vdwg.mxu0
        %v5006 = vmax.f32 %v5000, 0.0
        %v5007 = vmax.f32 %v5003, 0.0
        %v5008 = vpack.c.bf16 %v5007, %v5006
        %v5009 = vld [vmem:[%s1117] sm:$0xf]
        %v5010 = vld [vmem:[%s1117 + $0x4] sm:$0xf]
        %v5011 = vld [vmem:[%s1117 + $0x8] sm:$0xf]
        %v5012 = vld [vmem:[%s1117 + $0xc] sm:$0xf]
        %v5013 = vld [vmem:[%s1117 + $0x10] sm:$0xf]
        %v5014 = vld [vmem:[%s1117 + $0x14] sm:$0xf]
        %v5015 = vld [vmem:[%s1117 + $0x18] sm:$0xf]
        %v5016 = vld [vmem:[%s1117 + $0x1c] sm:$0xf]
        %v5017 = vld [vmem:[%s1117 + $0x20] sm:$0xf]
        %v5018 = vld [vmem:[%s1117 + $0x24] sm:$0xf]
        %v5019 = vld [vmem:[%s1117 + $0x28] sm:$0xf]
        %v5020 = vld [vmem:[%s1117 + $0x2c] sm:$0xf]
        %v5021 = vld [vmem:[%s1117 + $0x30] sm:$0xf]
        %v5022 = vld [vmem:[%s1117 + $0x34] sm:$0xf]
        %v5023 = vld [vmem:[%s1117 + $0x38] sm:$0xf]
        %v5024 = vld [vmem:[%s1117 + $0x3c] sm:$0xf]
        %v5025 = vlaneseq
        %v5026 = vshrl.u32 %v5025, 7
        %v5027 = vsub.s32 6, %v5026
        %v5028 = vrot.slane %v2588, %v5027
        %v5045 = vunpack.c.l.b16 %v5009
        %v5046 = vunpack.c.l.b16 %v5010
        %v5047 = vunpack.c.l.b16 %v5011
        %v5048 = vunpack.c.l.b16 %v5012
        %v5049 = vunpack.c.l.b16 %v5013
        %v5050 = vunpack.c.l.b16 %v5014
        %v5051 = vunpack.c.l.b16 %v5015
        %v5052 = vunpack.c.l.b16 %v5016
        %v5053 = vunpack.c.l.b16 %v5017
        %v5054 = vunpack.c.l.b16 %v5018
        %v5055 = vunpack.c.l.b16 %v5019
        %v5056 = vunpack.c.l.b16 %v5020
        %v5057 = vunpack.c.l.b16 %v5021
        %v5058 = vunpack.c.l.b16 %v5022
        %v5059 = vunpack.c.l.b16 %v5023
        %v5060 = vunpack.c.l.b16 %v5024
        %v5061 = vpack.c.b16 %v5046, %v5045
        %v5062 = vpack.c.b16 %v5048, %v5047
        %v5063 = vpack.c.b16 %v5050, %v5049
        %v5064 = vpack.c.b16 %v5052, %v5051
        %v5065 = vpack.c.b16 %v5054, %v5053
        %v5066 = vpack.c.b16 %v5056, %v5055
        %v5067 = vpack.c.b16 %v5058, %v5057
        %v5068 = vpack.c.b16 %v5060, %v5059
        %5077 = vmatprep.subr.bf16.mxu0 0
        %5078 = vmatpush1.bf16.msra.mxu0 %v5061
        %5079 = vmatprep.subr.bf16.mxu0 0
        %5080 = vmatpush1.bf16.msra.mxu0 %v5062
        %5081 = vmatprep.subr.bf16.mxu0 0
        %5082 = vmatpush1.bf16.msra.mxu0 %v5063
        %5083 = vmatprep.subr.bf16.mxu0 0
        %5084 = vmatpush1.bf16.msra.mxu0 %v5064
        %5085 = vmatprep.subr.bf16.mxu0 0
        %5086 = vmatpush1.bf16.msra.mxu0 %v5065
        %5087 = vmatprep.subr.bf16.mxu0 0
        %5088 = vmatpush1.bf16.msra.mxu0 %v5066
        %5089 = vmatprep.subr.bf16.mxu0 0
        %5090 = vmatpush1.bf16.msra.mxu0 %v5067
        %5091 = vmatprep.subr.bf16.mxu0 0
        %5092 = vmatpush1.bf16.msra.mxu0 %v5068
        %5093 = vmatprep.subr.bf16.mxu0 0
        %5094 = vmatpush1.bf16.msra.mxu0 0
        %5095 = vmatprep.subr.bf16.mxu0 0
        %5096 = vmatpush1.bf16.msra.mxu0 0
        %5097 = vmatprep.subr.bf16.mxu0 0
        %5098 = vmatpush1.bf16.msra.mxu0 0
        %5099 = vmatprep.subr.bf16.mxu0 0
        %5100 = vmatpush1.bf16.msra.mxu0 0
        %5101 = vmatprep.subr.bf16.mxu0 0
        %5102 = vmatpush1.bf16.msra.mxu0 0
        %5103 = vmatprep.subr.bf16.mxu0 0
        %5104 = vmatpush1.bf16.msra.mxu0 0
        %5105 = vmatprep.subr.bf16.mxu0 0
        %5106 = vmatpush1.bf16.msra.mxu0 0
        %5107 = vmatprep.subr.bf16.mxu0 0
        %5108 = vmatpush1.bf16.msra.mxu0 0
        %5109 = vmatprep.mubr.bf16.mxu0 0
        %5110 = vmatmul.mubr.bf16.gmra.mrb[0].mxu0 %v5008
        %v5111 = vpop.f32.mrb[0].mxu0
        %v5112 = vadd.f32 %v5028, %v5111
        %v5113 = vpop.f32.mrb[0].mxu0
        %v5114 = vpop.f32.mrb[0].mxu0
        %v5115 = vadd.f32 %v5028, %v5114
        %v5116 = vpop.f32.mrb[0].mxu0
        %5117 = vdwg.mxu0
        %v5118 = vadd.f32 %v4923, %v5112
        %v5119 = vadd.f32 %v4924, %v5115
        %v5120 = vsel %vm2648, %v5118, 0.0
        %5121 = vadd.xlane.f32.xlu0 %v5120
        %v5122 = vpop.xlane.xlu0 %5121
        %v5123 = vsel %vm2648, %v5119, 0.0
        %5124 = vadd.xlane.f32.xlu0 %v5123
        %v5125 = vpop.xlane.xlu0 %5124
        %v5126 = vmul.f32 %v5122, %v3699
        %v5127 = vmul.f32 %v5125, %v3699
        %v5128 = vsub.f32 %v5118, %v5126
        %v5129 = vsub.f32 %v5119, %v5127
        %v5130 = vmul.f32 %v5128, %v5128
        %v5131 = vmul.f32 %v5129, %v5129
        %v5132 = vsel %vm2648, %v5130, 0.0
        %5133 = vadd.xlane.f32.xlu0 %v5132
        %v5134 = vpop.xlane.xlu0 %5133
        %v5135 = vsel %vm2648, %v5131, 0.0
        %5136 = vadd.xlane.f32.xlu0 %v5135
        %v5137 = vpop.xlane.xlu0 %5136
        %v5138 = vmul.f32 %v5134, %v3699
        %v5139 = vmul.f32 %v5137, %v3699
        %v5140 = vadd.f32 %v5138, 1e-05
        %v5141 = vadd.f32 %v5139, 1e-05
        %v5142 = vrsqrt.pop %v5140
        %v5143 = vrsqrt.pop %v5141
        %v5144 = vmul.f32 %v5128, %v5142
        %v5145 = vmul.f32 %v5129, %v5143
        %v5146 = vlaneseq
        %v5147 = vshrl.u32 %v5146, 7
        %v5148 = vsub.s32 3, %v5147
        %v5149 = vrot.slane %v2590, %v5148
        %v5150 = vmul.f32 %v5144, %v5149
        %v5151 = vmul.f32 %v5145, %v5149
        %v5152 = vlaneseq
        %v5153 = vshrl.u32 %v5152, 7
        %v5154 = vsub.s32 4, %v5153
        %v5155 = vrot.slane %v2590, %v5154
        %v5156 = vadd.f32 %v5150, %v5155
        %v5157 = vadd.f32 %v5151, %v5155
        %5158 = vst.msk [vmem:[#allocation4] sm:$0xff] %vm2648, %v5156
        %5159 = vst.msk [vmem:[#allocation4 + $0x8] sm:$0xff] %vm2648, %v5157
        %p5160 = scmp.eq.s32.totalorder %s35, 3
        // Predicated region
        $region113: #{transformer_forward.1} parent=111 // pred_check
          %p5161 = pneg %p5160
        $region114: #{transformer_forward.1} parent=111 // pred_check_branch
          %5163 = sbr.rel (%p5161) target = $region116
        $region115: #{transformer_forward.1} parent=111 // pred_region
          %v5164 = vld [vmem:[%s16] sm:$0x1]
          %v5165 = vld [vmem:[%s16 + $0x1] sm:$0x1]
          %v5166 = vsel %vm2648, %v5156, 0.0
          %5167 = vadd.xlane.f32.xlu0 %v5166
          %v5168 = vpop.xlane.xlu0 %5167
          %v5169 = vsel %vm2648, %v5157, 0.0
          %5170 = vadd.xlane.f32.xlu0 %v5169
          %v5171 = vpop.xlane.xlu0 %5170
          %v5172 = vmul.f32 %v5168, %v3699
          %v5173 = vmul.f32 %v5171, %v3699
          %v5174 = vsub.f32 %v5156, %v5172
          %v5175 = vsub.f32 %v5157, %v5173
          %v5176 = vmul.f32 %v5174, %v5174
          %v5177 = vmul.f32 %v5175, %v5175
          %v5178 = vsel %vm2648, %v5176, 0.0
          %5179 = vadd.xlane.f32.xlu0 %v5178
          %v5180 = vpop.xlane.xlu0 %5179
          %v5181 = vsel %vm2648, %v5177, 0.0
          %5182 = vadd.xlane.f32.xlu0 %v5181
          %v5183 = vpop.xlane.xlu0 %5182
          %v5184 = vmul.f32 %v5180, %v3699
          %v5185 = vmul.f32 %v5183, %v3699
          %v5186 = vadd.f32 %v5184, 1e-05
          %v5187 = vadd.f32 %v5185, 1e-05
          %v5188 = vrsqrt.pop %v5186
          %v5189 = vrsqrt.pop %v5187
          %v5190 = vmul.f32 %v5174, %v5188
          %v5191 = vmul.f32 %v5175, %v5189
          %v5192 = vlaneseq
          %v5193 = vshrl.u32 %v5192, 7
          %v5194 = vsub.s32 0, %v5193
          %v5195 = vrot.slane %v5164, %v5194
          %v5196 = vmul.f32 %v5190, %v5195
          %v5197 = vmul.f32 %v5191, %v5195
          %v5198 = vlaneseq
          %v5199 = vshrl.u32 %v5198, 7
          %v5200 = vsub.s32 0, %v5199
          %v5201 = vrot.slane %v5165, %v5200
          %v5202 = vadd.f32 %v5196, %v5201
          %v5203 = vadd.f32 %v5197, %v5201
          %v5204 = vpack.c.bf16 %v5203, %v5202
          %v5205 = vld [vmem:[%s17] sm:$0xf]
          %v5206 = vld [vmem:[%s17 + $0x4] sm:$0xf]
          %v5207 = vld [vmem:[%s17 + $0x8] sm:$0xf]
          %v5208 = vld [vmem:[%s17 + $0xc] sm:$0xf]
          %v5209 = vld [vmem:[%s17 + $0x10] sm:$0xf]
          %v5210 = vld [vmem:[%s17 + $0x14] sm:$0xf]
          %v5211 = vld [vmem:[%s17 + $0x18] sm:$0xf]
          %v5212 = vld [vmem:[%s17 + $0x1c] sm:$0xf]
          %v5213 = vld [vmem:[%s18] sm:$0x1]
          %v5215 = vlaneseq
          %v5216 = vshrl.u32 %v5215, 7
          %v5217 = vsub.s32 0, %v5216
          %v5218 = vrot.slane %v5213, %v5217
          %v5228 = vunpack.c.l.b16 %v5205
          %v5229 = vunpack.c.l.b16 %v5206
          %v5230 = vunpack.c.l.b16 %v5207
          %v5231 = vunpack.c.l.b16 %v5208
          %v5232 = vunpack.c.l.b16 %v5209
          %v5233 = vunpack.c.l.b16 %v5210
          %v5234 = vunpack.c.l.b16 %v5211
          %v5235 = vunpack.c.l.b16 %v5212
          %v5236 = vpack.c.b16 %v5229, %v5228
          %v5237 = vpack.c.b16 %v5231, %v5230
          %v5238 = vpack.c.b16 %v5233, %v5232
          %v5239 = vpack.c.b16 %v5235, %v5234
          %v5245 = vsel %vm2648, %v5204, 0
          %5247 = vmatprep.subr.bf16.mxu0 0
          %5248 = vmatpush1.bf16.msra.mxu0 %v5236
          %5249 = vmatprep.subr.bf16.mxu0 0
          %5250 = vmatpush1.bf16.msra.mxu0 %v5237
          %5251 = vmatprep.subr.bf16.mxu0 0
          %5252 = vmatpush1.bf16.msra.mxu0 %v5238
          %5253 = vmatprep.subr.bf16.mxu0 0
          %5254 = vmatpush1.bf16.msra.mxu0 %v5239
          %5255 = vmatprep.subr.bf16.mxu0 0
          %5256 = vmatpush1.bf16.msra.mxu0 0
          %5257 = vmatprep.subr.bf16.mxu0 0
          %5258 = vmatpush1.bf16.msra.mxu0 0
          %5259 = vmatprep.subr.bf16.mxu0 0
          %5260 = vmatpush1.bf16.msra.mxu0 0
          %5261 = vmatprep.subr.bf16.mxu0 0
          %5262 = vmatpush1.bf16.msra.mxu0 0
          %5263 = vmatprep.subr.bf16.mxu0 0
          %5264 = vmatpush1.bf16.msra.mxu0 0
          %5265 = vmatprep.subr.bf16.mxu0 0
          %5266 = vmatpush1.bf16.msra.mxu0 0
          %5267 = vmatprep.subr.bf16.mxu0 0
          %5268 = vmatpush1.bf16.msra.mxu0 0
          %5269 = vmatprep.subr.bf16.mxu0 0
          %5270 = vmatpush1.bf16.msra.mxu0 0
          %5271 = vmatprep.subr.bf16.mxu0 0
          %5272 = vmatpush1.bf16.msra.mxu0 0
          %5273 = vmatprep.subr.bf16.mxu0 0
          %5274 = vmatpush1.bf16.msra.mxu0 0
          %5275 = vmatprep.subr.bf16.mxu0 0
          %5276 = vmatpush1.bf16.msra.mxu0 0
          %5277 = vmatprep.subr.bf16.mxu0 0
          %5278 = vmatpush1.bf16.msra.mxu0 0
          %5279 = vmatprep.mubr.bf16.mxu0 0
          %5280 = vmatmul.mubr.bf16.gmra.mrb[0].mxu0 %v5245
          %v5281 = vpop.f32.mrb[0].mxu0
          %v5282 = vadd.f32 %v5218, %v5281
          %v5283 = vpop.f32.mrb[0].mxu0
          %v5284 = vpop.f32.mrb[0].mxu0
          %v5285 = vadd.f32 %v5218, %v5284
          %v5286 = vpop.f32.mrb[0].mxu0
          %5287 = vdwg.mxu0
          %5288 = vst [vmem:[%s1136] sm:$0xff] %v5282
          %5289 = vst [vmem:[%s1136 + $0x8] sm:$0xff] %v5285
        $region116: #{transformer_forward.1} parent=111 // pred_fallthru
          _
      $region112: #{transformer_forward.1} parent=95 // pred_fallthru
        _
      %s5290 = smul.u32 2, %s34
      %p5291 = scmp.lt.s32.totalorder %s5290, 1
      %s5292 = scalar_select %p5291, %s5290, 1
      %s5293 = smul.addr %s5292, 8
      %s5294 = scalar_lea.vmem %s19, %s5293
      // Predicated region
      $region117: #{transformer_forward.1} parent=95 // pred_check
        %p5295 = pneg %p602
      $region118: #{transformer_forward.1} parent=95 // pred_check_branch
        %5297 = sbr.rel (%p5295) target = $region120
      $region119: #{transformer_forward.1} parent=95 // pred_region
        %s5298 = smul.u32 2, %s34
      $region120: #{transformer_forward.1} parent=95 // pred_fallthru
        _
      // Predicated region
      $region121: #{transformer_forward.1} parent=95 // pred_check
        %p5299 = pneg %p602
      $region122: #{transformer_forward.1} parent=95 // pred_check_branch
        %5301 = sbr.rel (%p5299) target = $region124
      $region123: #{transformer_forward.1} parent=95 // pred_region
        %s5302 = smul.u32 2, %s34
        %p5303 = scmp.lt.s32.totalorder %s5302, 1
        %s5304 = scalar_select %p5303, %s5302, 1
        %s5305 = smul.addr %s5304, 8
        %s5306 = scalar_lea.vmem %s19, %s5305
      $region124: #{transformer_forward.1} parent=95 // pred_fallthru
        _
    $region96: #{transformer_forward.1} parent=5 // pred_fallthru
      _
    %p5307 = scmp.le.s32.totalorder 2, %s25
    // Predicated region
    $region125: #{transformer_forward.1} parent=5 // pred_check
      %p5308 = pneg %p5307
    $region126: #{transformer_forward.1} parent=5 // pred_check_branch
      %5310 = sbr.rel (%p5308) target = $region128
    $region127: #{transformer_forward.1} parent=5 // pred_region
      %s5311 = ssub.s32 %s25, 2
    $region128: #{transformer_forward.1} parent=5 // pred_fallthru
      _
  $region6: #{transformer_forward.1} parent=0 // loop_footer
    %s29 = sadd.s32 1, %s25
  $region7: #{transformer_forward.1} parent=0 // loop_footer_branch
    %24 = sbr.rel target = $region3
  $region8: #{transformer_forward.1} parent=0 // loop_exit
    _

</llo_original>
